<compile_context>
chip_gen: v5e
topology: v5e:2x2
jax: 0.10.0
libtpu: 0.0.40
codegen_flags: <defaults>
</compile_context>

<pallas_src>
import math
import random as pyrandom

import numpy as np
import jax
import jax.numpy as jnp
from jax.experimental import pallas as pl
from jax.experimental.pallas import tpu as pltpu

# ----------------------------------------------------------------------------
# Hyper-parameters (stand-ins for `args`)
# ----------------------------------------------------------------------------
DIM_HIDDEN = 32            # args.dim_hidden
TF_HEAD = 4                # args.tf_head
TF_LAYER = 2               # args.tf_layer
D_MODEL = DIM_HIDDEN * 2   # transformer d_model (64)
DH = D_MODEL // TF_HEAD    # per-head dim (16)
DIM_FF = 2048              # PyTorch TransformerEncoderLayer default dim_feedforward
FF_CHUNK = 512             # FFN chunking over DIM_FF
QKV_PAD = 128              # Q / K / V each padded to a 128-lane panel
FEAT_DIM = 16              # synthetic node-feature dimension for encoder stand-ins
N_NODES = 12               # len(G.x)
LN_EPS = 1e-5
BN_EPS = 1e-5


# ----------------------------------------------------------------------------
# In-kernel helpers (pure jnp, traced inside the kernel)
# ----------------------------------------------------------------------------
def _ln(x, g, b):
    mu = jnp.mean(x, axis=-1, keepdims=True)
    var = jnp.mean((x - mu) ** 2, axis=-1, keepdims=True)
    return (x - mu) * jax.lax.rsqrt(var + LN_EPS) * g + b


def _bn_relu(x, g, b):
    # TODO(synk): BatchNorm1d uses training-mode batch statistics here; eval mode
    # would use running_mean/running_var (not available without a checkpoint).
    mu = jnp.mean(x, axis=0, keepdims=True)
    var = jnp.mean((x - mu) ** 2, axis=0, keepdims=True)
    return jnp.maximum((x - mu) * jax.lax.rsqrt(var + BN_EPS) * g + b, 0.0)


# ----------------------------------------------------------------------------
# ONE fused kernel: encoders + MCM mask + TF_LAYER transformer layers + heads
# ----------------------------------------------------------------------------
def _fused_forward_kernel(
        # scalar (SMEM)
        mn_ref,
        # encoder inputs / params
        xf_ref, m_ref, ew_ref, eb_ref, tok_ref,
        # transformer params (stacked on leading L axis)
        wqkv_ref, bqkv_ref, wo_ref, bo_ref,
        ln1g_ref, ln1b_ref, w1_ref, b1_ref, w2_ref, b2_ref, ln2g_ref, ln2b_ref,
        # prediction-head params
        wp_ref, bp_ref, w0a_ref, w0b_ref, wmid_ref, bmlp_ref, bng_ref, bnb_ref,
        w3_ref, b3_ref,
        # outputs
        pred_ref, nomask_ref, prob_ref, drive_ref):
    H = DIM_HIDDEN
    D = D_MODEL
    n = xf_ref.shape[0]

    # ---- Encoders (DeepCell / DeepGate stand-ins) + MCM mask -----------------
    # TODO(synk): DeepCell / DeepGate are external GNN encoders loaded from
    # checkpoints (not provided); stand-in is one fused linear encoder whose
    # (F, 4H) weight holds [pm_hs | pm_hf | aig_hs | aig_hf].
    xf = xf_ref[...]                                                   # (N, F)
    enc = jnp.dot(xf, ew_ref[...], preferred_element_type=jnp.float32) + eb_ref[...]

    # nomask_pm_tokens = cat([nomask_pm_hs, nomask_pm_hf], dim=1)
    nomask_ref[...] = enc[:, :D]

    # MCM mask: replace hf lanes (H:2H) of masked nodes with the mask token
    # (mask token is pre-padded to the full 4H lane width on the host).
    lane = jax.lax.broadcasted_iota(jnp.int32, enc.shape, 1)
    hf_lane = jnp.logical_and(lane >= H, lane < 2 * H)
    enc_m = jnp.where(jnp.logical_and(hf_lane, m_ref[...] == 0),
                      tok_ref[...], enc)
    pm_hf = enc_m[:, H:D]                                              # masked hf

    # all_tokens = cat([pm_tokens, aig_tokens], dim=0)  -> (2N, D)
    # TODO(synk): aig tokens are .detach()-ed in the reference; gradient
    # stopping is a no-op for this forward-only implementation.
    x = jnp.concatenate([enc_m[:, :D], enc_m[:, D:]], axis=0)

    # ---- Transformer encoder layers (post-norm, relu FFN), fully unrolled ----
    # TODO(synk): dropout layers (train-mode randomness) are identity (eval).
    M = 2 * n
    scale = 1.0 / math.sqrt(DH)
    for l in range(TF_LAYER):
        qkv = jnp.dot(x, wqkv_ref[l], preferred_element_type=jnp.float32) + bqkv_ref[l]
        heads = []
        for h in range(TF_HEAD):
            q = qkv[:, h * DH:(h + 1) * DH]
            k = qkv[:, QKV_PAD + h * DH:QKV_PAD + (h + 1) * DH]
            v = qkv[:, 2 * QKV_PAD + h * DH:2 * QKV_PAD + (h + 1) * DH]
            s = jax.lax.dot_general(q, k, (((1,), (1,)), ((), ())),
                                    preferred_element_type=jnp.float32) * scale
            s = s - jnp.max(s, axis=-1, keepdims=True)
            p = jnp.exp(s)
            p = p * pl.reciprocal(jnp.sum(p, axis=-1, keepdims=True), approx=True)
            heads.append(jnp.dot(p, v, preferred_element_type=jnp.float32))
        # One K=64 output projection over the concatenated heads.
        attn = jnp.dot(jnp.concatenate(heads, axis=1), wo_ref[l],
                       preferred_element_type=jnp.float32) + bo_ref[l]

        # Residual + LayerNorm 1 (f32 VPU math).
        x1 = _ln(x + attn, ln1g_ref[l], ln1b_ref[l])

        # FFN, chunked over DIM_FF: bf16 MXU operands, f32 accumulation.
        x1_bf = x1.astype(jnp.bfloat16)
        acc = jnp.zeros((M, D), jnp.float32)
        for c in range(0, DIM_FF, FF_CHUNK):
            h1 = jnp.dot(x1_bf, w1_ref[l, :, c:c + FF_CHUNK],
                         preferred_element_type=jnp.float32) + b1_ref[l, :, c:c + FF_CHUNK]
            h1 = jnp.maximum(h1, 0.0)
            acc = acc + jnp.dot(h1.astype(jnp.bfloat16), w2_ref[l, c:c + FF_CHUNK, :],
                                preferred_element_type=jnp.float32)
        # Residual + LayerNorm 2.
        x = _ln(x1 + acc + b2_ref[l], ln2g_ref[l], ln2b_ref[l])

    # ---- Outputs / prediction heads ------------------------------------------
    pred = x[:n, :]                                                    # (N, D)
    pred_ref[...] = pred

    # pm_prob = sigmoid((pred[:, :H] + pm_hf) @ w_prob + b_prob)
    z = pred[:, :H] + pm_hf
    prob_ref[...] = jax.nn.sigmoid(
        jnp.sum(z * wp_ref[...], axis=-1, keepdims=True) + bp_ref[...])

    # drive MLP: input = cat([pred, pred[mask_node].repeat(N, 1)], dim=1)
    # == pred @ W0[:D] + pred[mask_node] @ W0[D:]  (concat folded into 2 matmuls);
    # the masked row is gathered in-kernel via pl.ds with the SMEM scalar.
    # TODO(synk): drive-MLP dropout (p=0.2, train-mode randomness) is identity.
    mrow = pred_ref[pl.ds(mn_ref[0], 1), :]                            # (1, D)
    t = (jnp.dot(pred, w0a_ref[...], preferred_element_type=jnp.float32)
         + jnp.dot(mrow, w0b_ref[...], preferred_element_type=jnp.float32)
         + bmlp_ref[0])
    t = _bn_relu(t, bng_ref[0], bnb_ref[0])
    t = _bn_relu(jnp.dot(t, wmid_ref[0], preferred_element_type=jnp.float32)
                 + bmlp_ref[1], bng_ref[1], bnb_ref[1])
    t = _bn_relu(jnp.dot(t, wmid_ref[1], preferred_element_type=jnp.float32)
                 + bmlp_ref[2], bng_ref[2], bnb_ref[2])
    drive_ref[...] = jax.nn.sigmoid(
        jnp.sum(t * w3_ref[...], axis=-1, keepdims=True) + b3_ref[...])


def fused_forward(packed, x_feat, m_masked, mask_node_arr):
    N = x_feat.shape[0]
    enc, tf, hd = packed["enc"], packed["tf"], packed["head"]
    smem = pl.BlockSpec(memory_space=pltpu.MemorySpace.SMEM)
    vmem = pl.BlockSpec(memory_space=pltpu.MemorySpace.VMEM)
    call = pl.pallas_call(
        _fused_forward_kernel,
        out_shape=(
            jax.ShapeDtypeStruct((N, D_MODEL), jnp.float32),   # pred_pm_tokens
            jax.ShapeDtypeStruct((N, D_MODEL), jnp.float32),   # nomask_pm_tokens
            jax.ShapeDtypeStruct((N, 1), jnp.float32),         # pm_prob
            jax.ShapeDtypeStruct((N, 1), jnp.float32),         # pred_pm_drive
        ),
        in_specs=[smem] + [vmem] * 27,
        out_specs=(vmem, vmem, vmem, vmem),
        compiler_params=pltpu.CompilerParams(vmem_limit_bytes=32 * 1024 * 1024),
        cost_estimate=pl.CostEstimate(flops=30_000_000, transcendentals=5_000,
                                      bytes_accessed=2_600_000),
    )
    return call(mask_node_arr, x_feat, m_masked,
                enc["w"], enc["b"], enc["mask_token"],
                tf["wqkv"], tf["bqkv"], tf["wo"], tf["bo"],
                tf["ln1_g"], tf["ln1_b"], tf["w1"], tf["b1"], tf["w2"], tf["b2"],
                tf["ln2_g"], tf["ln2_b"],
                hd["wprob"], hd["bprob"], hd["w0a"], hd["w0b"], hd["wmid"],
                hd["bmlp"], hd["bng"], hd["bnb"], hd["w3"], hd["b3"])


# ----------------------------------------------------------------------------
# Host-side graph logic: mask_single_nodes
# ----------------------------------------------------------------------------
def mask_single_nodes(edge_index, forward_level, k_hops=(4, 10), seed=0):
    # TODO(synk): original uses un-seeded `random`; seeded here for determinism.
    rng = pyrandom.Random(seed)
    seq_len = len(forward_level)
    cand = [i for i in range(seq_len) if forward_level[i] >= k_hops[1]]
    if len(cand) == 0:
        cand = list(range(seq_len))
    idx = rng.choice(cand)
    k_hop = min(rng.randint(k_hops[0], k_hops[1]), int(forward_level[idx]))

    src, dst = edge_index[0], edge_index[1]

    def fanin(nodes):
        nodeset = set(int(n) for n in nodes)
        return sorted({int(src[e]) for e in range(len(dst)) if int(dst[e]) in nodeset})

    current = [idx]
    mask_indices = {idx}
    for _ in range(k_hop):
        f = fanin(current)
        current = f
        mask_indices.update(f)

    drive = set(fanin(current))
    while len(current) > 0:
        f = fanin(current)
        drive.update(f)
        current = f

    drive_map = np.zeros(seq_len, dtype=bool)
    if drive:
        drive_map[list(drive)] = True
    return idx, np.array(sorted(mask_indices), dtype=np.int32), drive_map


# ----------------------------------------------------------------------------
# Parameter initialization (logical layout) and packing (kernel-ready layout)
# ----------------------------------------------------------------------------
def init_params(key):
    ks = iter(jax.random.split(key, 64))

    def w(shape, scale=0.05):
        return (scale * jax.random.normal(next(ks), shape)).astype(jnp.float32)

    def zeros(shape):
        return jnp.zeros(shape, jnp.float32)

    def ones(shape):
        return jnp.ones(shape, jnp.float32)

    params = {}
    params["deepcell"] = {
        "w_hs": w((FEAT_DIM, DIM_HIDDEN)), "b_hs": zeros((DIM_HIDDEN,)),
        "w_hf": w((FEAT_DIM, DIM_HIDDEN)), "b_hf": zeros((DIM_HIDDEN,)),
        "w_prob": w((DIM_HIDDEN, 1)), "b_prob": zeros((1,)),
    }
    params["deepgate"] = {
        "w_hs": w((FEAT_DIM, DIM_HIDDEN)), "b_hs": zeros((DIM_HIDDEN,)),
        "w_hf": w((FEAT_DIM, DIM_HIDDEN)), "b_hf": zeros((DIM_HIDDEN,)),
    }
    params["mask_token"] = w((1, DIM_HIDDEN), scale=1.0)  # nn.Parameter(torch.randn(1, h))

    tf_layers = []
    for _ in range(TF_LAYER):
        tf_layers.append({
            "wq": w((D_MODEL, D_MODEL)), "bq": zeros((D_MODEL,)),
            "wk": w((D_MODEL, D_MODEL)), "bk": zeros((D_MODEL,)),
            "wv": w((D_MODEL, D_MODEL)), "bv": zeros((D_MODEL,)),
            "wo": w((D_MODEL, D_MODEL)), "bo": zeros((D_MODEL,)),
            "w1": w((D_MODEL, DIM_FF)), "b1": zeros((DIM_FF,)),
            "w2": w((DIM_FF, D_MODEL)), "b2": zeros((D_MODEL,)),
            "ln1_g": ones((D_MODEL,)), "ln1_b": zeros((D_MODEL,)),
            "ln2_g": ones((D_MODEL,)), "ln2_b": zeros((D_MODEL,)),
        })
    params["mask_tf"] = tf_layers

    h2 = DIM_HIDDEN * 2
    params["drive_mlp"] = {
        "w": [w((DIM_HIDDEN * 4, h2)), w((h2, h2)), w((h2, h2)), w((h2, 1))],
        "b": [zeros((h2,)), zeros((h2,)), zeros((h2,)), zeros((1,))],
        "bn_g": [ones((h2,)) for _ in range(3)],
        "bn_b": [zeros((h2,)) for _ in range(3)],
    }
    return params


def prepare_params(params):
    """One-time host-side packing into kernel-ready (fused / padded / bf16) form."""
    dc, dg = params["deepcell"], params["deepgate"]
    packed = {}

    # Fused encoder: four (F, H) weights -> one lane-dense (F, 4H) weight.
    packed["enc"] = {
        "w": jnp.concatenate([dc["w_hs"], dc["w_hf"], dg["w_hs"], dg["w_hf"]], axis=1),
        "b": jnp.concatenate([dc["b_hs"], dc["b_hf"], dg["b_hs"], dg["b_hf"]])[None, :],
        # mask token padded to the full 4H lane width (real values at lanes H:2H).
        "mask_token": jnp.pad(params["mask_token"],
                              ((0, 0), (DIM_HIDDEN, 2 * DIM_HIDDEN))),
    }

    # Transformer layers, stacked on a leading L axis.
    # Q / K / V each padded to a 128-lane panel: Q at 0:64, K at 128:192, V at 256:320.
    zcol = jnp.zeros((D_MODEL, QKV_PAD - D_MODEL), jnp.float32)
    zrow = jnp.zeros((QKV_PAD - D_MODEL,), jnp.float32)
    wqkv, bqkv, wo, bo = [], [], [], []
    ln1g, ln1b, w1, b1, w2, b2, ln2g, ln2b = [], [], [], [], [], [], [], []
    for p in params["mask_tf"]:
        wqkv.append(jnp.concatenate([p["wq"], zcol, p["wk"], zcol, p["wv"], zcol], axis=1))
        bqkv.append(jnp.concatenate([p["bq"], zrow, p["bk"], zrow, p["bv"], zrow])[None, :])
        wo.append(p["wo"]); bo.append(p["bo"][None, :])
        ln1g.append(p["ln1_g"][None, :]); ln1b.append(p["ln1_b"][None, :])
        w1.append(p["w1"].astype(jnp.bfloat16)); b1.append(p["b1"][None, :])
        w2.append(p["w2"].astype(jnp.bfloat16)); b2.append(p["b2"][None, :])
        ln2g.append(p["ln2_g"][None, :]); ln2b.append(p["ln2_b"][None, :])
    packed["tf"] = {
        "wqkv": jnp.stack(wqkv), "bqkv": jnp.stack(bqkv),
        "wo": jnp.stack(wo), "bo": jnp.stack(bo),
        "ln1_g": jnp.stack(ln1g), "ln1_b": jnp.stack(ln1b),
        "w1": jnp.stack(w1), "b1": jnp.stack(b1),
        "w2": jnp.stack(w2), "b2": jnp.stack(b2),
        "ln2_g": jnp.stack(ln2g), "ln2_b": jnp.stack(ln2b),
    }

    # Heads: width-1 projections as row vectors (lane-reduce in-kernel),
    # drive-MLP first weight split so the row-concat folds into two matmuls.
    dm = params["drive_mlp"]
    packed["head"] = {
        "wprob": dc["w_prob"].T,                    # (1, H)
        "bprob": dc["b_prob"].reshape(1, 1),
        "w0a": dm["w"][0][:D_MODEL, :], "w0b": dm["w"][0][D_MODEL:, :],
        "wmid": jnp.stack([dm["w"][1], dm["w"][2]], axis=0),
        "bmlp": jnp.stack([dm["b"][0], dm["b"][1], dm["b"][2]], axis=0)[:, None, :],
        "bng": jnp.stack(dm["bn_g"], axis=0)[:, None, :],
        "bnb": jnp.stack(dm["bn_b"], axis=0)[:, None, :],
        "w3": dm["w"][3].T,                         # (1, 2H)
        "b3": dm["b"][3].reshape(1, 1),
    }
    return packed


# ----------------------------------------------------------------------------
# TopModel.forward
# ----------------------------------------------------------------------------
def top_model_forward(packed, x_feat, edge_index, forward_level):
    N = x_feat.shape[0]

    mask_node, mask_indices_np, gt_pm_drive_np = mask_single_nodes(edge_index, forward_level)
    mask_indices = jnp.asarray(mask_indices_np, dtype=jnp.int32)
    gt_pm_drive = jnp.asarray(gt_pm_drive_np)

    m_np = np.ones((N, 1), np.int32)
    m_np[mask_indices_np] = 0
    m_masked = jnp.asarray(m_np)
    mask_node_arr = jnp.asarray([mask_node], dtype=jnp.int32)

    # Single fused launch: encoder + MCM mask + transformer stack + both heads.
    pred_pm_tokens, nomask_pm_tokens, pm_prob, pred_pm_drive = fused_forward(
        packed, x_feat, m_masked, mask_node_arr)

    return (pred_pm_tokens, mask_indices, nomask_pm_tokens, pm_prob,
            pred_pm_drive, gt_pm_drive)


# ----------------------------------------------------------------------------
# Main
# ----------------------------------------------------------------------------
if __name__ == "__main__":
    key = jax.random.PRNGKey(0)
    k_params, k_feat = jax.random.split(key)

    params = init_params(k_params)
    packed = prepare_params(params)

    # Synthetic small DAG (batch_size == 1, a single graph G).
    x_feat = jax.random.normal(k_feat, (N_NODES, FEAT_DIM), dtype=jnp.float32)
    edge_list = [(0, 4), (1, 4), (1, 5), (2, 5), (2, 6), (3, 6),
                 (4, 7), (5, 7), (5, 8), (6, 8),
                 (7, 9), (8, 9), (8, 10), (9, 11), (10, 11)]
    edge_index = np.array(edge_list, dtype=np.int32).T                # (2, E) [src; dst]
    forward_level = np.array([0, 0, 0, 0, 1, 1, 1, 2, 2, 3, 3, 4], dtype=np.int32)

    outputs = top_model_forward(packed, x_feat, edge_index, forward_level)
    jax.block_until_ready(outputs)
    print("KERNEL_OK")
</pallas_src>

<mosaic_0001>
module attributes {stable_mosaic.version = 11 : i64} {
  func.func @_fused_forward_kernel(%arg0: memref<1xi32, #tpu.memory_space<smem>>, %arg1: memref<12x16xf32, #tpu.memory_space<vmem>>, %arg2: memref<12x1xi32, #tpu.memory_space<vmem>>, %arg3: memref<16x128xf32, #tpu.memory_space<vmem>>, %arg4: memref<1x128xf32, #tpu.memory_space<vmem>>, %arg5: memref<1x128xf32, #tpu.memory_space<vmem>>, %arg6: memref<2x64x384xf32, #tpu.memory_space<vmem>>, %arg7: memref<2x1x384xf32, #tpu.memory_space<vmem>>, %arg8: memref<2x64x64xf32, #tpu.memory_space<vmem>>, %arg9: memref<2x1x64xf32, #tpu.memory_space<vmem>>, %arg10: memref<2x1x64xf32, #tpu.memory_space<vmem>>, %arg11: memref<2x1x64xf32, #tpu.memory_space<vmem>>, %arg12: memref<2x64x2048xbf16, #tpu.memory_space<vmem>>, %arg13: memref<2x1x2048xf32, #tpu.memory_space<vmem>>, %arg14: memref<2x2048x64xbf16, #tpu.memory_space<vmem>>, %arg15: memref<2x1x64xf32, #tpu.memory_space<vmem>>, %arg16: memref<2x1x64xf32, #tpu.memory_space<vmem>>, %arg17: memref<2x1x64xf32, #tpu.memory_space<vmem>>, %arg18: memref<1x32xf32, #tpu.memory_space<vmem>>, %arg19: memref<1x1xf32, #tpu.memory_space<vmem>>, %arg20: memref<64x64xf32, #tpu.memory_space<vmem>>, %arg21: memref<64x64xf32, #tpu.memory_space<vmem>>, %arg22: memref<2x64x64xf32, #tpu.memory_space<vmem>>, %arg23: memref<3x1x64xf32, #tpu.memory_space<vmem>>, %arg24: memref<3x1x64xf32, #tpu.memory_space<vmem>>, %arg25: memref<3x1x64xf32, #tpu.memory_space<vmem>>, %arg26: memref<1x64xf32, #tpu.memory_space<vmem>>, %arg27: memref<1x1xf32, #tpu.memory_space<vmem>>, %arg28: memref<12x64xf32, #tpu.memory_space<vmem>>, %arg29: memref<12x64xf32, #tpu.memory_space<vmem>>, %arg30: memref<12x1xf32, #tpu.memory_space<vmem>>, %arg31: memref<12x1xf32, #tpu.memory_space<vmem>>) attributes {dimension_semantics = [], scalar_prefetch = 0 : i64, scratch_operands = 0 : i64, tpu.core_type = #tpu.core_type<tc>} {
    %c0 = arith.constant 0 : index
    %c0_0 = arith.constant 0 : index
    %0 = vector.load %arg1[%c0, %c0_0] : memref<12x16xf32, #tpu.memory_space<vmem>>, vector<12x16xf32>
    %c0_1 = arith.constant 0 : index
    %c0_2 = arith.constant 0 : index
    %1 = vector.load %arg3[%c0_1, %c0_2] : memref<16x128xf32, #tpu.memory_space<vmem>>, vector<16x128xf32>
    %cst = arith.constant dense<0.000000e+00> : vector<12x128xf32>
    %2 = tpu.matmul %0, %1, %cst {dimension_numbers = #tpu.dot_dimension_numbers<[1], [0], [0], [1], [0, 0, 1, 1], [], []>} : vector<12x16xf32>, vector<16x128xf32>, vector<12x128xf32> -> vector<12x128xf32>
    %c0_3 = arith.constant 0 : index
    %c0_4 = arith.constant 0 : index
    %3 = vector.load %arg4[%c0_3, %c0_4] : memref<1x128xf32, #tpu.memory_space<vmem>>, vector<1x128xf32>
    %4 = vector.broadcast %3 : vector<1x128xf32> to vector<12x128xf32>
    %5 = arith.addf %2, %4 : vector<12x128xf32>
    %6 = vector.extract_strided_slice %5 {offsets = [0, 0], sizes = [12, 64], strides = [1, 1]} : vector<12x128xf32> to vector<12x64xf32>
    %c0_5 = arith.constant 0 : index
    %c0_6 = arith.constant 0 : index
    %7 = vector.load %arg29[%c0_5, %c0_6] : memref<12x64xf32, #tpu.memory_space<vmem>>, vector<12x64xf32>
    tpu.vector_store %arg29[%c0_5, %c0_6], %6 {strides = array<i32>} : memref<12x64xf32, #tpu.memory_space<vmem>>, vector<12x64xf32>,
    %8 = tpu.iota {dimensions = array<i32: 1>} : vector<12x128xi32>
    %c32_i32 = arith.constant 32 : i32
    %9 = vector.broadcast %c32_i32 : i32 to vector<12x128xi32>
    %10 = arith.cmpi sge, %8, %9 : vector<12x128xi32>
    %c64_i32 = arith.constant 64 : i32
    %11 = vector.broadcast %c64_i32 : i32 to vector<12x128xi32>
    %12 = arith.cmpi slt, %8, %11 : vector<12x128xi32>
    %13 = arith.andi %10, %12 : vector<12x128xi1>
    %c0_7 = arith.constant 0 : index
    %c0_8 = arith.constant 0 : index
    %14 = vector.load %arg2[%c0_7, %c0_8] : memref<12x1xi32, #tpu.memory_space<vmem>>, vector<12x1xi32>
    %c0_i32 = arith.constant 0 : i32
    %15 = vector.broadcast %c0_i32 : i32 to vector<12x1xi32>
    %16 = arith.cmpi eq, %14, %15 : vector<12x1xi32>
    %17 = vector.broadcast %16 : vector<12x1xi1> to vector<12x128xi1>
    %18 = arith.andi %13, %17 : vector<12x128xi1>
    %c0_9 = arith.constant 0 : index
    %c0_10 = arith.constant 0 : index
    %19 = vector.load %arg5[%c0_9, %c0_10] : memref<1x128xf32, #tpu.memory_space<vmem>>, vector<1x128xf32>
    %20 = vector.shape_cast %19 : vector<1x128xf32> to vector<1x128xf32>
    %21 = vector.broadcast %20 : vector<1x128xf32> to vector<12x128xf32>
    %22 = arith.select %18, %21, %5 : vector<12x128xi1>, vector<12x128xf32>
    %23 = vector.extract_strided_slice %22 {offsets = [0, 32], sizes = [12, 32], strides = [1, 1]} : vector<12x128xf32> to vector<12x32xf32>
    %24 = vector.extract_strided_slice %22 {offsets = [0, 0], sizes = [12, 64], strides = [1, 1]} : vector<12x128xf32> to vector<12x64xf32>
    %25 = vector.extract_strided_slice %22 {offsets = [0, 64], sizes = [12, 64], strides = [1, 1]} : vector<12x128xf32> to vector<12x64xf32>
    %26 = tpu.concatenate %24, %25 in 0 : vector<12x64xf32>, vector<12x64xf32> -> vector<24x64xf32>
    %c0_11 = arith.constant 0 : index
    %c0_12 = arith.constant 0 : index
    %c0_13 = arith.constant 0 : index
    %27 = vector.load %arg6[%c0_11, %c0_12, %c0_13] : memref<2x64x384xf32, #tpu.memory_space<vmem>>, vector<1x64x384xf32>
    %28 = vector.shape_cast %27 : vector<1x64x384xf32> to vector<64x384xf32>
    %cst_14 = arith.constant dense<0.000000e+00> : vector<24x384xf32>
    %29 = tpu.matmul %26, %28, %cst_14 {dimension_numbers = #tpu.dot_dimension_numbers<[1], [0], [0], [1], [0, 0, 1, 1], [], []>} : vector<24x64xf32>, vector<64x384xf32>, vector<24x384xf32> -> vector<24x384xf32>
    %c0_15 = arith.constant 0 : index
    %c0_16 = arith.constant 0 : index
    %c0_17 = arith.constant 0 : index
    %30 = vector.load %arg7[%c0_15, %c0_16, %c0_17] : memref<2x1x384xf32, #tpu.memory_space<vmem>>, vector<1x1x384xf32>
    %31 = vector.shape_cast %30 : vector<1x1x384xf32> to vector<1x384xf32>
    %32 = vector.broadcast %31 : vector<1x384xf32> to vector<24x384xf32>
    %33 = arith.addf %29, %32 : vector<24x384xf32>
    %34 = vector.extract_strided_slice %33 {offsets = [0, 0], sizes = [24, 16], strides = [1, 1]} : vector<24x384xf32> to vector<24x16xf32>
    %35 = vector.extract_strided_slice %33 {offsets = [0, 128], sizes = [24, 16], strides = [1, 1]} : vector<24x384xf32> to vector<24x16xf32>
    %36 = vector.extract_strided_slice %33 {offsets = [0, 256], sizes = [24, 16], strides = [1, 1]} : vector<24x384xf32> to vector<24x16xf32>
    %cst_18 = arith.constant dense<0.000000e+00> : vector<24x24xf32>
    %37 = tpu.matmul %34, %35, %cst_18 {dimension_numbers = #tpu.dot_dimension_numbers<[1], [1], [0], [0], [0, 0, 1, 0], [], []>} : vector<24x16xf32>, vector<24x16xf32>, vector<24x24xf32> -> vector<24x24xf32>
    %cst_19 = arith.constant 2.500000e-01 : f32
    %38 = vector.broadcast %cst_19 : f32 to vector<24x24xf32>
    %39 = arith.mulf %37, %38 : vector<24x24xf32>
    %cst_20 = arith.constant dense<0xFF800000> : vector<24xf32>
    %40 = vector.multi_reduction <maximumf>, %39, %cst_20 [1] : vector<24x24xf32> to vector<24xf32>
    %41 = vector.shape_cast %40 : vector<24xf32> to vector<24x1xf32>
    %42 = vector.broadcast %41 : vector<24x1xf32> to vector<24x24xf32>
    %43 = arith.subf %39, %42 : vector<24x24xf32>
    %44 = math.exp %43 : vector<24x24xf32>
    %cst_21 = arith.constant dense<0.000000e+00> : vector<24xf32>
    %45 = vector.multi_reduction <add>, %44, %cst_21 [1] : vector<24x24xf32> to vector<24xf32>
    %46 = vector.shape_cast %45 : vector<24xf32> to vector<24x1xf32>
    %47 = tpu.reciprocal %46 {approx = true} : vector<24x1xf32> -> vector<24x1xf32>
    %48 = vector.broadcast %47 : vector<24x1xf32> to vector<24x24xf32>
    %49 = arith.mulf %44, %48 : vector<24x24xf32>
    %cst_22 = arith.constant dense<0.000000e+00> : vector<24x16xf32>
    %50 = tpu.matmul %49, %36, %cst_22 {dimension_numbers = #tpu.dot_dimension_numbers<[1], [0], [0], [1], [0, 0, 1, 1], [], []>} : vector<24x24xf32>, vector<24x16xf32>, vector<24x16xf32> -> vector<24x16xf32>
    %51 = vector.extract_strided_slice %33 {offsets = [0, 16], sizes = [24, 16], strides = [1, 1]} : vector<24x384xf32> to vector<24x16xf32>
    %52 = vector.extract_strided_slice %33 {offsets = [0, 144], sizes = [24, 16], strides = [1, 1]} : vector<24x384xf32> to vector<24x16xf32>
    %53 = vector.extract_strided_slice %33 {offsets = [0, 272], sizes = [24, 16], strides = [1, 1]} : vector<24x384xf32> to vector<24x16xf32>
    %cst_23 = arith.constant dense<0.000000e+00> : vector<24x24xf32>
    %54 = tpu.matmul %51, %52, %cst_23 {dimension_numbers = #tpu.dot_dimension_numbers<[1], [1], [0], [0], [0, 0, 1, 0], [], []>} : vector<24x16xf32>, vector<24x16xf32>, vector<24x24xf32> -> vector<24x24xf32>
    %cst_24 = arith.constant 2.500000e-01 : f32
    %55 = vector.broadcast %cst_24 : f32 to vector<24x24xf32>
    %56 = arith.mulf %54, %55 : vector<24x24xf32>
    %cst_25 = arith.constant dense<0xFF800000> : vector<24xf32>
    %57 = vector.multi_reduction <maximumf>, %56, %cst_25 [1] : vector<24x24xf32> to vector<24xf32>
    %58 = vector.shape_cast %57 : vector<24xf32> to vector<24x1xf32>
    %59 = vector.broadcast %58 : vector<24x1xf32> to vector<24x24xf32>
    %60 = arith.subf %56, %59 : vector<24x24xf32>
    %61 = math.exp %60 : vector<24x24xf32>
    %cst_26 = arith.constant dense<0.000000e+00> : vector<24xf32>
    %62 = vector.multi_reduction <add>, %61, %cst_26 [1] : vector<24x24xf32> to vector<24xf32>
    %63 = vector.shape_cast %62 : vector<24xf32> to vector<24x1xf32>
    %64 = tpu.reciprocal %63 {approx = true} : vector<24x1xf32> -> vector<24x1xf32>
    %65 = vector.broadcast %64 : vector<24x1xf32> to vector<24x24xf32>
    %66 = arith.mulf %61, %65 : vector<24x24xf32>
    %cst_27 = arith.constant dense<0.000000e+00> : vector<24x16xf32>
    %67 = tpu.matmul %66, %53, %cst_27 {dimension_numbers = #tpu.dot_dimension_numbers<[1], [0], [0], [1], [0, 0, 1, 1], [], []>} : vector<24x24xf32>, vector<24x16xf32>, vector<24x16xf32> -> vector<24x16xf32>
    %68 = vector.extract_strided_slice %33 {offsets = [0, 32], sizes = [24, 16], strides = [1, 1]} : vector<24x384xf32> to vector<24x16xf32>
    %69 = vector.extract_strided_slice %33 {offsets = [0, 160], sizes = [24, 16], strides = [1, 1]} : vector<24x384xf32> to vector<24x16xf32>
    %70 = vector.extract_strided_slice %33 {offsets = [0, 288], sizes = [24, 16], strides = [1, 1]} : vector<24x384xf32> to vector<24x16xf32>
    %cst_28 = arith.constant dense<0.000000e+00> : vector<24x24xf32>
    %71 = tpu.matmul %68, %69, %cst_28 {dimension_numbers = #tpu.dot_dimension_numbers<[1], [1], [0], [0], [0, 0, 1, 0], [], []>} : vector<24x16xf32>, vector<24x16xf32>, vector<24x24xf32> -> vector<24x24xf32>
    %cst_29 = arith.constant 2.500000e-01 : f32
    %72 = vector.broadcast %cst_29 : f32 to vector<24x24xf32>
    %73 = arith.mulf %71, %72 : vector<24x24xf32>
    %cst_30 = arith.constant dense<0xFF800000> : vector<24xf32>
    %74 = vector.multi_reduction <maximumf>, %73, %cst_30 [1] : vector<24x24xf32> to vector<24xf32>
    %75 = vector.shape_cast %74 : vector<24xf32> to vector<24x1xf32>
    %76 = vector.broadcast %75 : vector<24x1xf32> to vector<24x24xf32>
    %77 = arith.subf %73, %76 : vector<24x24xf32>
    %78 = math.exp %77 : vector<24x24xf32>
    %cst_31 = arith.constant dense<0.000000e+00> : vector<24xf32>
    %79 = vector.multi_reduction <add>, %78, %cst_31 [1] : vector<24x24xf32> to vector<24xf32>
    %80 = vector.shape_cast %79 : vector<24xf32> to vector<24x1xf32>
    %81 = tpu.reciprocal %80 {approx = true} : vector<24x1xf32> -> vector<24x1xf32>
    %82 = vector.broadcast %81 : vector<24x1xf32> to vector<24x24xf32>
    %83 = arith.mulf %78, %82 : vector<24x24xf32>
    %cst_32 = arith.constant dense<0.000000e+00> : vector<24x16xf32>
    %84 = tpu.matmul %83, %70, %cst_32 {dimension_numbers = #tpu.dot_dimension_numbers<[1], [0], [0], [1], [0, 0, 1, 1], [], []>} : vector<24x24xf32>, vector<24x16xf32>, vector<24x16xf32> -> vector<24x16xf32>
    %85 = vector.extract_strided_slice %33 {offsets = [0, 48], sizes = [24, 16], strides = [1, 1]} : vector<24x384xf32> to vector<24x16xf32>
    %86 = vector.extract_strided_slice %33 {offsets = [0, 176], sizes = [24, 16], strides = [1, 1]} : vector<24x384xf32> to vector<24x16xf32>
    %87 = vector.extract_strided_slice %33 {offsets = [0, 304], sizes = [24, 16], strides = [1, 1]} : vector<24x384xf32> to vector<24x16xf32>
    %cst_33 = arith.constant dense<0.000000e+00> : vector<24x24xf32>
    %88 = tpu.matmul %85, %86, %cst_33 {dimension_numbers = #tpu.dot_dimension_numbers<[1], [1], [0], [0], [0, 0, 1, 0], [], []>} : vector<24x16xf32>, vector<24x16xf32>, vector<24x24xf32> -> vector<24x24xf32>
    %cst_34 = arith.constant 2.500000e-01 : f32
    %89 = vector.broadcast %cst_34 : f32 to vector<24x24xf32>
    %90 = arith.mulf %88, %89 : vector<24x24xf32>
    %cst_35 = arith.constant dense<0xFF800000> : vector<24xf32>
    %91 = vector.multi_reduction <maximumf>, %90, %cst_35 [1] : vector<24x24xf32> to vector<24xf32>
    %92 = vector.shape_cast %91 : vector<24xf32> to vector<24x1xf32>
    %93 = vector.broadcast %92 : vector<24x1xf32> to vector<24x24xf32>
    %94 = arith.subf %90, %93 : vector<24x24xf32>
    %95 = math.exp %94 : vector<24x24xf32>
    %cst_36 = arith.constant dense<0.000000e+00> : vector<24xf32>
    %96 = vector.multi_reduction <add>, %95, %cst_36 [1] : vector<24x24xf32> to vector<24xf32>
    %97 = vector.shape_cast %96 : vector<24xf32> to vector<24x1xf32>
    %98 = tpu.reciprocal %97 {approx = true} : vector<24x1xf32> -> vector<24x1xf32>
    %99 = vector.broadcast %98 : vector<24x1xf32> to vector<24x24xf32>
    %100 = arith.mulf %95, %99 : vector<24x24xf32>
    %cst_37 = arith.constant dense<0.000000e+00> : vector<24x16xf32>
    %101 = tpu.matmul %100, %87, %cst_37 {dimension_numbers = #tpu.dot_dimension_numbers<[1], [0], [0], [1], [0, 0, 1, 1], [], []>} : vector<24x24xf32>, vector<24x16xf32>, vector<24x16xf32> -> vector<24x16xf32>
    %102 = tpu.concatenate %50, %67, %84, %101 in 1 : vector<24x16xf32>, vector<24x16xf32>, vector<24x16xf32>, vector<24x16xf32> -> vector<24x64xf32>
    %c0_38 = arith.constant 0 : index
    %c0_39 = arith.constant 0 : index
    %c0_40 = arith.constant 0 : index
    %103 = vector.load %arg8[%c0_38, %c0_39, %c0_40] : memref<2x64x64xf32, #tpu.memory_space<vmem>>, vector<1x64x64xf32>
    %104 = vector.shape_cast %103 : vector<1x64x64xf32> to vector<64x64xf32>
    %cst_41 = arith.constant dense<0.000000e+00> : vector<24x64xf32>
    %105 = tpu.matmul %102, %104, %cst_41 {dimension_numbers = #tpu.dot_dimension_numbers<[1], [0], [0], [1], [0, 0, 1, 1], [], []>} : vector<24x64xf32>, vector<64x64xf32>, vector<24x64xf32> -> vector<24x64xf32>
    %c0_42 = arith.constant 0 : index
    %c0_43 = arith.constant 0 : index
    %c0_44 = arith.constant 0 : index
    %106 = vector.load %arg9[%c0_42, %c0_43, %c0_44] : memref<2x1x64xf32, #tpu.memory_space<vmem>>, vector<1x1x64xf32>
    %107 = vector.shape_cast %106 : vector<1x1x64xf32> to vector<1x64xf32>
    %108 = vector.broadcast %107 : vector<1x64xf32> to vector<24x64xf32>
    %109 = arith.addf %105, %108 : vector<24x64xf32>
    %110 = arith.addf %26, %109 : vector<24x64xf32>
    %c0_45 = arith.constant 0 : index
    %c0_46 = arith.constant 0 : index
    %c0_47 = arith.constant 0 : index
    %111 = vector.load %arg10[%c0_45, %c0_46, %c0_47] : memref<2x1x64xf32, #tpu.memory_space<vmem>>, vector<1x1x64xf32>
    %112 = vector.shape_cast %111 : vector<1x1x64xf32> to vector<1x64xf32>
    %c0_48 = arith.constant 0 : index
    %c0_49 = arith.constant 0 : index
    %c0_50 = arith.constant 0 : index
    %113 = vector.load %arg11[%c0_48, %c0_49, %c0_50] : memref<2x1x64xf32, #tpu.memory_space<vmem>>, vector<1x1x64xf32>
    %114 = vector.shape_cast %113 : vector<1x1x64xf32> to vector<1x64xf32>
    %cst_51 = arith.constant dense<0.000000e+00> : vector<24xf32>
    %115 = vector.multi_reduction <add>, %110, %cst_51 [1] : vector<24x64xf32> to vector<24xf32>
    %116 = vector.shape_cast %115 : vector<24xf32> to vector<24x1xf32>
    %cst_52 = arith.constant 6.400000e+01 : f32
    %117 = vector.broadcast %cst_52 : f32 to vector<24x1xf32>
    %118 = arith.divf %116, %117 : vector<24x1xf32>
    %119 = vector.broadcast %118 : vector<24x1xf32> to vector<24x64xf32>
    %120 = arith.subf %110, %119 : vector<24x64xf32>
    %121 = arith.mulf %120, %120 : vector<24x64xf32>
    %cst_53 = arith.constant dense<0.000000e+00> : vector<24xf32>
    %122 = vector.multi_reduction <add>, %121, %cst_53 [1] : vector<24x64xf32> to vector<24xf32>
    %123 = vector.shape_cast %122 : vector<24xf32> to vector<24x1xf32>
    %cst_54 = arith.constant 6.400000e+01 : f32
    %124 = vector.broadcast %cst_54 : f32 to vector<24x1xf32>
    %125 = arith.divf %123, %124 : vector<24x1xf32>
    %126 = vector.broadcast %118 : vector<24x1xf32> to vector<24x64xf32>
    %127 = arith.subf %110, %126 : vector<24x64xf32>
    %cst_55 = arith.constant 9.99999974E-6 : f32
    %128 = vector.broadcast %cst_55 : f32 to vector<24x1xf32>
    %129 = arith.addf %125, %128 : vector<24x1xf32>
    %130 = math.rsqrt %129 : vector<24x1xf32>
    %131 = vector.broadcast %130 : vector<24x1xf32> to vector<24x64xf32>
    %132 = arith.mulf %127, %131 : vector<24x64xf32>
    %133 = vector.broadcast %112 : vector<1x64xf32> to vector<24x64xf32>
    %134 = arith.mulf %132, %133 : vector<24x64xf32>
    %135 = vector.broadcast %114 : vector<1x64xf32> to vector<24x64xf32>
    %136 = arith.addf %134, %135 : vector<24x64xf32>
    %137 = arith.truncf %136 : vector<24x64xf32> to vector<24x64xbf16>
    %cst_56 = arith.constant 0.000000e+00 : f32
    %138 = vector.broadcast %cst_56 : f32 to vector<24x64xf32>
    %c0_57 = arith.constant 0 : index
    %c0_58 = arith.constant 0 : index
    %c0_59 = arith.constant 0 : index
    %139 = vector.load %arg12[%c0_57, %c0_58, %c0_59] : memref<2x64x2048xbf16, #tpu.memory_space<vmem>>, vector<1x64x512xbf16>
    %140 = vector.shape_cast %139 : vector<1x64x512xbf16> to vector<64x512xbf16>
    %cst_60 = arith.constant dense<0.000000e+00> : vector<24x512xf32>
    %141 = tpu.matmul %137, %140, %cst_60 {dimension_numbers = #tpu.dot_dimension_numbers<[1], [0], [0], [1], [0, 0, 1, 1], [], []>} : vector<24x64xbf16>, vector<64x512xbf16>, vector<24x512xf32> -> vector<24x512xf32>
    %c0_61 = arith.constant 0 : index
    %c0_62 = arith.constant 0 : index
    %c0_63 = arith.constant 0 : index
    %142 = vector.load %arg13[%c0_61, %c0_62, %c0_63] : memref<2x1x2048xf32, #tpu.memory_space<vmem>>, vector<1x1x512xf32>
    %143 = vector.shape_cast %142 : vector<1x1x512xf32> to vector<1x512xf32>
    %144 = vector.broadcast %143 : vector<1x512xf32> to vector<24x512xf32>
    %145 = arith.addf %141, %144 : vector<24x512xf32>
    %cst_64 = arith.constant 0.000000e+00 : f32
    %146 = vector.broadcast %cst_64 : f32 to vector<24x512xf32>
    %147 = arith.maximumf %145, %146 : vector<24x512xf32>
    %148 = arith.truncf %147 : vector<24x512xf32> to vector<24x512xbf16>
    %c0_65 = arith.constant 0 : index
    %c0_66 = arith.constant 0 : index
    %c0_67 = arith.constant 0 : index
    %149 = vector.load %arg14[%c0_65, %c0_66, %c0_67] : memref<2x2048x64xbf16, #tpu.memory_space<vmem>>, vector<1x512x64xbf16>
    %150 = vector.shape_cast %149 : vector<1x512x64xbf16> to vector<512x64xbf16>
    %cst_68 = arith.constant dense<0.000000e+00> : vector<24x64xf32>
    %151 = tpu.matmul %148, %150, %cst_68 {dimension_numbers = #tpu.dot_dimension_numbers<[1], [0], [0], [1], [0, 0, 1, 1], [], []>} : vector<24x512xbf16>, vector<512x64xbf16>, vector<24x64xf32> -> vector<24x64xf32>
    %152 = arith.addf %138, %151 : vector<24x64xf32>
    %c0_69 = arith.constant 0 : index
    %c0_70 = arith.constant 0 : index
    %c512 = arith.constant 512 : index
    %153 = vector.load %arg12[%c0_69, %c0_70, %c512] : memref<2x64x2048xbf16, #tpu.memory_space<vmem>>, vector<1x64x512xbf16>
    %154 = vector.shape_cast %153 : vector<1x64x512xbf16> to vector<64x512xbf16>
    %cst_71 = arith.constant dense<0.000000e+00> : vector<24x512xf32>
    %155 = tpu.matmul %137, %154, %cst_71 {dimension_numbers = #tpu.dot_dimension_numbers<[1], [0], [0], [1], [0, 0, 1, 1], [], []>} : vector<24x64xbf16>, vector<64x512xbf16>, vector<24x512xf32> -> vector<24x512xf32>
    %c0_72 = arith.constant 0 : index
    %c0_73 = arith.constant 0 : index
    %c512_74 = arith.constant 512 : index
    %156 = vector.load %arg13[%c0_72, %c0_73, %c512_74] : memref<2x1x2048xf32, #tpu.memory_space<vmem>>, vector<1x1x512xf32>
    %157 = vector.shape_cast %156 : vector<1x1x512xf32> to vector<1x512xf32>
    %158 = vector.broadcast %157 : vector<1x512xf32> to vector<24x512xf32>
    %159 = arith.addf %155, %158 : vector<24x512xf32>
    %cst_75 = arith.constant 0.000000e+00 : f32
    %160 = vector.broadcast %cst_75 : f32 to vector<24x512xf32>
    %161 = arith.maximumf %159, %160 : vector<24x512xf32>
    %162 = arith.truncf %161 : vector<24x512xf32> to vector<24x512xbf16>
    %c0_76 = arith.constant 0 : index
    %c512_77 = arith.constant 512 : index
    %c0_78 = arith.constant 0 : index
    %163 = vector.load %arg14[%c0_76, %c512_77, %c0_78] : memref<2x2048x64xbf16, #tpu.memory_space<vmem>>, vector<1x512x64xbf16>
    %164 = vector.shape_cast %163 : vector<1x512x64xbf16> to vector<512x64xbf16>
    %cst_79 = arith.constant dense<0.000000e+00> : vector<24x64xf32>
    %165 = tpu.matmul %162, %164, %cst_79 {dimension_numbers = #tpu.dot_dimension_numbers<[1], [0], [0], [1], [0, 0, 1, 1], [], []>} : vector<24x512xbf16>, vector<512x64xbf16>, vector<24x64xf32> -> vector<24x64xf32>
    %166 = arith.addf %152, %165 : vector<24x64xf32>
    %c0_80 = arith.constant 0 : index
    %c0_81 = arith.constant 0 : index
    %c1024 = arith.constant 1024 : index
    %167 = vector.load %arg12[%c0_80, %c0_81, %c1024] : memref<2x64x2048xbf16, #tpu.memory_space<vmem>>, vector<1x64x512xbf16>
    %168 = vector.shape_cast %167 : vector<1x64x512xbf16> to vector<64x512xbf16>
    %cst_82 = arith.constant dense<0.000000e+00> : vector<24x512xf32>
    %169 = tpu.matmul %137, %168, %cst_82 {dimension_numbers = #tpu.dot_dimension_numbers<[1], [0], [0], [1], [0, 0, 1, 1], [], []>} : vector<24x64xbf16>, vector<64x512xbf16>, vector<24x512xf32> -> vector<24x512xf32>
    %c0_83 = arith.constant 0 : index
    %c0_84 = arith.constant 0 : index
    %c1024_85 = arith.constant 1024 : index
    %170 = vector.load %arg13[%c0_83, %c0_84, %c1024_85] : memref<2x1x2048xf32, #tpu.memory_space<vmem>>, vector<1x1x512xf32>
    %171 = vector.shape_cast %170 : vector<1x1x512xf32> to vector<1x512xf32>
    %172 = vector.broadcast %171 : vector<1x512xf32> to vector<24x512xf32>
    %173 = arith.addf %169, %172 : vector<24x512xf32>
    %cst_86 = arith.constant 0.000000e+00 : f32
    %174 = vector.broadcast %cst_86 : f32 to vector<24x512xf32>
    %175 = arith.maximumf %173, %174 : vector<24x512xf32>
    %176 = arith.truncf %175 : vector<24x512xf32> to vector<24x512xbf16>
    %c0_87 = arith.constant 0 : index
    %c1024_88 = arith.constant 1024 : index
    %c0_89 = arith.constant 0 : index
    %177 = vector.load %arg14[%c0_87, %c1024_88, %c0_89] : memref<2x2048x64xbf16, #tpu.memory_space<vmem>>, vector<1x512x64xbf16>
    %178 = vector.shape_cast %177 : vector<1x512x64xbf16> to vector<512x64xbf16>
    %cst_90 = arith.constant dense<0.000000e+00> : vector<24x64xf32>
    %179 = tpu.matmul %176, %178, %cst_90 {dimension_numbers = #tpu.dot_dimension_numbers<[1], [0], [0], [1], [0, 0, 1, 1], [], []>} : vector<24x512xbf16>, vector<512x64xbf16>, vector<24x64xf32> -> vector<24x64xf32>
    %180 = arith.addf %166, %179 : vector<24x64xf32>
    %c0_91 = arith.constant 0 : index
    %c0_92 = arith.constant 0 : index
    %c1536 = arith.constant 1536 : index
    %181 = vector.load %arg12[%c0_91, %c0_92, %c1536] : memref<2x64x2048xbf16, #tpu.memory_space<vmem>>, vector<1x64x512xbf16>
    %182 = vector.shape_cast %181 : vector<1x64x512xbf16> to vector<64x512xbf16>
    %cst_93 = arith.constant dense<0.000000e+00> : vector<24x512xf32>
    %183 = tpu.matmul %137, %182, %cst_93 {dimension_numbers = #tpu.dot_dimension_numbers<[1], [0], [0], [1], [0, 0, 1, 1], [], []>} : vector<24x64xbf16>, vector<64x512xbf16>, vector<24x512xf32> -> vector<24x512xf32>
    %c0_94 = arith.constant 0 : index
    %c0_95 = arith.constant 0 : index
    %c1536_96 = arith.constant 1536 : index
    %184 = vector.load %arg13[%c0_94, %c0_95, %c1536_96] : memref<2x1x2048xf32, #tpu.memory_space<vmem>>, vector<1x1x512xf32>
    %185 = vector.shape_cast %184 : vector<1x1x512xf32> to vector<1x512xf32>
    %186 = vector.broadcast %185 : vector<1x512xf32> to vector<24x512xf32>
    %187 = arith.addf %183, %186 : vector<24x512xf32>
    %cst_97 = arith.constant 0.000000e+00 : f32
    %188 = vector.broadcast %cst_97 : f32 to vector<24x512xf32>
    %189 = arith.maximumf %187, %188 : vector<24x512xf32>
    %190 = arith.truncf %189 : vector<24x512xf32> to vector<24x512xbf16>
    %c0_98 = arith.constant 0 : index
    %c1536_99 = arith.constant 1536 : index
    %c0_100 = arith.constant 0 : index
    %191 = vector.load %arg14[%c0_98, %c1536_99, %c0_100] : memref<2x2048x64xbf16, #tpu.memory_space<vmem>>, vector<1x512x64xbf16>
    %192 = vector.shape_cast %191 : vector<1x512x64xbf16> to vector<512x64xbf16>
    %cst_101 = arith.constant dense<0.000000e+00> : vector<24x64xf32>
    %193 = tpu.matmul %190, %192, %cst_101 {dimension_numbers = #tpu.dot_dimension_numbers<[1], [0], [0], [1], [0, 0, 1, 1], [], []>} : vector<24x512xbf16>, vector<512x64xbf16>, vector<24x64xf32> -> vector<24x64xf32>
    %194 = arith.addf %180, %193 : vector<24x64xf32>
    %195 = arith.addf %136, %194 : vector<24x64xf32>
    %c0_102 = arith.constant 0 : index
    %c0_103 = arith.constant 0 : index
    %c0_104 = arith.constant 0 : index
    %196 = vector.load %arg15[%c0_102, %c0_103, %c0_104] : memref<2x1x64xf32, #tpu.memory_space<vmem>>, vector<1x1x64xf32>
    %197 = vector.shape_cast %196 : vector<1x1x64xf32> to vector<1x64xf32>
    %198 = vector.broadcast %197 : vector<1x64xf32> to vector<24x64xf32>
    %199 = arith.addf %195, %198 : vector<24x64xf32>
    %c0_105 = arith.constant 0 : index
    %c0_106 = arith.constant 0 : index
    %c0_107 = arith.constant 0 : index
    %200 = vector.load %arg16[%c0_105, %c0_106, %c0_107] : memref<2x1x64xf32, #tpu.memory_space<vmem>>, vector<1x1x64xf32>
    %201 = vector.shape_cast %200 : vector<1x1x64xf32> to vector<1x64xf32>
    %c0_108 = arith.constant 0 : index
    %c0_109 = arith.constant 0 : index
    %c0_110 = arith.constant 0 : index
    %202 = vector.load %arg17[%c0_108, %c0_109, %c0_110] : memref<2x1x64xf32, #tpu.memory_space<vmem>>, vector<1x1x64xf32>
    %203 = vector.shape_cast %202 : vector<1x1x64xf32> to vector<1x64xf32>
    %cst_111 = arith.constant dense<0.000000e+00> : vector<24xf32>
    %204 = vector.multi_reduction <add>, %199, %cst_111 [1] : vector<24x64xf32> to vector<24xf32>
    %205 = vector.shape_cast %204 : vector<24xf32> to vector<24x1xf32>
    %cst_112 = arith.constant 6.400000e+01 : f32
    %206 = vector.broadcast %cst_112 : f32 to vector<24x1xf32>
    %207 = arith.divf %205, %206 : vector<24x1xf32>
    %208 = vector.broadcast %207 : vector<24x1xf32> to vector<24x64xf32>
    %209 = arith.subf %199, %208 : vector<24x64xf32>
    %210 = arith.mulf %209, %209 : vector<24x64xf32>
    %cst_113 = arith.constant dense<0.000000e+00> : vector<24xf32>
    %211 = vector.multi_reduction <add>, %210, %cst_113 [1] : vector<24x64xf32> to vector<24xf32>
    %212 = vector.shape_cast %211 : vector<24xf32> to vector<24x1xf32>
    %cst_114 = arith.constant 6.400000e+01 : f32
    %213 = vector.broadcast %cst_114 : f32 to vector<24x1xf32>
    %214 = arith.divf %212, %213 : vector<24x1xf32>
    %215 = vector.broadcast %207 : vector<24x1xf32> to vector<24x64xf32>
    %216 = arith.subf %199, %215 : vector<24x64xf32>
    %cst_115 = arith.constant 9.99999974E-6 : f32
    %217 = vector.broadcast %cst_115 : f32 to vector<24x1xf32>
    %218 = arith.addf %214, %217 : vector<24x1xf32>
    %219 = math.rsqrt %218 : vector<24x1xf32>
    %220 = vector.broadcast %219 : vector<24x1xf32> to vector<24x64xf32>
    %221 = arith.mulf %216, %220 : vector<24x64xf32>
    %222 = vector.broadcast %201 : vector<1x64xf32> to vector<24x64xf32>
    %223 = arith.mulf %221, %222 : vector<24x64xf32>
    %224 = vector.broadcast %203 : vector<1x64xf32> to vector<24x64xf32>
    %225 = arith.addf %223, %224 : vector<24x64xf32>
    %c1 = arith.constant 1 : index
    %c0_116 = arith.constant 0 : index
    %c0_117 = arith.constant 0 : index
    %226 = vector.load %arg6[%c1, %c0_116, %c0_117] : memref<2x64x384xf32, #tpu.memory_space<vmem>>, vector<1x64x384xf32>
    %227 = vector.shape_cast %226 : vector<1x64x384xf32> to vector<64x384xf32>
    %cst_118 = arith.constant dense<0.000000e+00> : vector<24x384xf32>
    %228 = tpu.matmul %225, %227, %cst_118 {dimension_numbers = #tpu.dot_dimension_numbers<[1], [0], [0], [1], [0, 0, 1, 1], [], []>} : vector<24x64xf32>, vector<64x384xf32>, vector<24x384xf32> -> vector<24x384xf32>
    %c1_119 = arith.constant 1 : index
    %c0_120 = arith.constant 0 : index
    %c0_121 = arith.constant 0 : index
    %229 = vector.load %arg7[%c1_119, %c0_120, %c0_121] : memref<2x1x384xf32, #tpu.memory_space<vmem>>, vector<1x1x384xf32>
    %230 = vector.shape_cast %229 : vector<1x1x384xf32> to vector<1x384xf32>
    %231 = vector.broadcast %230 : vector<1x384xf32> to vector<24x384xf32>
    %232 = arith.addf %228, %231 : vector<24x384xf32>
    %233 = vector.extract_strided_slice %232 {offsets = [0, 0], sizes = [24, 16], strides = [1, 1]} : vector<24x384xf32> to vector<24x16xf32>
    %234 = vector.extract_strided_slice %232 {offsets = [0, 128], sizes = [24, 16], strides = [1, 1]} : vector<24x384xf32> to vector<24x16xf32>
    %235 = vector.extract_strided_slice %232 {offsets = [0, 256], sizes = [24, 16], strides = [1, 1]} : vector<24x384xf32> to vector<24x16xf32>
    %cst_122 = arith.constant dense<0.000000e+00> : vector<24x24xf32>
    %236 = tpu.matmul %233, %234, %cst_122 {dimension_numbers = #tpu.dot_dimension_numbers<[1], [1], [0], [0], [0, 0, 1, 0], [], []>} : vector<24x16xf32>, vector<24x16xf32>, vector<24x24xf32> -> vector<24x24xf32>
    %cst_123 = arith.constant 2.500000e-01 : f32
    %237 = vector.broadcast %cst_123 : f32 to vector<24x24xf32>
    %238 = arith.mulf %236, %237 : vector<24x24xf32>
    %cst_124 = arith.constant dense<0xFF800000> : vector<24xf32>
    %239 = vector.multi_reduction <maximumf>, %238, %cst_124 [1] : vector<24x24xf32> to vector<24xf32>
    %240 = vector.shape_cast %239 : vector<24xf32> to vector<24x1xf32>
    %241 = vector.broadcast %240 : vector<24x1xf32> to vector<24x24xf32>
    %242 = arith.subf %238, %241 : vector<24x24xf32>
    %243 = math.exp %242 : vector<24x24xf32>
    %cst_125 = arith.constant dense<0.000000e+00> : vector<24xf32>
    %244 = vector.multi_reduction <add>, %243, %cst_125 [1] : vector<24x24xf32> to vector<24xf32>
    %245 = vector.shape_cast %244 : vector<24xf32> to vector<24x1xf32>
    %246 = tpu.reciprocal %245 {approx = true} : vector<24x1xf32> -> vector<24x1xf32>
    %247 = vector.broadcast %246 : vector<24x1xf32> to vector<24x24xf32>
    %248 = arith.mulf %243, %247 : vector<24x24xf32>
    %cst_126 = arith.constant dense<0.000000e+00> : vector<24x16xf32>
    %249 = tpu.matmul %248, %235, %cst_126 {dimension_numbers = #tpu.dot_dimension_numbers<[1], [0], [0], [1], [0, 0, 1, 1], [], []>} : vector<24x24xf32>, vector<24x16xf32>, vector<24x16xf32> -> vector<24x16xf32>
    %250 = vector.extract_strided_slice %232 {offsets = [0, 16], sizes = [24, 16], strides = [1, 1]} : vector<24x384xf32> to vector<24x16xf32>
    %251 = vector.extract_strided_slice %232 {offsets = [0, 144], sizes = [24, 16], strides = [1, 1]} : vector<24x384xf32> to vector<24x16xf32>
    %252 = vector.extract_strided_slice %232 {offsets = [0, 272], sizes = [24, 16], strides = [1, 1]} : vector<24x384xf32> to vector<24x16xf32>
    %cst_127 = arith.constant dense<0.000000e+00> : vector<24x24xf32>
    %253 = tpu.matmul %250, %251, %cst_127 {dimension_numbers = #tpu.dot_dimension_numbers<[1], [1], [0], [0], [0, 0, 1, 0], [], []>} : vector<24x16xf32>, vector<24x16xf32>, vector<24x24xf32> -> vector<24x24xf32>
    %cst_128 = arith.constant 2.500000e-01 : f32
    %254 = vector.broadcast %cst_128 : f32 to vector<24x24xf32>
    %255 = arith.mulf %253, %254 : vector<24x24xf32>
    %cst_129 = arith.constant dense<0xFF800000> : vector<24xf32>
    %256 = vector.multi_reduction <maximumf>, %255, %cst_129 [1] : vector<24x24xf32> to vector<24xf32>
    %257 = vector.shape_cast %256 : vector<24xf32> to vector<24x1xf32>
    %258 = vector.broadcast %257 : vector<24x1xf32> to vector<24x24xf32>
    %259 = arith.subf %255, %258 : vector<24x24xf32>
    %260 = math.exp %259 : vector<24x24xf32>
    %cst_130 = arith.constant dense<0.000000e+00> : vector<24xf32>
    %261 = vector.multi_reduction <add>, %260, %cst_130 [1] : vector<24x24xf32> to vector<24xf32>
    %262 = vector.shape_cast %261 : vector<24xf32> to vector<24x1xf32>
    %263 = tpu.reciprocal %262 {approx = true} : vector<24x1xf32> -> vector<24x1xf32>
    %264 = vector.broadcast %263 : vector<24x1xf32> to vector<24x24xf32>
    %265 = arith.mulf %260, %264 : vector<24x24xf32>
    %cst_131 = arith.constant dense<0.000000e+00> : vector<24x16xf32>
    %266 = tpu.matmul %265, %252, %cst_131 {dimension_numbers = #tpu.dot_dimension_numbers<[1], [0], [0], [1], [0, 0, 1, 1], [], []>} : vector<24x24xf32>, vector<24x16xf32>, vector<24x16xf32> -> vector<24x16xf32>
    %267 = vector.extract_strided_slice %232 {offsets = [0, 32], sizes = [24, 16], strides = [1, 1]} : vector<24x384xf32> to vector<24x16xf32>
    %268 = vector.extract_strided_slice %232 {offsets = [0, 160], sizes = [24, 16], strides = [1, 1]} : vector<24x384xf32> to vector<24x16xf32>
    %269 = vector.extract_strided_slice %232 {offsets = [0, 288], sizes = [24, 16], strides = [1, 1]} : vector<24x384xf32> to vector<24x16xf32>
    %cst_132 = arith.constant dense<0.000000e+00> : vector<24x24xf32>
    %270 = tpu.matmul %267, %268, %cst_132 {dimension_numbers = #tpu.dot_dimension_numbers<[1], [1], [0], [0], [0, 0, 1, 0], [], []>} : vector<24x16xf32>, vector<24x16xf32>, vector<24x24xf32> -> vector<24x24xf32>
    %cst_133 = arith.constant 2.500000e-01 : f32
    %271 = vector.broadcast %cst_133 : f32 to vector<24x24xf32>
    %272 = arith.mulf %270, %271 : vector<24x24xf32>
    %cst_134 = arith.constant dense<0xFF800000> : vector<24xf32>
    %273 = vector.multi_reduction <maximumf>, %272, %cst_134 [1] : vector<24x24xf32> to vector<24xf32>
    %274 = vector.shape_cast %273 : vector<24xf32> to vector<24x1xf32>
    %275 = vector.broadcast %274 : vector<24x1xf32> to vector<24x24xf32>
    %276 = arith.subf %272, %275 : vector<24x24xf32>
    %277 = math.exp %276 : vector<24x24xf32>
    %cst_135 = arith.constant dense<0.000000e+00> : vector<24xf32>
    %278 = vector.multi_reduction <add>, %277, %cst_135 [1] : vector<24x24xf32> to vector<24xf32>
    %279 = vector.shape_cast %278 : vector<24xf32> to vector<24x1xf32>
    %280 = tpu.reciprocal %279 {approx = true} : vector<24x1xf32> -> vector<24x1xf32>
    %281 = vector.broadcast %280 : vector<24x1xf32> to vector<24x24xf32>
    %282 = arith.mulf %277, %281 : vector<24x24xf32>
    %cst_136 = arith.constant dense<0.000000e+00> : vector<24x16xf32>
    %283 = tpu.matmul %282, %269, %cst_136 {dimension_numbers = #tpu.dot_dimension_numbers<[1], [0], [0], [1], [0, 0, 1, 1], [], []>} : vector<24x24xf32>, vector<24x16xf32>, vector<24x16xf32> -> vector<24x16xf32>
    %284 = vector.extract_strided_slice %232 {offsets = [0, 48], sizes = [24, 16], strides = [1, 1]} : vector<24x384xf32> to vector<24x16xf32>
    %285 = vector.extract_strided_slice %232 {offsets = [0, 176], sizes = [24, 16], strides = [1, 1]} : vector<24x384xf32> to vector<24x16xf32>
    %286 = vector.extract_strided_slice %232 {offsets = [0, 304], sizes = [24, 16], strides = [1, 1]} : vector<24x384xf32> to vector<24x16xf32>
    %cst_137 = arith.constant dense<0.000000e+00> : vector<24x24xf32>
    %287 = tpu.matmul %284, %285, %cst_137 {dimension_numbers = #tpu.dot_dimension_numbers<[1], [1], [0], [0], [0, 0, 1, 0], [], []>} : vector<24x16xf32>, vector<24x16xf32>, vector<24x24xf32> -> vector<24x24xf32>
    %cst_138 = arith.constant 2.500000e-01 : f32
    %288 = vector.broadcast %cst_138 : f32 to vector<24x24xf32>
    %289 = arith.mulf %287, %288 : vector<24x24xf32>
    %cst_139 = arith.constant dense<0xFF800000> : vector<24xf32>
    %290 = vector.multi_reduction <maximumf>, %289, %cst_139 [1] : vector<24x24xf32> to vector<24xf32>
    %291 = vector.shape_cast %290 : vector<24xf32> to vector<24x1xf32>
    %292 = vector.broadcast %291 : vector<24x1xf32> to vector<24x24xf32>
    %293 = arith.subf %289, %292 : vector<24x24xf32>
    %294 = math.exp %293 : vector<24x24xf32>
    %cst_140 = arith.constant dense<0.000000e+00> : vector<24xf32>
    %295 = vector.multi_reduction <add>, %294, %cst_140 [1] : vector<24x24xf32> to vector<24xf32>
    %296 = vector.shape_cast %295 : vector<24xf32> to vector<24x1xf32>
    %297 = tpu.reciprocal %296 {approx = true} : vector<24x1xf32> -> vector<24x1xf32>
    %298 = vector.broadcast %297 : vector<24x1xf32> to vector<24x24xf32>
    %299 = arith.mulf %294, %298 : vector<24x24xf32>
    %cst_141 = arith.constant dense<0.000000e+00> : vector<24x16xf32>
    %300 = tpu.matmul %299, %286, %cst_141 {dimension_numbers = #tpu.dot_dimension_numbers<[1], [0], [0], [1], [0, 0, 1, 1], [], []>} : vector<24x24xf32>, vector<24x16xf32>, vector<24x16xf32> -> vector<24x16xf32>
    %301 = tpu.concatenate %249, %266, %283, %300 in 1 : vector<24x16xf32>, vector<24x16xf32>, vector<24x16xf32>, vector<24x16xf32> -> vector<24x64xf32>
    %c1_142 = arith.constant 1 : index
    %c0_143 = arith.constant 0 : index
    %c0_144 = arith.constant 0 : index
    %302 = vector.load %arg8[%c1_142, %c0_143, %c0_144] : memref<2x64x64xf32, #tpu.memory_space<vmem>>, vector<1x64x64xf32>
    %303 = vector.shape_cast %302 : vector<1x64x64xf32> to vector<64x64xf32>
    %cst_145 = arith.constant dense<0.000000e+00> : vector<24x64xf32>
    %304 = tpu.matmul %301, %303, %cst_145 {dimension_numbers = #tpu.dot_dimension_numbers<[1], [0], [0], [1], [0, 0, 1, 1], [], []>} : vector<24x64xf32>, vector<64x64xf32>, vector<24x64xf32> -> vector<24x64xf32>
    %c1_146 = arith.constant 1 : index
    %c0_147 = arith.constant 0 : index
    %c0_148 = arith.constant 0 : index
    %305 = vector.load %arg9[%c1_146, %c0_147, %c0_148] : memref<2x1x64xf32, #tpu.memory_space<vmem>>, vector<1x1x64xf32>
    %306 = vector.shape_cast %305 : vector<1x1x64xf32> to vector<1x64xf32>
    %307 = vector.broadcast %306 : vector<1x64xf32> to vector<24x64xf32>
    %308 = arith.addf %304, %307 : vector<24x64xf32>
    %309 = arith.addf %225, %308 : vector<24x64xf32>
    %c1_149 = arith.constant 1 : index
    %c0_150 = arith.constant 0 : index
    %c0_151 = arith.constant 0 : index
    %310 = vector.load %arg10[%c1_149, %c0_150, %c0_151] : memref<2x1x64xf32, #tpu.memory_space<vmem>>, vector<1x1x64xf32>
    %311 = vector.shape_cast %310 : vector<1x1x64xf32> to vector<1x64xf32>
    %c1_152 = arith.constant 1 : index
    %c0_153 = arith.constant 0 : index
    %c0_154 = arith.constant 0 : index
    %312 = vector.load %arg11[%c1_152, %c0_153, %c0_154] : memref<2x1x64xf32, #tpu.memory_space<vmem>>, vector<1x1x64xf32>
    %313 = vector.shape_cast %312 : vector<1x1x64xf32> to vector<1x64xf32>
    %cst_155 = arith.constant dense<0.000000e+00> : vector<24xf32>
    %314 = vector.multi_reduction <add>, %309, %cst_155 [1] : vector<24x64xf32> to vector<24xf32>
    %315 = vector.shape_cast %314 : vector<24xf32> to vector<24x1xf32>
    %cst_156 = arith.constant 6.400000e+01 : f32
    %316 = vector.broadcast %cst_156 : f32 to vector<24x1xf32>
    %317 = arith.divf %315, %316 : vector<24x1xf32>
    %318 = vector.broadcast %317 : vector<24x1xf32> to vector<24x64xf32>
    %319 = arith.subf %309, %318 : vector<24x64xf32>
    %320 = arith.mulf %319, %319 : vector<24x64xf32>
    %cst_157 = arith.constant dense<0.000000e+00> : vector<24xf32>
    %321 = vector.multi_reduction <add>, %320, %cst_157 [1] : vector<24x64xf32> to vector<24xf32>
    %322 = vector.shape_cast %321 : vector<24xf32> to vector<24x1xf32>
    %cst_158 = arith.constant 6.400000e+01 : f32
    %323 = vector.broadcast %cst_158 : f32 to vector<24x1xf32>
    %324 = arith.divf %322, %323 : vector<24x1xf32>
    %325 = vector.broadcast %317 : vector<24x1xf32> to vector<24x64xf32>
    %326 = arith.subf %309, %325 : vector<24x64xf32>
    %cst_159 = arith.constant 9.99999974E-6 : f32
    %327 = vector.broadcast %cst_159 : f32 to vector<24x1xf32>
    %328 = arith.addf %324, %327 : vector<24x1xf32>
    %329 = math.rsqrt %328 : vector<24x1xf32>
    %330 = vector.broadcast %329 : vector<24x1xf32> to vector<24x64xf32>
    %331 = arith.mulf %326, %330 : vector<24x64xf32>
    %332 = vector.broadcast %311 : vector<1x64xf32> to vector<24x64xf32>
    %333 = arith.mulf %331, %332 : vector<24x64xf32>
    %334 = vector.broadcast %313 : vector<1x64xf32> to vector<24x64xf32>
    %335 = arith.addf %333, %334 : vector<24x64xf32>
    %336 = arith.truncf %335 : vector<24x64xf32> to vector<24x64xbf16>
    %cst_160 = arith.constant 0.000000e+00 : f32
    %337 = vector.broadcast %cst_160 : f32 to vector<24x64xf32>
    %c1_161 = arith.constant 1 : index
    %c0_162 = arith.constant 0 : index
    %c0_163 = arith.constant 0 : index
    %338 = vector.load %arg12[%c1_161, %c0_162, %c0_163] : memref<2x64x2048xbf16, #tpu.memory_space<vmem>>, vector<1x64x512xbf16>
    %339 = vector.shape_cast %338 : vector<1x64x512xbf16> to vector<64x512xbf16>
    %cst_164 = arith.constant dense<0.000000e+00> : vector<24x512xf32>
    %340 = tpu.matmul %336, %339, %cst_164 {dimension_numbers = #tpu.dot_dimension_numbers<[1], [0], [0], [1], [0, 0, 1, 1], [], []>} : vector<24x64xbf16>, vector<64x512xbf16>, vector<24x512xf32> -> vector<24x512xf32>
    %c1_165 = arith.constant 1 : index
    %c0_166 = arith.constant 0 : index
    %c0_167 = arith.constant 0 : index
    %341 = vector.load %arg13[%c1_165, %c0_166, %c0_167] : memref<2x1x2048xf32, #tpu.memory_space<vmem>>, vector<1x1x512xf32>
    %342 = vector.shape_cast %341 : vector<1x1x512xf32> to vector<1x512xf32>
    %343 = vector.broadcast %342 : vector<1x512xf32> to vector<24x512xf32>
    %344 = arith.addf %340, %343 : vector<24x512xf32>
    %cst_168 = arith.constant 0.000000e+00 : f32
    %345 = vector.broadcast %cst_168 : f32 to vector<24x512xf32>
    %346 = arith.maximumf %344, %345 : vector<24x512xf32>
    %347 = arith.truncf %346 : vector<24x512xf32> to vector<24x512xbf16>
    %c1_169 = arith.constant 1 : index
    %c0_170 = arith.constant 0 : index
    %c0_171 = arith.constant 0 : index
    %348 = vector.load %arg14[%c1_169, %c0_170, %c0_171] : memref<2x2048x64xbf16, #tpu.memory_space<vmem>>, vector<1x512x64xbf16>
    %349 = vector.shape_cast %348 : vector<1x512x64xbf16> to vector<512x64xbf16>
    %cst_172 = arith.constant dense<0.000000e+00> : vector<24x64xf32>
    %350 = tpu.matmul %347, %349, %cst_172 {dimension_numbers = #tpu.dot_dimension_numbers<[1], [0], [0], [1], [0, 0, 1, 1], [], []>} : vector<24x512xbf16>, vector<512x64xbf16>, vector<24x64xf32> -> vector<24x64xf32>
    %351 = arith.addf %337, %350 : vector<24x64xf32>
    %c1_173 = arith.constant 1 : index
    %c0_174 = arith.constant 0 : index
    %c512_175 = arith.constant 512 : index
    %352 = vector.load %arg12[%c1_173, %c0_174, %c512_175] : memref<2x64x2048xbf16, #tpu.memory_space<vmem>>, vector<1x64x512xbf16>
    %353 = vector.shape_cast %352 : vector<1x64x512xbf16> to vector<64x512xbf16>
    %cst_176 = arith.constant dense<0.000000e+00> : vector<24x512xf32>
    %354 = tpu.matmul %336, %353, %cst_176 {dimension_numbers = #tpu.dot_dimension_numbers<[1], [0], [0], [1], [0, 0, 1, 1], [], []>} : vector<24x64xbf16>, vector<64x512xbf16>, vector<24x512xf32> -> vector<24x512xf32>
    %c1_177 = arith.constant 1 : index
    %c0_178 = arith.constant 0 : index
    %c512_179 = arith.constant 512 : index
    %355 = vector.load %arg13[%c1_177, %c0_178, %c512_179] : memref<2x1x2048xf32, #tpu.memory_space<vmem>>, vector<1x1x512xf32>
    %356 = vector.shape_cast %355 : vector<1x1x512xf32> to vector<1x512xf32>
    %357 = vector.broadcast %356 : vector<1x512xf32> to vector<24x512xf32>
    %358 = arith.addf %354, %357 : vector<24x512xf32>
    %cst_180 = arith.constant 0.000000e+00 : f32
    %359 = vector.broadcast %cst_180 : f32 to vector<24x512xf32>
    %360 = arith.maximumf %358, %359 : vector<24x512xf32>
    %361 = arith.truncf %360 : vector<24x512xf32> to vector<24x512xbf16>
    %c1_181 = arith.constant 1 : index
    %c512_182 = arith.constant 512 : index
    %c0_183 = arith.constant 0 : index
    %362 = vector.load %arg14[%c1_181, %c512_182, %c0_183] : memref<2x2048x64xbf16, #tpu.memory_space<vmem>>, vector<1x512x64xbf16>
    %363 = vector.shape_cast %362 : vector<1x512x64xbf16> to vector<512x64xbf16>
    %cst_184 = arith.constant dense<0.000000e+00> : vector<24x64xf32>
    %364 = tpu.matmul %361, %363, %cst_184 {dimension_numbers = #tpu.dot_dimension_numbers<[1], [0], [0], [1], [0, 0, 1, 1], [], []>} : vector<24x512xbf16>, vector<512x64xbf16>, vector<24x64xf32> -> vector<24x64xf32>
    %365 = arith.addf %351, %364 : vector<24x64xf32>
    %c1_185 = arith.constant 1 : index
    %c0_186 = arith.constant 0 : index
    %c1024_187 = arith.constant 1024 : index
    %366 = vector.load %arg12[%c1_185, %c0_186, %c1024_187] : memref<2x64x2048xbf16, #tpu.memory_space<vmem>>, vector<1x64x512xbf16>
    %367 = vector.shape_cast %366 : vector<1x64x512xbf16> to vector<64x512xbf16>
    %cst_188 = arith.constant dense<0.000000e+00> : vector<24x512xf32>
    %368 = tpu.matmul %336, %367, %cst_188 {dimension_numbers = #tpu.dot_dimension_numbers<[1], [0], [0], [1], [0, 0, 1, 1], [], []>} : vector<24x64xbf16>, vector<64x512xbf16>, vector<24x512xf32> -> vector<24x512xf32>
    %c1_189 = arith.constant 1 : index
    %c0_190 = arith.constant 0 : index
    %c1024_191 = arith.constant 1024 : index
    %369 = vector.load %arg13[%c1_189, %c0_190, %c1024_191] : memref<2x1x2048xf32, #tpu.memory_space<vmem>>, vector<1x1x512xf32>
    %370 = vector.shape_cast %369 : vector<1x1x512xf32> to vector<1x512xf32>
    %371 = vector.broadcast %370 : vector<1x512xf32> to vector<24x512xf32>
    %372 = arith.addf %368, %371 : vector<24x512xf32>
    %cst_192 = arith.constant 0.000000e+00 : f32
    %373 = vector.broadcast %cst_192 : f32 to vector<24x512xf32>
    %374 = arith.maximumf %372, %373 : vector<24x512xf32>
    %375 = arith.truncf %374 : vector<24x512xf32> to vector<24x512xbf16>
    %c1_193 = arith.constant 1 : index
    %c1024_194 = arith.constant 1024 : index
    %c0_195 = arith.constant 0 : index
    %376 = vector.load %arg14[%c1_193, %c1024_194, %c0_195] : memref<2x2048x64xbf16, #tpu.memory_space<vmem>>, vector<1x512x64xbf16>
    %377 = vector.shape_cast %376 : vector<1x512x64xbf16> to vector<512x64xbf16>
    %cst_196 = arith.constant dense<0.000000e+00> : vector<24x64xf32>
    %378 = tpu.matmul %375, %377, %cst_196 {dimension_numbers = #tpu.dot_dimension_numbers<[1], [0], [0], [1], [0, 0, 1, 1], [], []>} : vector<24x512xbf16>, vector<512x64xbf16>, vector<24x64xf32> -> vector<24x64xf32>
    %379 = arith.addf %365, %378 : vector<24x64xf32>
    %c1_197 = arith.constant 1 : index
    %c0_198 = arith.constant 0 : index
    %c1536_199 = arith.constant 1536 : index
    %380 = vector.load %arg12[%c1_197, %c0_198, %c1536_199] : memref<2x64x2048xbf16, #tpu.memory_space<vmem>>, vector<1x64x512xbf16>
    %381 = vector.shape_cast %380 : vector<1x64x512xbf16> to vector<64x512xbf16>
    %cst_200 = arith.constant dense<0.000000e+00> : vector<24x512xf32>
    %382 = tpu.matmul %336, %381, %cst_200 {dimension_numbers = #tpu.dot_dimension_numbers<[1], [0], [0], [1], [0, 0, 1, 1], [], []>} : vector<24x64xbf16>, vector<64x512xbf16>, vector<24x512xf32> -> vector<24x512xf32>
    %c1_201 = arith.constant 1 : index
    %c0_202 = arith.constant 0 : index
    %c1536_203 = arith.constant 1536 : index
    %383 = vector.load %arg13[%c1_201, %c0_202, %c1536_203] : memref<2x1x2048xf32, #tpu.memory_space<vmem>>, vector<1x1x512xf32>
    %384 = vector.shape_cast %383 : vector<1x1x512xf32> to vector<1x512xf32>
    %385 = vector.broadcast %384 : vector<1x512xf32> to vector<24x512xf32>
    %386 = arith.addf %382, %385 : vector<24x512xf32>
    %cst_204 = arith.constant 0.000000e+00 : f32
    %387 = vector.broadcast %cst_204 : f32 to vector<24x512xf32>
    %388 = arith.maximumf %386, %387 : vector<24x512xf32>
    %389 = arith.truncf %388 : vector<24x512xf32> to vector<24x512xbf16>
    %c1_205 = arith.constant 1 : index
    %c1536_206 = arith.constant 1536 : index
    %c0_207 = arith.constant 0 : index
    %390 = vector.load %arg14[%c1_205, %c1536_206, %c0_207] : memref<2x2048x64xbf16, #tpu.memory_space<vmem>>, vector<1x512x64xbf16>
    %391 = vector.shape_cast %390 : vector<1x512x64xbf16> to vector<512x64xbf16>
    %cst_208 = arith.constant dense<0.000000e+00> : vector<24x64xf32>
    %392 = tpu.matmul %389, %391, %cst_208 {dimension_numbers = #tpu.dot_dimension_numbers<[1], [0], [0], [1], [0, 0, 1, 1], [], []>} : vector<24x512xbf16>, vector<512x64xbf16>, vector<24x64xf32> -> vector<24x64xf32>
    %393 = arith.addf %379, %392 : vector<24x64xf32>
    %394 = arith.addf %335, %393 : vector<24x64xf32>
    %c1_209 = arith.constant 1 : index
    %c0_210 = arith.constant 0 : index
    %c0_211 = arith.constant 0 : index
    %395 = vector.load %arg15[%c1_209, %c0_210, %c0_211] : memref<2x1x64xf32, #tpu.memory_space<vmem>>, vector<1x1x64xf32>
    %396 = vector.shape_cast %395 : vector<1x1x64xf32> to vector<1x64xf32>
    %397 = vector.broadcast %396 : vector<1x64xf32> to vector<24x64xf32>
    %398 = arith.addf %394, %397 : vector<24x64xf32>
    %c1_212 = arith.constant 1 : index
    %c0_213 = arith.constant 0 : index
    %c0_214 = arith.constant 0 : index
    %399 = vector.load %arg16[%c1_212, %c0_213, %c0_214] : memref<2x1x64xf32, #tpu.memory_space<vmem>>, vector<1x1x64xf32>
    %400 = vector.shape_cast %399 : vector<1x1x64xf32> to vector<1x64xf32>
    %c1_215 = arith.constant 1 : index
    %c0_216 = arith.constant 0 : index
    %c0_217 = arith.constant 0 : index
    %401 = vector.load %arg17[%c1_215, %c0_216, %c0_217] : memref<2x1x64xf32, #tpu.memory_space<vmem>>, vector<1x1x64xf32>
    %402 = vector.shape_cast %401 : vector<1x1x64xf32> to vector<1x64xf32>
    %cst_218 = arith.constant dense<0.000000e+00> : vector<24xf32>
    %403 = vector.multi_reduction <add>, %398, %cst_218 [1] : vector<24x64xf32> to vector<24xf32>
    %404 = vector.shape_cast %403 : vector<24xf32> to vector<24x1xf32>
    %cst_219 = arith.constant 6.400000e+01 : f32
    %405 = vector.broadcast %cst_219 : f32 to vector<24x1xf32>
    %406 = arith.divf %404, %405 : vector<24x1xf32>
    %407 = vector.broadcast %406 : vector<24x1xf32> to vector<24x64xf32>
    %408 = arith.subf %398, %407 : vector<24x64xf32>
    %409 = arith.mulf %408, %408 : vector<24x64xf32>
    %cst_220 = arith.constant dense<0.000000e+00> : vector<24xf32>
    %410 = vector.multi_reduction <add>, %409, %cst_220 [1] : vector<24x64xf32> to vector<24xf32>
    %411 = vector.shape_cast %410 : vector<24xf32> to vector<24x1xf32>
    %cst_221 = arith.constant 6.400000e+01 : f32
    %412 = vector.broadcast %cst_221 : f32 to vector<24x1xf32>
    %413 = arith.divf %411, %412 : vector<24x1xf32>
    %414 = vector.broadcast %406 : vector<24x1xf32> to vector<24x64xf32>
    %415 = arith.subf %398, %414 : vector<24x64xf32>
    %cst_222 = arith.constant 9.99999974E-6 : f32
    %416 = vector.broadcast %cst_222 : f32 to vector<24x1xf32>
    %417 = arith.addf %413, %416 : vector<24x1xf32>
    %418 = math.rsqrt %417 : vector<24x1xf32>
    %419 = vector.broadcast %418 : vector<24x1xf32> to vector<24x64xf32>
    %420 = arith.mulf %415, %419 : vector<24x64xf32>
    %421 = vector.broadcast %400 : vector<1x64xf32> to vector<24x64xf32>
    %422 = arith.mulf %420, %421 : vector<24x64xf32>
    %423 = vector.broadcast %402 : vector<1x64xf32> to vector<24x64xf32>
    %424 = arith.addf %422, %423 : vector<24x64xf32>
    %425 = vector.extract_strided_slice %424 {offsets = [0, 0], sizes = [12, 64], strides = [1, 1]} : vector<24x64xf32> to vector<12x64xf32>
    %c0_223 = arith.constant 0 : index
    %c0_224 = arith.constant 0 : index
    %426 = vector.load %arg28[%c0_223, %c0_224] : memref<12x64xf32, #tpu.memory_space<vmem>>, vector<12x64xf32>
    tpu.vector_store %arg28[%c0_223, %c0_224], %425 {strides = array<i32>} : memref<12x64xf32, #tpu.memory_space<vmem>>, vector<12x64xf32>,
    %427 = vector.extract_strided_slice %425 {offsets = [0, 0], sizes = [12, 32], strides = [1, 1]} : vector<12x64xf32> to vector<12x32xf32>
    %428 = arith.addf %427, %23 : vector<12x32xf32>
    %c0_225 = arith.constant 0 : index
    %c0_226 = arith.constant 0 : index
    %429 = vector.load %arg18[%c0_225, %c0_226] : memref<1x32xf32, #tpu.memory_space<vmem>>, vector<1x32xf32>
    %430 = vector.broadcast %429 : vector<1x32xf32> to vector<12x32xf32>
    %431 = arith.mulf %428, %430 : vector<12x32xf32>
    %cst_227 = arith.constant dense<0.000000e+00> : vector<12xf32>
    %432 = vector.multi_reduction <add>, %431, %cst_227 [1] : vector<12x32xf32> to vector<12xf32>
    %433 = vector.shape_cast %432 : vector<12xf32> to vector<12x1xf32>
    %c0_228 = arith.constant 0 : index
    %c0_229 = arith.constant 0 : index
    %434 = vector.load %arg19[%c0_228, %c0_229] : memref<1x1xf32, #tpu.memory_space<vmem>>, vector<1x1xf32>
    %435 = vector.broadcast %434 : vector<1x1xf32> to vector<12x1xf32>
    %436 = arith.addf %433, %435 : vector<12x1xf32>
    %437 = arith.negf %436 : vector<12x1xf32>
    %438 = math.exp %437 : vector<12x1xf32>
    %cst_230 = arith.constant 1.000000e+00 : f32
    %439 = vector.broadcast %cst_230 : f32 to vector<12x1xf32>
    %440 = arith.addf %439, %438 : vector<12x1xf32>
    %441 = arith.divf %439, %440 : vector<12x1xf32>
    %c0_231 = arith.constant 0 : index
    %c0_232 = arith.constant 0 : index
    %442 = vector.load %arg30[%c0_231, %c0_232] : memref<12x1xf32, #tpu.memory_space<vmem>>, vector<12x1xf32>
    tpu.vector_store %arg30[%c0_231, %c0_232], %441 {strides = array<i32>} : memref<12x1xf32, #tpu.memory_space<vmem>>, vector<12x1xf32>,
    %c0_233 = arith.constant 0 : index
    %443 = memref.load %arg0[%c0_233] : memref<1xi32, #tpu.memory_space<smem>>
    %444 = arith.index_cast %443 : i32 to index
    %c0_234 = arith.constant 0 : index
    %445 = vector.load %arg28[%444, %c0_234] : memref<12x64xf32, #tpu.memory_space<vmem>>, vector<1x64xf32>
    %c0_235 = arith.constant 0 : index
    %c0_236 = arith.constant 0 : index
    %446 = vector.load %arg20[%c0_235, %c0_236] : memref<64x64xf32, #tpu.memory_space<vmem>>, vector<64x64xf32>
    %cst_237 = arith.constant dense<0.000000e+00> : vector<12x64xf32>
    %447 = tpu.matmul %425, %446, %cst_237 {dimension_numbers = #tpu.dot_dimension_numbers<[1], [0], [0], [1], [0, 0, 1, 1], [], []>} : vector<12x64xf32>, vector<64x64xf32>, vector<12x64xf32> -> vector<12x64xf32>
    %c0_238 = arith.constant 0 : index
    %c0_239 = arith.constant 0 : index
    %448 = vector.load %arg21[%c0_238, %c0_239] : memref<64x64xf32, #tpu.memory_space<vmem>>, vector<64x64xf32>
    %cst_240 = arith.constant dense<0.000000e+00> : vector<1x64xf32>
    %449 = tpu.matmul %445, %448, %cst_240 {dimension_numbers = #tpu.dot_dimension_numbers<[1], [0], [0], [1], [0, 0, 1, 1], [], []>} : vector<1x64xf32>, vector<64x64xf32>, vector<1x64xf32> -> vector<1x64xf32>
    %450 = vector.broadcast %449 : vector<1x64xf32> to vector<12x64xf32>
    %451 = arith.addf %447, %450 : vector<12x64xf32>
    %c0_241 = arith.constant 0 : index
    %c0_242 = arith.constant 0 : index
    %c0_243 = arith.constant 0 : index
    %452 = vector.load %arg23[%c0_241, %c0_242, %c0_243] : memref<3x1x64xf32, #tpu.memory_space<vmem>>, vector<1x1x64xf32>
    %453 = vector.shape_cast %452 : vector<1x1x64xf32> to vector<1x64xf32>
    %454 = vector.broadcast %453 : vector<1x64xf32> to vector<12x64xf32>
    %455 = arith.addf %451, %454 : vector<12x64xf32>
    %c0_244 = arith.constant 0 : index
    %c0_245 = arith.constant 0 : index
    %c0_246 = arith.constant 0 : index
    %456 = vector.load %arg24[%c0_244, %c0_245, %c0_246] : memref<3x1x64xf32, #tpu.memory_space<vmem>>, vector<1x1x64xf32>
    %457 = vector.shape_cast %456 : vector<1x1x64xf32> to vector<1x64xf32>
    %c0_247 = arith.constant 0 : index
    %c0_248 = arith.constant 0 : index
    %c0_249 = arith.constant 0 : index
    %458 = vector.load %arg25[%c0_247, %c0_248, %c0_249] : memref<3x1x64xf32, #tpu.memory_space<vmem>>, vector<1x1x64xf32>
    %459 = vector.shape_cast %458 : vector<1x1x64xf32> to vector<1x64xf32>
    %cst_250 = arith.constant dense<0.000000e+00> : vector<64xf32>
    %460 = vector.multi_reduction <add>, %455, %cst_250 [0] : vector<12x64xf32> to vector<64xf32>
    %461 = vector.shape_cast %460 : vector<64xf32> to vector<1x64xf32>
    %cst_251 = arith.constant 1.200000e+01 : f32
    %462 = vector.broadcast %cst_251 : f32 to vector<1x64xf32>
    %463 = arith.divf %461, %462 : vector<1x64xf32>
    %464 = vector.broadcast %463 : vector<1x64xf32> to vector<12x64xf32>
    %465 = arith.subf %455, %464 : vector<12x64xf32>
    %466 = arith.mulf %465, %465 : vector<12x64xf32>
    %cst_252 = arith.constant dense<0.000000e+00> : vector<64xf32>
    %467 = vector.multi_reduction <add>, %466, %cst_252 [0] : vector<12x64xf32> to vector<64xf32>
    %468 = vector.shape_cast %467 : vector<64xf32> to vector<1x64xf32>
    %cst_253 = arith.constant 1.200000e+01 : f32
    %469 = vector.broadcast %cst_253 : f32 to vector<1x64xf32>
    %470 = arith.divf %468, %469 : vector<1x64xf32>
    %471 = vector.broadcast %463 : vector<1x64xf32> to vector<12x64xf32>
    %472 = arith.subf %455, %471 : vector<12x64xf32>
    %cst_254 = arith.constant 9.99999974E-6 : f32
    %473 = vector.broadcast %cst_254 : f32 to vector<1x64xf32>
    %474 = arith.addf %470, %473 : vector<1x64xf32>
    %475 = math.rsqrt %474 : vector<1x64xf32>
    %476 = vector.broadcast %475 : vector<1x64xf32> to vector<12x64xf32>
    %477 = arith.mulf %472, %476 : vector<12x64xf32>
    %478 = vector.broadcast %457 : vector<1x64xf32> to vector<12x64xf32>
    %479 = arith.mulf %477, %478 : vector<12x64xf32>
    %480 = vector.broadcast %459 : vector<1x64xf32> to vector<12x64xf32>
    %481 = arith.addf %479, %480 : vector<12x64xf32>
    %cst_255 = arith.constant 0.000000e+00 : f32
    %482 = vector.broadcast %cst_255 : f32 to vector<12x64xf32>
    %483 = arith.maximumf %481, %482 : vector<12x64xf32>
    %c0_256 = arith.constant 0 : index
    %c0_257 = arith.constant 0 : index
    %c0_258 = arith.constant 0 : index
    %484 = vector.load %arg22[%c0_256, %c0_257, %c0_258] : memref<2x64x64xf32, #tpu.memory_space<vmem>>, vector<1x64x64xf32>
    %485 = vector.shape_cast %484 : vector<1x64x64xf32> to vector<64x64xf32>
    %cst_259 = arith.constant dense<0.000000e+00> : vector<12x64xf32>
    %486 = tpu.matmul %483, %485, %cst_259 {dimension_numbers = #tpu.dot_dimension_numbers<[1], [0], [0], [1], [0, 0, 1, 1], [], []>} : vector<12x64xf32>, vector<64x64xf32>, vector<12x64xf32> -> vector<12x64xf32>
    %c1_260 = arith.constant 1 : index
    %c0_261 = arith.constant 0 : index
    %c0_262 = arith.constant 0 : index
    %487 = vector.load %arg23[%c1_260, %c0_261, %c0_262] : memref<3x1x64xf32, #tpu.memory_space<vmem>>, vector<1x1x64xf32>
    %488 = vector.shape_cast %487 : vector<1x1x64xf32> to vector<1x64xf32>
    %489 = vector.broadcast %488 : vector<1x64xf32> to vector<12x64xf32>
    %490 = arith.addf %486, %489 : vector<12x64xf32>
    %c1_263 = arith.constant 1 : index
    %c0_264 = arith.constant 0 : index
    %c0_265 = arith.constant 0 : index
    %491 = vector.load %arg24[%c1_263, %c0_264, %c0_265] : memref<3x1x64xf32, #tpu.memory_space<vmem>>, vector<1x1x64xf32>
    %492 = vector.shape_cast %491 : vector<1x1x64xf32> to vector<1x64xf32>
    %c1_266 = arith.constant 1 : index
    %c0_267 = arith.constant 0 : index
    %c0_268 = arith.constant 0 : index
    %493 = vector.load %arg25[%c1_266, %c0_267, %c0_268] : memref<3x1x64xf32, #tpu.memory_space<vmem>>, vector<1x1x64xf32>
    %494 = vector.shape_cast %493 : vector<1x1x64xf32> to vector<1x64xf32>
    %cst_269 = arith.constant dense<0.000000e+00> : vector<64xf32>
    %495 = vector.multi_reduction <add>, %490, %cst_269 [0] : vector<12x64xf32> to vector<64xf32>
    %496 = vector.shape_cast %495 : vector<64xf32> to vector<1x64xf32>
    %cst_270 = arith.constant 1.200000e+01 : f32
    %497 = vector.broadcast %cst_270 : f32 to vector<1x64xf32>
    %498 = arith.divf %496, %497 : vector<1x64xf32>
    %499 = vector.broadcast %498 : vector<1x64xf32> to vector<12x64xf32>
    %500 = arith.subf %490, %499 : vector<12x64xf32>
    %501 = arith.mulf %500, %500 : vector<12x64xf32>
    %cst_271 = arith.constant dense<0.000000e+00> : vector<64xf32>
    %502 = vector.multi_reduction <add>, %501, %cst_271 [0] : vector<12x64xf32> to vector<64xf32>
    %503 = vector.shape_cast %502 : vector<64xf32> to vector<1x64xf32>
    %cst_272 = arith.constant 1.200000e+01 : f32
    %504 = vector.broadcast %cst_272 : f32 to vector<1x64xf32>
    %505 = arith.divf %503, %504 : vector<1x64xf32>
    %506 = vector.broadcast %498 : vector<1x64xf32> to vector<12x64xf32>
    %507 = arith.subf %490, %506 : vector<12x64xf32>
    %cst_273 = arith.constant 9.99999974E-6 : f32
    %508 = vector.broadcast %cst_273 : f32 to vector<1x64xf32>
    %509 = arith.addf %505, %508 : vector<1x64xf32>
    %510 = math.rsqrt %509 : vector<1x64xf32>
    %511 = vector.broadcast %510 : vector<1x64xf32> to vector<12x64xf32>
    %512 = arith.mulf %507, %511 : vector<12x64xf32>
    %513 = vector.broadcast %492 : vector<1x64xf32> to vector<12x64xf32>
    %514 = arith.mulf %512, %513 : vector<12x64xf32>
    %515 = vector.broadcast %494 : vector<1x64xf32> to vector<12x64xf32>
    %516 = arith.addf %514, %515 : vector<12x64xf32>
    %cst_274 = arith.constant 0.000000e+00 : f32
    %517 = vector.broadcast %cst_274 : f32 to vector<12x64xf32>
    %518 = arith.maximumf %516, %517 : vector<12x64xf32>
    %c1_275 = arith.constant 1 : index
    %c0_276 = arith.constant 0 : index
    %c0_277 = arith.constant 0 : index
    %519 = vector.load %arg22[%c1_275, %c0_276, %c0_277] : memref<2x64x64xf32, #tpu.memory_space<vmem>>, vector<1x64x64xf32>
    %520 = vector.shape_cast %519 : vector<1x64x64xf32> to vector<64x64xf32>
    %cst_278 = arith.constant dense<0.000000e+00> : vector<12x64xf32>
    %521 = tpu.matmul %518, %520, %cst_278 {dimension_numbers = #tpu.dot_dimension_numbers<[1], [0], [0], [1], [0, 0, 1, 1], [], []>} : vector<12x64xf32>, vector<64x64xf32>, vector<12x64xf32> -> vector<12x64xf32>
    %c2 = arith.constant 2 : index
    %c0_279 = arith.constant 0 : index
    %c0_280 = arith.constant 0 : index
    %522 = vector.load %arg23[%c2, %c0_279, %c0_280] : memref<3x1x64xf32, #tpu.memory_space<vmem>>, vector<1x1x64xf32>
    %523 = vector.shape_cast %522 : vector<1x1x64xf32> to vector<1x64xf32>
    %524 = vector.broadcast %523 : vector<1x64xf32> to vector<12x64xf32>
    %525 = arith.addf %521, %524 : vector<12x64xf32>
    %c2_281 = arith.constant 2 : index
    %c0_282 = arith.constant 0 : index
    %c0_283 = arith.constant 0 : index
    %526 = vector.load %arg24[%c2_281, %c0_282, %c0_283] : memref<3x1x64xf32, #tpu.memory_space<vmem>>, vector<1x1x64xf32>
    %527 = vector.shape_cast %526 : vector<1x1x64xf32> to vector<1x64xf32>
    %c2_284 = arith.constant 2 : index
    %c0_285 = arith.constant 0 : index
    %c0_286 = arith.constant 0 : index
    %528 = vector.load %arg25[%c2_284, %c0_285, %c0_286] : memref<3x1x64xf32, #tpu.memory_space<vmem>>, vector<1x1x64xf32>
    %529 = vector.shape_cast %528 : vector<1x1x64xf32> to vector<1x64xf32>
    %cst_287 = arith.constant dense<0.000000e+00> : vector<64xf32>
    %530 = vector.multi_reduction <add>, %525, %cst_287 [0] : vector<12x64xf32> to vector<64xf32>
    %531 = vector.shape_cast %530 : vector<64xf32> to vector<1x64xf32>
    %cst_288 = arith.constant 1.200000e+01 : f32
    %532 = vector.broadcast %cst_288 : f32 to vector<1x64xf32>
    %533 = arith.divf %531, %532 : vector<1x64xf32>
    %534 = vector.broadcast %533 : vector<1x64xf32> to vector<12x64xf32>
    %535 = arith.subf %525, %534 : vector<12x64xf32>
    %536 = arith.mulf %535, %535 : vector<12x64xf32>
    %cst_289 = arith.constant dense<0.000000e+00> : vector<64xf32>
    %537 = vector.multi_reduction <add>, %536, %cst_289 [0] : vector<12x64xf32> to vector<64xf32>
    %538 = vector.shape_cast %537 : vector<64xf32> to vector<1x64xf32>
    %cst_290 = arith.constant 1.200000e+01 : f32
    %539 = vector.broadcast %cst_290 : f32 to vector<1x64xf32>
    %540 = arith.divf %538, %539 : vector<1x64xf32>
    %541 = vector.broadcast %533 : vector<1x64xf32> to vector<12x64xf32>
    %542 = arith.subf %525, %541 : vector<12x64xf32>
    %cst_291 = arith.constant 9.99999974E-6 : f32
    %543 = vector.broadcast %cst_291 : f32 to vector<1x64xf32>
    %544 = arith.addf %540, %543 : vector<1x64xf32>
    %545 = math.rsqrt %544 : vector<1x64xf32>
    %546 = vector.broadcast %545 : vector<1x64xf32> to vector<12x64xf32>
    %547 = arith.mulf %542, %546 : vector<12x64xf32>
    %548 = vector.broadcast %527 : vector<1x64xf32> to vector<12x64xf32>
    %549 = arith.mulf %547, %548 : vector<12x64xf32>
    %550 = vector.broadcast %529 : vector<1x64xf32> to vector<12x64xf32>
    %551 = arith.addf %549, %550 : vector<12x64xf32>
    %cst_292 = arith.constant 0.000000e+00 : f32
    %552 = vector.broadcast %cst_292 : f32 to vector<12x64xf32>
    %553 = arith.maximumf %551, %552 : vector<12x64xf32>
    %c0_293 = arith.constant 0 : index
    %c0_294 = arith.constant 0 : index
    %554 = vector.load %arg26[%c0_293, %c0_294] : memref<1x64xf32, #tpu.memory_space<vmem>>, vector<1x64xf32>
    %555 = vector.broadcast %554 : vector<1x64xf32> to vector<12x64xf32>
    %556 = arith.mulf %553, %555 : vector<12x64xf32>
    %cst_295 = arith.constant dense<0.000000e+00> : vector<12xf32>
    %557 = vector.multi_reduction <add>, %556, %cst_295 [1] : vector<12x64xf32> to vector<12xf32>
    %558 = vector.shape_cast %557 : vector<12xf32> to vector<12x1xf32>
    %c0_296 = arith.constant 0 : index
    %c0_297 = arith.constant 0 : index
    %559 = vector.load %arg27[%c0_296, %c0_297] : memref<1x1xf32, #tpu.memory_space<vmem>>, vector<1x1xf32>
    %560 = vector.broadcast %559 : vector<1x1xf32> to vector<12x1xf32>
    %561 = arith.addf %558, %560 : vector<12x1xf32>
    %562 = arith.negf %561 : vector<12x1xf32>
    %563 = math.exp %562 : vector<12x1xf32>
    %cst_298 = arith.constant 1.000000e+00 : f32
    %564 = vector.broadcast %cst_298 : f32 to vector<12x1xf32>
    %565 = arith.addf %564, %563 : vector<12x1xf32>
    %566 = arith.divf %564, %565 : vector<12x1xf32>
    %c0_299 = arith.constant 0 : index
    %c0_300 = arith.constant 0 : index
    %567 = vector.load %arg31[%c0_299, %c0_300] : memref<12x1xf32, #tpu.memory_space<vmem>>, vector<12x1xf32>
    tpu.vector_store %arg31[%c0_299, %c0_300], %566 {strides = array<i32>} : memref<12x1xf32, #tpu.memory_space<vmem>>, vector<12x1xf32>,
    return
  }
}

</mosaic_0001>

<llo_original>
// kernel: tpu_custom_call.1
$region0: #{tpu_custom_call.1}
  #allocation0 [shape = 'u32[]', space=smem, size = 0x4, offset = 0x4, fixed_abs, tag = 'smem constant byte address 0x4 - core index']
  #allocation1 [shape = 'u32[72,128]{1,0:T(1,128)}', space=vmem, size = 0x9000, scoped, tag = 'internal scratch']
  #allocation2 [shape = 's32[1]{0:T(128)S(6)}', space=smem, size = 0x200, scoped, tag = 'scoped memory for tpu_custom_call.1']
  #allocation3 [shape = 'f32[1,1]{1,0:T(1,128)S(1)}', space=vmem, size = 0x200, scoped, tag = 'scoped memory for tpu_custom_call.1']
  #allocation4 [shape = 'f32[1,1]{1,0:T(1,128)S(1)}', space=vmem, size = 0x200, scoped, tag = 'scoped memory for tpu_custom_call.1']
  %s0 = inlined_call_operand.smem [shape: u32[32], index: -1, kind: input, shape index: {}]
  %s1 = sld [smem:[%s0]]
  %s2 = scalar_lea.smem %s0, 1
  %s3 = sld [smem:[%s2]]
  %s4 = scalar_lea.smem %s0, 2
  %s5 = sld [smem:[%s4]]
  %s6 = scalar_lea.smem %s0, 3
  %s7 = sld [smem:[%s6]]
  %s8 = scalar_lea.smem %s0, 4
  %s9 = sld [smem:[%s8]]
  %s10 = scalar_lea.smem %s0, 5
  %s11 = sld [smem:[%s10]]
  %s12 = scalar_lea.smem %s0, 6
  %s13 = sld [smem:[%s12]]
  %s14 = scalar_lea.smem %s0, 7
  %s15 = sld [smem:[%s14]]
  %s16 = scalar_lea.smem %s0, 8
  %s17 = sld [smem:[%s16]]
  %s18 = scalar_lea.smem %s0, 9
  %s19 = sld [smem:[%s18]]
  %s20 = scalar_lea.smem %s0, 10
  %s21 = sld [smem:[%s20]]
  %s22 = scalar_lea.smem %s0, 11
  %s23 = sld [smem:[%s22]]
  %s24 = scalar_lea.smem %s0, 12
  %s25 = sld [smem:[%s24]]
  %s26 = scalar_lea.smem %s0, 13
  %s27 = sld [smem:[%s26]]
  %s28 = scalar_lea.smem %s0, 14
  %s29 = sld [smem:[%s28]]
  %s30 = scalar_lea.smem %s0, 15
  %s31 = sld [smem:[%s30]]
  %s32 = scalar_lea.smem %s0, 16
  %s33 = sld [smem:[%s32]]
  %s34 = scalar_lea.smem %s0, 17
  %s35 = sld [smem:[%s34]]
  %s36 = scalar_lea.smem %s0, 18
  %s37 = sld [smem:[%s36]]
  %s38 = scalar_lea.smem %s0, 19
  %s39 = sld [smem:[%s38]]
  %s40 = scalar_lea.smem %s0, 20
  %s41 = sld [smem:[%s40]]
  %s42 = scalar_lea.smem %s0, 21
  %s43 = sld [smem:[%s42]]
  %s44 = scalar_lea.smem %s0, 22
  %s45 = sld [smem:[%s44]]
  %s46 = scalar_lea.smem %s0, 23
  %s47 = sld [smem:[%s46]]
  %s48 = scalar_lea.smem %s0, 24
  %s49 = sld [smem:[%s48]]
  %s50 = scalar_lea.smem %s0, 25
  %s51 = sld [smem:[%s50]]
  %s52 = scalar_lea.smem %s0, 26
  %s53 = sld [smem:[%s52]]
  %s54 = scalar_lea.smem %s0, 27
  %s55 = sld [smem:[%s54]]
  %s56 = scalar_lea.smem %s0, 28
  %s57 = sld [smem:[%s56]]
  %s58 = scalar_lea.smem %s0, 29
  %s59 = sld [smem:[%s58]]
  %s60 = scalar_lea.smem %s0, 30
  %s61 = sld [smem:[%s60]]
  %s62 = scalar_lea.smem %s0, 31
  %s63 = sld [smem:[%s62]]
  %64 = xla_tuple %s57, %s59, %s61, %s63
  %s65 = sld [smem:[#allocation0]]
  $region146: #{tpu_custom_call.1} parent=0
    _
  %s67 = ssub.s32 1, %s65
  %s68 = scalar_select 0, %s67, %s65
  %69 = sst [smem:[#allocation2]] %s1
  %v70 = vstv %s39
  %71 = vst [vmem:[#allocation3] sm:$0x1] %v70
  %v72 = vstv %s55
  %73 = vst [vmem:[#allocation4] sm:$0x1] %v72
  $region1: #{tpu_custom_call.1} parent=0
    #allocation5 [shape = 'u8[8192]{0}', space=vmem, size = 0x2000, scoped, tag = 'output window, operand 0, single buffered']
    #allocation6 [shape = 's32[1]{0}', space=sflag, size = 0x4, scoped, tag = 'scoped memory for tpu_custom_call.1']
    #allocation7 [shape = 'u8[8192]{0}', space=vmem, size = 0x2000, scoped, tag = 'output window, operand 1, single buffered']
    #allocation8 [shape = 's32[1]{0}', space=sflag, size = 0x4, scoped, tag = 'scoped memory for tpu_custom_call.1']
    %74 = vsyncpa [#allocation6], 0
    %75 = vsyncpa [#allocation8], 0
    // Predicated region
    $region2: #{tpu_custom_call.1} parent=1 // pred_check
      _
    $region3: #{tpu_custom_call.1} parent=1 // pred_check_branch
      %77 = sbr.rel (0) target = $region5
    $region4: #{tpu_custom_call.1} parent=1 // pred_region
      _
    $region5: #{tpu_custom_call.1} parent=1 // pred_fallthru
      _
    // Predicated region
    $region6: #{tpu_custom_call.1} parent=1 // pred_check
      _
    $region7: #{tpu_custom_call.1} parent=1 // pred_check_branch
      %79 = sbr.rel (0) target = $region9
    $region8: #{tpu_custom_call.1} parent=1 // pred_region
      _
    $region9: #{tpu_custom_call.1} parent=1 // pred_fallthru
      _
    // Predicated region
    $region10: #{tpu_custom_call.1} parent=1 // pred_check
      _
    $region11: #{tpu_custom_call.1} parent=1 // pred_check_branch
      %81 = sbr.rel (0) target = $region13
    $region12: #{tpu_custom_call.1} parent=1 // pred_region
      _
    $region13: #{tpu_custom_call.1} parent=1 // pred_fallthru
      _
    // Predicated region
    $region14: #{tpu_custom_call.1} parent=1 // pred_check
      _
    $region15: #{tpu_custom_call.1} parent=1 // pred_check_branch
      %83 = sbr.rel (0) target = $region17
    $region16: #{tpu_custom_call.1} parent=1 // pred_region
      _
    $region17: #{tpu_custom_call.1} parent=1 // pred_fallthru
      _
    // Predicated region
    $region18: #{tpu_custom_call.1} parent=1 // pred_check
      _
    $region19: #{tpu_custom_call.1} parent=1 // pred_check_branch
      %85 = sbr.rel (0) target = $region21
    $region20: #{tpu_custom_call.1} parent=1 // pred_region
      _
    $region21: #{tpu_custom_call.1} parent=1 // pred_fallthru
      _
    // Predicated region
    $region22: #{tpu_custom_call.1} parent=1 // pred_check
      _
    $region23: #{tpu_custom_call.1} parent=1 // pred_check_branch
      %87 = sbr.rel (0) target = $region25
    $region24: #{tpu_custom_call.1} parent=1 // pred_region
      _
    $region25: #{tpu_custom_call.1} parent=1 // pred_fallthru
      _
    // Predicated region
    $region26: #{tpu_custom_call.1} parent=1 // pred_check
      _
    $region27: #{tpu_custom_call.1} parent=1 // pred_check_branch
      %89 = sbr.rel (0) target = $region29
    $region28: #{tpu_custom_call.1} parent=1 // pred_region
      _
    $region29: #{tpu_custom_call.1} parent=1 // pred_fallthru
      _
    // Predicated region
    $region30: #{tpu_custom_call.1} parent=1 // pred_check
      _
    $region31: #{tpu_custom_call.1} parent=1 // pred_check_branch
      %91 = sbr.rel (0) target = $region33
    $region32: #{tpu_custom_call.1} parent=1 // pred_region
      _
    $region33: #{tpu_custom_call.1} parent=1 // pred_fallthru
      _
    // Predicated region
    $region34: #{tpu_custom_call.1} parent=1 // pred_check
      _
    $region35: #{tpu_custom_call.1} parent=1 // pred_check_branch
      %93 = sbr.rel (0) target = $region37
    $region36: #{tpu_custom_call.1} parent=1 // pred_region
      _
    $region37: #{tpu_custom_call.1} parent=1 // pred_fallthru
      _
    // Predicated region
    $region38: #{tpu_custom_call.1} parent=1 // pred_check
      _
    $region39: #{tpu_custom_call.1} parent=1 // pred_check_branch
      %95 = sbr.rel (0) target = $region41
    $region40: #{tpu_custom_call.1} parent=1 // pred_region
      _
    $region41: #{tpu_custom_call.1} parent=1 // pred_fallthru
      _
    // Predicated region
    $region42: #{tpu_custom_call.1} parent=1 // pred_check
      _
    $region43: #{tpu_custom_call.1} parent=1 // pred_check_branch
      %97 = sbr.rel (0) target = $region45
    $region44: #{tpu_custom_call.1} parent=1 // pred_region
      _
    $region45: #{tpu_custom_call.1} parent=1 // pred_fallthru
      _
    // Predicated region
    $region46: #{tpu_custom_call.1} parent=1 // pred_check
      _
    $region47: #{tpu_custom_call.1} parent=1 // pred_check_branch
      %99 = sbr.rel (0) target = $region49
    $region48: #{tpu_custom_call.1} parent=1 // pred_region
      _
    $region49: #{tpu_custom_call.1} parent=1 // pred_fallthru
      _
    // Predicated region
    $region50: #{tpu_custom_call.1} parent=1 // pred_check
      _
    $region51: #{tpu_custom_call.1} parent=1 // pred_check_branch
      %101 = sbr.rel (0) target = $region53
    $region52: #{tpu_custom_call.1} parent=1 // pred_region
      _
    $region53: #{tpu_custom_call.1} parent=1 // pred_fallthru
      _
    // Predicated region
    $region54: #{tpu_custom_call.1} parent=1 // pred_check
      _
    $region55: #{tpu_custom_call.1} parent=1 // pred_check_branch
      %103 = sbr.rel (0) target = $region57
    $region56: #{tpu_custom_call.1} parent=1 // pred_region
      _
    $region57: #{tpu_custom_call.1} parent=1 // pred_fallthru
      _
    // Predicated region
    $region58: #{tpu_custom_call.1} parent=1 // pred_check
      _
    $region59: #{tpu_custom_call.1} parent=1 // pred_check_branch
      %105 = sbr.rel (0) target = $region61
    $region60: #{tpu_custom_call.1} parent=1 // pred_region
      _
    $region61: #{tpu_custom_call.1} parent=1 // pred_fallthru
      _
    // Predicated region
    $region62: #{tpu_custom_call.1} parent=1 // pred_check
      _
    $region63: #{tpu_custom_call.1} parent=1 // pred_check_branch
      %107 = sbr.rel (0) target = $region65
    $region64: #{tpu_custom_call.1} parent=1 // pred_region
      _
    $region65: #{tpu_custom_call.1} parent=1 // pred_fallthru
      _
    // Predicated region
    $region66: #{tpu_custom_call.1} parent=1 // pred_check
      _
    $region67: #{tpu_custom_call.1} parent=1 // pred_check_branch
      %109 = sbr.rel (0) target = $region69
    $region68: #{tpu_custom_call.1} parent=1 // pred_region
      _
    $region69: #{tpu_custom_call.1} parent=1 // pred_fallthru
      _
    // Predicated region
    $region70: #{tpu_custom_call.1} parent=1 // pred_check
      _
    $region71: #{tpu_custom_call.1} parent=1 // pred_check_branch
      %111 = sbr.rel (0) target = $region73
    $region72: #{tpu_custom_call.1} parent=1 // pred_region
      _
    $region73: #{tpu_custom_call.1} parent=1 // pred_fallthru
      _
    // Predicated region
    $region74: #{tpu_custom_call.1} parent=1 // pred_check
      _
    $region75: #{tpu_custom_call.1} parent=1 // pred_check_branch
      %113 = sbr.rel (0) target = $region77
    $region76: #{tpu_custom_call.1} parent=1 // pred_region
      _
    $region77: #{tpu_custom_call.1} parent=1 // pred_fallthru
      _
    // Predicated region
    $region78: #{tpu_custom_call.1} parent=1 // pred_check
      _
    $region79: #{tpu_custom_call.1} parent=1 // pred_check_branch
      %115 = sbr.rel (0) target = $region81
    $region80: #{tpu_custom_call.1} parent=1 // pred_region
      _
    $region81: #{tpu_custom_call.1} parent=1 // pred_fallthru
      _
    // Predicated region
    $region82: #{tpu_custom_call.1} parent=1 // pred_check
      _
    $region83: #{tpu_custom_call.1} parent=1 // pred_check_branch
      %117 = sbr.rel (0) target = $region85
    $region84: #{tpu_custom_call.1} parent=1 // pred_region
      _
    $region85: #{tpu_custom_call.1} parent=1 // pred_fallthru
      _
    // Predicated region
    $region86: #{tpu_custom_call.1} parent=1 // pred_check
      _
    $region87: #{tpu_custom_call.1} parent=1 // pred_check_branch
      %119 = sbr.rel (0) target = $region89
    $region88: #{tpu_custom_call.1} parent=1 // pred_region
      _
    $region89: #{tpu_custom_call.1} parent=1 // pred_fallthru
      _
    // Predicated region
    $region90: #{tpu_custom_call.1} parent=1 // pred_check
      _
    $region91: #{tpu_custom_call.1} parent=1 // pred_check_branch
      %121 = sbr.rel (0) target = $region93
    $region92: #{tpu_custom_call.1} parent=1 // pred_region
      _
    $region93: #{tpu_custom_call.1} parent=1 // pred_fallthru
      _
    // Predicated region
    $region94: #{tpu_custom_call.1} parent=1 // pred_check
      _
    $region95: #{tpu_custom_call.1} parent=1 // pred_check_branch
      %123 = sbr.rel (0) target = $region97
    $region96: #{tpu_custom_call.1} parent=1 // pred_region
      _
    $region97: #{tpu_custom_call.1} parent=1 // pred_fallthru
      _
    // Predicated region
    $region98: #{tpu_custom_call.1} parent=1 // pred_check
      _
    $region99: #{tpu_custom_call.1} parent=1 // pred_check_branch
      %125 = sbr.rel (0) target = $region101
    $region100: #{tpu_custom_call.1} parent=1 // pred_region
      _
    $region101: #{tpu_custom_call.1} parent=1 // pred_fallthru
      _
    // Predicated region
    $region102: #{tpu_custom_call.1} parent=1 // pred_check
      _
    $region103: #{tpu_custom_call.1} parent=1 // pred_check_branch
      %127 = sbr.rel (0) target = $region105
    $region104: #{tpu_custom_call.1} parent=1 // pred_region
      _
    $region105: #{tpu_custom_call.1} parent=1 // pred_fallthru
      _
    // Predicated region
    $region106: #{tpu_custom_call.1} parent=1 // pred_check
      _
    $region107: #{tpu_custom_call.1} parent=1 // pred_check_branch
      %129 = sbr.rel (0) target = $region109
    $region108: #{tpu_custom_call.1} parent=1 // pred_region
      _
    $region109: #{tpu_custom_call.1} parent=1 // pred_fallthru
      _
    // Predicated region
    $region110: #{tpu_custom_call.1} parent=1 // pred_check
      _
    $region111: #{tpu_custom_call.1} parent=1 // pred_check_branch
      %131 = sbr.rel (0) target = $region113
    $region112: #{tpu_custom_call.1} parent=1 // pred_region
      _
    $region113: #{tpu_custom_call.1} parent=1 // pred_fallthru
      _
    %v133 = vld [vmem:[%s3] sm:$0xff]
    %v134 = vld [vmem:[%s3 + $0x8] sm:$0xf]
    %v135 = vld [vmem:[%s7] sm:$0xff]
    %v136 = vld [vmem:[%s7 + $0x8] sm:$0xff]
    %v137 = vld [vmem:[%s9] sm:$0x1]
    %v139 = vperm.slane %v137, 0
    %vm141 = vcmask 130048
    %v143 = vsel %vm141, %v133, 0
    %v146 = vsel %vm141, %v134, 0
    %148 = vmatpush.msra.mxu0 0.0
    %149 = vmatpush.msra.mxu0 0.0
    %150 = vmatpush.msra.mxu0 0.0
    %151 = vmatpush.msra.mxu0 0.0
    %152 = vmatpush.msra.mxu0 0.0
    %153 = vmatpush.msra.mxu0 0.0
    %154 = vmatpush.msra.mxu0 0.0
    %155 = vmatpush.msra.mxu0 0.0
    %156 = vmatpush.msra.mxu0 0.0
    %157 = vmatpush.msra.mxu0 0.0
    %158 = vmatpush.msra.mxu0 0.0
    %159 = vmatpush.msra.mxu0 0.0
    %160 = vmatpush.msra.mxu0 0.0
    %161 = vmatpush.msra.mxu0 0.0
    %162 = vmatpush.msra.mxu0 %v136
    %163 = vmatpush.msra.mxu0 %v135
    %164 = vmatmul.f32.gmra.mxu0 %v143
    %v165 = vpop.f32.mrf.mxu0
    %v166 = vadd.f32 %v139, %v165
    %167 = vmatmul.f32.gmra.mxu0 %v146
    %v168 = vpop.f32.mrf.mxu0
    %v169 = vadd.f32 %v139, %v168
    %170 = vdwg.mxu0
    %vm171 = vcmask 523264
    %172 = vst.msk [vmem:[#allocation7] sm:$0xff] %vm171, %v166
    %vm173 = vcmask 519168
    %174 = vst.msk [vmem:[#allocation7 + $0x8] sm:$0xf] %vm173, %v169
    %v175 = vlaneseq
    %v176 = vand.u32 %v175, 127
    %vm177 = vcmp.ge.s32.totalorder %v176, 32
    %vm178 = vcmp.lt.s32.totalorder %v176, 64
    %vm179 = vmand %vm177, %vm178
    %v180 = vld [vmem:[%s5] sm:$0xff]
    %v181 = vld [vmem:[%s5 + $0x8] sm:$0xf]
    %vm182 = vcmp.eq.s32.totalorder %v180, 0
    %vm183 = vcmp.eq.s32.totalorder %v181, 0
    %v184 = vsel %vm182, 1, 0
    %v185 = vsel %vm183, 1, 0
    %186 = vset.pattern.permute.xlu0 0
    %187 = vperm.xlu0 %186, %v184
    %v188 = vpop.permute.xlu0 %187
    %189 = vset.pattern.permute.xlu0 0
    %190 = vperm.xlu0 %189, %v185
    %v191 = vpop.permute.xlu0 %190
    %vm192 = vcmp.eq.s32.totalorder %v188, 1
    %vm193 = vcmp.eq.s32.totalorder %v191, 1
    %vm194 = vmand %vm179, %vm192
    %vm195 = vmand %vm179, %vm193
    %v196 = vld [vmem:[%s11] sm:$0x1]
    %v198 = vperm.slane %v196, 0
    %v200 = vsel %vm194, %v198, %v166
    %v201 = vsel %vm195, %v198, %v169
    %vm204 = vcmask 1043456
    %v205 = vrot.slane %v200, 4
    %v206 = vrot.slane %v201, 4
    %v207 = vsel %vm204, %v205, %v206
    %208 = vrot.lane.b32.xlu0 %v205, 64
    %v209 = vpop.permute.xlu0 %208
    %210 = vrot.lane.b32.xlu0 %v207, 64
    %v211 = vpop.permute.xlu0 %210
    %v214 = vsel %vm204, %v201, %v209
    %v215 = vld [vmem:[%s13] sm:$0xff]
    %v216 = vld [vmem:[%s13 + $0x8] sm:$0xff]
    %v217 = vld [vmem:[%s13 + $0x10] sm:$0xff]
    %v218 = vld [vmem:[%s13 + $0x18] sm:$0xff]
    %v219 = vld [vmem:[%s13 + $0x20] sm:$0xff]
    %v220 = vld [vmem:[%s13 + $0x28] sm:$0xff]
    %v221 = vld [vmem:[%s13 + $0x30] sm:$0xff]
    %v222 = vld [vmem:[%s13 + $0x38] sm:$0xff]
    %v223 = vld [vmem:[%s13 + $0x40] sm:$0xff]
    %v224 = vld [vmem:[%s13 + $0x48] sm:$0xff]
    %v225 = vld [vmem:[%s13 + $0x50] sm:$0xff]
    %v226 = vld [vmem:[%s13 + $0x58] sm:$0xff]
    %v227 = vld [vmem:[%s13 + $0x60] sm:$0xff]
    %v228 = vld [vmem:[%s13 + $0x68] sm:$0xff]
    %v229 = vld [vmem:[%s13 + $0x70] sm:$0xff]
    %v230 = vld [vmem:[%s13 + $0x78] sm:$0xff]
    %v231 = vld [vmem:[%s13 + $0x80] sm:$0xff]
    %v232 = vld [vmem:[%s13 + $0x88] sm:$0xff]
    %v233 = vld [vmem:[%s13 + $0x90] sm:$0xff]
    %v234 = vld [vmem:[%s13 + $0x98] sm:$0xff]
    %v235 = vld [vmem:[%s13 + $0xa0] sm:$0xff]
    %v236 = vld [vmem:[%s13 + $0xa8] sm:$0xff]
    %v237 = vld [vmem:[%s13 + $0xb0] sm:$0xff]
    %v238 = vld [vmem:[%s13 + $0xb8] sm:$0xff]
    %v239 = vld [vmem:[%s15] sm:$0x7]
    %v241 = vperm.slane %v239, 0
    %v242 = vperm.slane %v239, 1
    %v243 = vperm.slane %v239, 2
    %v247 = vsel %vm171, %v200, 0
    %v250 = vsel %vm171, %v214, 0
    %v252 = vsel %vm171, %v211, 0
    %254 = vmatpush.msra.mxu0 0.0
    %255 = vmatpush.msra.mxu0 0.0
    %256 = vmatpush.msra.mxu0 0.0
    %257 = vmatpush.msra.mxu0 0.0
    %258 = vmatpush.msra.mxu0 0.0
    %259 = vmatpush.msra.mxu0 0.0
    %260 = vmatpush.msra.mxu0 0.0
    %261 = vmatpush.msra.mxu0 0.0
    %262 = vmatpush.msra.mxu0 %v236
    %263 = vmatpush.msra.mxu0 %v233
    %264 = vmatpush.msra.mxu0 %v230
    %265 = vmatpush.msra.mxu0 %v227
    %266 = vmatpush.msra.mxu0 %v224
    %267 = vmatpush.msra.mxu0 %v221
    %268 = vmatpush.msra.mxu0 %v218
    %269 = vmatpush.msra.mxu0 %v215
    %270 = vmatmul.f32.gmra.mxu0 %v247
    %v271 = vpop.f32.mrf.mxu0
    %v272 = vadd.f32 %v241, %v271
    %273 = vmatmul.f32.gmra.mxu0 %v250
    %v274 = vpop.f32.mrf.mxu0
    %v275 = vadd.f32 %v241, %v274
    %276 = vmatmul.f32.gmra.mxu0 %v252
    %v277 = vpop.f32.mrf.mxu0
    %v278 = vadd.f32 %v241, %v277
    %279 = vdwg.mxu0
    %280 = vmatpush.msra.mxu0 0.0
    %281 = vmatpush.msra.mxu0 0.0
    %282 = vmatpush.msra.mxu0 0.0
    %283 = vmatpush.msra.mxu0 0.0
    %284 = vmatpush.msra.mxu0 0.0
    %285 = vmatpush.msra.mxu0 0.0
    %286 = vmatpush.msra.mxu0 0.0
    %287 = vmatpush.msra.mxu0 0.0
    %288 = vmatpush.msra.mxu0 %v237
    %289 = vmatpush.msra.mxu0 %v234
    %290 = vmatpush.msra.mxu0 %v231
    %291 = vmatpush.msra.mxu0 %v228
    %292 = vmatpush.msra.mxu0 %v225
    %293 = vmatpush.msra.mxu0 %v222
    %294 = vmatpush.msra.mxu0 %v219
    %295 = vmatpush.msra.mxu0 %v216
    %296 = vmatmul.f32.gmra.mxu0 %v247
    %v297 = vpop.f32.mrf.mxu0
    %v298 = vadd.f32 %v242, %v297
    %299 = vmatmul.f32.gmra.mxu0 %v250
    %v300 = vpop.f32.mrf.mxu0
    %v301 = vadd.f32 %v242, %v300
    %302 = vmatmul.f32.gmra.mxu0 %v252
    %v303 = vpop.f32.mrf.mxu0
    %v304 = vadd.f32 %v242, %v303
    %305 = vdwg.mxu0
    %306 = vmatpush.msra.mxu0 0.0
    %307 = vmatpush.msra.mxu0 0.0
    %308 = vmatpush.msra.mxu0 0.0
    %309 = vmatpush.msra.mxu0 0.0
    %310 = vmatpush.msra.mxu0 0.0
    %311 = vmatpush.msra.mxu0 0.0
    %312 = vmatpush.msra.mxu0 0.0
    %313 = vmatpush.msra.mxu0 0.0
    %314 = vmatpush.msra.mxu0 %v238
    %315 = vmatpush.msra.mxu0 %v235
    %316 = vmatpush.msra.mxu0 %v232
    %317 = vmatpush.msra.mxu0 %v229
    %318 = vmatpush.msra.mxu0 %v226
    %319 = vmatpush.msra.mxu0 %v223
    %320 = vmatpush.msra.mxu0 %v220
    %321 = vmatpush.msra.mxu0 %v217
    %322 = vmatmul.f32.gmra.mxu0 %v247
    %v323 = vpop.f32.mrf.mxu0
    %v324 = vadd.f32 %v243, %v323
    %325 = vmatmul.f32.gmra.mxu0 %v250
    %v326 = vpop.f32.mrf.mxu0
    %v327 = vadd.f32 %v243, %v326
    %328 = vmatmul.f32.gmra.mxu0 %v252
    %v329 = vpop.f32.mrf.mxu0
    %v330 = vadd.f32 %v243, %v329
    %331 = vdwg.mxu0
    %v333 = vsel %vm141, %v272, 0
    %v336 = vsel %vm141, %v275, 0
    %v339 = vsel %vm141, %v278, 0
    %v342 = vsel %vm141, %v298, 0
    %v345 = vsel %vm141, %v301, 0
    %v348 = vsel %vm141, %v304, 0
    %350 = vmatpush.xpose.msra.mxu0 0.0
    %351 = vmatpush.xpose.msra.mxu0 0.0
    %352 = vmatpush.xpose.msra.mxu0 0.0
    %353 = vmatpush.xpose.msra.mxu0 0.0
    %354 = vmatpush.xpose.msra.mxu0 0.0
    %355 = vmatpush.xpose.msra.mxu0 0.0
    %356 = vmatpush.xpose.msra.mxu0 0.0
    %357 = vmatpush.xpose.msra.mxu0 0.0
    %358 = vmatpush.xpose.msra.mxu0 0.0
    %359 = vmatpush.xpose.msra.mxu0 0.0
    %360 = vmatpush.xpose.msra.mxu0 0.0
    %361 = vmatpush.xpose.msra.mxu0 0.0
    %362 = vmatpush.xpose.msra.mxu0 0.0
    %363 = vmatpush.xpose.msra.mxu0 %v348
    %364 = vmatpush.xpose.msra.mxu0 %v345
    %365 = vmatpush.xpose.msra.mxu0 %v342
    %366 = vmatmul.f32.gmra.mxu0 %v333
    %v367 = vpop.f32.mrf.mxu0
    %v368 = vadd.f32 0.0, %v367
    %369 = vmatmul.f32.gmra.mxu0 %v336
    %v370 = vpop.f32.mrf.mxu0
    %v371 = vadd.f32 0.0, %v370
    %372 = vmatmul.f32.gmra.mxu0 %v339
    %v373 = vpop.f32.mrf.mxu0
    %v374 = vadd.f32 0.0, %v373
    %375 = vdwg.mxu0
    %v376 = vmul.f32 %v368, 0.25
    %v377 = vmul.f32 %v371, 0.25
    %v378 = vmul.f32 %v374, 0.25
    %vm379 = vcmask 195584
    %v380 = vsel %vm379, %v376, -inf
    %381 = vmax.xlane.f32.xlu0 %v380
    %v382 = vpop.xlane.xlu0 %381
    %v383 = vsel %vm379, %v377, -inf
    %384 = vmax.xlane.f32.xlu0 %v383
    %v385 = vpop.xlane.xlu0 %384
    %v386 = vsel %vm379, %v378, -inf
    %387 = vmax.xlane.f32.xlu0 %v386
    %v388 = vpop.xlane.xlu0 %387
    %v389 = vsub.f32 %v376, %v382
    %v390 = vsub.f32 %v377, %v385
    %v391 = vsub.f32 %v378, %v388
    %v392 = vmul.f32 %v389, 1.442695
    %v393 = vpow.pop %v392
    %v394 = vmul.f32 %v390, 1.442695
    %v395 = vpow.pop %v394
    %v396 = vmul.f32 %v391, 1.442695
    %v397 = vpow.pop %v396
    %v398 = vsel %vm379, %v393, 0.0
    %399 = vadd.xlane.f32.xlu0 %v398
    %v400 = vpop.xlane.xlu0 %399
    %v401 = vsel %vm379, %v395, 0.0
    %402 = vadd.xlane.f32.xlu0 %v401
    %v403 = vpop.xlane.xlu0 %402
    %v404 = vsel %vm379, %v397, 0.0
    %405 = vadd.xlane.f32.xlu0 %v404
    %v406 = vpop.xlane.xlu0 %405
    %v407 = vrcp.pop %v400
    %v408 = vrcp.pop %v403
    %v409 = vrcp.pop %v406
    %v410 = vmul.f32 %v393, %v407
    %v411 = vmul.f32 %v395, %v408
    %v412 = vmul.f32 %v397, %v409
    %v414 = vsel %vm379, %v410, 0
    %v417 = vsel %vm379, %v411, 0
    %v420 = vsel %vm379, %v412, 0
    %422 = vmatpush.msra.mxu0 0.0
    %423 = vmatpush.msra.mxu0 0.0
    %424 = vmatpush.msra.mxu0 0.0
    %425 = vmatpush.msra.mxu0 0.0
    %426 = vmatpush.msra.mxu0 0.0
    %427 = vmatpush.msra.mxu0 0.0
    %428 = vmatpush.msra.mxu0 0.0
    %429 = vmatpush.msra.mxu0 0.0
    %430 = vmatpush.msra.mxu0 0.0
    %431 = vmatpush.msra.mxu0 0.0
    %432 = vmatpush.msra.mxu0 0.0
    %433 = vmatpush.msra.mxu0 0.0
    %434 = vmatpush.msra.mxu0 0.0
    %435 = vmatpush.msra.mxu0 %v330
    %436 = vmatpush.msra.mxu0 %v327
    %437 = vmatpush.msra.mxu0 %v324
    %438 = vmatmul.f32.gmra.mxu0 %v414
    %v439 = vpop.f32.mrf.mxu0
    %v440 = vadd.f32 0.0, %v439
    %441 = vmatmul.f32.gmra.mxu0 %v417
    %v442 = vpop.f32.mrf.mxu0
    %v443 = vadd.f32 0.0, %v442
    %444 = vmatmul.f32.gmra.mxu0 %v420
    %v445 = vpop.f32.mrf.mxu0
    %v446 = vadd.f32 0.0, %v445
    %447 = vdwg.mxu0
    %448 = vrot.lane.b32.xlu0 %v272, 112
    %v449 = vpop.permute.xlu0 %448
    %450 = vrot.lane.b32.xlu0 %v275, 112
    %v451 = vpop.permute.xlu0 %450
    %452 = vrot.lane.b32.xlu0 %v278, 112
    %v453 = vpop.permute.xlu0 %452
    %454 = vrot.lane.b32.xlu0 %v298, 112
    %v455 = vpop.permute.xlu0 %454
    %456 = vrot.lane.b32.xlu0 %v301, 112
    %v457 = vpop.permute.xlu0 %456
    %458 = vrot.lane.b32.xlu0 %v304, 112
    %v459 = vpop.permute.xlu0 %458
    %v460 = vsel %vm141, %v449, 0
    %v462 = vsel %vm141, %v451, 0
    %v464 = vsel %vm141, %v453, 0
    %v466 = vsel %vm141, %v455, 0
    %v468 = vsel %vm141, %v457, 0
    %v470 = vsel %vm141, %v459, 0
    %472 = vmatpush.xpose.msra.mxu0 0.0
    %473 = vmatpush.xpose.msra.mxu0 0.0
    %474 = vmatpush.xpose.msra.mxu0 0.0
    %475 = vmatpush.xpose.msra.mxu0 0.0
    %476 = vmatpush.xpose.msra.mxu0 0.0
    %477 = vmatpush.xpose.msra.mxu0 0.0
    %478 = vmatpush.xpose.msra.mxu0 0.0
    %479 = vmatpush.xpose.msra.mxu0 0.0
    %480 = vmatpush.xpose.msra.mxu0 0.0
    %481 = vmatpush.xpose.msra.mxu0 0.0
    %482 = vmatpush.xpose.msra.mxu0 0.0
    %483 = vmatpush.xpose.msra.mxu0 0.0
    %484 = vmatpush.xpose.msra.mxu0 0.0
    %485 = vmatpush.xpose.msra.mxu0 %v470
    %486 = vmatpush.xpose.msra.mxu0 %v468
    %487 = vmatpush.xpose.msra.mxu0 %v466
    %488 = vmatmul.f32.gmra.mxu0 %v460
    %v489 = vpop.f32.mrf.mxu0
    %v490 = vadd.f32 0.0, %v489
    %491 = vmatmul.f32.gmra.mxu0 %v462
    %v492 = vpop.f32.mrf.mxu0
    %v493 = vadd.f32 0.0, %v492
    %494 = vmatmul.f32.gmra.mxu0 %v464
    %v495 = vpop.f32.mrf.mxu0
    %v496 = vadd.f32 0.0, %v495
    %497 = vdwg.mxu0
    %v498 = vmul.f32 %v490, 0.25
    %v499 = vmul.f32 %v493, 0.25
    %v500 = vmul.f32 %v496, 0.25
    %v501 = vsel %vm379, %v498, -inf
    %502 = vmax.xlane.f32.xlu0 %v501
    %v503 = vpop.xlane.xlu0 %502
    %v504 = vsel %vm379, %v499, -inf
    %505 = vmax.xlane.f32.xlu0 %v504
    %v506 = vpop.xlane.xlu0 %505
    %v507 = vsel %vm379, %v500, -inf
    %508 = vmax.xlane.f32.xlu0 %v507
    %v509 = vpop.xlane.xlu0 %508
    %v510 = vsub.f32 %v498, %v503
    %v511 = vsub.f32 %v499, %v506
    %v512 = vsub.f32 %v500, %v509
    %v513 = vmul.f32 %v510, 1.442695
    %v514 = vpow.pop %v513
    %v515 = vmul.f32 %v511, 1.442695
    %v516 = vpow.pop %v515
    %v517 = vmul.f32 %v512, 1.442695
    %v518 = vpow.pop %v517
    %v519 = vsel %vm379, %v514, 0.0
    %520 = vadd.xlane.f32.xlu0 %v519
    %v521 = vpop.xlane.xlu0 %520
    %v522 = vsel %vm379, %v516, 0.0
    %523 = vadd.xlane.f32.xlu0 %v522
    %v524 = vpop.xlane.xlu0 %523
    %v525 = vsel %vm379, %v518, 0.0
    %526 = vadd.xlane.f32.xlu0 %v525
    %v527 = vpop.xlane.xlu0 %526
    %v528 = vrcp.pop %v521
    %v529 = vrcp.pop %v524
    %v530 = vrcp.pop %v527
    %v531 = vmul.f32 %v514, %v528
    %v532 = vmul.f32 %v516, %v529
    %v533 = vmul.f32 %v518, %v530
    %537 = vrot.lane.b32.xlu0 %v324, 112
    %v538 = vpop.permute.xlu0 %537
    %539 = vrot.lane.b32.xlu0 %v327, 112
    %v540 = vpop.permute.xlu0 %539
    %541 = vrot.lane.b32.xlu0 %v330, 112
    %v542 = vpop.permute.xlu0 %541
    %v547 = vsel %vm379, %v531, 0
    %v550 = vsel %vm379, %v532, 0
    %v553 = vsel %vm379, %v533, 0
    %555 = vmatpush.msra.mxu0 0.0
    %556 = vmatpush.msra.mxu0 0.0
    %557 = vmatpush.msra.mxu0 0.0
    %558 = vmatpush.msra.mxu0 0.0
    %559 = vmatpush.msra.mxu0 0.0
    %560 = vmatpush.msra.mxu0 0.0
    %561 = vmatpush.msra.mxu0 0.0
    %562 = vmatpush.msra.mxu0 0.0
    %563 = vmatpush.msra.mxu0 0.0
    %564 = vmatpush.msra.mxu0 0.0
    %565 = vmatpush.msra.mxu0 0.0
    %566 = vmatpush.msra.mxu0 0.0
    %567 = vmatpush.msra.mxu0 0.0
    %568 = vmatpush.msra.mxu0 %v542
    %569 = vmatpush.msra.mxu0 %v540
    %570 = vmatpush.msra.mxu0 %v538
    %571 = vmatmul.f32.gmra.mxu0 %v547
    %v572 = vpop.f32.mrf.mxu0
    %v573 = vadd.f32 0.0, %v572
    %574 = vmatmul.f32.gmra.mxu0 %v550
    %v575 = vpop.f32.mrf.mxu0
    %v576 = vadd.f32 0.0, %v575
    %577 = vmatmul.f32.gmra.mxu0 %v553
    %v578 = vpop.f32.mrf.mxu0
    %v579 = vadd.f32 0.0, %v578
    %580 = vdwg.mxu0
    %581 = vrot.lane.b32.xlu0 %v272, 96
    %v582 = vpop.permute.xlu0 %581
    %583 = vrot.lane.b32.xlu0 %v275, 96
    %v584 = vpop.permute.xlu0 %583
    %585 = vrot.lane.b32.xlu0 %v278, 96
    %v586 = vpop.permute.xlu0 %585
    %587 = vrot.lane.b32.xlu0 %v298, 96
    %v588 = vpop.permute.xlu0 %587
    %589 = vrot.lane.b32.xlu0 %v301, 96
    %v590 = vpop.permute.xlu0 %589
    %591 = vrot.lane.b32.xlu0 %v304, 96
    %v592 = vpop.permute.xlu0 %591
    %v593 = vsel %vm141, %v582, 0
    %v595 = vsel %vm141, %v584, 0
    %v597 = vsel %vm141, %v586, 0
    %v599 = vsel %vm141, %v588, 0
    %v601 = vsel %vm141, %v590, 0
    %v603 = vsel %vm141, %v592, 0
    %605 = vmatpush.xpose.msra.mxu0 0.0
    %606 = vmatpush.xpose.msra.mxu0 0.0
    %607 = vmatpush.xpose.msra.mxu0 0.0
    %608 = vmatpush.xpose.msra.mxu0 0.0
    %609 = vmatpush.xpose.msra.mxu0 0.0
    %610 = vmatpush.xpose.msra.mxu0 0.0
    %611 = vmatpush.xpose.msra.mxu0 0.0
    %612 = vmatpush.xpose.msra.mxu0 0.0
    %613 = vmatpush.xpose.msra.mxu0 0.0
    %614 = vmatpush.xpose.msra.mxu0 0.0
    %615 = vmatpush.xpose.msra.mxu0 0.0
    %616 = vmatpush.xpose.msra.mxu0 0.0
    %617 = vmatpush.xpose.msra.mxu0 0.0
    %618 = vmatpush.xpose.msra.mxu0 %v603
    %619 = vmatpush.xpose.msra.mxu0 %v601
    %620 = vmatpush.xpose.msra.mxu0 %v599
    %621 = vmatmul.f32.gmra.mxu0 %v593
    %v622 = vpop.f32.mrf.mxu0
    %v623 = vadd.f32 0.0, %v622
    %624 = vmatmul.f32.gmra.mxu0 %v595
    %v625 = vpop.f32.mrf.mxu0
    %v626 = vadd.f32 0.0, %v625
    %627 = vmatmul.f32.gmra.mxu0 %v597
    %v628 = vpop.f32.mrf.mxu0
    %v629 = vadd.f32 0.0, %v628
    %630 = vdwg.mxu0
    %v631 = vmul.f32 %v623, 0.25
    %v632 = vmul.f32 %v626, 0.25
    %v633 = vmul.f32 %v629, 0.25
    %v634 = vsel %vm379, %v631, -inf
    %635 = vmax.xlane.f32.xlu0 %v634
    %v636 = vpop.xlane.xlu0 %635
    %v637 = vsel %vm379, %v632, -inf
    %638 = vmax.xlane.f32.xlu0 %v637
    %v639 = vpop.xlane.xlu0 %638
    %v640 = vsel %vm379, %v633, -inf
    %641 = vmax.xlane.f32.xlu0 %v640
    %v642 = vpop.xlane.xlu0 %641
    %v643 = vsub.f32 %v631, %v636
    %v644 = vsub.f32 %v632, %v639
    %v645 = vsub.f32 %v633, %v642
    %v646 = vmul.f32 %v643, 1.442695
    %v647 = vpow.pop %v646
    %v648 = vmul.f32 %v644, 1.442695
    %v649 = vpow.pop %v648
    %v650 = vmul.f32 %v645, 1.442695
    %v651 = vpow.pop %v650
    %v652 = vsel %vm379, %v647, 0.0
    %653 = vadd.xlane.f32.xlu0 %v652
    %v654 = vpop.xlane.xlu0 %653
    %v655 = vsel %vm379, %v649, 0.0
    %656 = vadd.xlane.f32.xlu0 %v655
    %v657 = vpop.xlane.xlu0 %656
    %v658 = vsel %vm379, %v651, 0.0
    %659 = vadd.xlane.f32.xlu0 %v658
    %v660 = vpop.xlane.xlu0 %659
    %v661 = vrcp.pop %v654
    %v662 = vrcp.pop %v657
    %v663 = vrcp.pop %v660
    %v664 = vmul.f32 %v647, %v661
    %v665 = vmul.f32 %v649, %v662
    %v666 = vmul.f32 %v651, %v663
    %667 = vrot.lane.b32.xlu0 %v324, 96
    %v668 = vpop.permute.xlu0 %667
    %669 = vrot.lane.b32.xlu0 %v327, 96
    %v670 = vpop.permute.xlu0 %669
    %671 = vrot.lane.b32.xlu0 %v330, 96
    %v672 = vpop.permute.xlu0 %671
    %v677 = vsel %vm379, %v664, 0
    %v680 = vsel %vm379, %v665, 0
    %v683 = vsel %vm379, %v666, 0
    %685 = vmatpush.msra.mxu0 0.0
    %686 = vmatpush.msra.mxu0 0.0
    %687 = vmatpush.msra.mxu0 0.0
    %688 = vmatpush.msra.mxu0 0.0
    %689 = vmatpush.msra.mxu0 0.0
    %690 = vmatpush.msra.mxu0 0.0
    %691 = vmatpush.msra.mxu0 0.0
    %692 = vmatpush.msra.mxu0 0.0
    %693 = vmatpush.msra.mxu0 0.0
    %694 = vmatpush.msra.mxu0 0.0
    %695 = vmatpush.msra.mxu0 0.0
    %696 = vmatpush.msra.mxu0 0.0
    %697 = vmatpush.msra.mxu0 0.0
    %698 = vmatpush.msra.mxu0 %v672
    %699 = vmatpush.msra.mxu0 %v670
    %700 = vmatpush.msra.mxu0 %v668
    %701 = vmatmul.f32.gmra.mxu0 %v677
    %v702 = vpop.f32.mrf.mxu0
    %v703 = vadd.f32 0.0, %v702
    %704 = vmatmul.f32.gmra.mxu0 %v680
    %v705 = vpop.f32.mrf.mxu0
    %v706 = vadd.f32 0.0, %v705
    %707 = vmatmul.f32.gmra.mxu0 %v683
    %v708 = vpop.f32.mrf.mxu0
    %v709 = vadd.f32 0.0, %v708
    %710 = vdwg.mxu0
    %711 = vrot.lane.b32.xlu0 %v272, 80
    %v712 = vpop.permute.xlu0 %711
    %713 = vrot.lane.b32.xlu0 %v275, 80
    %v714 = vpop.permute.xlu0 %713
    %715 = vrot.lane.b32.xlu0 %v278, 80
    %v716 = vpop.permute.xlu0 %715
    %717 = vrot.lane.b32.xlu0 %v298, 80
    %v718 = vpop.permute.xlu0 %717
    %719 = vrot.lane.b32.xlu0 %v301, 80
    %v720 = vpop.permute.xlu0 %719
    %721 = vrot.lane.b32.xlu0 %v304, 80
    %v722 = vpop.permute.xlu0 %721
    %v723 = vsel %vm141, %v712, 0
    %v725 = vsel %vm141, %v714, 0
    %v727 = vsel %vm141, %v716, 0
    %v729 = vsel %vm141, %v718, 0
    %v731 = vsel %vm141, %v720, 0
    %v733 = vsel %vm141, %v722, 0
    %735 = vmatpush.xpose.msra.mxu0 0.0
    %736 = vmatpush.xpose.msra.mxu0 0.0
    %737 = vmatpush.xpose.msra.mxu0 0.0
    %738 = vmatpush.xpose.msra.mxu0 0.0
    %739 = vmatpush.xpose.msra.mxu0 0.0
    %740 = vmatpush.xpose.msra.mxu0 0.0
    %741 = vmatpush.xpose.msra.mxu0 0.0
    %742 = vmatpush.xpose.msra.mxu0 0.0
    %743 = vmatpush.xpose.msra.mxu0 0.0
    %744 = vmatpush.xpose.msra.mxu0 0.0
    %745 = vmatpush.xpose.msra.mxu0 0.0
    %746 = vmatpush.xpose.msra.mxu0 0.0
    %747 = vmatpush.xpose.msra.mxu0 0.0
    %748 = vmatpush.xpose.msra.mxu0 %v733
    %749 = vmatpush.xpose.msra.mxu0 %v731
    %750 = vmatpush.xpose.msra.mxu0 %v729
    %751 = vmatmul.f32.gmra.mxu0 %v723
    %v752 = vpop.f32.mrf.mxu0
    %v753 = vadd.f32 0.0, %v752
    %754 = vmatmul.f32.gmra.mxu0 %v725
    %v755 = vpop.f32.mrf.mxu0
    %v756 = vadd.f32 0.0, %v755
    %757 = vmatmul.f32.gmra.mxu0 %v727
    %v758 = vpop.f32.mrf.mxu0
    %v759 = vadd.f32 0.0, %v758
    %760 = vdwg.mxu0
    %v761 = vmul.f32 %v753, 0.25
    %v762 = vmul.f32 %v756, 0.25
    %v763 = vmul.f32 %v759, 0.25
    %v764 = vsel %vm379, %v761, -inf
    %765 = vmax.xlane.f32.xlu0 %v764
    %v766 = vpop.xlane.xlu0 %765
    %v767 = vsel %vm379, %v762, -inf
    %768 = vmax.xlane.f32.xlu0 %v767
    %v769 = vpop.xlane.xlu0 %768
    %v770 = vsel %vm379, %v763, -inf
    %771 = vmax.xlane.f32.xlu0 %v770
    %v772 = vpop.xlane.xlu0 %771
    %v773 = vsub.f32 %v761, %v766
    %v774 = vsub.f32 %v762, %v769
    %v775 = vsub.f32 %v763, %v772
    %v776 = vmul.f32 %v773, 1.442695
    %v777 = vpow.pop %v776
    %v778 = vmul.f32 %v774, 1.442695
    %v779 = vpow.pop %v778
    %v780 = vmul.f32 %v775, 1.442695
    %v781 = vpow.pop %v780
    %v782 = vsel %vm379, %v777, 0.0
    %783 = vadd.xlane.f32.xlu0 %v782
    %v784 = vpop.xlane.xlu0 %783
    %v785 = vsel %vm379, %v779, 0.0
    %786 = vadd.xlane.f32.xlu0 %v785
    %v787 = vpop.xlane.xlu0 %786
    %v788 = vsel %vm379, %v781, 0.0
    %789 = vadd.xlane.f32.xlu0 %v788
    %v790 = vpop.xlane.xlu0 %789
    %v791 = vrcp.pop %v784
    %v792 = vrcp.pop %v787
    %v793 = vrcp.pop %v790
    %v794 = vmul.f32 %v777, %v791
    %v795 = vmul.f32 %v779, %v792
    %v796 = vmul.f32 %v781, %v793
    %797 = vrot.lane.b32.xlu0 %v324, 80
    %v798 = vpop.permute.xlu0 %797
    %799 = vrot.lane.b32.xlu0 %v327, 80
    %v800 = vpop.permute.xlu0 %799
    %801 = vrot.lane.b32.xlu0 %v330, 80
    %v802 = vpop.permute.xlu0 %801
    %v807 = vsel %vm379, %v794, 0
    %v810 = vsel %vm379, %v795, 0
    %v813 = vsel %vm379, %v796, 0
    %815 = vmatpush.msra.mxu0 0.0
    %816 = vmatpush.msra.mxu0 0.0
    %817 = vmatpush.msra.mxu0 0.0
    %818 = vmatpush.msra.mxu0 0.0
    %819 = vmatpush.msra.mxu0 0.0
    %820 = vmatpush.msra.mxu0 0.0
    %821 = vmatpush.msra.mxu0 0.0
    %822 = vmatpush.msra.mxu0 0.0
    %823 = vmatpush.msra.mxu0 0.0
    %824 = vmatpush.msra.mxu0 0.0
    %825 = vmatpush.msra.mxu0 0.0
    %826 = vmatpush.msra.mxu0 0.0
    %827 = vmatpush.msra.mxu0 0.0
    %828 = vmatpush.msra.mxu0 %v802
    %829 = vmatpush.msra.mxu0 %v800
    %830 = vmatpush.msra.mxu0 %v798
    %831 = vmatmul.f32.gmra.mxu0 %v807
    %v832 = vpop.f32.mrf.mxu0
    %v833 = vadd.f32 0.0, %v832
    %834 = vmatmul.f32.gmra.mxu0 %v810
    %v835 = vpop.f32.mrf.mxu0
    %v836 = vadd.f32 0.0, %v835
    %837 = vmatmul.f32.gmra.mxu0 %v813
    %v838 = vpop.f32.mrf.mxu0
    %v839 = vadd.f32 0.0, %v838
    %840 = vdwg.mxu0
    %844 = vrot.lane.b32.xlu0 %v573, 16
    %v845 = vpop.permute.xlu0 %844
    %846 = vrot.lane.b32.xlu0 %v576, 16
    %v847 = vpop.permute.xlu0 %846
    %848 = vrot.lane.b32.xlu0 %v579, 16
    %v849 = vpop.permute.xlu0 %848
    %856 = vrot.lane.b32.xlu0 %v703, 32
    %v857 = vpop.permute.xlu0 %856
    %858 = vrot.lane.b32.xlu0 %v706, 32
    %v859 = vpop.permute.xlu0 %858
    %860 = vrot.lane.b32.xlu0 %v709, 32
    %v861 = vpop.permute.xlu0 %860
    %868 = vrot.lane.b32.xlu0 %v833, 48
    %v869 = vpop.permute.xlu0 %868
    %870 = vrot.lane.b32.xlu0 %v836, 48
    %v871 = vpop.permute.xlu0 %870
    %872 = vrot.lane.b32.xlu0 %v839, 48
    %v873 = vpop.permute.xlu0 %872
    %v877 = vsel %vm141, %v440, %v845
    %v878 = vsel %vm141, %v443, %v847
    %v879 = vsel %vm141, %v446, %v849
    %vm880 = vcmask 261120
    %v881 = vsel %vm880, %v877, %v857
    %v882 = vsel %vm880, %v878, %v859
    %v883 = vsel %vm880, %v879, %v861
    %vm884 = vcmask 392192
    %v885 = vsel %vm884, %v881, %v869
    %v886 = vsel %vm884, %v882, %v871
    %v887 = vsel %vm884, %v883, %v873
    %v888 = vld [vmem:[%s17] sm:$0xff]
    %v889 = vld [vmem:[%s17 + $0x8] sm:$0xff]
    %v890 = vld [vmem:[%s17 + $0x10] sm:$0xff]
    %v891 = vld [vmem:[%s17 + $0x18] sm:$0xff]
    %v892 = vld [vmem:[%s17 + $0x20] sm:$0xff]
    %v893 = vld [vmem:[%s17 + $0x28] sm:$0xff]
    %v894 = vld [vmem:[%s17 + $0x30] sm:$0xff]
    %v895 = vld [vmem:[%s17 + $0x38] sm:$0xff]
    %v896 = vld [vmem:[%s19] sm:$0x1]
    %v898 = vperm.slane %v896, 0
    %v901 = vsel %vm171, %v885, 0
    %v904 = vsel %vm171, %v886, 0
    %v907 = vsel %vm171, %v887, 0
    %909 = vmatpush.msra.mxu0 0.0
    %910 = vmatpush.msra.mxu0 0.0
    %911 = vmatpush.msra.mxu0 0.0
    %912 = vmatpush.msra.mxu0 0.0
    %913 = vmatpush.msra.mxu0 0.0
    %914 = vmatpush.msra.mxu0 0.0
    %915 = vmatpush.msra.mxu0 0.0
    %916 = vmatpush.msra.mxu0 0.0
    %917 = vmatpush.msra.mxu0 %v895
    %918 = vmatpush.msra.mxu0 %v894
    %919 = vmatpush.msra.mxu0 %v893
    %920 = vmatpush.msra.mxu0 %v892
    %921 = vmatpush.msra.mxu0 %v891
    %922 = vmatpush.msra.mxu0 %v890
    %923 = vmatpush.msra.mxu0 %v889
    %924 = vmatpush.msra.mxu0 %v888
    %925 = vmatmul.f32.gmra.mxu0 %v901
    %v926 = vpop.f32.mrf.mxu0
    %v927 = vadd.f32 %v898, %v926
    %928 = vmatmul.f32.gmra.mxu0 %v904
    %v929 = vpop.f32.mrf.mxu0
    %v930 = vadd.f32 %v898, %v929
    %931 = vmatmul.f32.gmra.mxu0 %v907
    %v932 = vpop.f32.mrf.mxu0
    %v933 = vadd.f32 %v898, %v932
    %934 = vdwg.mxu0
    %v935 = vadd.f32 %v200, %v927
    %v936 = vadd.f32 %v214, %v930
    %v937 = vadd.f32 %v211, %v933
    %v938 = vld [vmem:[%s21] sm:$0x1]
    %v939 = vld [vmem:[%s23] sm:$0x1]
    %v940 = vsel %vm171, %v935, 0.0
    %941 = vadd.xlane.f32.xlu0 %v940
    %v942 = vpop.xlane.xlu0 %941
    %v943 = vsel %vm171, %v936, 0.0
    %944 = vadd.xlane.f32.xlu0 %v943
    %v945 = vpop.xlane.xlu0 %944
    %v946 = vsel %vm171, %v937, 0.0
    %947 = vadd.xlane.f32.xlu0 %v946
    %v948 = vpop.xlane.xlu0 %947
    %v949 = vrcp.pop 64.0
    %v950 = vmul.f32 64.0, %v949
    %v951 = vsub.f32 1.0, %v950
    %v952 = vmul.f32 %v949, %v951
    %v953 = vadd.f32 %v949, %v952
    %vm954 = vweird.f32 %v949
    %v955 = vsel %vm954, %v949, %v953
    %v956 = vmul.f32 %v942, %v955
    %v957 = vmul.f32 %v945, %v955
    %v958 = vmul.f32 %v948, %v955
    %v959 = vsub.f32 %v935, %v956
    %v960 = vsub.f32 %v936, %v957
    %v961 = vsub.f32 %v937, %v958
    %v962 = vmul.f32 %v959, %v959
    %v963 = vmul.f32 %v960, %v960
    %v964 = vmul.f32 %v961, %v961
    %v965 = vsel %vm171, %v962, 0.0
    %966 = vadd.xlane.f32.xlu0 %v965
    %v967 = vpop.xlane.xlu0 %966
    %v968 = vsel %vm171, %v963, 0.0
    %969 = vadd.xlane.f32.xlu0 %v968
    %v970 = vpop.xlane.xlu0 %969
    %v971 = vsel %vm171, %v964, 0.0
    %972 = vadd.xlane.f32.xlu0 %v971
    %v973 = vpop.xlane.xlu0 %972
    %v974 = vmul.f32 %v967, %v955
    %v975 = vmul.f32 %v970, %v955
    %v976 = vmul.f32 %v973, %v955
    %v977 = vadd.f32 %v974, 1e-05
    %v978 = vadd.f32 %v975, 1e-05
    %v979 = vadd.f32 %v976, 1e-05
    %v980 = vrsqrt.pop %v977
    %v981 = vmul.f32 %v980, %v977
    %v982 = vmul.f32 %v981, %v980
    %v983 = vmul.f32 0.5, %v982
    %v984 = vsub.f32 1.5, %v983
    %v985 = vmul.f32 %v980, %v984
    %vm986 = vweird.f32 %v977
    %vm987 = vweird.f32 %v980
    %vm988 = vmor %vm986, %vm987
    %v989 = vsel %vm988, %v980, %v985
    %v990 = vrsqrt.pop %v978
    %v991 = vmul.f32 %v990, %v978
    %v992 = vmul.f32 %v991, %v990
    %v993 = vmul.f32 0.5, %v992
    %v994 = vsub.f32 1.5, %v993
    %v995 = vmul.f32 %v990, %v994
    %vm996 = vweird.f32 %v978
    %vm997 = vweird.f32 %v990
    %vm998 = vmor %vm996, %vm997
    %v999 = vsel %vm998, %v990, %v995
    %v1000 = vrsqrt.pop %v979
    %v1001 = vmul.f32 %v1000, %v979
    %v1002 = vmul.f32 %v1001, %v1000
    %v1003 = vmul.f32 0.5, %v1002
    %v1004 = vsub.f32 1.5, %v1003
    %v1005 = vmul.f32 %v1000, %v1004
    %vm1006 = vweird.f32 %v979
    %vm1007 = vweird.f32 %v1000
    %vm1008 = vmor %vm1006, %vm1007
    %v1009 = vsel %vm1008, %v1000, %v1005
    %v1010 = vmul.f32 %v959, %v989
    %v1011 = vmul.f32 %v960, %v999
    %v1012 = vmul.f32 %v961, %v1009
    %v1014 = vperm.slane %v938, 0
    %v1016 = vmul.f32 %v1010, %v1014
    %v1017 = vmul.f32 %v1011, %v1014
    %v1018 = vmul.f32 %v1012, %v1014
    %v1020 = vperm.slane %v939, 0
    %v1022 = vadd.f32 %v1016, %v1020
    %v1023 = vadd.f32 %v1017, %v1020
    %v1024 = vadd.f32 %v1018, %v1020
    %v1025 = vpack.c.bf16 %v1023, %v1022
    %v1026 = vpack.c.bf16 %v1024, %v1024
    %v1027 = vld [vmem:[%s25] sm:$0xff]
    %v1028 = vld [vmem:[%s25 + $0x8] sm:$0xff]
    %v1029 = vld [vmem:[%s25 + $0x40] sm:$0xff]
    %v1030 = vld [vmem:[%s25 + $0x48] sm:$0xff]
    %v1031 = vld [vmem:[%s25 + $0x80] sm:$0xff]
    %v1032 = vld [vmem:[%s25 + $0x88] sm:$0xff]
    %v1033 = vld [vmem:[%s25 + $0xc0] sm:$0xff]
    %v1034 = vld [vmem:[%s25 + $0xc8] sm:$0xff]
    %v1035 = vld [vmem:[%s25 + $0x100] sm:$0xff]
    %v1036 = vld [vmem:[%s25 + $0x108] sm:$0xff]
    %v1037 = vld [vmem:[%s25 + $0x140] sm:$0xff]
    %v1038 = vld [vmem:[%s25 + $0x148] sm:$0xff]
    %v1039 = vld [vmem:[%s25 + $0x180] sm:$0xff]
    %v1040 = vld [vmem:[%s25 + $0x188] sm:$0xff]
    %v1041 = vld [vmem:[%s25 + $0x1c0] sm:$0xff]
    %v1042 = vld [vmem:[%s25 + $0x1c8] sm:$0xff]
    %v1043 = vld [vmem:[%s27] sm:$0xf]
    %v1045 = vperm.slane %v1043, 0
    %v1046 = vperm.slane %v1043, 1
    %v1047 = vperm.slane %v1043, 2
    %v1048 = vperm.slane %v1043, 3
    %v1069 = vunpack.c.l.b16 %v1027
    %v1070 = vunpack.c.h.b16 %v1027
    %v1071 = vunpack.c.l.b16 %v1028
    %v1072 = vunpack.c.h.b16 %v1028
    %v1073 = vunpack.c.l.b16 %v1029
    %v1074 = vunpack.c.h.b16 %v1029
    %v1075 = vunpack.c.l.b16 %v1030
    %v1076 = vunpack.c.h.b16 %v1030
    %v1077 = vunpack.c.l.b16 %v1031
    %v1078 = vunpack.c.h.b16 %v1031
    %v1079 = vunpack.c.l.b16 %v1032
    %v1080 = vunpack.c.h.b16 %v1032
    %v1081 = vunpack.c.l.b16 %v1033
    %v1082 = vunpack.c.h.b16 %v1033
    %v1083 = vunpack.c.l.b16 %v1034
    %v1084 = vunpack.c.h.b16 %v1034
    %v1085 = vunpack.c.l.b16 %v1035
    %v1086 = vunpack.c.h.b16 %v1035
    %v1087 = vunpack.c.l.b16 %v1036
    %v1088 = vunpack.c.h.b16 %v1036
    %v1089 = vunpack.c.l.b16 %v1037
    %v1090 = vunpack.c.h.b16 %v1037
    %v1091 = vunpack.c.l.b16 %v1038
    %v1092 = vunpack.c.h.b16 %v1038
    %v1093 = vunpack.c.l.b16 %v1039
    %v1094 = vunpack.c.h.b16 %v1039
    %v1095 = vunpack.c.l.b16 %v1040
    %v1096 = vunpack.c.h.b16 %v1040
    %v1097 = vunpack.c.l.b16 %v1041
    %v1098 = vunpack.c.h.b16 %v1041
    %v1099 = vunpack.c.l.b16 %v1042
    %v1100 = vunpack.c.h.b16 %v1042
    %v1101 = vpack.c.b16 %v1073, %v1069
    %v1102 = vpack.c.b16 %v1074, %v1070
    %v1103 = vpack.c.b16 %v1075, %v1071
    %v1104 = vpack.c.b16 %v1076, %v1072
    %v1105 = vpack.c.b16 %v1081, %v1077
    %v1106 = vpack.c.b16 %v1082, %v1078
    %v1107 = vpack.c.b16 %v1083, %v1079
    %v1108 = vpack.c.b16 %v1084, %v1080
    %v1109 = vpack.c.b16 %v1089, %v1085
    %v1110 = vpack.c.b16 %v1090, %v1086
    %v1111 = vpack.c.b16 %v1091, %v1087
    %v1112 = vpack.c.b16 %v1092, %v1088
    %v1113 = vpack.c.b16 %v1097, %v1093
    %v1114 = vpack.c.b16 %v1098, %v1094
    %v1115 = vpack.c.b16 %v1099, %v1095
    %v1116 = vpack.c.b16 %v1100, %v1096
    %v1134 = vsel %vm171, %v1025, 0
    %v1137 = vsel %vm171, %v1026, 0
    %1139 = vmatpush.bf16.msra.mxu0 0
    %1140 = vmatpush.bf16.msra.mxu0 0
    %1141 = vmatpush.bf16.msra.mxu0 0
    %1142 = vmatpush.bf16.msra.mxu0 0
    %1143 = vmatpush.bf16.msra.mxu0 %v1113
    %1144 = vmatpush.bf16.msra.mxu0 %v1109
    %1145 = vmatpush.bf16.msra.mxu0 %v1105
    %1146 = vmatpush.bf16.msra.mxu0 %v1101
    %1147 = vmatmul.bf16.gmra.mxu0 %v1134
    %v1148 = vpop.f32.mrf.mxu0
    %v1149 = vadd.f32 %v1045, %v1148
    %v1150 = vpop.f32.mrf.mxu0
    %v1151 = vadd.f32 %v1045, %v1150
    %1152 = vmatmul.bf16.gmra.mxu0 %v1137
    %v1153 = vpop.f32.mrf.mxu0
    %v1154 = vadd.f32 %v1045, %v1153
    %v1155 = vpop.f32.mrf.mxu0
    %1156 = vdwg.mxu0
    %1157 = vmatpush.bf16.msra.mxu0 0
    %1158 = vmatpush.bf16.msra.mxu0 0
    %1159 = vmatpush.bf16.msra.mxu0 0
    %1160 = vmatpush.bf16.msra.mxu0 0
    %1161 = vmatpush.bf16.msra.mxu0 %v1114
    %1162 = vmatpush.bf16.msra.mxu0 %v1110
    %1163 = vmatpush.bf16.msra.mxu0 %v1106
    %1164 = vmatpush.bf16.msra.mxu0 %v1102
    %1165 = vmatmul.bf16.gmra.mxu0 %v1134
    %v1166 = vpop.f32.mrf.mxu0
    %v1167 = vadd.f32 %v1046, %v1166
    %v1168 = vpop.f32.mrf.mxu0
    %v1169 = vadd.f32 %v1046, %v1168
    %1170 = vmatmul.bf16.gmra.mxu0 %v1137
    %v1171 = vpop.f32.mrf.mxu0
    %v1172 = vadd.f32 %v1046, %v1171
    %v1173 = vpop.f32.mrf.mxu0
    %1174 = vdwg.mxu0
    %1175 = vmatpush.bf16.msra.mxu0 0
    %1176 = vmatpush.bf16.msra.mxu0 0
    %1177 = vmatpush.bf16.msra.mxu0 0
    %1178 = vmatpush.bf16.msra.mxu0 0
    %1179 = vmatpush.bf16.msra.mxu0 %v1115
    %1180 = vmatpush.bf16.msra.mxu0 %v1111
    %1181 = vmatpush.bf16.msra.mxu0 %v1107
    %1182 = vmatpush.bf16.msra.mxu0 %v1103
    %1183 = vmatmul.bf16.gmra.mxu0 %v1134
    %v1184 = vpop.f32.mrf.mxu0
    %v1185 = vadd.f32 %v1047, %v1184
    %v1186 = vpop.f32.mrf.mxu0
    %v1187 = vadd.f32 %v1047, %v1186
    %1188 = vmatmul.bf16.gmra.mxu0 %v1137
    %v1189 = vpop.f32.mrf.mxu0
    %v1190 = vadd.f32 %v1047, %v1189
    %v1191 = vpop.f32.mrf.mxu0
    %1192 = vdwg.mxu0
    %1193 = vmatpush.bf16.msra.mxu0 0
    %1194 = vmatpush.bf16.msra.mxu0 0
    %1195 = vmatpush.bf16.msra.mxu0 0
    %1196 = vmatpush.bf16.msra.mxu0 0
    %1197 = vmatpush.bf16.msra.mxu0 %v1116
    %1198 = vmatpush.bf16.msra.mxu0 %v1112
    %1199 = vmatpush.bf16.msra.mxu0 %v1108
    %1200 = vmatpush.bf16.msra.mxu0 %v1104
    %1201 = vmatmul.bf16.gmra.mxu0 %v1134
    %v1202 = vpop.f32.mrf.mxu0
    %v1203 = vadd.f32 %v1048, %v1202
    %v1204 = vpop.f32.mrf.mxu0
    %v1205 = vadd.f32 %v1048, %v1204
    %1206 = vmatmul.bf16.gmra.mxu0 %v1137
    %v1207 = vpop.f32.mrf.mxu0
    %v1208 = vadd.f32 %v1048, %v1207
    %v1209 = vpop.f32.mrf.mxu0
    %1210 = vdwg.mxu0
    %v1211 = vmax.f32 %v1149, 0.0
    %v1212 = vmax.f32 %v1167, 0.0
    %v1213 = vmax.f32 %v1185, 0.0
    %v1214 = vmax.f32 %v1203, 0.0
    %v1215 = vmax.f32 %v1151, 0.0
    %v1216 = vmax.f32 %v1169, 0.0
    %v1217 = vmax.f32 %v1187, 0.0
    %v1218 = vmax.f32 %v1205, 0.0
    %v1219 = vmax.f32 %v1154, 0.0
    %v1220 = vmax.f32 %v1172, 0.0
    %v1221 = vmax.f32 %v1190, 0.0
    %v1222 = vmax.f32 %v1208, 0.0
    %v1223 = vpack.c.bf16 %v1215, %v1211
    %v1224 = vpack.c.bf16 %v1216, %v1212
    %v1225 = vpack.c.bf16 %v1217, %v1213
    %v1226 = vpack.c.bf16 %v1218, %v1214
    %v1227 = vpack.c.bf16 %v1219, %v1219
    %v1228 = vpack.c.bf16 %v1220, %v1220
    %v1229 = vpack.c.bf16 %v1221, %v1221
    %v1230 = vpack.c.bf16 %v1222, %v1222
    %v1231 = vld [vmem:[%s29] sm:$0xf]
    %v1232 = vld [vmem:[%s29 + $0x4] sm:$0xf]
    %v1233 = vld [vmem:[%s29 + $0x8] sm:$0xf]
    %v1234 = vld [vmem:[%s29 + $0xc] sm:$0xf]
    %v1235 = vld [vmem:[%s29 + $0x10] sm:$0xf]
    %v1236 = vld [vmem:[%s29 + $0x14] sm:$0xf]
    %v1237 = vld [vmem:[%s29 + $0x18] sm:$0xf]
    %v1238 = vld [vmem:[%s29 + $0x1c] sm:$0xf]
    %v1239 = vld [vmem:[%s29 + $0x20] sm:$0xf]
    %v1240 = vld [vmem:[%s29 + $0x24] sm:$0xf]
    %v1241 = vld [vmem:[%s29 + $0x28] sm:$0xf]
    %v1242 = vld [vmem:[%s29 + $0x2c] sm:$0xf]
    %v1243 = vld [vmem:[%s29 + $0x30] sm:$0xf]
    %v1244 = vld [vmem:[%s29 + $0x34] sm:$0xf]
    %v1245 = vld [vmem:[%s29 + $0x38] sm:$0xf]
    %v1246 = vld [vmem:[%s29 + $0x3c] sm:$0xf]
    %v1247 = vld [vmem:[%s29 + $0x40] sm:$0xf]
    %v1248 = vld [vmem:[%s29 + $0x44] sm:$0xf]
    %v1249 = vld [vmem:[%s29 + $0x48] sm:$0xf]
    %v1250 = vld [vmem:[%s29 + $0x4c] sm:$0xf]
    %v1251 = vld [vmem:[%s29 + $0x50] sm:$0xf]
    %v1252 = vld [vmem:[%s29 + $0x54] sm:$0xf]
    %v1253 = vld [vmem:[%s29 + $0x58] sm:$0xf]
    %v1254 = vld [vmem:[%s29 + $0x5c] sm:$0xf]
    %v1255 = vld [vmem:[%s29 + $0x60] sm:$0xf]
    %v1256 = vld [vmem:[%s29 + $0x64] sm:$0xf]
    %v1257 = vld [vmem:[%s29 + $0x68] sm:$0xf]
    %v1258 = vld [vmem:[%s29 + $0x6c] sm:$0xf]
    %v1259 = vld [vmem:[%s29 + $0x70] sm:$0xf]
    %v1260 = vld [vmem:[%s29 + $0x74] sm:$0xf]
    %v1261 = vld [vmem:[%s29 + $0x78] sm:$0xf]
    %v1262 = vld [vmem:[%s29 + $0x7c] sm:$0xf]
    %v1263 = vld [vmem:[%s29 + $0x80] sm:$0xf]
    %v1264 = vld [vmem:[%s29 + $0x84] sm:$0xf]
    %v1265 = vld [vmem:[%s29 + $0x88] sm:$0xf]
    %v1266 = vld [vmem:[%s29 + $0x8c] sm:$0xf]
    %v1267 = vld [vmem:[%s29 + $0x90] sm:$0xf]
    %v1268 = vld [vmem:[%s29 + $0x94] sm:$0xf]
    %v1269 = vld [vmem:[%s29 + $0x98] sm:$0xf]
    %v1270 = vld [vmem:[%s29 + $0x9c] sm:$0xf]
    %v1271 = vld [vmem:[%s29 + $0xa0] sm:$0xf]
    %v1272 = vld [vmem:[%s29 + $0xa4] sm:$0xf]
    %v1273 = vld [vmem:[%s29 + $0xa8] sm:$0xf]
    %v1274 = vld [vmem:[%s29 + $0xac] sm:$0xf]
    %v1275 = vld [vmem:[%s29 + $0xb0] sm:$0xf]
    %v1276 = vld [vmem:[%s29 + $0xb4] sm:$0xf]
    %v1277 = vld [vmem:[%s29 + $0xb8] sm:$0xf]
    %v1278 = vld [vmem:[%s29 + $0xbc] sm:$0xf]
    %v1279 = vld [vmem:[%s29 + $0xc0] sm:$0xf]
    %v1280 = vld [vmem:[%s29 + $0xc4] sm:$0xf]
    %v1281 = vld [vmem:[%s29 + $0xc8] sm:$0xf]
    %v1282 = vld [vmem:[%s29 + $0xcc] sm:$0xf]
    %v1283 = vld [vmem:[%s29 + $0xd0] sm:$0xf]
    %v1284 = vld [vmem:[%s29 + $0xd4] sm:$0xf]
    %v1285 = vld [vmem:[%s29 + $0xd8] sm:$0xf]
    %v1286 = vld [vmem:[%s29 + $0xdc] sm:$0xf]
    %v1287 = vld [vmem:[%s29 + $0xe0] sm:$0xf]
    %v1288 = vld [vmem:[%s29 + $0xe4] sm:$0xf]
    %v1289 = vld [vmem:[%s29 + $0xe8] sm:$0xf]
    %v1290 = vld [vmem:[%s29 + $0xec] sm:$0xf]
    %v1291 = vld [vmem:[%s29 + $0xf0] sm:$0xf]
    %v1292 = vld [vmem:[%s29 + $0xf4] sm:$0xf]
    %v1293 = vld [vmem:[%s29 + $0xf8] sm:$0xf]
    %v1294 = vld [vmem:[%s29 + $0xfc] sm:$0xf]
    %v1295 = vld [vmem:[%s25 + $0x10] sm:$0xff]
    %v1296 = vld [vmem:[%s25 + $0x18] sm:$0xff]
    %v1297 = vld [vmem:[%s25 + $0x50] sm:$0xff]
    %v1298 = vld [vmem:[%s25 + $0x58] sm:$0xff]
    %v1299 = vld [vmem:[%s25 + $0x90] sm:$0xff]
    %v1300 = vld [vmem:[%s25 + $0x98] sm:$0xff]
    %v1301 = vld [vmem:[%s25 + $0xd0] sm:$0xff]
    %v1302 = vld [vmem:[%s25 + $0xd8] sm:$0xff]
    %v1303 = vld [vmem:[%s25 + $0x110] sm:$0xff]
    %v1304 = vld [vmem:[%s25 + $0x118] sm:$0xff]
    %v1305 = vld [vmem:[%s25 + $0x150] sm:$0xff]
    %v1306 = vld [vmem:[%s25 + $0x158] sm:$0xff]
    %v1307 = vld [vmem:[%s25 + $0x190] sm:$0xff]
    %v1308 = vld [vmem:[%s25 + $0x198] sm:$0xff]
    %v1309 = vld [vmem:[%s25 + $0x1d0] sm:$0xff]
    %v1310 = vld [vmem:[%s25 + $0x1d8] sm:$0xff]
    %v1311 = vld [vmem:[%s27 + $0x4] sm:$0xf]
    %v1313 = vperm.slane %v1311, 0
    %v1314 = vperm.slane %v1311, 1
    %v1315 = vperm.slane %v1311, 2
    %v1316 = vperm.slane %v1311, 3
    %v1337 = vunpack.c.l.b16 %v1295
    %v1338 = vunpack.c.h.b16 %v1295
    %v1339 = vunpack.c.l.b16 %v1296
    %v1340 = vunpack.c.h.b16 %v1296
    %v1341 = vunpack.c.l.b16 %v1297
    %v1342 = vunpack.c.h.b16 %v1297
    %v1343 = vunpack.c.l.b16 %v1298
    %v1344 = vunpack.c.h.b16 %v1298
    %v1345 = vunpack.c.l.b16 %v1299
    %v1346 = vunpack.c.h.b16 %v1299
    %v1347 = vunpack.c.l.b16 %v1300
    %v1348 = vunpack.c.h.b16 %v1300
    %v1349 = vunpack.c.l.b16 %v1301
    %v1350 = vunpack.c.h.b16 %v1301
    %v1351 = vunpack.c.l.b16 %v1302
    %v1352 = vunpack.c.h.b16 %v1302
    %v1353 = vunpack.c.l.b16 %v1303
    %v1354 = vunpack.c.h.b16 %v1303
    %v1355 = vunpack.c.l.b16 %v1304
    %v1356 = vunpack.c.h.b16 %v1304
    %v1357 = vunpack.c.l.b16 %v1305
    %v1358 = vunpack.c.h.b16 %v1305
    %v1359 = vunpack.c.l.b16 %v1306
    %v1360 = vunpack.c.h.b16 %v1306
    %v1361 = vunpack.c.l.b16 %v1307
    %v1362 = vunpack.c.h.b16 %v1307
    %v1363 = vunpack.c.l.b16 %v1308
    %v1364 = vunpack.c.h.b16 %v1308
    %v1365 = vunpack.c.l.b16 %v1309
    %v1366 = vunpack.c.h.b16 %v1309
    %v1367 = vunpack.c.l.b16 %v1310
    %v1368 = vunpack.c.h.b16 %v1310
    %v1369 = vpack.c.b16 %v1341, %v1337
    %v1370 = vpack.c.b16 %v1342, %v1338
    %v1371 = vpack.c.b16 %v1343, %v1339
    %v1372 = vpack.c.b16 %v1344, %v1340
    %v1373 = vpack.c.b16 %v1349, %v1345
    %v1374 = vpack.c.b16 %v1350, %v1346
    %v1375 = vpack.c.b16 %v1351, %v1347
    %v1376 = vpack.c.b16 %v1352, %v1348
    %v1377 = vpack.c.b16 %v1357, %v1353
    %v1378 = vpack.c.b16 %v1358, %v1354
    %v1379 = vpack.c.b16 %v1359, %v1355
    %v1380 = vpack.c.b16 %v1360, %v1356
    %v1381 = vpack.c.b16 %v1365, %v1361
    %v1382 = vpack.c.b16 %v1366, %v1362
    %v1383 = vpack.c.b16 %v1367, %v1363
    %v1384 = vpack.c.b16 %v1368, %v1364
    %1401 = vmatpush.bf16.msra.mxu0 0
    %1402 = vmatpush.bf16.msra.mxu0 0
    %1403 = vmatpush.bf16.msra.mxu0 0
    %1404 = vmatpush.bf16.msra.mxu0 0
    %1405 = vmatpush.bf16.msra.mxu0 %v1381
    %1406 = vmatpush.bf16.msra.mxu0 %v1377
    %1407 = vmatpush.bf16.msra.mxu0 %v1373
    %1408 = vmatpush.bf16.msra.mxu0 %v1369
    %1409 = vmatmul.bf16.gmra.mxu0 %v1134
    %v1410 = vpop.f32.mrf.mxu0
    %v1411 = vadd.f32 %v1313, %v1410
    %v1412 = vpop.f32.mrf.mxu0
    %v1413 = vadd.f32 %v1313, %v1412
    %1414 = vmatmul.bf16.gmra.mxu0 %v1137
    %v1415 = vpop.f32.mrf.mxu0
    %v1416 = vadd.f32 %v1313, %v1415
    %v1417 = vpop.f32.mrf.mxu0
    %1418 = vdwg.mxu0
    %1419 = vmatpush.bf16.msra.mxu0 0
    %1420 = vmatpush.bf16.msra.mxu0 0
    %1421 = vmatpush.bf16.msra.mxu0 0
    %1422 = vmatpush.bf16.msra.mxu0 0
    %1423 = vmatpush.bf16.msra.mxu0 %v1382
    %1424 = vmatpush.bf16.msra.mxu0 %v1378
    %1425 = vmatpush.bf16.msra.mxu0 %v1374
    %1426 = vmatpush.bf16.msra.mxu0 %v1370
    %1427 = vmatmul.bf16.gmra.mxu0 %v1134
    %v1428 = vpop.f32.mrf.mxu0
    %v1429 = vadd.f32 %v1314, %v1428
    %v1430 = vpop.f32.mrf.mxu0
    %v1431 = vadd.f32 %v1314, %v1430
    %1432 = vmatmul.bf16.gmra.mxu0 %v1137
    %v1433 = vpop.f32.mrf.mxu0
    %v1434 = vadd.f32 %v1314, %v1433
    %v1435 = vpop.f32.mrf.mxu0
    %1436 = vdwg.mxu0
    %1437 = vmatpush.bf16.msra.mxu0 0
    %1438 = vmatpush.bf16.msra.mxu0 0
    %1439 = vmatpush.bf16.msra.mxu0 0
    %1440 = vmatpush.bf16.msra.mxu0 0
    %1441 = vmatpush.bf16.msra.mxu0 %v1383
    %1442 = vmatpush.bf16.msra.mxu0 %v1379
    %1443 = vmatpush.bf16.msra.mxu0 %v1375
    %1444 = vmatpush.bf16.msra.mxu0 %v1371
    %1445 = vmatmul.bf16.gmra.mxu0 %v1134
    %v1446 = vpop.f32.mrf.mxu0
    %v1447 = vadd.f32 %v1315, %v1446
    %v1448 = vpop.f32.mrf.mxu0
    %v1449 = vadd.f32 %v1315, %v1448
    %1450 = vmatmul.bf16.gmra.mxu0 %v1137
    %v1451 = vpop.f32.mrf.mxu0
    %v1452 = vadd.f32 %v1315, %v1451
    %v1453 = vpop.f32.mrf.mxu0
    %1454 = vdwg.mxu0
    %1455 = vmatpush.bf16.msra.mxu0 0
    %1456 = vmatpush.bf16.msra.mxu0 0
    %1457 = vmatpush.bf16.msra.mxu0 0
    %1458 = vmatpush.bf16.msra.mxu0 0
    %1459 = vmatpush.bf16.msra.mxu0 %v1384
    %1460 = vmatpush.bf16.msra.mxu0 %v1380
    %1461 = vmatpush.bf16.msra.mxu0 %v1376
    %1462 = vmatpush.bf16.msra.mxu0 %v1372
    %1463 = vmatmul.bf16.gmra.mxu0 %v1134
    %v1464 = vpop.f32.mrf.mxu0
    %v1465 = vadd.f32 %v1316, %v1464
    %v1466 = vpop.f32.mrf.mxu0
    %v1467 = vadd.f32 %v1316, %v1466
    %1468 = vmatmul.bf16.gmra.mxu0 %v1137
    %v1469 = vpop.f32.mrf.mxu0
    %v1470 = vadd.f32 %v1316, %v1469
    %v1471 = vpop.f32.mrf.mxu0
    %1472 = vdwg.mxu0
    %v1473 = vmax.f32 %v1411, 0.0
    %v1474 = vmax.f32 %v1429, 0.0
    %v1475 = vmax.f32 %v1447, 0.0
    %v1476 = vmax.f32 %v1465, 0.0
    %v1477 = vmax.f32 %v1413, 0.0
    %v1478 = vmax.f32 %v1431, 0.0
    %v1479 = vmax.f32 %v1449, 0.0
    %v1480 = vmax.f32 %v1467, 0.0
    %v1481 = vmax.f32 %v1416, 0.0
    %v1482 = vmax.f32 %v1434, 0.0
    %v1483 = vmax.f32 %v1452, 0.0
    %v1484 = vmax.f32 %v1470, 0.0
    %v1485 = vpack.c.bf16 %v1477, %v1473
    %v1486 = vpack.c.bf16 %v1478, %v1474
    %v1487 = vpack.c.bf16 %v1479, %v1475
    %v1488 = vpack.c.bf16 %v1480, %v1476
    %v1489 = vpack.c.bf16 %v1481, %v1481
    %v1490 = vpack.c.bf16 %v1482, %v1482
    %v1491 = vpack.c.bf16 %v1483, %v1483
    %v1492 = vpack.c.bf16 %v1484, %v1484
    %v1493 = vld [vmem:[%s29 + $0x100] sm:$0xf]
    %v1494 = vld [vmem:[%s29 + $0x104] sm:$0xf]
    %v1495 = vld [vmem:[%s29 + $0x108] sm:$0xf]
    %v1496 = vld [vmem:[%s29 + $0x10c] sm:$0xf]
    %v1497 = vld [vmem:[%s29 + $0x110] sm:$0xf]
    %v1498 = vld [vmem:[%s29 + $0x114] sm:$0xf]
    %v1499 = vld [vmem:[%s29 + $0x118] sm:$0xf]
    %v1500 = vld [vmem:[%s29 + $0x11c] sm:$0xf]
    %v1501 = vld [vmem:[%s29 + $0x120] sm:$0xf]
    %v1502 = vld [vmem:[%s29 + $0x124] sm:$0xf]
    %v1503 = vld [vmem:[%s29 + $0x128] sm:$0xf]
    %v1504 = vld [vmem:[%s29 + $0x12c] sm:$0xf]
    %v1505 = vld [vmem:[%s29 + $0x130] sm:$0xf]
    %v1506 = vld [vmem:[%s29 + $0x134] sm:$0xf]
    %v1507 = vld [vmem:[%s29 + $0x138] sm:$0xf]
    %v1508 = vld [vmem:[%s29 + $0x13c] sm:$0xf]
    %v1509 = vld [vmem:[%s29 + $0x140] sm:$0xf]
    %v1510 = vld [vmem:[%s29 + $0x144] sm:$0xf]
    %v1511 = vld [vmem:[%s29 + $0x148] sm:$0xf]
    %v1512 = vld [vmem:[%s29 + $0x14c] sm:$0xf]
    %v1513 = vld [vmem:[%s29 + $0x150] sm:$0xf]
    %v1514 = vld [vmem:[%s29 + $0x154] sm:$0xf]
    %v1515 = vld [vmem:[%s29 + $0x158] sm:$0xf]
    %v1516 = vld [vmem:[%s29 + $0x15c] sm:$0xf]
    %v1517 = vld [vmem:[%s29 + $0x160] sm:$0xf]
    %v1518 = vld [vmem:[%s29 + $0x164] sm:$0xf]
    %v1519 = vld [vmem:[%s29 + $0x168] sm:$0xf]
    %v1520 = vld [vmem:[%s29 + $0x16c] sm:$0xf]
    %v1521 = vld [vmem:[%s29 + $0x170] sm:$0xf]
    %v1522 = vld [vmem:[%s29 + $0x174] sm:$0xf]
    %v1523 = vld [vmem:[%s29 + $0x178] sm:$0xf]
    %v1524 = vld [vmem:[%s29 + $0x17c] sm:$0xf]
    %v1525 = vld [vmem:[%s29 + $0x180] sm:$0xf]
    %v1526 = vld [vmem:[%s29 + $0x184] sm:$0xf]
    %v1527 = vld [vmem:[%s29 + $0x188] sm:$0xf]
    %v1528 = vld [vmem:[%s29 + $0x18c] sm:$0xf]
    %v1529 = vld [vmem:[%s29 + $0x190] sm:$0xf]
    %v1530 = vld [vmem:[%s29 + $0x194] sm:$0xf]
    %v1531 = vld [vmem:[%s29 + $0x198] sm:$0xf]
    %v1532 = vld [vmem:[%s29 + $0x19c] sm:$0xf]
    %v1533 = vld [vmem:[%s29 + $0x1a0] sm:$0xf]
    %v1534 = vld [vmem:[%s29 + $0x1a4] sm:$0xf]
    %v1535 = vld [vmem:[%s29 + $0x1a8] sm:$0xf]
    %v1536 = vld [vmem:[%s29 + $0x1ac] sm:$0xf]
    %v1537 = vld [vmem:[%s29 + $0x1b0] sm:$0xf]
    %v1538 = vld [vmem:[%s29 + $0x1b4] sm:$0xf]
    %v1539 = vld [vmem:[%s29 + $0x1b8] sm:$0xf]
    %v1540 = vld [vmem:[%s29 + $0x1bc] sm:$0xf]
    %v1541 = vld [vmem:[%s29 + $0x1c0] sm:$0xf]
    %v1542 = vld [vmem:[%s29 + $0x1c4] sm:$0xf]
    %v1543 = vld [vmem:[%s29 + $0x1c8] sm:$0xf]
    %v1544 = vld [vmem:[%s29 + $0x1cc] sm:$0xf]
    %v1545 = vld [vmem:[%s29 + $0x1d0] sm:$0xf]
    %v1546 = vld [vmem:[%s29 + $0x1d4] sm:$0xf]
    %v1547 = vld [vmem:[%s29 + $0x1d8] sm:$0xf]
    %v1548 = vld [vmem:[%s29 + $0x1dc] sm:$0xf]
    %v1549 = vld [vmem:[%s29 + $0x1e0] sm:$0xf]
    %v1550 = vld [vmem:[%s29 + $0x1e4] sm:$0xf]
    %v1551 = vld [vmem:[%s29 + $0x1e8] sm:$0xf]
    %v1552 = vld [vmem:[%s29 + $0x1ec] sm:$0xf]
    %v1553 = vld [vmem:[%s29 + $0x1f0] sm:$0xf]
    %v1554 = vld [vmem:[%s29 + $0x1f4] sm:$0xf]
    %v1555 = vld [vmem:[%s29 + $0x1f8] sm:$0xf]
    %v1556 = vld [vmem:[%s29 + $0x1fc] sm:$0xf]
    %v1621 = vunpack.c.l.b16 %v1493
    %v1622 = vunpack.c.l.b16 %v1494
    %v1623 = vunpack.c.l.b16 %v1495
    %v1624 = vunpack.c.l.b16 %v1496
    %v1625 = vunpack.c.l.b16 %v1497
    %v1626 = vunpack.c.l.b16 %v1498
    %v1627 = vunpack.c.l.b16 %v1499
    %v1628 = vunpack.c.l.b16 %v1500
    %v1629 = vunpack.c.l.b16 %v1501
    %v1630 = vunpack.c.l.b16 %v1502
    %v1631 = vunpack.c.l.b16 %v1503
    %v1632 = vunpack.c.l.b16 %v1504
    %v1633 = vunpack.c.l.b16 %v1505
    %v1634 = vunpack.c.l.b16 %v1506
    %v1635 = vunpack.c.l.b16 %v1507
    %v1636 = vunpack.c.l.b16 %v1508
    %v1637 = vunpack.c.l.b16 %v1509
    %v1638 = vunpack.c.l.b16 %v1510
    %v1639 = vunpack.c.l.b16 %v1511
    %v1640 = vunpack.c.l.b16 %v1512
    %v1641 = vunpack.c.l.b16 %v1513
    %v1642 = vunpack.c.l.b16 %v1514
    %v1643 = vunpack.c.l.b16 %v1515
    %v1644 = vunpack.c.l.b16 %v1516
    %v1645 = vunpack.c.l.b16 %v1517
    %v1646 = vunpack.c.l.b16 %v1518
    %v1647 = vunpack.c.l.b16 %v1519
    %v1648 = vunpack.c.l.b16 %v1520
    %v1649 = vunpack.c.l.b16 %v1521
    %v1650 = vunpack.c.l.b16 %v1522
    %v1651 = vunpack.c.l.b16 %v1523
    %v1652 = vunpack.c.l.b16 %v1524
    %v1653 = vunpack.c.l.b16 %v1525
    %v1654 = vunpack.c.l.b16 %v1526
    %v1655 = vunpack.c.l.b16 %v1527
    %v1656 = vunpack.c.l.b16 %v1528
    %v1657 = vunpack.c.l.b16 %v1529
    %v1658 = vunpack.c.l.b16 %v1530
    %v1659 = vunpack.c.l.b16 %v1531
    %v1660 = vunpack.c.l.b16 %v1532
    %v1661 = vunpack.c.l.b16 %v1533
    %v1662 = vunpack.c.l.b16 %v1534
    %v1663 = vunpack.c.l.b16 %v1535
    %v1664 = vunpack.c.l.b16 %v1536
    %v1665 = vunpack.c.l.b16 %v1537
    %v1666 = vunpack.c.l.b16 %v1538
    %v1667 = vunpack.c.l.b16 %v1539
    %v1668 = vunpack.c.l.b16 %v1540
    %v1669 = vunpack.c.l.b16 %v1541
    %v1670 = vunpack.c.l.b16 %v1542
    %v1671 = vunpack.c.l.b16 %v1543
    %v1672 = vunpack.c.l.b16 %v1544
    %v1673 = vunpack.c.l.b16 %v1545
    %v1674 = vunpack.c.l.b16 %v1546
    %v1675 = vunpack.c.l.b16 %v1547
    %v1676 = vunpack.c.l.b16 %v1548
    %v1677 = vunpack.c.l.b16 %v1549
    %v1678 = vunpack.c.l.b16 %v1550
    %v1679 = vunpack.c.l.b16 %v1551
    %v1680 = vunpack.c.l.b16 %v1552
    %v1681 = vunpack.c.l.b16 %v1553
    %v1682 = vunpack.c.l.b16 %v1554
    %v1683 = vunpack.c.l.b16 %v1555
    %v1684 = vunpack.c.l.b16 %v1556
    %v1685 = vpack.c.b16 %v1622, %v1621
    %v1686 = vpack.c.b16 %v1624, %v1623
    %v1687 = vpack.c.b16 %v1626, %v1625
    %v1688 = vpack.c.b16 %v1628, %v1627
    %v1689 = vpack.c.b16 %v1630, %v1629
    %v1690 = vpack.c.b16 %v1632, %v1631
    %v1691 = vpack.c.b16 %v1634, %v1633
    %v1692 = vpack.c.b16 %v1636, %v1635
    %v1693 = vpack.c.b16 %v1638, %v1637
    %v1694 = vpack.c.b16 %v1640, %v1639
    %v1695 = vpack.c.b16 %v1642, %v1641
    %v1696 = vpack.c.b16 %v1644, %v1643
    %v1697 = vpack.c.b16 %v1646, %v1645
    %v1698 = vpack.c.b16 %v1648, %v1647
    %v1699 = vpack.c.b16 %v1650, %v1649
    %v1700 = vpack.c.b16 %v1652, %v1651
    %v1701 = vpack.c.b16 %v1654, %v1653
    %v1702 = vpack.c.b16 %v1656, %v1655
    %v1703 = vpack.c.b16 %v1658, %v1657
    %v1704 = vpack.c.b16 %v1660, %v1659
    %v1705 = vpack.c.b16 %v1662, %v1661
    %v1706 = vpack.c.b16 %v1664, %v1663
    %v1707 = vpack.c.b16 %v1666, %v1665
    %v1708 = vpack.c.b16 %v1668, %v1667
    %v1709 = vpack.c.b16 %v1670, %v1669
    %v1710 = vpack.c.b16 %v1672, %v1671
    %v1711 = vpack.c.b16 %v1674, %v1673
    %v1712 = vpack.c.b16 %v1676, %v1675
    %v1713 = vpack.c.b16 %v1678, %v1677
    %v1714 = vpack.c.b16 %v1680, %v1679
    %v1715 = vpack.c.b16 %v1682, %v1681
    %v1716 = vpack.c.b16 %v1684, %v1683
    %1749 = vmatpush.bf16.msra.mxu0 %v1692
    %1750 = vmatpush.bf16.msra.mxu0 %v1691
    %1751 = vmatpush.bf16.msra.mxu0 %v1690
    %1752 = vmatpush.bf16.msra.mxu0 %v1689
    %1753 = vmatpush.bf16.msra.mxu0 %v1688
    %1754 = vmatpush.bf16.msra.mxu0 %v1687
    %1755 = vmatpush.bf16.msra.mxu0 %v1686
    %1756 = vmatpush.bf16.msra.mxu0 %v1685
    %1757 = vmatmul.bf16.gmra.mxu0 %v1485
    %v1758 = vpop.f32.mrf.mxu0
    %v1759 = vadd.f32 0.0, %v1758
    %v1760 = vpop.f32.mrf.mxu0
    %v1761 = vadd.f32 0.0, %v1760
    %1762 = vmatmul.bf16.gmra.mxu0 %v1489
    %v1763 = vpop.f32.mrf.mxu0
    %v1764 = vadd.f32 0.0, %v1763
    %v1765 = vpop.f32.mrf.mxu0
    %1766 = vdwg.mxu0
    %1767 = vmatpush.bf16.msra.mxu0 %v1700
    %1768 = vmatpush.bf16.msra.mxu0 %v1699
    %1769 = vmatpush.bf16.msra.mxu0 %v1698
    %1770 = vmatpush.bf16.msra.mxu0 %v1697
    %1771 = vmatpush.bf16.msra.mxu0 %v1696
    %1772 = vmatpush.bf16.msra.mxu0 %v1695
    %1773 = vmatpush.bf16.msra.mxu0 %v1694
    %1774 = vmatpush.bf16.msra.mxu0 %v1693
    %1775 = vmatmul.bf16.gmra.mxu0 %v1486
    %v1776 = vpop.f32.mrf.mxu0
    %v1777 = vadd.f32 %v1759, %v1776
    %v1778 = vpop.f32.mrf.mxu0
    %v1779 = vadd.f32 %v1761, %v1778
    %1780 = vmatmul.bf16.gmra.mxu0 %v1490
    %v1781 = vpop.f32.mrf.mxu0
    %v1782 = vadd.f32 %v1764, %v1781
    %v1783 = vpop.f32.mrf.mxu0
    %1784 = vdwg.mxu0
    %1785 = vmatpush.bf16.msra.mxu0 %v1708
    %1786 = vmatpush.bf16.msra.mxu0 %v1707
    %1787 = vmatpush.bf16.msra.mxu0 %v1706
    %1788 = vmatpush.bf16.msra.mxu0 %v1705
    %1789 = vmatpush.bf16.msra.mxu0 %v1704
    %1790 = vmatpush.bf16.msra.mxu0 %v1703
    %1791 = vmatpush.bf16.msra.mxu0 %v1702
    %1792 = vmatpush.bf16.msra.mxu0 %v1701
    %1793 = vmatmul.bf16.gmra.mxu0 %v1487
    %v1794 = vpop.f32.mrf.mxu0
    %v1795 = vadd.f32 %v1777, %v1794
    %v1796 = vpop.f32.mrf.mxu0
    %v1797 = vadd.f32 %v1779, %v1796
    %1798 = vmatmul.bf16.gmra.mxu0 %v1491
    %v1799 = vpop.f32.mrf.mxu0
    %v1800 = vadd.f32 %v1782, %v1799
    %v1801 = vpop.f32.mrf.mxu0
    %1802 = vdwg.mxu0
    %1803 = vmatpush.bf16.msra.mxu0 %v1716
    %1804 = vmatpush.bf16.msra.mxu0 %v1715
    %1805 = vmatpush.bf16.msra.mxu0 %v1714
    %1806 = vmatpush.bf16.msra.mxu0 %v1713
    %1807 = vmatpush.bf16.msra.mxu0 %v1712
    %1808 = vmatpush.bf16.msra.mxu0 %v1711
    %1809 = vmatpush.bf16.msra.mxu0 %v1710
    %1810 = vmatpush.bf16.msra.mxu0 %v1709
    %1811 = vmatmul.bf16.gmra.mxu0 %v1488
    %v1812 = vpop.f32.mrf.mxu0
    %v1813 = vadd.f32 %v1795, %v1812
    %v1814 = vpop.f32.mrf.mxu0
    %v1815 = vadd.f32 %v1797, %v1814
    %1816 = vmatmul.bf16.gmra.mxu0 %v1492
    %v1817 = vpop.f32.mrf.mxu0
    %v1818 = vadd.f32 %v1800, %v1817
    %v1819 = vpop.f32.mrf.mxu0
    %1820 = vdwg.mxu0
    %v1885 = vunpack.c.l.b16 %v1231
    %v1886 = vunpack.c.l.b16 %v1232
    %v1887 = vunpack.c.l.b16 %v1233
    %v1888 = vunpack.c.l.b16 %v1234
    %v1889 = vunpack.c.l.b16 %v1235
    %v1890 = vunpack.c.l.b16 %v1236
    %v1891 = vunpack.c.l.b16 %v1237
    %v1892 = vunpack.c.l.b16 %v1238
    %v1893 = vunpack.c.l.b16 %v1239
    %v1894 = vunpack.c.l.b16 %v1240
    %v1895 = vunpack.c.l.b16 %v1241
    %v1896 = vunpack.c.l.b16 %v1242
    %v1897 = vunpack.c.l.b16 %v1243
    %v1898 = vunpack.c.l.b16 %v1244
    %v1899 = vunpack.c.l.b16 %v1245
    %v1900 = vunpack.c.l.b16 %v1246
    %v1901 = vunpack.c.l.b16 %v1247
    %v1902 = vunpack.c.l.b16 %v1248
    %v1903 = vunpack.c.l.b16 %v1249
    %v1904 = vunpack.c.l.b16 %v1250
    %v1905 = vunpack.c.l.b16 %v1251
    %v1906 = vunpack.c.l.b16 %v1252
    %v1907 = vunpack.c.l.b16 %v1253
    %v1908 = vunpack.c.l.b16 %v1254
    %v1909 = vunpack.c.l.b16 %v1255
    %v1910 = vunpack.c.l.b16 %v1256
    %v1911 = vunpack.c.l.b16 %v1257
    %v1912 = vunpack.c.l.b16 %v1258
    %v1913 = vunpack.c.l.b16 %v1259
    %v1914 = vunpack.c.l.b16 %v1260
    %v1915 = vunpack.c.l.b16 %v1261
    %v1916 = vunpack.c.l.b16 %v1262
    %v1917 = vunpack.c.l.b16 %v1263
    %v1918 = vunpack.c.l.b16 %v1264
    %v1919 = vunpack.c.l.b16 %v1265
    %v1920 = vunpack.c.l.b16 %v1266
    %v1921 = vunpack.c.l.b16 %v1267
    %v1922 = vunpack.c.l.b16 %v1268
    %v1923 = vunpack.c.l.b16 %v1269
    %v1924 = vunpack.c.l.b16 %v1270
    %v1925 = vunpack.c.l.b16 %v1271
    %v1926 = vunpack.c.l.b16 %v1272
    %v1927 = vunpack.c.l.b16 %v1273
    %v1928 = vunpack.c.l.b16 %v1274
    %v1929 = vunpack.c.l.b16 %v1275
    %v1930 = vunpack.c.l.b16 %v1276
    %v1931 = vunpack.c.l.b16 %v1277
    %v1932 = vunpack.c.l.b16 %v1278
    %v1933 = vunpack.c.l.b16 %v1279
    %v1934 = vunpack.c.l.b16 %v1280
    %v1935 = vunpack.c.l.b16 %v1281
    %v1936 = vunpack.c.l.b16 %v1282
    %v1937 = vunpack.c.l.b16 %v1283
    %v1938 = vunpack.c.l.b16 %v1284
    %v1939 = vunpack.c.l.b16 %v1285
    %v1940 = vunpack.c.l.b16 %v1286
    %v1941 = vunpack.c.l.b16 %v1287
    %v1942 = vunpack.c.l.b16 %v1288
    %v1943 = vunpack.c.l.b16 %v1289
    %v1944 = vunpack.c.l.b16 %v1290
    %v1945 = vunpack.c.l.b16 %v1291
    %v1946 = vunpack.c.l.b16 %v1292
    %v1947 = vunpack.c.l.b16 %v1293
    %v1948 = vunpack.c.l.b16 %v1294
    %v1949 = vpack.c.b16 %v1886, %v1885
    %v1950 = vpack.c.b16 %v1888, %v1887
    %v1951 = vpack.c.b16 %v1890, %v1889
    %v1952 = vpack.c.b16 %v1892, %v1891
    %v1953 = vpack.c.b16 %v1894, %v1893
    %v1954 = vpack.c.b16 %v1896, %v1895
    %v1955 = vpack.c.b16 %v1898, %v1897
    %v1956 = vpack.c.b16 %v1900, %v1899
    %v1957 = vpack.c.b16 %v1902, %v1901
    %v1958 = vpack.c.b16 %v1904, %v1903
    %v1959 = vpack.c.b16 %v1906, %v1905
    %v1960 = vpack.c.b16 %v1908, %v1907
    %v1961 = vpack.c.b16 %v1910, %v1909
    %v1962 = vpack.c.b16 %v1912, %v1911
    %v1963 = vpack.c.b16 %v1914, %v1913
    %v1964 = vpack.c.b16 %v1916, %v1915
    %v1965 = vpack.c.b16 %v1918, %v1917
    %v1966 = vpack.c.b16 %v1920, %v1919
    %v1967 = vpack.c.b16 %v1922, %v1921
    %v1968 = vpack.c.b16 %v1924, %v1923
    %v1969 = vpack.c.b16 %v1926, %v1925
    %v1970 = vpack.c.b16 %v1928, %v1927
    %v1971 = vpack.c.b16 %v1930, %v1929
    %v1972 = vpack.c.b16 %v1932, %v1931
    %v1973 = vpack.c.b16 %v1934, %v1933
    %v1974 = vpack.c.b16 %v1936, %v1935
    %v1975 = vpack.c.b16 %v1938, %v1937
    %v1976 = vpack.c.b16 %v1940, %v1939
    %v1977 = vpack.c.b16 %v1942, %v1941
    %v1978 = vpack.c.b16 %v1944, %v1943
    %v1979 = vpack.c.b16 %v1946, %v1945
    %v1980 = vpack.c.b16 %v1948, %v1947
    %2013 = vmatpush.bf16.msra.mxu0 %v1956
    %2014 = vmatpush.bf16.msra.mxu0 %v1955
    %2015 = vmatpush.bf16.msra.mxu0 %v1954
    %2016 = vmatpush.bf16.msra.mxu0 %v1953
    %2017 = vmatpush.bf16.msra.mxu0 %v1952
    %2018 = vmatpush.bf16.msra.mxu0 %v1951
    %2019 = vmatpush.bf16.msra.mxu0 %v1950
    %2020 = vmatpush.bf16.msra.mxu0 %v1949
    %2021 = vmatmul.bf16.gmra.mxu0 %v1223
    %v2022 = vpop.f32.mrf.mxu0
    %v2023 = vadd.f32 %v1813, %v2022
    %v2024 = vpop.f32.mrf.mxu0
    %v2025 = vadd.f32 %v1815, %v2024
    %2026 = vmatmul.bf16.gmra.mxu0 %v1227
    %v2027 = vpop.f32.mrf.mxu0
    %v2028 = vadd.f32 %v1818, %v2027
    %v2029 = vpop.f32.mrf.mxu0
    %2030 = vdwg.mxu0
    %2031 = vmatpush.bf16.msra.mxu0 %v1964
    %2032 = vmatpush.bf16.msra.mxu0 %v1963
    %2033 = vmatpush.bf16.msra.mxu0 %v1962
    %2034 = vmatpush.bf16.msra.mxu0 %v1961
    %2035 = vmatpush.bf16.msra.mxu0 %v1960
    %2036 = vmatpush.bf16.msra.mxu0 %v1959
    %2037 = vmatpush.bf16.msra.mxu0 %v1958
    %2038 = vmatpush.bf16.msra.mxu0 %v1957
    %2039 = vmatmul.bf16.gmra.mxu0 %v1224
    %v2040 = vpop.f32.mrf.mxu0
    %v2041 = vadd.f32 %v2023, %v2040
    %v2042 = vpop.f32.mrf.mxu0
    %v2043 = vadd.f32 %v2025, %v2042
    %2044 = vmatmul.bf16.gmra.mxu0 %v1228
    %v2045 = vpop.f32.mrf.mxu0
    %v2046 = vadd.f32 %v2028, %v2045
    %v2047 = vpop.f32.mrf.mxu0
    %2048 = vdwg.mxu0
    %2049 = vmatpush.bf16.msra.mxu0 %v1972
    %2050 = vmatpush.bf16.msra.mxu0 %v1971
    %2051 = vmatpush.bf16.msra.mxu0 %v1970
    %2052 = vmatpush.bf16.msra.mxu0 %v1969
    %2053 = vmatpush.bf16.msra.mxu0 %v1968
    %2054 = vmatpush.bf16.msra.mxu0 %v1967
    %2055 = vmatpush.bf16.msra.mxu0 %v1966
    %2056 = vmatpush.bf16.msra.mxu0 %v1965
    %2057 = vmatmul.bf16.gmra.mxu0 %v1225
    %v2058 = vpop.f32.mrf.mxu0
    %v2059 = vadd.f32 %v2041, %v2058
    %v2060 = vpop.f32.mrf.mxu0
    %v2061 = vadd.f32 %v2043, %v2060
    %2062 = vmatmul.bf16.gmra.mxu0 %v1229
    %v2063 = vpop.f32.mrf.mxu0
    %v2064 = vadd.f32 %v2046, %v2063
    %v2065 = vpop.f32.mrf.mxu0
    %2066 = vdwg.mxu0
    %2067 = vmatpush.bf16.msra.mxu0 %v1980
    %2068 = vmatpush.bf16.msra.mxu0 %v1979
    %2069 = vmatpush.bf16.msra.mxu0 %v1978
    %2070 = vmatpush.bf16.msra.mxu0 %v1977
    %2071 = vmatpush.bf16.msra.mxu0 %v1976
    %2072 = vmatpush.bf16.msra.mxu0 %v1975
    %2073 = vmatpush.bf16.msra.mxu0 %v1974
    %2074 = vmatpush.bf16.msra.mxu0 %v1973
    %2075 = vmatmul.bf16.gmra.mxu0 %v1226
    %v2076 = vpop.f32.mrf.mxu0
    %v2077 = vadd.f32 %v2059, %v2076
    %v2078 = vpop.f32.mrf.mxu0
    %v2079 = vadd.f32 %v2061, %v2078
    %2080 = vmatmul.bf16.gmra.mxu0 %v1230
    %v2081 = vpop.f32.mrf.mxu0
    %v2082 = vadd.f32 %v2064, %v2081
    %v2083 = vpop.f32.mrf.mxu0
    %2084 = vdwg.mxu0
    %v2085 = vld [vmem:[%s25 + $0x20] sm:$0xff]
    %v2086 = vld [vmem:[%s25 + $0x28] sm:$0xff]
    %v2087 = vld [vmem:[%s25 + $0x60] sm:$0xff]
    %v2088 = vld [vmem:[%s25 + $0x68] sm:$0xff]
    %v2089 = vld [vmem:[%s25 + $0xa0] sm:$0xff]
    %v2090 = vld [vmem:[%s25 + $0xa8] sm:$0xff]
    %v2091 = vld [vmem:[%s25 + $0xe0] sm:$0xff]
    %v2092 = vld [vmem:[%s25 + $0xe8] sm:$0xff]
    %v2093 = vld [vmem:[%s25 + $0x120] sm:$0xff]
    %v2094 = vld [vmem:[%s25 + $0x128] sm:$0xff]
    %v2095 = vld [vmem:[%s25 + $0x160] sm:$0xff]
    %v2096 = vld [vmem:[%s25 + $0x168] sm:$0xff]
    %v2097 = vld [vmem:[%s25 + $0x1a0] sm:$0xff]
    %v2098 = vld [vmem:[%s25 + $0x1a8] sm:$0xff]
    %v2099 = vld [vmem:[%s25 + $0x1e0] sm:$0xff]
    %v2100 = vld [vmem:[%s25 + $0x1e8] sm:$0xff]
    %v2101 = vld [vmem:[%s27 + $0x8] sm:$0xf]
    %v2103 = vperm.slane %v2101, 0
    %v2104 = vperm.slane %v2101, 1
    %v2105 = vperm.slane %v2101, 2
    %v2106 = vperm.slane %v2101, 3
    %v2127 = vunpack.c.l.b16 %v2085
    %v2128 = vunpack.c.h.b16 %v2085
    %v2129 = vunpack.c.l.b16 %v2086
    %v2130 = vunpack.c.h.b16 %v2086
    %v2131 = vunpack.c.l.b16 %v2087
    %v2132 = vunpack.c.h.b16 %v2087
    %v2133 = vunpack.c.l.b16 %v2088
    %v2134 = vunpack.c.h.b16 %v2088
    %v2135 = vunpack.c.l.b16 %v2089
    %v2136 = vunpack.c.h.b16 %v2089
    %v2137 = vunpack.c.l.b16 %v2090
    %v2138 = vunpack.c.h.b16 %v2090
    %v2139 = vunpack.c.l.b16 %v2091
    %v2140 = vunpack.c.h.b16 %v2091
    %v2141 = vunpack.c.l.b16 %v2092
    %v2142 = vunpack.c.h.b16 %v2092
    %v2143 = vunpack.c.l.b16 %v2093
    %v2144 = vunpack.c.h.b16 %v2093
    %v2145 = vunpack.c.l.b16 %v2094
    %v2146 = vunpack.c.h.b16 %v2094
    %v2147 = vunpack.c.l.b16 %v2095
    %v2148 = vunpack.c.h.b16 %v2095
    %v2149 = vunpack.c.l.b16 %v2096
    %v2150 = vunpack.c.h.b16 %v2096
    %v2151 = vunpack.c.l.b16 %v2097
    %v2152 = vunpack.c.h.b16 %v2097
    %v2153 = vunpack.c.l.b16 %v2098
    %v2154 = vunpack.c.h.b16 %v2098
    %v2155 = vunpack.c.l.b16 %v2099
    %v2156 = vunpack.c.h.b16 %v2099
    %v2157 = vunpack.c.l.b16 %v2100
    %v2158 = vunpack.c.h.b16 %v2100
    %v2159 = vpack.c.b16 %v2131, %v2127
    %v2160 = vpack.c.b16 %v2132, %v2128
    %v2161 = vpack.c.b16 %v2133, %v2129
    %v2162 = vpack.c.b16 %v2134, %v2130
    %v2163 = vpack.c.b16 %v2139, %v2135
    %v2164 = vpack.c.b16 %v2140, %v2136
    %v2165 = vpack.c.b16 %v2141, %v2137
    %v2166 = vpack.c.b16 %v2142, %v2138
    %v2167 = vpack.c.b16 %v2147, %v2143
    %v2168 = vpack.c.b16 %v2148, %v2144
    %v2169 = vpack.c.b16 %v2149, %v2145
    %v2170 = vpack.c.b16 %v2150, %v2146
    %v2171 = vpack.c.b16 %v2155, %v2151
    %v2172 = vpack.c.b16 %v2156, %v2152
    %v2173 = vpack.c.b16 %v2157, %v2153
    %v2174 = vpack.c.b16 %v2158, %v2154
    %2191 = vmatpush.bf16.msra.mxu0 0
    %2192 = vmatpush.bf16.msra.mxu0 0
    %2193 = vmatpush.bf16.msra.mxu0 0
    %2194 = vmatpush.bf16.msra.mxu0 0
    %2195 = vmatpush.bf16.msra.mxu0 %v2171
    %2196 = vmatpush.bf16.msra.mxu0 %v2167
    %2197 = vmatpush.bf16.msra.mxu0 %v2163
    %2198 = vmatpush.bf16.msra.mxu0 %v2159
    %2199 = vmatmul.bf16.gmra.mxu0 %v1134
    %v2200 = vpop.f32.mrf.mxu0
    %v2201 = vadd.f32 %v2103, %v2200
    %v2202 = vpop.f32.mrf.mxu0
    %v2203 = vadd.f32 %v2103, %v2202
    %2204 = vmatmul.bf16.gmra.mxu0 %v1137
    %v2205 = vpop.f32.mrf.mxu0
    %v2206 = vadd.f32 %v2103, %v2205
    %v2207 = vpop.f32.mrf.mxu0
    %2208 = vdwg.mxu0
    %2209 = vmatpush.bf16.msra.mxu0 0
    %2210 = vmatpush.bf16.msra.mxu0 0
    %2211 = vmatpush.bf16.msra.mxu0 0
    %2212 = vmatpush.bf16.msra.mxu0 0
    %2213 = vmatpush.bf16.msra.mxu0 %v2172
    %2214 = vmatpush.bf16.msra.mxu0 %v2168
    %2215 = vmatpush.bf16.msra.mxu0 %v2164
    %2216 = vmatpush.bf16.msra.mxu0 %v2160
    %2217 = vmatmul.bf16.gmra.mxu0 %v1134
    %v2218 = vpop.f32.mrf.mxu0
    %v2219 = vadd.f32 %v2104, %v2218
    %v2220 = vpop.f32.mrf.mxu0
    %v2221 = vadd.f32 %v2104, %v2220
    %2222 = vmatmul.bf16.gmra.mxu0 %v1137
    %v2223 = vpop.f32.mrf.mxu0
    %v2224 = vadd.f32 %v2104, %v2223
    %v2225 = vpop.f32.mrf.mxu0
    %2226 = vdwg.mxu0
    %2227 = vmatpush.bf16.msra.mxu0 0
    %2228 = vmatpush.bf16.msra.mxu0 0
    %2229 = vmatpush.bf16.msra.mxu0 0
    %2230 = vmatpush.bf16.msra.mxu0 0
    %2231 = vmatpush.bf16.msra.mxu0 %v2173
    %2232 = vmatpush.bf16.msra.mxu0 %v2169
    %2233 = vmatpush.bf16.msra.mxu0 %v2165
    %2234 = vmatpush.bf16.msra.mxu0 %v2161
    %2235 = vmatmul.bf16.gmra.mxu0 %v1134
    %v2236 = vpop.f32.mrf.mxu0
    %v2237 = vadd.f32 %v2105, %v2236
    %v2238 = vpop.f32.mrf.mxu0
    %v2239 = vadd.f32 %v2105, %v2238
    %2240 = vmatmul.bf16.gmra.mxu0 %v1137
    %v2241 = vpop.f32.mrf.mxu0
    %v2242 = vadd.f32 %v2105, %v2241
    %v2243 = vpop.f32.mrf.mxu0
    %2244 = vdwg.mxu0
    %2245 = vmatpush.bf16.msra.mxu0 0
    %2246 = vmatpush.bf16.msra.mxu0 0
    %2247 = vmatpush.bf16.msra.mxu0 0
    %2248 = vmatpush.bf16.msra.mxu0 0
    %2249 = vmatpush.bf16.msra.mxu0 %v2174
    %2250 = vmatpush.bf16.msra.mxu0 %v2170
    %2251 = vmatpush.bf16.msra.mxu0 %v2166
    %2252 = vmatpush.bf16.msra.mxu0 %v2162
    %2253 = vmatmul.bf16.gmra.mxu0 %v1134
    %v2254 = vpop.f32.mrf.mxu0
    %v2255 = vadd.f32 %v2106, %v2254
    %v2256 = vpop.f32.mrf.mxu0
    %v2257 = vadd.f32 %v2106, %v2256
    %2258 = vmatmul.bf16.gmra.mxu0 %v1137
    %v2259 = vpop.f32.mrf.mxu0
    %v2260 = vadd.f32 %v2106, %v2259
    %v2261 = vpop.f32.mrf.mxu0
    %2262 = vdwg.mxu0
    %v2263 = vmax.f32 %v2201, 0.0
    %v2264 = vmax.f32 %v2219, 0.0
    %v2265 = vmax.f32 %v2237, 0.0
    %v2266 = vmax.f32 %v2255, 0.0
    %v2267 = vmax.f32 %v2203, 0.0
    %v2268 = vmax.f32 %v2221, 0.0
    %v2269 = vmax.f32 %v2239, 0.0
    %v2270 = vmax.f32 %v2257, 0.0
    %v2271 = vmax.f32 %v2206, 0.0
    %v2272 = vmax.f32 %v2224, 0.0
    %v2273 = vmax.f32 %v2242, 0.0
    %v2274 = vmax.f32 %v2260, 0.0
    %v2275 = vpack.c.bf16 %v2267, %v2263
    %v2276 = vpack.c.bf16 %v2268, %v2264
    %v2277 = vpack.c.bf16 %v2269, %v2265
    %v2278 = vpack.c.bf16 %v2270, %v2266
    %v2279 = vpack.c.bf16 %v2271, %v2271
    %v2280 = vpack.c.bf16 %v2272, %v2272
    %v2281 = vpack.c.bf16 %v2273, %v2273
    %v2282 = vpack.c.bf16 %v2274, %v2274
    %v2283 = vld [vmem:[%s29 + $0x200] sm:$0xf]
    %v2284 = vld [vmem:[%s29 + $0x204] sm:$0xf]
    %v2285 = vld [vmem:[%s29 + $0x208] sm:$0xf]
    %v2286 = vld [vmem:[%s29 + $0x20c] sm:$0xf]
    %v2287 = vld [vmem:[%s29 + $0x210] sm:$0xf]
    %v2288 = vld [vmem:[%s29 + $0x214] sm:$0xf]
    %v2289 = vld [vmem:[%s29 + $0x218] sm:$0xf]
    %v2290 = vld [vmem:[%s29 + $0x21c] sm:$0xf]
    %v2291 = vld [vmem:[%s29 + $0x220] sm:$0xf]
    %v2292 = vld [vmem:[%s29 + $0x224] sm:$0xf]
    %v2293 = vld [vmem:[%s29 + $0x228] sm:$0xf]
    %v2294 = vld [vmem:[%s29 + $0x22c] sm:$0xf]
    %v2295 = vld [vmem:[%s29 + $0x230] sm:$0xf]
    %v2296 = vld [vmem:[%s29 + $0x234] sm:$0xf]
    %v2297 = vld [vmem:[%s29 + $0x238] sm:$0xf]
    %v2298 = vld [vmem:[%s29 + $0x23c] sm:$0xf]
    %v2299 = vld [vmem:[%s29 + $0x240] sm:$0xf]
    %v2300 = vld [vmem:[%s29 + $0x244] sm:$0xf]
    %v2301 = vld [vmem:[%s29 + $0x248] sm:$0xf]
    %v2302 = vld [vmem:[%s29 + $0x24c] sm:$0xf]
    %v2303 = vld [vmem:[%s29 + $0x250] sm:$0xf]
    %v2304 = vld [vmem:[%s29 + $0x254] sm:$0xf]
    %v2305 = vld [vmem:[%s29 + $0x258] sm:$0xf]
    %v2306 = vld [vmem:[%s29 + $0x25c] sm:$0xf]
    %v2307 = vld [vmem:[%s29 + $0x260] sm:$0xf]
    %v2308 = vld [vmem:[%s29 + $0x264] sm:$0xf]
    %v2309 = vld [vmem:[%s29 + $0x268] sm:$0xf]
    %v2310 = vld [vmem:[%s29 + $0x26c] sm:$0xf]
    %v2311 = vld [vmem:[%s29 + $0x270] sm:$0xf]
    %v2312 = vld [vmem:[%s29 + $0x274] sm:$0xf]
    %v2313 = vld [vmem:[%s29 + $0x278] sm:$0xf]
    %v2314 = vld [vmem:[%s29 + $0x27c] sm:$0xf]
    %v2315 = vld [vmem:[%s29 + $0x280] sm:$0xf]
    %v2316 = vld [vmem:[%s29 + $0x284] sm:$0xf]
    %v2317 = vld [vmem:[%s29 + $0x288] sm:$0xf]
    %v2318 = vld [vmem:[%s29 + $0x28c] sm:$0xf]
    %v2319 = vld [vmem:[%s29 + $0x290] sm:$0xf]
    %v2320 = vld [vmem:[%s29 + $0x294] sm:$0xf]
    %v2321 = vld [vmem:[%s29 + $0x298] sm:$0xf]
    %v2322 = vld [vmem:[%s29 + $0x29c] sm:$0xf]
    %v2323 = vld [vmem:[%s29 + $0x2a0] sm:$0xf]
    %v2324 = vld [vmem:[%s29 + $0x2a4] sm:$0xf]
    %v2325 = vld [vmem:[%s29 + $0x2a8] sm:$0xf]
    %v2326 = vld [vmem:[%s29 + $0x2ac] sm:$0xf]
    %v2327 = vld [vmem:[%s29 + $0x2b0] sm:$0xf]
    %v2328 = vld [vmem:[%s29 + $0x2b4] sm:$0xf]
    %v2329 = vld [vmem:[%s29 + $0x2b8] sm:$0xf]
    %v2330 = vld [vmem:[%s29 + $0x2bc] sm:$0xf]
    %v2331 = vld [vmem:[%s29 + $0x2c0] sm:$0xf]
    %v2332 = vld [vmem:[%s29 + $0x2c4] sm:$0xf]
    %v2333 = vld [vmem:[%s29 + $0x2c8] sm:$0xf]
    %v2334 = vld [vmem:[%s29 + $0x2cc] sm:$0xf]
    %v2335 = vld [vmem:[%s29 + $0x2d0] sm:$0xf]
    %v2336 = vld [vmem:[%s29 + $0x2d4] sm:$0xf]
    %v2337 = vld [vmem:[%s29 + $0x2d8] sm:$0xf]
    %v2338 = vld [vmem:[%s29 + $0x2dc] sm:$0xf]
    %v2339 = vld [vmem:[%s29 + $0x2e0] sm:$0xf]
    %v2340 = vld [vmem:[%s29 + $0x2e4] sm:$0xf]
    %v2341 = vld [vmem:[%s29 + $0x2e8] sm:$0xf]
    %v2342 = vld [vmem:[%s29 + $0x2ec] sm:$0xf]
    %v2343 = vld [vmem:[%s29 + $0x2f0] sm:$0xf]
    %v2344 = vld [vmem:[%s29 + $0x2f4] sm:$0xf]
    %v2345 = vld [vmem:[%s29 + $0x2f8] sm:$0xf]
    %v2346 = vld [vmem:[%s29 + $0x2fc] sm:$0xf]
    %v2411 = vunpack.c.l.b16 %v2283
    %v2412 = vunpack.c.l.b16 %v2284
    %v2413 = vunpack.c.l.b16 %v2285
    %v2414 = vunpack.c.l.b16 %v2286
    %v2415 = vunpack.c.l.b16 %v2287
    %v2416 = vunpack.c.l.b16 %v2288
    %v2417 = vunpack.c.l.b16 %v2289
    %v2418 = vunpack.c.l.b16 %v2290
    %v2419 = vunpack.c.l.b16 %v2291
    %v2420 = vunpack.c.l.b16 %v2292
    %v2421 = vunpack.c.l.b16 %v2293
    %v2422 = vunpack.c.l.b16 %v2294
    %v2423 = vunpack.c.l.b16 %v2295
    %v2424 = vunpack.c.l.b16 %v2296
    %v2425 = vunpack.c.l.b16 %v2297
    %v2426 = vunpack.c.l.b16 %v2298
    %v2427 = vunpack.c.l.b16 %v2299
    %v2428 = vunpack.c.l.b16 %v2300
    %v2429 = vunpack.c.l.b16 %v2301
    %v2430 = vunpack.c.l.b16 %v2302
    %v2431 = vunpack.c.l.b16 %v2303
    %v2432 = vunpack.c.l.b16 %v2304
    %v2433 = vunpack.c.l.b16 %v2305
    %v2434 = vunpack.c.l.b16 %v2306
    %v2435 = vunpack.c.l.b16 %v2307
    %v2436 = vunpack.c.l.b16 %v2308
    %v2437 = vunpack.c.l.b16 %v2309
    %v2438 = vunpack.c.l.b16 %v2310
    %v2439 = vunpack.c.l.b16 %v2311
    %v2440 = vunpack.c.l.b16 %v2312
    %v2441 = vunpack.c.l.b16 %v2313
    %v2442 = vunpack.c.l.b16 %v2314
    %v2443 = vunpack.c.l.b16 %v2315
    %v2444 = vunpack.c.l.b16 %v2316
    %v2445 = vunpack.c.l.b16 %v2317
    %v2446 = vunpack.c.l.b16 %v2318
    %v2447 = vunpack.c.l.b16 %v2319
    %v2448 = vunpack.c.l.b16 %v2320
    %v2449 = vunpack.c.l.b16 %v2321
    %v2450 = vunpack.c.l.b16 %v2322
    %v2451 = vunpack.c.l.b16 %v2323
    %v2452 = vunpack.c.l.b16 %v2324
    %v2453 = vunpack.c.l.b16 %v2325
    %v2454 = vunpack.c.l.b16 %v2326
    %v2455 = vunpack.c.l.b16 %v2327
    %v2456 = vunpack.c.l.b16 %v2328
    %v2457 = vunpack.c.l.b16 %v2329
    %v2458 = vunpack.c.l.b16 %v2330
    %v2459 = vunpack.c.l.b16 %v2331
    %v2460 = vunpack.c.l.b16 %v2332
    %v2461 = vunpack.c.l.b16 %v2333
    %v2462 = vunpack.c.l.b16 %v2334
    %v2463 = vunpack.c.l.b16 %v2335
    %v2464 = vunpack.c.l.b16 %v2336
    %v2465 = vunpack.c.l.b16 %v2337
    %v2466 = vunpack.c.l.b16 %v2338
    %v2467 = vunpack.c.l.b16 %v2339
    %v2468 = vunpack.c.l.b16 %v2340
    %v2469 = vunpack.c.l.b16 %v2341
    %v2470 = vunpack.c.l.b16 %v2342
    %v2471 = vunpack.c.l.b16 %v2343
    %v2472 = vunpack.c.l.b16 %v2344
    %v2473 = vunpack.c.l.b16 %v2345
    %v2474 = vunpack.c.l.b16 %v2346
    %v2475 = vpack.c.b16 %v2412, %v2411
    %v2476 = vpack.c.b16 %v2414, %v2413
    %v2477 = vpack.c.b16 %v2416, %v2415
    %v2478 = vpack.c.b16 %v2418, %v2417
    %v2479 = vpack.c.b16 %v2420, %v2419
    %v2480 = vpack.c.b16 %v2422, %v2421
    %v2481 = vpack.c.b16 %v2424, %v2423
    %v2482 = vpack.c.b16 %v2426, %v2425
    %v2483 = vpack.c.b16 %v2428, %v2427
    %v2484 = vpack.c.b16 %v2430, %v2429
    %v2485 = vpack.c.b16 %v2432, %v2431
    %v2486 = vpack.c.b16 %v2434, %v2433
    %v2487 = vpack.c.b16 %v2436, %v2435
    %v2488 = vpack.c.b16 %v2438, %v2437
    %v2489 = vpack.c.b16 %v2440, %v2439
    %v2490 = vpack.c.b16 %v2442, %v2441
    %v2491 = vpack.c.b16 %v2444, %v2443
    %v2492 = vpack.c.b16 %v2446, %v2445
    %v2493 = vpack.c.b16 %v2448, %v2447
    %v2494 = vpack.c.b16 %v2450, %v2449
    %v2495 = vpack.c.b16 %v2452, %v2451
    %v2496 = vpack.c.b16 %v2454, %v2453
    %v2497 = vpack.c.b16 %v2456, %v2455
    %v2498 = vpack.c.b16 %v2458, %v2457
    %v2499 = vpack.c.b16 %v2460, %v2459
    %v2500 = vpack.c.b16 %v2462, %v2461
    %v2501 = vpack.c.b16 %v2464, %v2463
    %v2502 = vpack.c.b16 %v2466, %v2465
    %v2503 = vpack.c.b16 %v2468, %v2467
    %v2504 = vpack.c.b16 %v2470, %v2469
    %v2505 = vpack.c.b16 %v2472, %v2471
    %v2506 = vpack.c.b16 %v2474, %v2473
    %2539 = vmatpush.bf16.msra.mxu0 %v2482
    %2540 = vmatpush.bf16.msra.mxu0 %v2481
    %2541 = vmatpush.bf16.msra.mxu0 %v2480
    %2542 = vmatpush.bf16.msra.mxu0 %v2479
    %2543 = vmatpush.bf16.msra.mxu0 %v2478
    %2544 = vmatpush.bf16.msra.mxu0 %v2477
    %2545 = vmatpush.bf16.msra.mxu0 %v2476
    %2546 = vmatpush.bf16.msra.mxu0 %v2475
    %2547 = vmatmul.bf16.gmra.mxu0 %v2275
    %v2548 = vpop.f32.mrf.mxu0
    %v2549 = vadd.f32 0.0, %v2548
    %v2550 = vpop.f32.mrf.mxu0
    %v2551 = vadd.f32 0.0, %v2550
    %2552 = vmatmul.bf16.gmra.mxu0 %v2279
    %v2553 = vpop.f32.mrf.mxu0
    %v2554 = vadd.f32 0.0, %v2553
    %v2555 = vpop.f32.mrf.mxu0
    %2556 = vdwg.mxu0
    %2557 = vmatpush.bf16.msra.mxu0 %v2490
    %2558 = vmatpush.bf16.msra.mxu0 %v2489
    %2559 = vmatpush.bf16.msra.mxu0 %v2488
    %2560 = vmatpush.bf16.msra.mxu0 %v2487
    %2561 = vmatpush.bf16.msra.mxu0 %v2486
    %2562 = vmatpush.bf16.msra.mxu0 %v2485
    %2563 = vmatpush.bf16.msra.mxu0 %v2484
    %2564 = vmatpush.bf16.msra.mxu0 %v2483
    %2565 = vmatmul.bf16.gmra.mxu0 %v2276
    %v2566 = vpop.f32.mrf.mxu0
    %v2567 = vadd.f32 %v2549, %v2566
    %v2568 = vpop.f32.mrf.mxu0
    %v2569 = vadd.f32 %v2551, %v2568
    %2570 = vmatmul.bf16.gmra.mxu0 %v2280
    %v2571 = vpop.f32.mrf.mxu0
    %v2572 = vadd.f32 %v2554, %v2571
    %v2573 = vpop.f32.mrf.mxu0
    %2574 = vdwg.mxu0
    %2575 = vmatpush.bf16.msra.mxu0 %v2498
    %2576 = vmatpush.bf16.msra.mxu0 %v2497
    %2577 = vmatpush.bf16.msra.mxu0 %v2496
    %2578 = vmatpush.bf16.msra.mxu0 %v2495
    %2579 = vmatpush.bf16.msra.mxu0 %v2494
    %2580 = vmatpush.bf16.msra.mxu0 %v2493
    %2581 = vmatpush.bf16.msra.mxu0 %v2492
    %2582 = vmatpush.bf16.msra.mxu0 %v2491
    %2583 = vmatmul.bf16.gmra.mxu0 %v2277
    %v2584 = vpop.f32.mrf.mxu0
    %v2585 = vadd.f32 %v2567, %v2584
    %v2586 = vpop.f32.mrf.mxu0
    %v2587 = vadd.f32 %v2569, %v2586
    %2588 = vmatmul.bf16.gmra.mxu0 %v2281
    %v2589 = vpop.f32.mrf.mxu0
    %v2590 = vadd.f32 %v2572, %v2589
    %v2591 = vpop.f32.mrf.mxu0
    %2592 = vdwg.mxu0
    %2593 = vmatpush.bf16.msra.mxu0 %v2506
    %2594 = vmatpush.bf16.msra.mxu0 %v2505
    %2595 = vmatpush.bf16.msra.mxu0 %v2504
    %2596 = vmatpush.bf16.msra.mxu0 %v2503
    %2597 = vmatpush.bf16.msra.mxu0 %v2502
    %2598 = vmatpush.bf16.msra.mxu0 %v2501
    %2599 = vmatpush.bf16.msra.mxu0 %v2500
    %2600 = vmatpush.bf16.msra.mxu0 %v2499
    %2601 = vmatmul.bf16.gmra.mxu0 %v2278
    %v2602 = vpop.f32.mrf.mxu0
    %v2603 = vadd.f32 %v2585, %v2602
    %v2604 = vpop.f32.mrf.mxu0
    %v2605 = vadd.f32 %v2587, %v2604
    %2606 = vmatmul.bf16.gmra.mxu0 %v2282
    %v2607 = vpop.f32.mrf.mxu0
    %v2608 = vadd.f32 %v2590, %v2607
    %v2609 = vpop.f32.mrf.mxu0
    %2610 = vdwg.mxu0
    %v2611 = vadd.f32 %v2077, %v2603
    %v2612 = vadd.f32 %v2079, %v2605
    %v2613 = vadd.f32 %v2082, %v2608
    %v2614 = vld [vmem:[%s25 + $0x30] sm:$0xff]
    %v2615 = vld [vmem:[%s25 + $0x38] sm:$0xff]
    %v2616 = vld [vmem:[%s25 + $0x70] sm:$0xff]
    %v2617 = vld [vmem:[%s25 + $0x78] sm:$0xff]
    %v2618 = vld [vmem:[%s25 + $0xb0] sm:$0xff]
    %v2619 = vld [vmem:[%s25 + $0xb8] sm:$0xff]
    %v2620 = vld [vmem:[%s25 + $0xf0] sm:$0xff]
    %v2621 = vld [vmem:[%s25 + $0xf8] sm:$0xff]
    %v2622 = vld [vmem:[%s25 + $0x130] sm:$0xff]
    %v2623 = vld [vmem:[%s25 + $0x138] sm:$0xff]
    %v2624 = vld [vmem:[%s25 + $0x170] sm:$0xff]
    %v2625 = vld [vmem:[%s25 + $0x178] sm:$0xff]
    %v2626 = vld [vmem:[%s25 + $0x1b0] sm:$0xff]
    %v2627 = vld [vmem:[%s25 + $0x1b8] sm:$0xff]
    %v2628 = vld [vmem:[%s25 + $0x1f0] sm:$0xff]
    %v2629 = vld [vmem:[%s25 + $0x1f8] sm:$0xff]
    %v2630 = vld [vmem:[%s27 + $0xc] sm:$0xf]
    %v2632 = vperm.slane %v2630, 0
    %v2633 = vperm.slane %v2630, 1
    %v2634 = vperm.slane %v2630, 2
    %v2635 = vperm.slane %v2630, 3
    %v2656 = vunpack.c.l.b16 %v2614
    %v2657 = vunpack.c.h.b16 %v2614
    %v2658 = vunpack.c.l.b16 %v2615
    %v2659 = vunpack.c.h.b16 %v2615
    %v2660 = vunpack.c.l.b16 %v2616
    %v2661 = vunpack.c.h.b16 %v2616
    %v2662 = vunpack.c.l.b16 %v2617
    %v2663 = vunpack.c.h.b16 %v2617
    %v2664 = vunpack.c.l.b16 %v2618
    %v2665 = vunpack.c.h.b16 %v2618
    %v2666 = vunpack.c.l.b16 %v2619
    %v2667 = vunpack.c.h.b16 %v2619
    %v2668 = vunpack.c.l.b16 %v2620
    %v2669 = vunpack.c.h.b16 %v2620
    %v2670 = vunpack.c.l.b16 %v2621
    %v2671 = vunpack.c.h.b16 %v2621
    %v2672 = vunpack.c.l.b16 %v2622
    %v2673 = vunpack.c.h.b16 %v2622
    %v2674 = vunpack.c.l.b16 %v2623
    %v2675 = vunpack.c.h.b16 %v2623
    %v2676 = vunpack.c.l.b16 %v2624
    %v2677 = vunpack.c.h.b16 %v2624
    %v2678 = vunpack.c.l.b16 %v2625
    %v2679 = vunpack.c.h.b16 %v2625
    %v2680 = vunpack.c.l.b16 %v2626
    %v2681 = vunpack.c.h.b16 %v2626
    %v2682 = vunpack.c.l.b16 %v2627
    %v2683 = vunpack.c.h.b16 %v2627
    %v2684 = vunpack.c.l.b16 %v2628
    %v2685 = vunpack.c.h.b16 %v2628
    %v2686 = vunpack.c.l.b16 %v2629
    %v2687 = vunpack.c.h.b16 %v2629
    %v2688 = vpack.c.b16 %v2660, %v2656
    %v2689 = vpack.c.b16 %v2661, %v2657
    %v2690 = vpack.c.b16 %v2662, %v2658
    %v2691 = vpack.c.b16 %v2663, %v2659
    %v2692 = vpack.c.b16 %v2668, %v2664
    %v2693 = vpack.c.b16 %v2669, %v2665
    %v2694 = vpack.c.b16 %v2670, %v2666
    %v2695 = vpack.c.b16 %v2671, %v2667
    %v2696 = vpack.c.b16 %v2676, %v2672
    %v2697 = vpack.c.b16 %v2677, %v2673
    %v2698 = vpack.c.b16 %v2678, %v2674
    %v2699 = vpack.c.b16 %v2679, %v2675
    %v2700 = vpack.c.b16 %v2684, %v2680
    %v2701 = vpack.c.b16 %v2685, %v2681
    %v2702 = vpack.c.b16 %v2686, %v2682
    %v2703 = vpack.c.b16 %v2687, %v2683
    %2720 = vmatpush.bf16.msra.mxu0 0
    %2721 = vmatpush.bf16.msra.mxu0 0
    %2722 = vmatpush.bf16.msra.mxu0 0
    %2723 = vmatpush.bf16.msra.mxu0 0
    %2724 = vmatpush.bf16.msra.mxu0 %v2700
    %2725 = vmatpush.bf16.msra.mxu0 %v2696
    %2726 = vmatpush.bf16.msra.mxu0 %v2692
    %2727 = vmatpush.bf16.msra.mxu0 %v2688
    %2728 = vmatmul.bf16.gmra.mxu0 %v1134
    %v2729 = vpop.f32.mrf.mxu0
    %v2730 = vadd.f32 %v2632, %v2729
    %v2731 = vpop.f32.mrf.mxu0
    %v2732 = vadd.f32 %v2632, %v2731
    %2733 = vmatmul.bf16.gmra.mxu0 %v1137
    %v2734 = vpop.f32.mrf.mxu0
    %v2735 = vadd.f32 %v2632, %v2734
    %v2736 = vpop.f32.mrf.mxu0
    %2737 = vdwg.mxu0
    %2738 = vmatpush.bf16.msra.mxu0 0
    %2739 = vmatpush.bf16.msra.mxu0 0
    %2740 = vmatpush.bf16.msra.mxu0 0
    %2741 = vmatpush.bf16.msra.mxu0 0
    %2742 = vmatpush.bf16.msra.mxu0 %v2701
    %2743 = vmatpush.bf16.msra.mxu0 %v2697
    %2744 = vmatpush.bf16.msra.mxu0 %v2693
    %2745 = vmatpush.bf16.msra.mxu0 %v2689
    %2746 = vmatmul.bf16.gmra.mxu0 %v1134
    %v2747 = vpop.f32.mrf.mxu0
    %v2748 = vadd.f32 %v2633, %v2747
    %v2749 = vpop.f32.mrf.mxu0
    %v2750 = vadd.f32 %v2633, %v2749
    %2751 = vmatmul.bf16.gmra.mxu0 %v1137
    %v2752 = vpop.f32.mrf.mxu0
    %v2753 = vadd.f32 %v2633, %v2752
    %v2754 = vpop.f32.mrf.mxu0
    %2755 = vdwg.mxu0
    %2756 = vmatpush.bf16.msra.mxu0 0
    %2757 = vmatpush.bf16.msra.mxu0 0
    %2758 = vmatpush.bf16.msra.mxu0 0
    %2759 = vmatpush.bf16.msra.mxu0 0
    %2760 = vmatpush.bf16.msra.mxu0 %v2702
    %2761 = vmatpush.bf16.msra.mxu0 %v2698
    %2762 = vmatpush.bf16.msra.mxu0 %v2694
    %2763 = vmatpush.bf16.msra.mxu0 %v2690
    %2764 = vmatmul.bf16.gmra.mxu0 %v1134
    %v2765 = vpop.f32.mrf.mxu0
    %v2766 = vadd.f32 %v2634, %v2765
    %v2767 = vpop.f32.mrf.mxu0
    %v2768 = vadd.f32 %v2634, %v2767
    %2769 = vmatmul.bf16.gmra.mxu0 %v1137
    %v2770 = vpop.f32.mrf.mxu0
    %v2771 = vadd.f32 %v2634, %v2770
    %v2772 = vpop.f32.mrf.mxu0
    %2773 = vdwg.mxu0
    %2774 = vmatpush.bf16.msra.mxu0 0
    %2775 = vmatpush.bf16.msra.mxu0 0
    %2776 = vmatpush.bf16.msra.mxu0 0
    %2777 = vmatpush.bf16.msra.mxu0 0
    %2778 = vmatpush.bf16.msra.mxu0 %v2703
    %2779 = vmatpush.bf16.msra.mxu0 %v2699
    %2780 = vmatpush.bf16.msra.mxu0 %v2695
    %2781 = vmatpush.bf16.msra.mxu0 %v2691
    %2782 = vmatmul.bf16.gmra.mxu0 %v1134
    %v2783 = vpop.f32.mrf.mxu0
    %v2784 = vadd.f32 %v2635, %v2783
    %v2785 = vpop.f32.mrf.mxu0
    %v2786 = vadd.f32 %v2635, %v2785
    %2787 = vmatmul.bf16.gmra.mxu0 %v1137
    %v2788 = vpop.f32.mrf.mxu0
    %v2789 = vadd.f32 %v2635, %v2788
    %v2790 = vpop.f32.mrf.mxu0
    %2791 = vdwg.mxu0
    %v2792 = vmax.f32 %v2730, 0.0
    %v2793 = vmax.f32 %v2748, 0.0
    %v2794 = vmax.f32 %v2766, 0.0
    %v2795 = vmax.f32 %v2784, 0.0
    %v2796 = vmax.f32 %v2732, 0.0
    %v2797 = vmax.f32 %v2750, 0.0
    %v2798 = vmax.f32 %v2768, 0.0
    %v2799 = vmax.f32 %v2786, 0.0
    %v2800 = vmax.f32 %v2735, 0.0
    %v2801 = vmax.f32 %v2753, 0.0
    %v2802 = vmax.f32 %v2771, 0.0
    %v2803 = vmax.f32 %v2789, 0.0
    %v2804 = vpack.c.bf16 %v2796, %v2792
    %v2805 = vpack.c.bf16 %v2797, %v2793
    %v2806 = vpack.c.bf16 %v2798, %v2794
    %v2807 = vpack.c.bf16 %v2799, %v2795
    %v2808 = vpack.c.bf16 %v2800, %v2800
    %v2809 = vpack.c.bf16 %v2801, %v2801
    %v2810 = vpack.c.bf16 %v2802, %v2802
    %v2811 = vpack.c.bf16 %v2803, %v2803
    %v2812 = vld [vmem:[%s29 + $0x300] sm:$0xf]
    %v2813 = vld [vmem:[%s29 + $0x304] sm:$0xf]
    %v2814 = vld [vmem:[%s29 + $0x308] sm:$0xf]
    %v2815 = vld [vmem:[%s29 + $0x30c] sm:$0xf]
    %v2816 = vld [vmem:[%s29 + $0x310] sm:$0xf]
    %v2817 = vld [vmem:[%s29 + $0x314] sm:$0xf]
    %v2818 = vld [vmem:[%s29 + $0x318] sm:$0xf]
    %v2819 = vld [vmem:[%s29 + $0x31c] sm:$0xf]
    %v2820 = vld [vmem:[%s29 + $0x320] sm:$0xf]
    %v2821 = vld [vmem:[%s29 + $0x324] sm:$0xf]
    %v2822 = vld [vmem:[%s29 + $0x328] sm:$0xf]
    %v2823 = vld [vmem:[%s29 + $0x32c] sm:$0xf]
    %v2824 = vld [vmem:[%s29 + $0x330] sm:$0xf]
    %v2825 = vld [vmem:[%s29 + $0x334] sm:$0xf]
    %v2826 = vld [vmem:[%s29 + $0x338] sm:$0xf]
    %v2827 = vld [vmem:[%s29 + $0x33c] sm:$0xf]
    %v2828 = vld [vmem:[%s29 + $0x340] sm:$0xf]
    %v2829 = vld [vmem:[%s29 + $0x344] sm:$0xf]
    %v2830 = vld [vmem:[%s29 + $0x348] sm:$0xf]
    %v2831 = vld [vmem:[%s29 + $0x34c] sm:$0xf]
    %v2832 = vld [vmem:[%s29 + $0x350] sm:$0xf]
    %v2833 = vld [vmem:[%s29 + $0x354] sm:$0xf]
    %v2834 = vld [vmem:[%s29 + $0x358] sm:$0xf]
    %v2835 = vld [vmem:[%s29 + $0x35c] sm:$0xf]
    %v2836 = vld [vmem:[%s29 + $0x360] sm:$0xf]
    %v2837 = vld [vmem:[%s29 + $0x364] sm:$0xf]
    %v2838 = vld [vmem:[%s29 + $0x368] sm:$0xf]
    %v2839 = vld [vmem:[%s29 + $0x36c] sm:$0xf]
    %v2840 = vld [vmem:[%s29 + $0x370] sm:$0xf]
    %v2841 = vld [vmem:[%s29 + $0x374] sm:$0xf]
    %v2842 = vld [vmem:[%s29 + $0x378] sm:$0xf]
    %v2843 = vld [vmem:[%s29 + $0x37c] sm:$0xf]
    %v2844 = vld [vmem:[%s29 + $0x380] sm:$0xf]
    %v2845 = vld [vmem:[%s29 + $0x384] sm:$0xf]
    %v2846 = vld [vmem:[%s29 + $0x388] sm:$0xf]
    %v2847 = vld [vmem:[%s29 + $0x38c] sm:$0xf]
    %v2848 = vld [vmem:[%s29 + $0x390] sm:$0xf]
    %v2849 = vld [vmem:[%s29 + $0x394] sm:$0xf]
    %v2850 = vld [vmem:[%s29 + $0x398] sm:$0xf]
    %v2851 = vld [vmem:[%s29 + $0x39c] sm:$0xf]
    %v2852 = vld [vmem:[%s29 + $0x3a0] sm:$0xf]
    %v2853 = vld [vmem:[%s29 + $0x3a4] sm:$0xf]
    %v2854 = vld [vmem:[%s29 + $0x3a8] sm:$0xf]
    %v2855 = vld [vmem:[%s29 + $0x3ac] sm:$0xf]
    %v2856 = vld [vmem:[%s29 + $0x3b0] sm:$0xf]
    %v2857 = vld [vmem:[%s29 + $0x3b4] sm:$0xf]
    %v2858 = vld [vmem:[%s29 + $0x3b8] sm:$0xf]
    %v2859 = vld [vmem:[%s29 + $0x3bc] sm:$0xf]
    %v2860 = vld [vmem:[%s29 + $0x3c0] sm:$0xf]
    %v2861 = vld [vmem:[%s29 + $0x3c4] sm:$0xf]
    %v2862 = vld [vmem:[%s29 + $0x3c8] sm:$0xf]
    %v2863 = vld [vmem:[%s29 + $0x3cc] sm:$0xf]
    %v2864 = vld [vmem:[%s29 + $0x3d0] sm:$0xf]
    %v2865 = vld [vmem:[%s29 + $0x3d4] sm:$0xf]
    %v2866 = vld [vmem:[%s29 + $0x3d8] sm:$0xf]
    %v2867 = vld [vmem:[%s29 + $0x3dc] sm:$0xf]
    %v2868 = vld [vmem:[%s29 + $0x3e0] sm:$0xf]
    %v2869 = vld [vmem:[%s29 + $0x3e4] sm:$0xf]
    %v2870 = vld [vmem:[%s29 + $0x3e8] sm:$0xf]
    %v2871 = vld [vmem:[%s29 + $0x3ec] sm:$0xf]
    %v2872 = vld [vmem:[%s29 + $0x3f0] sm:$0xf]
    %v2873 = vld [vmem:[%s29 + $0x3f4] sm:$0xf]
    %v2874 = vld [vmem:[%s29 + $0x3f8] sm:$0xf]
    %v2875 = vld [vmem:[%s29 + $0x3fc] sm:$0xf]
    %v2940 = vunpack.c.l.b16 %v2812
    %v2941 = vunpack.c.l.b16 %v2813
    %v2942 = vunpack.c.l.b16 %v2814
    %v2943 = vunpack.c.l.b16 %v2815
    %v2944 = vunpack.c.l.b16 %v2816
    %v2945 = vunpack.c.l.b16 %v2817
    %v2946 = vunpack.c.l.b16 %v2818
    %v2947 = vunpack.c.l.b16 %v2819
    %v2948 = vunpack.c.l.b16 %v2820
    %v2949 = vunpack.c.l.b16 %v2821
    %v2950 = vunpack.c.l.b16 %v2822
    %v2951 = vunpack.c.l.b16 %v2823
    %v2952 = vunpack.c.l.b16 %v2824
    %v2953 = vunpack.c.l.b16 %v2825
    %v2954 = vunpack.c.l.b16 %v2826
    %v2955 = vunpack.c.l.b16 %v2827
    %v2956 = vunpack.c.l.b16 %v2828
    %v2957 = vunpack.c.l.b16 %v2829
    %v2958 = vunpack.c.l.b16 %v2830
    %v2959 = vunpack.c.l.b16 %v2831
    %v2960 = vunpack.c.l.b16 %v2832
    %v2961 = vunpack.c.l.b16 %v2833
    %v2962 = vunpack.c.l.b16 %v2834
    %v2963 = vunpack.c.l.b16 %v2835
    %v2964 = vunpack.c.l.b16 %v2836
    %v2965 = vunpack.c.l.b16 %v2837
    %v2966 = vunpack.c.l.b16 %v2838
    %v2967 = vunpack.c.l.b16 %v2839
    %v2968 = vunpack.c.l.b16 %v2840
    %v2969 = vunpack.c.l.b16 %v2841
    %v2970 = vunpack.c.l.b16 %v2842
    %v2971 = vunpack.c.l.b16 %v2843
    %v2972 = vunpack.c.l.b16 %v2844
    %v2973 = vunpack.c.l.b16 %v2845
    %v2974 = vunpack.c.l.b16 %v2846
    %v2975 = vunpack.c.l.b16 %v2847
    %v2976 = vunpack.c.l.b16 %v2848
    %v2977 = vunpack.c.l.b16 %v2849
    %v2978 = vunpack.c.l.b16 %v2850
    %v2979 = vunpack.c.l.b16 %v2851
    %v2980 = vunpack.c.l.b16 %v2852
    %v2981 = vunpack.c.l.b16 %v2853
    %v2982 = vunpack.c.l.b16 %v2854
    %v2983 = vunpack.c.l.b16 %v2855
    %v2984 = vunpack.c.l.b16 %v2856
    %v2985 = vunpack.c.l.b16 %v2857
    %v2986 = vunpack.c.l.b16 %v2858
    %v2987 = vunpack.c.l.b16 %v2859
    %v2988 = vunpack.c.l.b16 %v2860
    %v2989 = vunpack.c.l.b16 %v2861
    %v2990 = vunpack.c.l.b16 %v2862
    %v2991 = vunpack.c.l.b16 %v2863
    %v2992 = vunpack.c.l.b16 %v2864
    %v2993 = vunpack.c.l.b16 %v2865
    %v2994 = vunpack.c.l.b16 %v2866
    %v2995 = vunpack.c.l.b16 %v2867
    %v2996 = vunpack.c.l.b16 %v2868
    %v2997 = vunpack.c.l.b16 %v2869
    %v2998 = vunpack.c.l.b16 %v2870
    %v2999 = vunpack.c.l.b16 %v2871
    %v3000 = vunpack.c.l.b16 %v2872
    %v3001 = vunpack.c.l.b16 %v2873
    %v3002 = vunpack.c.l.b16 %v2874
    %v3003 = vunpack.c.l.b16 %v2875
    %v3004 = vpack.c.b16 %v2941, %v2940
    %v3005 = vpack.c.b16 %v2943, %v2942
    %v3006 = vpack.c.b16 %v2945, %v2944
    %v3007 = vpack.c.b16 %v2947, %v2946
    %v3008 = vpack.c.b16 %v2949, %v2948
    %v3009 = vpack.c.b16 %v2951, %v2950
    %v3010 = vpack.c.b16 %v2953, %v2952
    %v3011 = vpack.c.b16 %v2955, %v2954
    %v3012 = vpack.c.b16 %v2957, %v2956
    %v3013 = vpack.c.b16 %v2959, %v2958
    %v3014 = vpack.c.b16 %v2961, %v2960
    %v3015 = vpack.c.b16 %v2963, %v2962
    %v3016 = vpack.c.b16 %v2965, %v2964
    %v3017 = vpack.c.b16 %v2967, %v2966
    %v3018 = vpack.c.b16 %v2969, %v2968
    %v3019 = vpack.c.b16 %v2971, %v2970
    %v3020 = vpack.c.b16 %v2973, %v2972
    %v3021 = vpack.c.b16 %v2975, %v2974
    %v3022 = vpack.c.b16 %v2977, %v2976
    %v3023 = vpack.c.b16 %v2979, %v2978
    %v3024 = vpack.c.b16 %v2981, %v2980
    %v3025 = vpack.c.b16 %v2983, %v2982
    %v3026 = vpack.c.b16 %v2985, %v2984
    %v3027 = vpack.c.b16 %v2987, %v2986
    %v3028 = vpack.c.b16 %v2989, %v2988
    %v3029 = vpack.c.b16 %v2991, %v2990
    %v3030 = vpack.c.b16 %v2993, %v2992
    %v3031 = vpack.c.b16 %v2995, %v2994
    %v3032 = vpack.c.b16 %v2997, %v2996
    %v3033 = vpack.c.b16 %v2999, %v2998
    %v3034 = vpack.c.b16 %v3001, %v3000
    %v3035 = vpack.c.b16 %v3003, %v3002
    %3068 = vmatpush.bf16.msra.mxu0 %v3011
    %3069 = vmatpush.bf16.msra.mxu0 %v3010
    %3070 = vmatpush.bf16.msra.mxu0 %v3009
    %3071 = vmatpush.bf16.msra.mxu0 %v3008
    %3072 = vmatpush.bf16.msra.mxu0 %v3007
    %3073 = vmatpush.bf16.msra.mxu0 %v3006
    %3074 = vmatpush.bf16.msra.mxu0 %v3005
    %3075 = vmatpush.bf16.msra.mxu0 %v3004
    %3076 = vmatmul.bf16.gmra.mxu0 %v2804
    %v3077 = vpop.f32.mrf.mxu0
    %v3078 = vadd.f32 0.0, %v3077
    %v3079 = vpop.f32.mrf.mxu0
    %v3080 = vadd.f32 0.0, %v3079
    %3081 = vmatmul.bf16.gmra.mxu0 %v2808
    %v3082 = vpop.f32.mrf.mxu0
    %v3083 = vadd.f32 0.0, %v3082
    %v3084 = vpop.f32.mrf.mxu0
    %3085 = vdwg.mxu0
    %3086 = vmatpush.bf16.msra.mxu0 %v3019
    %3087 = vmatpush.bf16.msra.mxu0 %v3018
    %3088 = vmatpush.bf16.msra.mxu0 %v3017
    %3089 = vmatpush.bf16.msra.mxu0 %v3016
    %3090 = vmatpush.bf16.msra.mxu0 %v3015
    %3091 = vmatpush.bf16.msra.mxu0 %v3014
    %3092 = vmatpush.bf16.msra.mxu0 %v3013
    %3093 = vmatpush.bf16.msra.mxu0 %v3012
    %3094 = vmatmul.bf16.gmra.mxu0 %v2805
    %v3095 = vpop.f32.mrf.mxu0
    %v3096 = vadd.f32 %v3078, %v3095
    %v3097 = vpop.f32.mrf.mxu0
    %v3098 = vadd.f32 %v3080, %v3097
    %3099 = vmatmul.bf16.gmra.mxu0 %v2809
    %v3100 = vpop.f32.mrf.mxu0
    %v3101 = vadd.f32 %v3083, %v3100
    %v3102 = vpop.f32.mrf.mxu0
    %3103 = vdwg.mxu0
    %3104 = vmatpush.bf16.msra.mxu0 %v3027
    %3105 = vmatpush.bf16.msra.mxu0 %v3026
    %3106 = vmatpush.bf16.msra.mxu0 %v3025
    %3107 = vmatpush.bf16.msra.mxu0 %v3024
    %3108 = vmatpush.bf16.msra.mxu0 %v3023
    %3109 = vmatpush.bf16.msra.mxu0 %v3022
    %3110 = vmatpush.bf16.msra.mxu0 %v3021
    %3111 = vmatpush.bf16.msra.mxu0 %v3020
    %3112 = vmatmul.bf16.gmra.mxu0 %v2806
    %v3113 = vpop.f32.mrf.mxu0
    %v3114 = vadd.f32 %v3096, %v3113
    %v3115 = vpop.f32.mrf.mxu0
    %v3116 = vadd.f32 %v3098, %v3115
    %3117 = vmatmul.bf16.gmra.mxu0 %v2810
    %v3118 = vpop.f32.mrf.mxu0
    %v3119 = vadd.f32 %v3101, %v3118
    %v3120 = vpop.f32.mrf.mxu0
    %3121 = vdwg.mxu0
    %3122 = vmatpush.bf16.msra.mxu0 %v3035
    %3123 = vmatpush.bf16.msra.mxu0 %v3034
    %3124 = vmatpush.bf16.msra.mxu0 %v3033
    %3125 = vmatpush.bf16.msra.mxu0 %v3032
    %3126 = vmatpush.bf16.msra.mxu0 %v3031
    %3127 = vmatpush.bf16.msra.mxu0 %v3030
    %3128 = vmatpush.bf16.msra.mxu0 %v3029
    %3129 = vmatpush.bf16.msra.mxu0 %v3028
    %3130 = vmatmul.bf16.gmra.mxu0 %v2807
    %v3131 = vpop.f32.mrf.mxu0
    %v3132 = vadd.f32 %v3114, %v3131
    %v3133 = vpop.f32.mrf.mxu0
    %v3134 = vadd.f32 %v3116, %v3133
    %3135 = vmatmul.bf16.gmra.mxu0 %v2811
    %v3136 = vpop.f32.mrf.mxu0
    %v3137 = vadd.f32 %v3119, %v3136
    %v3138 = vpop.f32.mrf.mxu0
    %3139 = vdwg.mxu0
    %v3140 = vadd.f32 %v2611, %v3132
    %v3141 = vadd.f32 %v2612, %v3134
    %v3142 = vadd.f32 %v2613, %v3137
    %v3143 = vadd.f32 %v1022, %v3140
    %v3144 = vadd.f32 %v1023, %v3141
    %v3145 = vadd.f32 %v1024, %v3142
    %v3146 = vld [vmem:[%s31] sm:$0x1]
    %v3148 = vperm.slane %v3146, 0
    %v3150 = vadd.f32 %v3143, %v3148
    %v3151 = vadd.f32 %v3144, %v3148
    %v3152 = vadd.f32 %v3145, %v3148
    %v3153 = vld [vmem:[%s33] sm:$0x1]
    %v3154 = vld [vmem:[%s35] sm:$0x1]
    %v3155 = vsel %vm171, %v3150, 0.0
    %3156 = vadd.xlane.f32.xlu0 %v3155
    %v3157 = vpop.xlane.xlu0 %3156
    %v3158 = vsel %vm171, %v3151, 0.0
    %3159 = vadd.xlane.f32.xlu0 %v3158
    %v3160 = vpop.xlane.xlu0 %3159
    %v3161 = vsel %vm171, %v3152, 0.0
    %3162 = vadd.xlane.f32.xlu0 %v3161
    %v3163 = vpop.xlane.xlu0 %3162
    %v3164 = vmul.f32 %v3157, %v955
    %v3165 = vmul.f32 %v3160, %v955
    %v3166 = vmul.f32 %v3163, %v955
    %v3167 = vsub.f32 %v3150, %v3164
    %v3168 = vsub.f32 %v3151, %v3165
    %v3169 = vsub.f32 %v3152, %v3166
    %v3170 = vmul.f32 %v3167, %v3167
    %v3171 = vmul.f32 %v3168, %v3168
    %v3172 = vmul.f32 %v3169, %v3169
    %v3173 = vsel %vm171, %v3170, 0.0
    %3174 = vadd.xlane.f32.xlu0 %v3173
    %v3175 = vpop.xlane.xlu0 %3174
    %v3176 = vsel %vm171, %v3171, 0.0
    %3177 = vadd.xlane.f32.xlu0 %v3176
    %v3178 = vpop.xlane.xlu0 %3177
    %v3179 = vsel %vm171, %v3172, 0.0
    %3180 = vadd.xlane.f32.xlu0 %v3179
    %v3181 = vpop.xlane.xlu0 %3180
    %v3182 = vmul.f32 %v3175, %v955
    %v3183 = vmul.f32 %v3178, %v955
    %v3184 = vmul.f32 %v3181, %v955
    %v3185 = vadd.f32 %v3182, 1e-05
    %v3186 = vadd.f32 %v3183, 1e-05
    %v3187 = vadd.f32 %v3184, 1e-05
    %v3188 = vrsqrt.pop %v3185
    %v3189 = vmul.f32 %v3188, %v3185
    %v3190 = vmul.f32 %v3189, %v3188
    %v3191 = vmul.f32 0.5, %v3190
    %v3192 = vsub.f32 1.5, %v3191
    %v3193 = vmul.f32 %v3188, %v3192
    %vm3194 = vweird.f32 %v3185
    %vm3195 = vweird.f32 %v3188
    %vm3196 = vmor %vm3194, %vm3195
    %v3197 = vsel %vm3196, %v3188, %v3193
    %v3198 = vrsqrt.pop %v3186
    %v3199 = vmul.f32 %v3198, %v3186
    %v3200 = vmul.f32 %v3199, %v3198
    %v3201 = vmul.f32 0.5, %v3200
    %v3202 = vsub.f32 1.5, %v3201
    %v3203 = vmul.f32 %v3198, %v3202
    %vm3204 = vweird.f32 %v3186
    %vm3205 = vweird.f32 %v3198
    %vm3206 = vmor %vm3204, %vm3205
    %v3207 = vsel %vm3206, %v3198, %v3203
    %v3208 = vrsqrt.pop %v3187
    %v3209 = vmul.f32 %v3208, %v3187
    %v3210 = vmul.f32 %v3209, %v3208
    %v3211 = vmul.f32 0.5, %v3210
    %v3212 = vsub.f32 1.5, %v3211
    %v3213 = vmul.f32 %v3208, %v3212
    %vm3214 = vweird.f32 %v3187
    %vm3215 = vweird.f32 %v3208
    %vm3216 = vmor %vm3214, %vm3215
    %v3217 = vsel %vm3216, %v3208, %v3213
    %v3218 = vmul.f32 %v3167, %v3197
    %v3219 = vmul.f32 %v3168, %v3207
    %v3220 = vmul.f32 %v3169, %v3217
    %v3222 = vperm.slane %v3153, 0
    %v3224 = vmul.f32 %v3218, %v3222
    %v3225 = vmul.f32 %v3219, %v3222
    %v3226 = vmul.f32 %v3220, %v3222
    %v3228 = vperm.slane %v3154, 0
    %v3230 = vadd.f32 %v3224, %v3228
    %v3231 = vadd.f32 %v3225, %v3228
    %v3232 = vadd.f32 %v3226, %v3228
    %s3233 = scalar_lea.vmem %s13, 192
    %v3234 = vld [vmem:[%s3233] sm:$0xff]
    %v3235 = vld [vmem:[%s3233 + $0x8] sm:$0xff]
    %v3236 = vld [vmem:[%s3233 + $0x10] sm:$0xff]
    %v3237 = vld [vmem:[%s3233 + $0x18] sm:$0xff]
    %v3238 = vld [vmem:[%s3233 + $0x20] sm:$0xff]
    %v3239 = vld [vmem:[%s3233 + $0x28] sm:$0xff]
    %v3240 = vld [vmem:[%s3233 + $0x30] sm:$0xff]
    %v3241 = vld [vmem:[%s3233 + $0x38] sm:$0xff]
    %v3242 = vld [vmem:[%s3233 + $0x40] sm:$0xff]
    %v3243 = vld [vmem:[%s3233 + $0x48] sm:$0xff]
    %v3244 = vld [vmem:[%s3233 + $0x50] sm:$0xff]
    %v3245 = vld [vmem:[%s3233 + $0x58] sm:$0xff]
    %v3246 = vld [vmem:[%s3233 + $0x60] sm:$0xff]
    %v3247 = vld [vmem:[%s3233 + $0x68] sm:$0xff]
    %v3248 = vld [vmem:[%s3233 + $0x70] sm:$0xff]
    %v3249 = vld [vmem:[%s3233 + $0x78] sm:$0xff]
    %v3250 = vld [vmem:[%s3233 + $0x80] sm:$0xff]
    %v3251 = vld [vmem:[%s3233 + $0x88] sm:$0xff]
    %v3252 = vld [vmem:[%s3233 + $0x90] sm:$0xff]
    %v3253 = vld [vmem:[%s3233 + $0x98] sm:$0xff]
    %v3254 = vld [vmem:[%s3233 + $0xa0] sm:$0xff]
    %v3255 = vld [vmem:[%s3233 + $0xa8] sm:$0xff]
    %v3256 = vld [vmem:[%s3233 + $0xb0] sm:$0xff]
    %v3257 = vld [vmem:[%s3233 + $0xb8] sm:$0xff]
    %s3258 = scalar_lea.vmem %s15, 3
    %v3259 = vld [vmem:[%s3258] sm:$0x7]
    %v3261 = vperm.slane %v3259, 0
    %v3262 = vperm.slane %v3259, 1
    %v3263 = vperm.slane %v3259, 2
    %v3268 = vsel %vm171, %v3230, 0
    %v3271 = vsel %vm171, %v3231, 0
    %v3274 = vsel %vm171, %v3232, 0
    %3276 = vmatpush.msra.mxu0 0.0
    %3277 = vmatpush.msra.mxu0 0.0
    %3278 = vmatpush.msra.mxu0 0.0
    %3279 = vmatpush.msra.mxu0 0.0
    %3280 = vmatpush.msra.mxu0 0.0
    %3281 = vmatpush.msra.mxu0 0.0
    %3282 = vmatpush.msra.mxu0 0.0
    %3283 = vmatpush.msra.mxu0 0.0
    %3284 = vmatpush.msra.mxu0 %v3255
    %3285 = vmatpush.msra.mxu0 %v3252
    %3286 = vmatpush.msra.mxu0 %v3249
    %3287 = vmatpush.msra.mxu0 %v3246
    %3288 = vmatpush.msra.mxu0 %v3243
    %3289 = vmatpush.msra.mxu0 %v3240
    %3290 = vmatpush.msra.mxu0 %v3237
    %3291 = vmatpush.msra.mxu0 %v3234
    %3292 = vmatmul.f32.gmra.mxu0 %v3268
    %v3293 = vpop.f32.mrf.mxu0
    %v3294 = vadd.f32 %v3261, %v3293
    %3295 = vmatmul.f32.gmra.mxu0 %v3271
    %v3296 = vpop.f32.mrf.mxu0
    %v3297 = vadd.f32 %v3261, %v3296
    %3298 = vmatmul.f32.gmra.mxu0 %v3274
    %v3299 = vpop.f32.mrf.mxu0
    %v3300 = vadd.f32 %v3261, %v3299
    %3301 = vdwg.mxu0
    %3302 = vmatpush.msra.mxu0 0.0
    %3303 = vmatpush.msra.mxu0 0.0
    %3304 = vmatpush.msra.mxu0 0.0
    %3305 = vmatpush.msra.mxu0 0.0
    %3306 = vmatpush.msra.mxu0 0.0
    %3307 = vmatpush.msra.mxu0 0.0
    %3308 = vmatpush.msra.mxu0 0.0
    %3309 = vmatpush.msra.mxu0 0.0
    %3310 = vmatpush.msra.mxu0 %v3256
    %3311 = vmatpush.msra.mxu0 %v3253
    %3312 = vmatpush.msra.mxu0 %v3250
    %3313 = vmatpush.msra.mxu0 %v3247
    %3314 = vmatpush.msra.mxu0 %v3244
    %3315 = vmatpush.msra.mxu0 %v3241
    %3316 = vmatpush.msra.mxu0 %v3238
    %3317 = vmatpush.msra.mxu0 %v3235
    %3318 = vmatmul.f32.gmra.mxu0 %v3268
    %v3319 = vpop.f32.mrf.mxu0
    %v3320 = vadd.f32 %v3262, %v3319
    %3321 = vmatmul.f32.gmra.mxu0 %v3271
    %v3322 = vpop.f32.mrf.mxu0
    %v3323 = vadd.f32 %v3262, %v3322
    %3324 = vmatmul.f32.gmra.mxu0 %v3274
    %v3325 = vpop.f32.mrf.mxu0
    %v3326 = vadd.f32 %v3262, %v3325
    %3327 = vdwg.mxu0
    %3328 = vmatpush.msra.mxu0 0.0
    %3329 = vmatpush.msra.mxu0 0.0
    %3330 = vmatpush.msra.mxu0 0.0
    %3331 = vmatpush.msra.mxu0 0.0
    %3332 = vmatpush.msra.mxu0 0.0
    %3333 = vmatpush.msra.mxu0 0.0
    %3334 = vmatpush.msra.mxu0 0.0
    %3335 = vmatpush.msra.mxu0 0.0
    %3336 = vmatpush.msra.mxu0 %v3257
    %3337 = vmatpush.msra.mxu0 %v3254
    %3338 = vmatpush.msra.mxu0 %v3251
    %3339 = vmatpush.msra.mxu0 %v3248
    %3340 = vmatpush.msra.mxu0 %v3245
    %3341 = vmatpush.msra.mxu0 %v3242
    %3342 = vmatpush.msra.mxu0 %v3239
    %3343 = vmatpush.msra.mxu0 %v3236
    %3344 = vmatmul.f32.gmra.mxu0 %v3268
    %v3345 = vpop.f32.mrf.mxu0
    %v3346 = vadd.f32 %v3263, %v3345
    %3347 = vmatmul.f32.gmra.mxu0 %v3271
    %v3348 = vpop.f32.mrf.mxu0
    %v3349 = vadd.f32 %v3263, %v3348
    %3350 = vmatmul.f32.gmra.mxu0 %v3274
    %v3351 = vpop.f32.mrf.mxu0
    %v3352 = vadd.f32 %v3263, %v3351
    %3353 = vdwg.mxu0
    %v3355 = vsel %vm141, %v3294, 0
    %v3358 = vsel %vm141, %v3297, 0
    %v3361 = vsel %vm141, %v3300, 0
    %v3364 = vsel %vm141, %v3320, 0
    %v3367 = vsel %vm141, %v3323, 0
    %v3370 = vsel %vm141, %v3326, 0
    %3372 = vmatpush.xpose.msra.mxu0 0.0
    %3373 = vmatpush.xpose.msra.mxu0 0.0
    %3374 = vmatpush.xpose.msra.mxu0 0.0
    %3375 = vmatpush.xpose.msra.mxu0 0.0
    %3376 = vmatpush.xpose.msra.mxu0 0.0
    %3377 = vmatpush.xpose.msra.mxu0 0.0
    %3378 = vmatpush.xpose.msra.mxu0 0.0
    %3379 = vmatpush.xpose.msra.mxu0 0.0
    %3380 = vmatpush.xpose.msra.mxu0 0.0
    %3381 = vmatpush.xpose.msra.mxu0 0.0
    %3382 = vmatpush.xpose.msra.mxu0 0.0
    %3383 = vmatpush.xpose.msra.mxu0 0.0
    %3384 = vmatpush.xpose.msra.mxu0 0.0
    %3385 = vmatpush.xpose.msra.mxu0 %v3370
    %3386 = vmatpush.xpose.msra.mxu0 %v3367
    %3387 = vmatpush.xpose.msra.mxu0 %v3364
    %3388 = vmatmul.f32.gmra.mxu0 %v3355
    %v3389 = vpop.f32.mrf.mxu0
    %v3390 = vadd.f32 0.0, %v3389
    %3391 = vmatmul.f32.gmra.mxu0 %v3358
    %v3392 = vpop.f32.mrf.mxu0
    %v3393 = vadd.f32 0.0, %v3392
    %3394 = vmatmul.f32.gmra.mxu0 %v3361
    %v3395 = vpop.f32.mrf.mxu0
    %v3396 = vadd.f32 0.0, %v3395
    %3397 = vdwg.mxu0
    %v3398 = vmul.f32 %v3390, 0.25
    %v3399 = vmul.f32 %v3393, 0.25
    %v3400 = vmul.f32 %v3396, 0.25
    %v3401 = vsel %vm379, %v3398, -inf
    %3402 = vmax.xlane.f32.xlu0 %v3401
    %v3403 = vpop.xlane.xlu0 %3402
    %v3404 = vsel %vm379, %v3399, -inf
    %3405 = vmax.xlane.f32.xlu0 %v3404
    %v3406 = vpop.xlane.xlu0 %3405
    %v3407 = vsel %vm379, %v3400, -inf
    %3408 = vmax.xlane.f32.xlu0 %v3407
    %v3409 = vpop.xlane.xlu0 %3408
    %v3410 = vsub.f32 %v3398, %v3403
    %v3411 = vsub.f32 %v3399, %v3406
    %v3412 = vsub.f32 %v3400, %v3409
    %v3413 = vmul.f32 %v3410, 1.442695
    %v3414 = vpow.pop %v3413
    %v3415 = vmul.f32 %v3411, 1.442695
    %v3416 = vpow.pop %v3415
    %v3417 = vmul.f32 %v3412, 1.442695
    %v3418 = vpow.pop %v3417
    %v3419 = vsel %vm379, %v3414, 0.0
    %3420 = vadd.xlane.f32.xlu0 %v3419
    %v3421 = vpop.xlane.xlu0 %3420
    %v3422 = vsel %vm379, %v3416, 0.0
    %3423 = vadd.xlane.f32.xlu0 %v3422
    %v3424 = vpop.xlane.xlu0 %3423
    %v3425 = vsel %vm379, %v3418, 0.0
    %3426 = vadd.xlane.f32.xlu0 %v3425
    %v3427 = vpop.xlane.xlu0 %3426
    %v3428 = vrcp.pop %v3421
    %v3429 = vrcp.pop %v3424
    %v3430 = vrcp.pop %v3427
    %v3431 = vmul.f32 %v3414, %v3428
    %v3432 = vmul.f32 %v3416, %v3429
    %v3433 = vmul.f32 %v3418, %v3430
    %v3435 = vsel %vm379, %v3431, 0
    %v3438 = vsel %vm379, %v3432, 0
    %v3441 = vsel %vm379, %v3433, 0
    %3443 = vmatpush.msra.mxu0 0.0
    %3444 = vmatpush.msra.mxu0 0.0
    %3445 = vmatpush.msra.mxu0 0.0
    %3446 = vmatpush.msra.mxu0 0.0
    %3447 = vmatpush.msra.mxu0 0.0
    %3448 = vmatpush.msra.mxu0 0.0
    %3449 = vmatpush.msra.mxu0 0.0
    %3450 = vmatpush.msra.mxu0 0.0
    %3451 = vmatpush.msra.mxu0 0.0
    %3452 = vmatpush.msra.mxu0 0.0
    %3453 = vmatpush.msra.mxu0 0.0
    %3454 = vmatpush.msra.mxu0 0.0
    %3455 = vmatpush.msra.mxu0 0.0
    %3456 = vmatpush.msra.mxu0 %v3352
    %3457 = vmatpush.msra.mxu0 %v3349
    %3458 = vmatpush.msra.mxu0 %v3346
    %3459 = vmatmul.f32.gmra.mxu0 %v3435
    %v3460 = vpop.f32.mrf.mxu0
    %v3461 = vadd.f32 0.0, %v3460
    %3462 = vmatmul.f32.gmra.mxu0 %v3438
    %v3463 = vpop.f32.mrf.mxu0
    %v3464 = vadd.f32 0.0, %v3463
    %3465 = vmatmul.f32.gmra.mxu0 %v3441
    %v3466 = vpop.f32.mrf.mxu0
    %v3467 = vadd.f32 0.0, %v3466
    %3468 = vdwg.mxu0
    %3469 = vrot.lane.b32.xlu0 %v3294, 112
    %v3470 = vpop.permute.xlu0 %3469
    %3471 = vrot.lane.b32.xlu0 %v3297, 112
    %v3472 = vpop.permute.xlu0 %3471
    %3473 = vrot.lane.b32.xlu0 %v3300, 112
    %v3474 = vpop.permute.xlu0 %3473
    %3475 = vrot.lane.b32.xlu0 %v3320, 112
    %v3476 = vpop.permute.xlu0 %3475
    %3477 = vrot.lane.b32.xlu0 %v3323, 112
    %v3478 = vpop.permute.xlu0 %3477
    %3479 = vrot.lane.b32.xlu0 %v3326, 112
    %v3480 = vpop.permute.xlu0 %3479
    %v3481 = vsel %vm141, %v3470, 0
    %v3483 = vsel %vm141, %v3472, 0
    %v3485 = vsel %vm141, %v3474, 0
    %v3487 = vsel %vm141, %v3476, 0
    %v3489 = vsel %vm141, %v3478, 0
    %v3491 = vsel %vm141, %v3480, 0
    %3493 = vmatpush.xpose.msra.mxu0 0.0
    %3494 = vmatpush.xpose.msra.mxu0 0.0
    %3495 = vmatpush.xpose.msra.mxu0 0.0
    %3496 = vmatpush.xpose.msra.mxu0 0.0
    %3497 = vmatpush.xpose.msra.mxu0 0.0
    %3498 = vmatpush.xpose.msra.mxu0 0.0
    %3499 = vmatpush.xpose.msra.mxu0 0.0
    %3500 = vmatpush.xpose.msra.mxu0 0.0
    %3501 = vmatpush.xpose.msra.mxu0 0.0
    %3502 = vmatpush.xpose.msra.mxu0 0.0
    %3503 = vmatpush.xpose.msra.mxu0 0.0
    %3504 = vmatpush.xpose.msra.mxu0 0.0
    %3505 = vmatpush.xpose.msra.mxu0 0.0
    %3506 = vmatpush.xpose.msra.mxu0 %v3491
    %3507 = vmatpush.xpose.msra.mxu0 %v3489
    %3508 = vmatpush.xpose.msra.mxu0 %v3487
    %3509 = vmatmul.f32.gmra.mxu0 %v3481
    %v3510 = vpop.f32.mrf.mxu0
    %v3511 = vadd.f32 0.0, %v3510
    %3512 = vmatmul.f32.gmra.mxu0 %v3483
    %v3513 = vpop.f32.mrf.mxu0
    %v3514 = vadd.f32 0.0, %v3513
    %3515 = vmatmul.f32.gmra.mxu0 %v3485
    %v3516 = vpop.f32.mrf.mxu0
    %v3517 = vadd.f32 0.0, %v3516
    %3518 = vdwg.mxu0
    %v3519 = vmul.f32 %v3511, 0.25
    %v3520 = vmul.f32 %v3514, 0.25
    %v3521 = vmul.f32 %v3517, 0.25
    %v3522 = vsel %vm379, %v3519, -inf
    %3523 = vmax.xlane.f32.xlu0 %v3522
    %v3524 = vpop.xlane.xlu0 %3523
    %v3525 = vsel %vm379, %v3520, -inf
    %3526 = vmax.xlane.f32.xlu0 %v3525
    %v3527 = vpop.xlane.xlu0 %3526
    %v3528 = vsel %vm379, %v3521, -inf
    %3529 = vmax.xlane.f32.xlu0 %v3528
    %v3530 = vpop.xlane.xlu0 %3529
    %v3531 = vsub.f32 %v3519, %v3524
    %v3532 = vsub.f32 %v3520, %v3527
    %v3533 = vsub.f32 %v3521, %v3530
    %v3534 = vmul.f32 %v3531, 1.442695
    %v3535 = vpow.pop %v3534
    %v3536 = vmul.f32 %v3532, 1.442695
    %v3537 = vpow.pop %v3536
    %v3538 = vmul.f32 %v3533, 1.442695
    %v3539 = vpow.pop %v3538
    %v3540 = vsel %vm379, %v3535, 0.0
    %3541 = vadd.xlane.f32.xlu0 %v3540
    %v3542 = vpop.xlane.xlu0 %3541
    %v3543 = vsel %vm379, %v3537, 0.0
    %3544 = vadd.xlane.f32.xlu0 %v3543
    %v3545 = vpop.xlane.xlu0 %3544
    %v3546 = vsel %vm379, %v3539, 0.0
    %3547 = vadd.xlane.f32.xlu0 %v3546
    %v3548 = vpop.xlane.xlu0 %3547
    %v3549 = vrcp.pop %v3542
    %v3550 = vrcp.pop %v3545
    %v3551 = vrcp.pop %v3548
    %v3552 = vmul.f32 %v3535, %v3549
    %v3553 = vmul.f32 %v3537, %v3550
    %v3554 = vmul.f32 %v3539, %v3551
    %3558 = vrot.lane.b32.xlu0 %v3346, 112
    %v3559 = vpop.permute.xlu0 %3558
    %3560 = vrot.lane.b32.xlu0 %v3349, 112
    %v3561 = vpop.permute.xlu0 %3560
    %3562 = vrot.lane.b32.xlu0 %v3352, 112
    %v3563 = vpop.permute.xlu0 %3562
    %v3568 = vsel %vm379, %v3552, 0
    %v3571 = vsel %vm379, %v3553, 0
    %v3574 = vsel %vm379, %v3554, 0
    %3576 = vmatpush.msra.mxu0 0.0
    %3577 = vmatpush.msra.mxu0 0.0
    %3578 = vmatpush.msra.mxu0 0.0
    %3579 = vmatpush.msra.mxu0 0.0
    %3580 = vmatpush.msra.mxu0 0.0
    %3581 = vmatpush.msra.mxu0 0.0
    %3582 = vmatpush.msra.mxu0 0.0
    %3583 = vmatpush.msra.mxu0 0.0
    %3584 = vmatpush.msra.mxu0 0.0
    %3585 = vmatpush.msra.mxu0 0.0
    %3586 = vmatpush.msra.mxu0 0.0
    %3587 = vmatpush.msra.mxu0 0.0
    %3588 = vmatpush.msra.mxu0 0.0
    %3589 = vmatpush.msra.mxu0 %v3563
    %3590 = vmatpush.msra.mxu0 %v3561
    %3591 = vmatpush.msra.mxu0 %v3559
    %3592 = vmatmul.f32.gmra.mxu0 %v3568
    %v3593 = vpop.f32.mrf.mxu0
    %v3594 = vadd.f32 0.0, %v3593
    %3595 = vmatmul.f32.gmra.mxu0 %v3571
    %v3596 = vpop.f32.mrf.mxu0
    %v3597 = vadd.f32 0.0, %v3596
    %3598 = vmatmul.f32.gmra.mxu0 %v3574
    %v3599 = vpop.f32.mrf.mxu0
    %v3600 = vadd.f32 0.0, %v3599
    %3601 = vdwg.mxu0
    %3602 = vrot.lane.b32.xlu0 %v3294, 96
    %v3603 = vpop.permute.xlu0 %3602
    %3604 = vrot.lane.b32.xlu0 %v3297, 96
    %v3605 = vpop.permute.xlu0 %3604
    %3606 = vrot.lane.b32.xlu0 %v3300, 96
    %v3607 = vpop.permute.xlu0 %3606
    %3608 = vrot.lane.b32.xlu0 %v3320, 96
    %v3609 = vpop.permute.xlu0 %3608
    %3610 = vrot.lane.b32.xlu0 %v3323, 96
    %v3611 = vpop.permute.xlu0 %3610
    %3612 = vrot.lane.b32.xlu0 %v3326, 96
    %v3613 = vpop.permute.xlu0 %3612
    %v3614 = vsel %vm141, %v3603, 0
    %v3616 = vsel %vm141, %v3605, 0
    %v3618 = vsel %vm141, %v3607, 0
    %v3620 = vsel %vm141, %v3609, 0
    %v3622 = vsel %vm141, %v3611, 0
    %v3624 = vsel %vm141, %v3613, 0
    %3626 = vmatpush.xpose.msra.mxu0 0.0
    %3627 = vmatpush.xpose.msra.mxu0 0.0
    %3628 = vmatpush.xpose.msra.mxu0 0.0
    %3629 = vmatpush.xpose.msra.mxu0 0.0
    %3630 = vmatpush.xpose.msra.mxu0 0.0
    %3631 = vmatpush.xpose.msra.mxu0 0.0
    %3632 = vmatpush.xpose.msra.mxu0 0.0
    %3633 = vmatpush.xpose.msra.mxu0 0.0
    %3634 = vmatpush.xpose.msra.mxu0 0.0
    %3635 = vmatpush.xpose.msra.mxu0 0.0
    %3636 = vmatpush.xpose.msra.mxu0 0.0
    %3637 = vmatpush.xpose.msra.mxu0 0.0
    %3638 = vmatpush.xpose.msra.mxu0 0.0
    %3639 = vmatpush.xpose.msra.mxu0 %v3624
    %3640 = vmatpush.xpose.msra.mxu0 %v3622
    %3641 = vmatpush.xpose.msra.mxu0 %v3620
    %3642 = vmatmul.f32.gmra.mxu0 %v3614
    %v3643 = vpop.f32.mrf.mxu0
    %v3644 = vadd.f32 0.0, %v3643
    %3645 = vmatmul.f32.gmra.mxu0 %v3616
    %v3646 = vpop.f32.mrf.mxu0
    %v3647 = vadd.f32 0.0, %v3646
    %3648 = vmatmul.f32.gmra.mxu0 %v3618
    %v3649 = vpop.f32.mrf.mxu0
    %v3650 = vadd.f32 0.0, %v3649
    %3651 = vdwg.mxu0
    %v3652 = vmul.f32 %v3644, 0.25
    %v3653 = vmul.f32 %v3647, 0.25
    %v3654 = vmul.f32 %v3650, 0.25
    %v3655 = vsel %vm379, %v3652, -inf
    %3656 = vmax.xlane.f32.xlu0 %v3655
    %v3657 = vpop.xlane.xlu0 %3656
    %v3658 = vsel %vm379, %v3653, -inf
    %3659 = vmax.xlane.f32.xlu0 %v3658
    %v3660 = vpop.xlane.xlu0 %3659
    %v3661 = vsel %vm379, %v3654, -inf
    %3662 = vmax.xlane.f32.xlu0 %v3661
    %v3663 = vpop.xlane.xlu0 %3662
    %v3664 = vsub.f32 %v3652, %v3657
    %v3665 = vsub.f32 %v3653, %v3660
    %v3666 = vsub.f32 %v3654, %v3663
    %v3667 = vmul.f32 %v3664, 1.442695
    %v3668 = vpow.pop %v3667
    %v3669 = vmul.f32 %v3665, 1.442695
    %v3670 = vpow.pop %v3669
    %v3671 = vmul.f32 %v3666, 1.442695
    %v3672 = vpow.pop %v3671
    %v3673 = vsel %vm379, %v3668, 0.0
    %3674 = vadd.xlane.f32.xlu0 %v3673
    %v3675 = vpop.xlane.xlu0 %3674
    %v3676 = vsel %vm379, %v3670, 0.0
    %3677 = vadd.xlane.f32.xlu0 %v3676
    %v3678 = vpop.xlane.xlu0 %3677
    %v3679 = vsel %vm379, %v3672, 0.0
    %3680 = vadd.xlane.f32.xlu0 %v3679
    %v3681 = vpop.xlane.xlu0 %3680
    %v3682 = vrcp.pop %v3675
    %v3683 = vrcp.pop %v3678
    %v3684 = vrcp.pop %v3681
    %v3685 = vmul.f32 %v3668, %v3682
    %v3686 = vmul.f32 %v3670, %v3683
    %v3687 = vmul.f32 %v3672, %v3684
    %3688 = vrot.lane.b32.xlu0 %v3346, 96
    %v3689 = vpop.permute.xlu0 %3688
    %3690 = vrot.lane.b32.xlu0 %v3349, 96
    %v3691 = vpop.permute.xlu0 %3690
    %3692 = vrot.lane.b32.xlu0 %v3352, 96
    %v3693 = vpop.permute.xlu0 %3692
    %v3698 = vsel %vm379, %v3685, 0
    %v3701 = vsel %vm379, %v3686, 0
    %v3704 = vsel %vm379, %v3687, 0
    %3706 = vmatpush.msra.mxu0 0.0
    %3707 = vmatpush.msra.mxu0 0.0
    %3708 = vmatpush.msra.mxu0 0.0
    %3709 = vmatpush.msra.mxu0 0.0
    %3710 = vmatpush.msra.mxu0 0.0
    %3711 = vmatpush.msra.mxu0 0.0
    %3712 = vmatpush.msra.mxu0 0.0
    %3713 = vmatpush.msra.mxu0 0.0
    %3714 = vmatpush.msra.mxu0 0.0
    %3715 = vmatpush.msra.mxu0 0.0
    %3716 = vmatpush.msra.mxu0 0.0
    %3717 = vmatpush.msra.mxu0 0.0
    %3718 = vmatpush.msra.mxu0 0.0
    %3719 = vmatpush.msra.mxu0 %v3693
    %3720 = vmatpush.msra.mxu0 %v3691
    %3721 = vmatpush.msra.mxu0 %v3689
    %3722 = vmatmul.f32.gmra.mxu0 %v3698
    %v3723 = vpop.f32.mrf.mxu0
    %v3724 = vadd.f32 0.0, %v3723
    %3725 = vmatmul.f32.gmra.mxu0 %v3701
    %v3726 = vpop.f32.mrf.mxu0
    %v3727 = vadd.f32 0.0, %v3726
    %3728 = vmatmul.f32.gmra.mxu0 %v3704
    %v3729 = vpop.f32.mrf.mxu0
    %v3730 = vadd.f32 0.0, %v3729
    %3731 = vdwg.mxu0
    %3732 = vrot.lane.b32.xlu0 %v3294, 80
    %v3733 = vpop.permute.xlu0 %3732
    %3734 = vrot.lane.b32.xlu0 %v3297, 80
    %v3735 = vpop.permute.xlu0 %3734
    %3736 = vrot.lane.b32.xlu0 %v3300, 80
    %v3737 = vpop.permute.xlu0 %3736
    %3738 = vrot.lane.b32.xlu0 %v3320, 80
    %v3739 = vpop.permute.xlu0 %3738
    %3740 = vrot.lane.b32.xlu0 %v3323, 80
    %v3741 = vpop.permute.xlu0 %3740
    %3742 = vrot.lane.b32.xlu0 %v3326, 80
    %v3743 = vpop.permute.xlu0 %3742
    %v3744 = vsel %vm141, %v3733, 0
    %v3746 = vsel %vm141, %v3735, 0
    %v3748 = vsel %vm141, %v3737, 0
    %v3750 = vsel %vm141, %v3739, 0
    %v3752 = vsel %vm141, %v3741, 0
    %v3754 = vsel %vm141, %v3743, 0
    %3756 = vmatpush.xpose.msra.mxu0 0.0
    %3757 = vmatpush.xpose.msra.mxu0 0.0
    %3758 = vmatpush.xpose.msra.mxu0 0.0
    %3759 = vmatpush.xpose.msra.mxu0 0.0
    %3760 = vmatpush.xpose.msra.mxu0 0.0
    %3761 = vmatpush.xpose.msra.mxu0 0.0
    %3762 = vmatpush.xpose.msra.mxu0 0.0
    %3763 = vmatpush.xpose.msra.mxu0 0.0
    %3764 = vmatpush.xpose.msra.mxu0 0.0
    %3765 = vmatpush.xpose.msra.mxu0 0.0
    %3766 = vmatpush.xpose.msra.mxu0 0.0
    %3767 = vmatpush.xpose.msra.mxu0 0.0
    %3768 = vmatpush.xpose.msra.mxu0 0.0
    %3769 = vmatpush.xpose.msra.mxu0 %v3754
    %3770 = vmatpush.xpose.msra.mxu0 %v3752
    %3771 = vmatpush.xpose.msra.mxu0 %v3750
    %3772 = vmatmul.f32.gmra.mxu0 %v3744
    %v3773 = vpop.f32.mrf.mxu0
    %v3774 = vadd.f32 0.0, %v3773
    %3775 = vmatmul.f32.gmra.mxu0 %v3746
    %v3776 = vpop.f32.mrf.mxu0
    %v3777 = vadd.f32 0.0, %v3776
    %3778 = vmatmul.f32.gmra.mxu0 %v3748
    %v3779 = vpop.f32.mrf.mxu0
    %v3780 = vadd.f32 0.0, %v3779
    %3781 = vdwg.mxu0
    %v3782 = vmul.f32 %v3774, 0.25
    %v3783 = vmul.f32 %v3777, 0.25
    %v3784 = vmul.f32 %v3780, 0.25
    %v3785 = vsel %vm379, %v3782, -inf
    %3786 = vmax.xlane.f32.xlu0 %v3785
    %v3787 = vpop.xlane.xlu0 %3786
    %v3788 = vsel %vm379, %v3783, -inf
    %3789 = vmax.xlane.f32.xlu0 %v3788
    %v3790 = vpop.xlane.xlu0 %3789
    %v3791 = vsel %vm379, %v3784, -inf
    %3792 = vmax.xlane.f32.xlu0 %v3791
    %v3793 = vpop.xlane.xlu0 %3792
    %v3794 = vsub.f32 %v3782, %v3787
    %v3795 = vsub.f32 %v3783, %v3790
    %v3796 = vsub.f32 %v3784, %v3793
    %v3797 = vmul.f32 %v3794, 1.442695
    %v3798 = vpow.pop %v3797
    %v3799 = vmul.f32 %v3795, 1.442695
    %v3800 = vpow.pop %v3799
    %v3801 = vmul.f32 %v3796, 1.442695
    %v3802 = vpow.pop %v3801
    %v3803 = vsel %vm379, %v3798, 0.0
    %3804 = vadd.xlane.f32.xlu0 %v3803
    %v3805 = vpop.xlane.xlu0 %3804
    %v3806 = vsel %vm379, %v3800, 0.0
    %3807 = vadd.xlane.f32.xlu0 %v3806
    %v3808 = vpop.xlane.xlu0 %3807
    %v3809 = vsel %vm379, %v3802, 0.0
    %3810 = vadd.xlane.f32.xlu0 %v3809
    %v3811 = vpop.xlane.xlu0 %3810
    %v3812 = vrcp.pop %v3805
    %v3813 = vrcp.pop %v3808
    %v3814 = vrcp.pop %v3811
    %v3815 = vmul.f32 %v3798, %v3812
    %v3816 = vmul.f32 %v3800, %v3813
    %v3817 = vmul.f32 %v3802, %v3814
    %3818 = vrot.lane.b32.xlu0 %v3346, 80
    %v3819 = vpop.permute.xlu0 %3818
    %3820 = vrot.lane.b32.xlu0 %v3349, 80
    %v3821 = vpop.permute.xlu0 %3820
    %3822 = vrot.lane.b32.xlu0 %v3352, 80
    %v3823 = vpop.permute.xlu0 %3822
    %v3828 = vsel %vm379, %v3815, 0
    %v3831 = vsel %vm379, %v3816, 0
    %v3834 = vsel %vm379, %v3817, 0
    %3836 = vmatpush.msra.mxu0 0.0
    %3837 = vmatpush.msra.mxu0 0.0
    %3838 = vmatpush.msra.mxu0 0.0
    %3839 = vmatpush.msra.mxu0 0.0
    %3840 = vmatpush.msra.mxu0 0.0
    %3841 = vmatpush.msra.mxu0 0.0
    %3842 = vmatpush.msra.mxu0 0.0
    %3843 = vmatpush.msra.mxu0 0.0
    %3844 = vmatpush.msra.mxu0 0.0
    %3845 = vmatpush.msra.mxu0 0.0
    %3846 = vmatpush.msra.mxu0 0.0
    %3847 = vmatpush.msra.mxu0 0.0
    %3848 = vmatpush.msra.mxu0 0.0
    %3849 = vmatpush.msra.mxu0 %v3823
    %3850 = vmatpush.msra.mxu0 %v3821
    %3851 = vmatpush.msra.mxu0 %v3819
    %3852 = vmatmul.f32.gmra.mxu0 %v3828
    %v3853 = vpop.f32.mrf.mxu0
    %v3854 = vadd.f32 0.0, %v3853
    %3855 = vmatmul.f32.gmra.mxu0 %v3831
    %v3856 = vpop.f32.mrf.mxu0
    %v3857 = vadd.f32 0.0, %v3856
    %3858 = vmatmul.f32.gmra.mxu0 %v3834
    %v3859 = vpop.f32.mrf.mxu0
    %v3860 = vadd.f32 0.0, %v3859
    %3861 = vdwg.mxu0
    %3865 = vrot.lane.b32.xlu0 %v3594, 16
    %v3866 = vpop.permute.xlu0 %3865
    %3867 = vrot.lane.b32.xlu0 %v3597, 16
    %v3868 = vpop.permute.xlu0 %3867
    %3869 = vrot.lane.b32.xlu0 %v3600, 16
    %v3870 = vpop.permute.xlu0 %3869
    %3877 = vrot.lane.b32.xlu0 %v3724, 32
    %v3878 = vpop.permute.xlu0 %3877
    %3879 = vrot.lane.b32.xlu0 %v3727, 32
    %v3880 = vpop.permute.xlu0 %3879
    %3881 = vrot.lane.b32.xlu0 %v3730, 32
    %v3882 = vpop.permute.xlu0 %3881
    %3889 = vrot.lane.b32.xlu0 %v3854, 48
    %v3890 = vpop.permute.xlu0 %3889
    %3891 = vrot.lane.b32.xlu0 %v3857, 48
    %v3892 = vpop.permute.xlu0 %3891
    %3893 = vrot.lane.b32.xlu0 %v3860, 48
    %v3894 = vpop.permute.xlu0 %3893
    %v3898 = vsel %vm141, %v3461, %v3866
    %v3899 = vsel %vm141, %v3464, %v3868
    %v3900 = vsel %vm141, %v3467, %v3870
    %v3901 = vsel %vm880, %v3898, %v3878
    %v3902 = vsel %vm880, %v3899, %v3880
    %v3903 = vsel %vm880, %v3900, %v3882
    %v3904 = vsel %vm884, %v3901, %v3890
    %v3905 = vsel %vm884, %v3902, %v3892
    %v3906 = vsel %vm884, %v3903, %v3894
    %s3907 = scalar_lea.vmem %s17, 64
    %v3908 = vld [vmem:[%s3907] sm:$0xff]
    %v3909 = vld [vmem:[%s3907 + $0x8] sm:$0xff]
    %v3910 = vld [vmem:[%s3907 + $0x10] sm:$0xff]
    %v3911 = vld [vmem:[%s3907 + $0x18] sm:$0xff]
    %v3912 = vld [vmem:[%s3907 + $0x20] sm:$0xff]
    %v3913 = vld [vmem:[%s3907 + $0x28] sm:$0xff]
    %v3914 = vld [vmem:[%s3907 + $0x30] sm:$0xff]
    %v3915 = vld [vmem:[%s3907 + $0x38] sm:$0xff]
    %s3916 = scalar_lea.vmem %s19, 1
    %v3917 = vld [vmem:[%s3916] sm:$0x1]
    %v3919 = vperm.slane %v3917, 0
    %v3922 = vsel %vm171, %v3904, 0
    %v3925 = vsel %vm171, %v3905, 0
    %v3928 = vsel %vm171, %v3906, 0
    %3930 = vmatpush.msra.mxu0 0.0
    %3931 = vmatpush.msra.mxu0 0.0
    %3932 = vmatpush.msra.mxu0 0.0
    %3933 = vmatpush.msra.mxu0 0.0
    %3934 = vmatpush.msra.mxu0 0.0
    %3935 = vmatpush.msra.mxu0 0.0
    %3936 = vmatpush.msra.mxu0 0.0
    %3937 = vmatpush.msra.mxu0 0.0
    %3938 = vmatpush.msra.mxu0 %v3915
    %3939 = vmatpush.msra.mxu0 %v3914
    %3940 = vmatpush.msra.mxu0 %v3913
    %3941 = vmatpush.msra.mxu0 %v3912
    %3942 = vmatpush.msra.mxu0 %v3911
    %3943 = vmatpush.msra.mxu0 %v3910
    %3944 = vmatpush.msra.mxu0 %v3909
    %3945 = vmatpush.msra.mxu0 %v3908
    %3946 = vmatmul.f32.gmra.mxu0 %v3922
    %v3947 = vpop.f32.mrf.mxu0
    %v3948 = vadd.f32 %v3919, %v3947
    %3949 = vmatmul.f32.gmra.mxu0 %v3925
    %v3950 = vpop.f32.mrf.mxu0
    %v3951 = vadd.f32 %v3919, %v3950
    %3952 = vmatmul.f32.gmra.mxu0 %v3928
    %v3953 = vpop.f32.mrf.mxu0
    %v3954 = vadd.f32 %v3919, %v3953
    %3955 = vdwg.mxu0
    %v3956 = vadd.f32 %v3230, %v3948
    %v3957 = vadd.f32 %v3231, %v3951
    %v3958 = vadd.f32 %v3232, %v3954
    %s3959 = scalar_lea.vmem %s21, 1
    %v3960 = vld [vmem:[%s3959] sm:$0x1]
    %s3961 = scalar_lea.vmem %s23, 1
    %v3962 = vld [vmem:[%s3961] sm:$0x1]
    %v3963 = vsel %vm171, %v3956, 0.0
    %3964 = vadd.xlane.f32.xlu0 %v3963
    %v3965 = vpop.xlane.xlu0 %3964
    %v3966 = vsel %vm171, %v3957, 0.0
    %3967 = vadd.xlane.f32.xlu0 %v3966
    %v3968 = vpop.xlane.xlu0 %3967
    %v3969 = vsel %vm171, %v3958, 0.0
    %3970 = vadd.xlane.f32.xlu0 %v3969
    %v3971 = vpop.xlane.xlu0 %3970
    %v3972 = vmul.f32 %v3965, %v955
    %v3973 = vmul.f32 %v3968, %v955
    %v3974 = vmul.f32 %v3971, %v955
    %v3975 = vsub.f32 %v3956, %v3972
    %v3976 = vsub.f32 %v3957, %v3973
    %v3977 = vsub.f32 %v3958, %v3974
    %v3978 = vmul.f32 %v3975, %v3975
    %v3979 = vmul.f32 %v3976, %v3976
    %v3980 = vmul.f32 %v3977, %v3977
    %v3981 = vsel %vm171, %v3978, 0.0
    %3982 = vadd.xlane.f32.xlu0 %v3981
    %v3983 = vpop.xlane.xlu0 %3982
    %v3984 = vsel %vm171, %v3979, 0.0
    %3985 = vadd.xlane.f32.xlu0 %v3984
    %v3986 = vpop.xlane.xlu0 %3985
    %v3987 = vsel %vm171, %v3980, 0.0
    %3988 = vadd.xlane.f32.xlu0 %v3987
    %v3989 = vpop.xlane.xlu0 %3988
    %v3990 = vmul.f32 %v3983, %v955
    %v3991 = vmul.f32 %v3986, %v955
    %v3992 = vmul.f32 %v3989, %v955
    %v3993 = vadd.f32 %v3990, 1e-05
    %v3994 = vadd.f32 %v3991, 1e-05
    %v3995 = vadd.f32 %v3992, 1e-05
    %v3996 = vrsqrt.pop %v3993
    %v3997 = vmul.f32 %v3996, %v3993
    %v3998 = vmul.f32 %v3997, %v3996
    %v3999 = vmul.f32 0.5, %v3998
    %v4000 = vsub.f32 1.5, %v3999
    %v4001 = vmul.f32 %v3996, %v4000
    %vm4002 = vweird.f32 %v3993
    %vm4003 = vweird.f32 %v3996
    %vm4004 = vmor %vm4002, %vm4003
    %v4005 = vsel %vm4004, %v3996, %v4001
    %v4006 = vrsqrt.pop %v3994
    %v4007 = vmul.f32 %v4006, %v3994
    %v4008 = vmul.f32 %v4007, %v4006
    %v4009 = vmul.f32 0.5, %v4008
    %v4010 = vsub.f32 1.5, %v4009
    %v4011 = vmul.f32 %v4006, %v4010
    %vm4012 = vweird.f32 %v3994
    %vm4013 = vweird.f32 %v4006
    %vm4014 = vmor %vm4012, %vm4013
    %v4015 = vsel %vm4014, %v4006, %v4011
    %v4016 = vrsqrt.pop %v3995
    %v4017 = vmul.f32 %v4016, %v3995
    %v4018 = vmul.f32 %v4017, %v4016
    %v4019 = vmul.f32 0.5, %v4018
    %v4020 = vsub.f32 1.5, %v4019
    %v4021 = vmul.f32 %v4016, %v4020
    %vm4022 = vweird.f32 %v3995
    %vm4023 = vweird.f32 %v4016
    %vm4024 = vmor %vm4022, %vm4023
    %v4025 = vsel %vm4024, %v4016, %v4021
    %v4026 = vmul.f32 %v3975, %v4005
    %v4027 = vmul.f32 %v3976, %v4015
    %v4028 = vmul.f32 %v3977, %v4025
    %v4030 = vperm.slane %v3960, 0
    %v4032 = vmul.f32 %v4026, %v4030
    %v4033 = vmul.f32 %v4027, %v4030
    %v4034 = vmul.f32 %v4028, %v4030
    %v4036 = vperm.slane %v3962, 0
    %v4038 = vadd.f32 %v4032, %v4036
    %v4039 = vadd.f32 %v4033, %v4036
    %v4040 = vadd.f32 %v4034, %v4036
    %v4041 = vpack.c.bf16 %v4039, %v4038
    %v4042 = vpack.c.bf16 %v4040, %v4040
    %s4043 = scalar_lea.vmem %s25, 512
    %v4044 = vld [vmem:[%s4043] sm:$0xff]
    %v4045 = vld [vmem:[%s4043 + $0x8] sm:$0xff]
    %v4046 = vld [vmem:[%s4043 + $0x40] sm:$0xff]
    %v4047 = vld [vmem:[%s4043 + $0x48] sm:$0xff]
    %v4048 = vld [vmem:[%s4043 + $0x80] sm:$0xff]
    %v4049 = vld [vmem:[%s4043 + $0x88] sm:$0xff]
    %v4050 = vld [vmem:[%s4043 + $0xc0] sm:$0xff]
    %v4051 = vld [vmem:[%s4043 + $0xc8] sm:$0xff]
    %v4052 = vld [vmem:[%s4043 + $0x100] sm:$0xff]
    %v4053 = vld [vmem:[%s4043 + $0x108] sm:$0xff]
    %v4054 = vld [vmem:[%s4043 + $0x140] sm:$0xff]
    %v4055 = vld [vmem:[%s4043 + $0x148] sm:$0xff]
    %v4056 = vld [vmem:[%s4043 + $0x180] sm:$0xff]
    %v4057 = vld [vmem:[%s4043 + $0x188] sm:$0xff]
    %v4058 = vld [vmem:[%s4043 + $0x1c0] sm:$0xff]
    %v4059 = vld [vmem:[%s4043 + $0x1c8] sm:$0xff]
    %s4060 = scalar_lea.vmem %s27, 16
    %v4061 = vld [vmem:[%s4060] sm:$0xf]
    %v4063 = vperm.slane %v4061, 0
    %v4064 = vperm.slane %v4061, 1
    %v4065 = vperm.slane %v4061, 2
    %v4066 = vperm.slane %v4061, 3
    %v4087 = vunpack.c.l.b16 %v4044
    %v4088 = vunpack.c.h.b16 %v4044
    %v4089 = vunpack.c.l.b16 %v4045
    %v4090 = vunpack.c.h.b16 %v4045
    %v4091 = vunpack.c.l.b16 %v4046
    %v4092 = vunpack.c.h.b16 %v4046
    %v4093 = vunpack.c.l.b16 %v4047
    %v4094 = vunpack.c.h.b16 %v4047
    %v4095 = vunpack.c.l.b16 %v4048
    %v4096 = vunpack.c.h.b16 %v4048
    %v4097 = vunpack.c.l.b16 %v4049
    %v4098 = vunpack.c.h.b16 %v4049
    %v4099 = vunpack.c.l.b16 %v4050
    %v4100 = vunpack.c.h.b16 %v4050
    %v4101 = vunpack.c.l.b16 %v4051
    %v4102 = vunpack.c.h.b16 %v4051
    %v4103 = vunpack.c.l.b16 %v4052
    %v4104 = vunpack.c.h.b16 %v4052
    %v4105 = vunpack.c.l.b16 %v4053
    %v4106 = vunpack.c.h.b16 %v4053
    %v4107 = vunpack.c.l.b16 %v4054
    %v4108 = vunpack.c.h.b16 %v4054
    %v4109 = vunpack.c.l.b16 %v4055
    %v4110 = vunpack.c.h.b16 %v4055
    %v4111 = vunpack.c.l.b16 %v4056
    %v4112 = vunpack.c.h.b16 %v4056
    %v4113 = vunpack.c.l.b16 %v4057
    %v4114 = vunpack.c.h.b16 %v4057
    %v4115 = vunpack.c.l.b16 %v4058
    %v4116 = vunpack.c.h.b16 %v4058
    %v4117 = vunpack.c.l.b16 %v4059
    %v4118 = vunpack.c.h.b16 %v4059
    %v4119 = vpack.c.b16 %v4091, %v4087
    %v4120 = vpack.c.b16 %v4092, %v4088
    %v4121 = vpack.c.b16 %v4093, %v4089
    %v4122 = vpack.c.b16 %v4094, %v4090
    %v4123 = vpack.c.b16 %v4099, %v4095
    %v4124 = vpack.c.b16 %v4100, %v4096
    %v4125 = vpack.c.b16 %v4101, %v4097
    %v4126 = vpack.c.b16 %v4102, %v4098
    %v4127 = vpack.c.b16 %v4107, %v4103
    %v4128 = vpack.c.b16 %v4108, %v4104
    %v4129 = vpack.c.b16 %v4109, %v4105
    %v4130 = vpack.c.b16 %v4110, %v4106
    %v4131 = vpack.c.b16 %v4115, %v4111
    %v4132 = vpack.c.b16 %v4116, %v4112
    %v4133 = vpack.c.b16 %v4117, %v4113
    %v4134 = vpack.c.b16 %v4118, %v4114
    %v4152 = vsel %vm171, %v4041, 0
    %v4155 = vsel %vm171, %v4042, 0
    %4157 = vmatpush.bf16.msra.mxu0 0
    %4158 = vmatpush.bf16.msra.mxu0 0
    %4159 = vmatpush.bf16.msra.mxu0 0
    %4160 = vmatpush.bf16.msra.mxu0 0
    %4161 = vmatpush.bf16.msra.mxu0 %v4131
    %4162 = vmatpush.bf16.msra.mxu0 %v4127
    %4163 = vmatpush.bf16.msra.mxu0 %v4123
    %4164 = vmatpush.bf16.msra.mxu0 %v4119
    %4165 = vmatmul.bf16.gmra.mxu0 %v4152
    %v4166 = vpop.f32.mrf.mxu0
    %v4167 = vadd.f32 %v4063, %v4166
    %v4168 = vpop.f32.mrf.mxu0
    %v4169 = vadd.f32 %v4063, %v4168
    %4170 = vmatmul.bf16.gmra.mxu0 %v4155
    %v4171 = vpop.f32.mrf.mxu0
    %v4172 = vadd.f32 %v4063, %v4171
    %v4173 = vpop.f32.mrf.mxu0
    %4174 = vdwg.mxu0
    %4175 = vmatpush.bf16.msra.mxu0 0
    %4176 = vmatpush.bf16.msra.mxu0 0
    %4177 = vmatpush.bf16.msra.mxu0 0
    %4178 = vmatpush.bf16.msra.mxu0 0
    %4179 = vmatpush.bf16.msra.mxu0 %v4132
    %4180 = vmatpush.bf16.msra.mxu0 %v4128
    %4181 = vmatpush.bf16.msra.mxu0 %v4124
    %4182 = vmatpush.bf16.msra.mxu0 %v4120
    %4183 = vmatmul.bf16.gmra.mxu0 %v4152
    %v4184 = vpop.f32.mrf.mxu0
    %v4185 = vadd.f32 %v4064, %v4184
    %v4186 = vpop.f32.mrf.mxu0
    %v4187 = vadd.f32 %v4064, %v4186
    %4188 = vmatmul.bf16.gmra.mxu0 %v4155
    %v4189 = vpop.f32.mrf.mxu0
    %v4190 = vadd.f32 %v4064, %v4189
    %v4191 = vpop.f32.mrf.mxu0
    %4192 = vdwg.mxu0
    %4193 = vmatpush.bf16.msra.mxu0 0
    %4194 = vmatpush.bf16.msra.mxu0 0
    %4195 = vmatpush.bf16.msra.mxu0 0
    %4196 = vmatpush.bf16.msra.mxu0 0
    %4197 = vmatpush.bf16.msra.mxu0 %v4133
    %4198 = vmatpush.bf16.msra.mxu0 %v4129
    %4199 = vmatpush.bf16.msra.mxu0 %v4125
    %4200 = vmatpush.bf16.msra.mxu0 %v4121
    %4201 = vmatmul.bf16.gmra.mxu0 %v4152
    %v4202 = vpop.f32.mrf.mxu0
    %v4203 = vadd.f32 %v4065, %v4202
    %v4204 = vpop.f32.mrf.mxu0
    %v4205 = vadd.f32 %v4065, %v4204
    %4206 = vmatmul.bf16.gmra.mxu0 %v4155
    %v4207 = vpop.f32.mrf.mxu0
    %v4208 = vadd.f32 %v4065, %v4207
    %v4209 = vpop.f32.mrf.mxu0
    %4210 = vdwg.mxu0
    %4211 = vmatpush.bf16.msra.mxu0 0
    %4212 = vmatpush.bf16.msra.mxu0 0
    %4213 = vmatpush.bf16.msra.mxu0 0
    %4214 = vmatpush.bf16.msra.mxu0 0
    %4215 = vmatpush.bf16.msra.mxu0 %v4134
    %4216 = vmatpush.bf16.msra.mxu0 %v4130
    %4217 = vmatpush.bf16.msra.mxu0 %v4126
    %4218 = vmatpush.bf16.msra.mxu0 %v4122
    %4219 = vmatmul.bf16.gmra.mxu0 %v4152
    %v4220 = vpop.f32.mrf.mxu0
    %v4221 = vadd.f32 %v4066, %v4220
    %v4222 = vpop.f32.mrf.mxu0
    %v4223 = vadd.f32 %v4066, %v4222
    %4224 = vmatmul.bf16.gmra.mxu0 %v4155
    %v4225 = vpop.f32.mrf.mxu0
    %v4226 = vadd.f32 %v4066, %v4225
    %v4227 = vpop.f32.mrf.mxu0
    %4228 = vdwg.mxu0
    %v4229 = vmax.f32 %v4167, 0.0
    %v4230 = vmax.f32 %v4185, 0.0
    %v4231 = vmax.f32 %v4203, 0.0
    %v4232 = vmax.f32 %v4221, 0.0
    %v4233 = vmax.f32 %v4169, 0.0
    %v4234 = vmax.f32 %v4187, 0.0
    %v4235 = vmax.f32 %v4205, 0.0
    %v4236 = vmax.f32 %v4223, 0.0
    %v4237 = vmax.f32 %v4172, 0.0
    %v4238 = vmax.f32 %v4190, 0.0
    %v4239 = vmax.f32 %v4208, 0.0
    %v4240 = vmax.f32 %v4226, 0.0
    %v4241 = vpack.c.bf16 %v4233, %v4229
    %v4242 = vpack.c.bf16 %v4234, %v4230
    %v4243 = vpack.c.bf16 %v4235, %v4231
    %v4244 = vpack.c.bf16 %v4236, %v4232
    %v4245 = vpack.c.bf16 %v4237, %v4237
    %v4246 = vpack.c.bf16 %v4238, %v4238
    %v4247 = vpack.c.bf16 %v4239, %v4239
    %v4248 = vpack.c.bf16 %v4240, %v4240
    %s4249 = scalar_lea.vmem %s29, 1024
    %v4250 = vld [vmem:[%s4249] sm:$0xf]
    %v4251 = vld [vmem:[%s4249 + $0x4] sm:$0xf]
    %v4252 = vld [vmem:[%s4249 + $0x8] sm:$0xf]
    %v4253 = vld [vmem:[%s4249 + $0xc] sm:$0xf]
    %v4254 = vld [vmem:[%s4249 + $0x10] sm:$0xf]
    %v4255 = vld [vmem:[%s4249 + $0x14] sm:$0xf]
    %v4256 = vld [vmem:[%s4249 + $0x18] sm:$0xf]
    %v4257 = vld [vmem:[%s4249 + $0x1c] sm:$0xf]
    %v4258 = vld [vmem:[%s4249 + $0x20] sm:$0xf]
    %v4259 = vld [vmem:[%s4249 + $0x24] sm:$0xf]
    %v4260 = vld [vmem:[%s4249 + $0x28] sm:$0xf]
    %v4261 = vld [vmem:[%s4249 + $0x2c] sm:$0xf]
    %v4262 = vld [vmem:[%s4249 + $0x30] sm:$0xf]
    %v4263 = vld [vmem:[%s4249 + $0x34] sm:$0xf]
    %v4264 = vld [vmem:[%s4249 + $0x38] sm:$0xf]
    %v4265 = vld [vmem:[%s4249 + $0x3c] sm:$0xf]
    %v4266 = vld [vmem:[%s4249 + $0x40] sm:$0xf]
    %v4267 = vld [vmem:[%s4249 + $0x44] sm:$0xf]
    %v4268 = vld [vmem:[%s4249 + $0x48] sm:$0xf]
    %v4269 = vld [vmem:[%s4249 + $0x4c] sm:$0xf]
    %v4270 = vld [vmem:[%s4249 + $0x50] sm:$0xf]
    %v4271 = vld [vmem:[%s4249 + $0x54] sm:$0xf]
    %v4272 = vld [vmem:[%s4249 + $0x58] sm:$0xf]
    %v4273 = vld [vmem:[%s4249 + $0x5c] sm:$0xf]
    %v4274 = vld [vmem:[%s4249 + $0x60] sm:$0xf]
    %v4275 = vld [vmem:[%s4249 + $0x64] sm:$0xf]
    %v4276 = vld [vmem:[%s4249 + $0x68] sm:$0xf]
    %v4277 = vld [vmem:[%s4249 + $0x6c] sm:$0xf]
    %v4278 = vld [vmem:[%s4249 + $0x70] sm:$0xf]
    %v4279 = vld [vmem:[%s4249 + $0x74] sm:$0xf]
    %v4280 = vld [vmem:[%s4249 + $0x78] sm:$0xf]
    %v4281 = vld [vmem:[%s4249 + $0x7c] sm:$0xf]
    %v4282 = vld [vmem:[%s4249 + $0x80] sm:$0xf]
    %v4283 = vld [vmem:[%s4249 + $0x84] sm:$0xf]
    %v4284 = vld [vmem:[%s4249 + $0x88] sm:$0xf]
    %v4285 = vld [vmem:[%s4249 + $0x8c] sm:$0xf]
    %v4286 = vld [vmem:[%s4249 + $0x90] sm:$0xf]
    %v4287 = vld [vmem:[%s4249 + $0x94] sm:$0xf]
    %v4288 = vld [vmem:[%s4249 + $0x98] sm:$0xf]
    %v4289 = vld [vmem:[%s4249 + $0x9c] sm:$0xf]
    %v4290 = vld [vmem:[%s4249 + $0xa0] sm:$0xf]
    %v4291 = vld [vmem:[%s4249 + $0xa4] sm:$0xf]
    %v4292 = vld [vmem:[%s4249 + $0xa8] sm:$0xf]
    %v4293 = vld [vmem:[%s4249 + $0xac] sm:$0xf]
    %v4294 = vld [vmem:[%s4249 + $0xb0] sm:$0xf]
    %v4295 = vld [vmem:[%s4249 + $0xb4] sm:$0xf]
    %v4296 = vld [vmem:[%s4249 + $0xb8] sm:$0xf]
    %v4297 = vld [vmem:[%s4249 + $0xbc] sm:$0xf]
    %v4298 = vld [vmem:[%s4249 + $0xc0] sm:$0xf]
    %v4299 = vld [vmem:[%s4249 + $0xc4] sm:$0xf]
    %v4300 = vld [vmem:[%s4249 + $0xc8] sm:$0xf]
    %v4301 = vld [vmem:[%s4249 + $0xcc] sm:$0xf]
    %v4302 = vld [vmem:[%s4249 + $0xd0] sm:$0xf]
    %v4303 = vld [vmem:[%s4249 + $0xd4] sm:$0xf]
    %v4304 = vld [vmem:[%s4249 + $0xd8] sm:$0xf]
    %v4305 = vld [vmem:[%s4249 + $0xdc] sm:$0xf]
    %v4306 = vld [vmem:[%s4249 + $0xe0] sm:$0xf]
    %v4307 = vld [vmem:[%s4249 + $0xe4] sm:$0xf]
    %v4308 = vld [vmem:[%s4249 + $0xe8] sm:$0xf]
    %v4309 = vld [vmem:[%s4249 + $0xec] sm:$0xf]
    %v4310 = vld [vmem:[%s4249 + $0xf0] sm:$0xf]
    %v4311 = vld [vmem:[%s4249 + $0xf4] sm:$0xf]
    %v4312 = vld [vmem:[%s4249 + $0xf8] sm:$0xf]
    %v4313 = vld [vmem:[%s4249 + $0xfc] sm:$0xf]
    %v4314 = vld [vmem:[%s4043 + $0x10] sm:$0xff]
    %v4315 = vld [vmem:[%s4043 + $0x18] sm:$0xff]
    %v4316 = vld [vmem:[%s4043 + $0x50] sm:$0xff]
    %v4317 = vld [vmem:[%s4043 + $0x58] sm:$0xff]
    %v4318 = vld [vmem:[%s4043 + $0x90] sm:$0xff]
    %v4319 = vld [vmem:[%s4043 + $0x98] sm:$0xff]
    %v4320 = vld [vmem:[%s4043 + $0xd0] sm:$0xff]
    %v4321 = vld [vmem:[%s4043 + $0xd8] sm:$0xff]
    %v4322 = vld [vmem:[%s4043 + $0x110] sm:$0xff]
    %v4323 = vld [vmem:[%s4043 + $0x118] sm:$0xff]
    %v4324 = vld [vmem:[%s4043 + $0x150] sm:$0xff]
    %v4325 = vld [vmem:[%s4043 + $0x158] sm:$0xff]
    %v4326 = vld [vmem:[%s4043 + $0x190] sm:$0xff]
    %v4327 = vld [vmem:[%s4043 + $0x198] sm:$0xff]
    %v4328 = vld [vmem:[%s4043 + $0x1d0] sm:$0xff]
    %v4329 = vld [vmem:[%s4043 + $0x1d8] sm:$0xff]
    %v4330 = vld [vmem:[%s4060 + $0x4] sm:$0xf]
    %v4332 = vperm.slane %v4330, 0
    %v4333 = vperm.slane %v4330, 1
    %v4334 = vperm.slane %v4330, 2
    %v4335 = vperm.slane %v4330, 3
    %v4356 = vunpack.c.l.b16 %v4314
    %v4357 = vunpack.c.h.b16 %v4314
    %v4358 = vunpack.c.l.b16 %v4315
    %v4359 = vunpack.c.h.b16 %v4315
    %v4360 = vunpack.c.l.b16 %v4316
    %v4361 = vunpack.c.h.b16 %v4316
    %v4362 = vunpack.c.l.b16 %v4317
    %v4363 = vunpack.c.h.b16 %v4317
    %v4364 = vunpack.c.l.b16 %v4318
    %v4365 = vunpack.c.h.b16 %v4318
    %v4366 = vunpack.c.l.b16 %v4319
    %v4367 = vunpack.c.h.b16 %v4319
    %v4368 = vunpack.c.l.b16 %v4320
    %v4369 = vunpack.c.h.b16 %v4320
    %v4370 = vunpack.c.l.b16 %v4321
    %v4371 = vunpack.c.h.b16 %v4321
    %v4372 = vunpack.c.l.b16 %v4322
    %v4373 = vunpack.c.h.b16 %v4322
    %v4374 = vunpack.c.l.b16 %v4323
    %v4375 = vunpack.c.h.b16 %v4323
    %v4376 = vunpack.c.l.b16 %v4324
    %v4377 = vunpack.c.h.b16 %v4324
    %v4378 = vunpack.c.l.b16 %v4325
    %v4379 = vunpack.c.h.b16 %v4325
    %v4380 = vunpack.c.l.b16 %v4326
    %v4381 = vunpack.c.h.b16 %v4326
    %v4382 = vunpack.c.l.b16 %v4327
    %v4383 = vunpack.c.h.b16 %v4327
    %v4384 = vunpack.c.l.b16 %v4328
    %v4385 = vunpack.c.h.b16 %v4328
    %v4386 = vunpack.c.l.b16 %v4329
    %v4387 = vunpack.c.h.b16 %v4329
    %v4388 = vpack.c.b16 %v4360, %v4356
    %v4389 = vpack.c.b16 %v4361, %v4357
    %v4390 = vpack.c.b16 %v4362, %v4358
    %v4391 = vpack.c.b16 %v4363, %v4359
    %v4392 = vpack.c.b16 %v4368, %v4364
    %v4393 = vpack.c.b16 %v4369, %v4365
    %v4394 = vpack.c.b16 %v4370, %v4366
    %v4395 = vpack.c.b16 %v4371, %v4367
    %v4396 = vpack.c.b16 %v4376, %v4372
    %v4397 = vpack.c.b16 %v4377, %v4373
    %v4398 = vpack.c.b16 %v4378, %v4374
    %v4399 = vpack.c.b16 %v4379, %v4375
    %v4400 = vpack.c.b16 %v4384, %v4380
    %v4401 = vpack.c.b16 %v4385, %v4381
    %v4402 = vpack.c.b16 %v4386, %v4382
    %v4403 = vpack.c.b16 %v4387, %v4383
    %4420 = vmatpush.bf16.msra.mxu0 0
    %4421 = vmatpush.bf16.msra.mxu0 0
    %4422 = vmatpush.bf16.msra.mxu0 0
    %4423 = vmatpush.bf16.msra.mxu0 0
    %4424 = vmatpush.bf16.msra.mxu0 %v4400
    %4425 = vmatpush.bf16.msra.mxu0 %v4396
    %4426 = vmatpush.bf16.msra.mxu0 %v4392
    %4427 = vmatpush.bf16.msra.mxu0 %v4388
    %4428 = vmatmul.bf16.gmra.mxu0 %v4152
    %v4429 = vpop.f32.mrf.mxu0
    %v4430 = vadd.f32 %v4332, %v4429
    %v4431 = vpop.f32.mrf.mxu0
    %v4432 = vadd.f32 %v4332, %v4431
    %4433 = vmatmul.bf16.gmra.mxu0 %v4155
    %v4434 = vpop.f32.mrf.mxu0
    %v4435 = vadd.f32 %v4332, %v4434
    %v4436 = vpop.f32.mrf.mxu0
    %4437 = vdwg.mxu0
    %4438 = vmatpush.bf16.msra.mxu0 0
    %4439 = vmatpush.bf16.msra.mxu0 0
    %4440 = vmatpush.bf16.msra.mxu0 0
    %4441 = vmatpush.bf16.msra.mxu0 0
    %4442 = vmatpush.bf16.msra.mxu0 %v4401
    %4443 = vmatpush.bf16.msra.mxu0 %v4397
    %4444 = vmatpush.bf16.msra.mxu0 %v4393
    %4445 = vmatpush.bf16.msra.mxu0 %v4389
    %4446 = vmatmul.bf16.gmra.mxu0 %v4152
    %v4447 = vpop.f32.mrf.mxu0
    %v4448 = vadd.f32 %v4333, %v4447
    %v4449 = vpop.f32.mrf.mxu0
    %v4450 = vadd.f32 %v4333, %v4449
    %4451 = vmatmul.bf16.gmra.mxu0 %v4155
    %v4452 = vpop.f32.mrf.mxu0
    %v4453 = vadd.f32 %v4333, %v4452
    %v4454 = vpop.f32.mrf.mxu0
    %4455 = vdwg.mxu0
    %4456 = vmatpush.bf16.msra.mxu0 0
    %4457 = vmatpush.bf16.msra.mxu0 0
    %4458 = vmatpush.bf16.msra.mxu0 0
    %4459 = vmatpush.bf16.msra.mxu0 0
    %4460 = vmatpush.bf16.msra.mxu0 %v4402
    %4461 = vmatpush.bf16.msra.mxu0 %v4398
    %4462 = vmatpush.bf16.msra.mxu0 %v4394
    %4463 = vmatpush.bf16.msra.mxu0 %v4390
    %4464 = vmatmul.bf16.gmra.mxu0 %v4152
    %v4465 = vpop.f32.mrf.mxu0
    %v4466 = vadd.f32 %v4334, %v4465
    %v4467 = vpop.f32.mrf.mxu0
    %v4468 = vadd.f32 %v4334, %v4467
    %4469 = vmatmul.bf16.gmra.mxu0 %v4155
    %v4470 = vpop.f32.mrf.mxu0
    %v4471 = vadd.f32 %v4334, %v4470
    %v4472 = vpop.f32.mrf.mxu0
    %4473 = vdwg.mxu0
    %4474 = vmatpush.bf16.msra.mxu0 0
    %4475 = vmatpush.bf16.msra.mxu0 0
    %4476 = vmatpush.bf16.msra.mxu0 0
    %4477 = vmatpush.bf16.msra.mxu0 0
    %4478 = vmatpush.bf16.msra.mxu0 %v4403
    %4479 = vmatpush.bf16.msra.mxu0 %v4399
    %4480 = vmatpush.bf16.msra.mxu0 %v4395
    %4481 = vmatpush.bf16.msra.mxu0 %v4391
    %4482 = vmatmul.bf16.gmra.mxu0 %v4152
    %v4483 = vpop.f32.mrf.mxu0
    %v4484 = vadd.f32 %v4335, %v4483
    %v4485 = vpop.f32.mrf.mxu0
    %v4486 = vadd.f32 %v4335, %v4485
    %4487 = vmatmul.bf16.gmra.mxu0 %v4155
    %v4488 = vpop.f32.mrf.mxu0
    %v4489 = vadd.f32 %v4335, %v4488
    %v4490 = vpop.f32.mrf.mxu0
    %4491 = vdwg.mxu0
    %v4492 = vmax.f32 %v4430, 0.0
    %v4493 = vmax.f32 %v4448, 0.0
    %v4494 = vmax.f32 %v4466, 0.0
    %v4495 = vmax.f32 %v4484, 0.0
    %v4496 = vmax.f32 %v4432, 0.0
    %v4497 = vmax.f32 %v4450, 0.0
    %v4498 = vmax.f32 %v4468, 0.0
    %v4499 = vmax.f32 %v4486, 0.0
    %v4500 = vmax.f32 %v4435, 0.0
    %v4501 = vmax.f32 %v4453, 0.0
    %v4502 = vmax.f32 %v4471, 0.0
    %v4503 = vmax.f32 %v4489, 0.0
    %v4504 = vpack.c.bf16 %v4496, %v4492
    %v4505 = vpack.c.bf16 %v4497, %v4493
    %v4506 = vpack.c.bf16 %v4498, %v4494
    %v4507 = vpack.c.bf16 %v4499, %v4495
    %v4508 = vpack.c.bf16 %v4500, %v4500
    %v4509 = vpack.c.bf16 %v4501, %v4501
    %v4510 = vpack.c.bf16 %v4502, %v4502
    %v4511 = vpack.c.bf16 %v4503, %v4503
    %v4512 = vld [vmem:[%s4249 + $0x100] sm:$0xf]
    %v4513 = vld [vmem:[%s4249 + $0x104] sm:$0xf]
    %v4514 = vld [vmem:[%s4249 + $0x108] sm:$0xf]
    %v4515 = vld [vmem:[%s4249 + $0x10c] sm:$0xf]
    %v4516 = vld [vmem:[%s4249 + $0x110] sm:$0xf]
    %v4517 = vld [vmem:[%s4249 + $0x114] sm:$0xf]
    %v4518 = vld [vmem:[%s4249 + $0x118] sm:$0xf]
    %v4519 = vld [vmem:[%s4249 + $0x11c] sm:$0xf]
    %v4520 = vld [vmem:[%s4249 + $0x120] sm:$0xf]
    %v4521 = vld [vmem:[%s4249 + $0x124] sm:$0xf]
    %v4522 = vld [vmem:[%s4249 + $0x128] sm:$0xf]
    %v4523 = vld [vmem:[%s4249 + $0x12c] sm:$0xf]
    %v4524 = vld [vmem:[%s4249 + $0x130] sm:$0xf]
    %v4525 = vld [vmem:[%s4249 + $0x134] sm:$0xf]
    %v4526 = vld [vmem:[%s4249 + $0x138] sm:$0xf]
    %v4527 = vld [vmem:[%s4249 + $0x13c] sm:$0xf]
    %v4528 = vld [vmem:[%s4249 + $0x140] sm:$0xf]
    %v4529 = vld [vmem:[%s4249 + $0x144] sm:$0xf]
    %v4530 = vld [vmem:[%s4249 + $0x148] sm:$0xf]
    %v4531 = vld [vmem:[%s4249 + $0x14c] sm:$0xf]
    %v4532 = vld [vmem:[%s4249 + $0x150] sm:$0xf]
    %v4533 = vld [vmem:[%s4249 + $0x154] sm:$0xf]
    %v4534 = vld [vmem:[%s4249 + $0x158] sm:$0xf]
    %v4535 = vld [vmem:[%s4249 + $0x15c] sm:$0xf]
    %v4536 = vld [vmem:[%s4249 + $0x160] sm:$0xf]
    %v4537 = vld [vmem:[%s4249 + $0x164] sm:$0xf]
    %v4538 = vld [vmem:[%s4249 + $0x168] sm:$0xf]
    %v4539 = vld [vmem:[%s4249 + $0x16c] sm:$0xf]
    %v4540 = vld [vmem:[%s4249 + $0x170] sm:$0xf]
    %v4541 = vld [vmem:[%s4249 + $0x174] sm:$0xf]
    %v4542 = vld [vmem:[%s4249 + $0x178] sm:$0xf]
    %v4543 = vld [vmem:[%s4249 + $0x17c] sm:$0xf]
    %v4544 = vld [vmem:[%s4249 + $0x180] sm:$0xf]
    %v4545 = vld [vmem:[%s4249 + $0x184] sm:$0xf]
    %v4546 = vld [vmem:[%s4249 + $0x188] sm:$0xf]
    %v4547 = vld [vmem:[%s4249 + $0x18c] sm:$0xf]
    %v4548 = vld [vmem:[%s4249 + $0x190] sm:$0xf]
    %v4549 = vld [vmem:[%s4249 + $0x194] sm:$0xf]
    %v4550 = vld [vmem:[%s4249 + $0x198] sm:$0xf]
    %v4551 = vld [vmem:[%s4249 + $0x19c] sm:$0xf]
    %v4552 = vld [vmem:[%s4249 + $0x1a0] sm:$0xf]
    %v4553 = vld [vmem:[%s4249 + $0x1a4] sm:$0xf]
    %v4554 = vld [vmem:[%s4249 + $0x1a8] sm:$0xf]
    %v4555 = vld [vmem:[%s4249 + $0x1ac] sm:$0xf]
    %v4556 = vld [vmem:[%s4249 + $0x1b0] sm:$0xf]
    %v4557 = vld [vmem:[%s4249 + $0x1b4] sm:$0xf]
    %v4558 = vld [vmem:[%s4249 + $0x1b8] sm:$0xf]
    %v4559 = vld [vmem:[%s4249 + $0x1bc] sm:$0xf]
    %v4560 = vld [vmem:[%s4249 + $0x1c0] sm:$0xf]
    %v4561 = vld [vmem:[%s4249 + $0x1c4] sm:$0xf]
    %v4562 = vld [vmem:[%s4249 + $0x1c8] sm:$0xf]
    %v4563 = vld [vmem:[%s4249 + $0x1cc] sm:$0xf]
    %v4564 = vld [vmem:[%s4249 + $0x1d0] sm:$0xf]
    %v4565 = vld [vmem:[%s4249 + $0x1d4] sm:$0xf]
    %v4566 = vld [vmem:[%s4249 + $0x1d8] sm:$0xf]
    %v4567 = vld [vmem:[%s4249 + $0x1dc] sm:$0xf]
    %v4568 = vld [vmem:[%s4249 + $0x1e0] sm:$0xf]
    %v4569 = vld [vmem:[%s4249 + $0x1e4] sm:$0xf]
    %v4570 = vld [vmem:[%s4249 + $0x1e8] sm:$0xf]
    %v4571 = vld [vmem:[%s4249 + $0x1ec] sm:$0xf]
    %v4572 = vld [vmem:[%s4249 + $0x1f0] sm:$0xf]
    %v4573 = vld [vmem:[%s4249 + $0x1f4] sm:$0xf]
    %v4574 = vld [vmem:[%s4249 + $0x1f8] sm:$0xf]
    %v4575 = vld [vmem:[%s4249 + $0x1fc] sm:$0xf]
    %v4640 = vunpack.c.l.b16 %v4512
    %v4641 = vunpack.c.l.b16 %v4513
    %v4642 = vunpack.c.l.b16 %v4514
    %v4643 = vunpack.c.l.b16 %v4515
    %v4644 = vunpack.c.l.b16 %v4516
    %v4645 = vunpack.c.l.b16 %v4517
    %v4646 = vunpack.c.l.b16 %v4518
    %v4647 = vunpack.c.l.b16 %v4519
    %v4648 = vunpack.c.l.b16 %v4520
    %v4649 = vunpack.c.l.b16 %v4521
    %v4650 = vunpack.c.l.b16 %v4522
    %v4651 = vunpack.c.l.b16 %v4523
    %v4652 = vunpack.c.l.b16 %v4524
    %v4653 = vunpack.c.l.b16 %v4525
    %v4654 = vunpack.c.l.b16 %v4526
    %v4655 = vunpack.c.l.b16 %v4527
    %v4656 = vunpack.c.l.b16 %v4528
    %v4657 = vunpack.c.l.b16 %v4529
    %v4658 = vunpack.c.l.b16 %v4530
    %v4659 = vunpack.c.l.b16 %v4531
    %v4660 = vunpack.c.l.b16 %v4532
    %v4661 = vunpack.c.l.b16 %v4533
    %v4662 = vunpack.c.l.b16 %v4534
    %v4663 = vunpack.c.l.b16 %v4535
    %v4664 = vunpack.c.l.b16 %v4536
    %v4665 = vunpack.c.l.b16 %v4537
    %v4666 = vunpack.c.l.b16 %v4538
    %v4667 = vunpack.c.l.b16 %v4539
    %v4668 = vunpack.c.l.b16 %v4540
    %v4669 = vunpack.c.l.b16 %v4541
    %v4670 = vunpack.c.l.b16 %v4542
    %v4671 = vunpack.c.l.b16 %v4543
    %v4672 = vunpack.c.l.b16 %v4544
    %v4673 = vunpack.c.l.b16 %v4545
    %v4674 = vunpack.c.l.b16 %v4546
    %v4675 = vunpack.c.l.b16 %v4547
    %v4676 = vunpack.c.l.b16 %v4548
    %v4677 = vunpack.c.l.b16 %v4549
    %v4678 = vunpack.c.l.b16 %v4550
    %v4679 = vunpack.c.l.b16 %v4551
    %v4680 = vunpack.c.l.b16 %v4552
    %v4681 = vunpack.c.l.b16 %v4553
    %v4682 = vunpack.c.l.b16 %v4554
    %v4683 = vunpack.c.l.b16 %v4555
    %v4684 = vunpack.c.l.b16 %v4556
    %v4685 = vunpack.c.l.b16 %v4557
    %v4686 = vunpack.c.l.b16 %v4558
    %v4687 = vunpack.c.l.b16 %v4559
    %v4688 = vunpack.c.l.b16 %v4560
    %v4689 = vunpack.c.l.b16 %v4561
    %v4690 = vunpack.c.l.b16 %v4562
    %v4691 = vunpack.c.l.b16 %v4563
    %v4692 = vunpack.c.l.b16 %v4564
    %v4693 = vunpack.c.l.b16 %v4565
    %v4694 = vunpack.c.l.b16 %v4566
    %v4695 = vunpack.c.l.b16 %v4567
    %v4696 = vunpack.c.l.b16 %v4568
    %v4697 = vunpack.c.l.b16 %v4569
    %v4698 = vunpack.c.l.b16 %v4570
    %v4699 = vunpack.c.l.b16 %v4571
    %v4700 = vunpack.c.l.b16 %v4572
    %v4701 = vunpack.c.l.b16 %v4573
    %v4702 = vunpack.c.l.b16 %v4574
    %v4703 = vunpack.c.l.b16 %v4575
    %v4704 = vpack.c.b16 %v4641, %v4640
    %v4705 = vpack.c.b16 %v4643, %v4642
    %v4706 = vpack.c.b16 %v4645, %v4644
    %v4707 = vpack.c.b16 %v4647, %v4646
    %v4708 = vpack.c.b16 %v4649, %v4648
    %v4709 = vpack.c.b16 %v4651, %v4650
    %v4710 = vpack.c.b16 %v4653, %v4652
    %v4711 = vpack.c.b16 %v4655, %v4654
    %v4712 = vpack.c.b16 %v4657, %v4656
    %v4713 = vpack.c.b16 %v4659, %v4658
    %v4714 = vpack.c.b16 %v4661, %v4660
    %v4715 = vpack.c.b16 %v4663, %v4662
    %v4716 = vpack.c.b16 %v4665, %v4664
    %v4717 = vpack.c.b16 %v4667, %v4666
    %v4718 = vpack.c.b16 %v4669, %v4668
    %v4719 = vpack.c.b16 %v4671, %v4670
    %v4720 = vpack.c.b16 %v4673, %v4672
    %v4721 = vpack.c.b16 %v4675, %v4674
    %v4722 = vpack.c.b16 %v4677, %v4676
    %v4723 = vpack.c.b16 %v4679, %v4678
    %v4724 = vpack.c.b16 %v4681, %v4680
    %v4725 = vpack.c.b16 %v4683, %v4682
    %v4726 = vpack.c.b16 %v4685, %v4684
    %v4727 = vpack.c.b16 %v4687, %v4686
    %v4728 = vpack.c.b16 %v4689, %v4688
    %v4729 = vpack.c.b16 %v4691, %v4690
    %v4730 = vpack.c.b16 %v4693, %v4692
    %v4731 = vpack.c.b16 %v4695, %v4694
    %v4732 = vpack.c.b16 %v4697, %v4696
    %v4733 = vpack.c.b16 %v4699, %v4698
    %v4734 = vpack.c.b16 %v4701, %v4700
    %v4735 = vpack.c.b16 %v4703, %v4702
    %4768 = vmatpush.bf16.msra.mxu0 %v4711
    %4769 = vmatpush.bf16.msra.mxu0 %v4710
    %4770 = vmatpush.bf16.msra.mxu0 %v4709
    %4771 = vmatpush.bf16.msra.mxu0 %v4708
    %4772 = vmatpush.bf16.msra.mxu0 %v4707
    %4773 = vmatpush.bf16.msra.mxu0 %v4706
    %4774 = vmatpush.bf16.msra.mxu0 %v4705
    %4775 = vmatpush.bf16.msra.mxu0 %v4704
    %4776 = vmatmul.bf16.gmra.mxu0 %v4504
    %v4777 = vpop.f32.mrf.mxu0
    %v4778 = vadd.f32 0.0, %v4777
    %v4779 = vpop.f32.mrf.mxu0
    %v4780 = vadd.f32 0.0, %v4779
    %4781 = vmatmul.bf16.gmra.mxu0 %v4508
    %v4782 = vpop.f32.mrf.mxu0
    %v4783 = vpop.f32.mrf.mxu0
    %4784 = vdwg.mxu0
    %4785 = vmatpush.bf16.msra.mxu0 %v4719
    %4786 = vmatpush.bf16.msra.mxu0 %v4718
    %4787 = vmatpush.bf16.msra.mxu0 %v4717
    %4788 = vmatpush.bf16.msra.mxu0 %v4716
    %4789 = vmatpush.bf16.msra.mxu0 %v4715
    %4790 = vmatpush.bf16.msra.mxu0 %v4714
    %4791 = vmatpush.bf16.msra.mxu0 %v4713
    %4792 = vmatpush.bf16.msra.mxu0 %v4712
    %4793 = vmatmul.bf16.gmra.mxu0 %v4505
    %v4794 = vpop.f32.mrf.mxu0
    %v4795 = vadd.f32 %v4778, %v4794
    %v4796 = vpop.f32.mrf.mxu0
    %v4797 = vadd.f32 %v4780, %v4796
    %4798 = vmatmul.bf16.gmra.mxu0 %v4509
    %v4799 = vpop.f32.mrf.mxu0
    %v4800 = vpop.f32.mrf.mxu0
    %4801 = vdwg.mxu0
    %4802 = vmatpush.bf16.msra.mxu0 %v4727
    %4803 = vmatpush.bf16.msra.mxu0 %v4726
    %4804 = vmatpush.bf16.msra.mxu0 %v4725
    %4805 = vmatpush.bf16.msra.mxu0 %v4724
    %4806 = vmatpush.bf16.msra.mxu0 %v4723
    %4807 = vmatpush.bf16.msra.mxu0 %v4722
    %4808 = vmatpush.bf16.msra.mxu0 %v4721
    %4809 = vmatpush.bf16.msra.mxu0 %v4720
    %4810 = vmatmul.bf16.gmra.mxu0 %v4506
    %v4811 = vpop.f32.mrf.mxu0
    %v4812 = vadd.f32 %v4795, %v4811
    %v4813 = vpop.f32.mrf.mxu0
    %v4814 = vadd.f32 %v4797, %v4813
    %4815 = vmatmul.bf16.gmra.mxu0 %v4510
    %v4816 = vpop.f32.mrf.mxu0
    %v4817 = vpop.f32.mrf.mxu0
    %4818 = vdwg.mxu0
    %4819 = vmatpush.bf16.msra.mxu0 %v4735
    %4820 = vmatpush.bf16.msra.mxu0 %v4734
    %4821 = vmatpush.bf16.msra.mxu0 %v4733
    %4822 = vmatpush.bf16.msra.mxu0 %v4732
    %4823 = vmatpush.bf16.msra.mxu0 %v4731
    %4824 = vmatpush.bf16.msra.mxu0 %v4730
    %4825 = vmatpush.bf16.msra.mxu0 %v4729
    %4826 = vmatpush.bf16.msra.mxu0 %v4728
    %4827 = vmatmul.bf16.gmra.mxu0 %v4507
    %v4828 = vpop.f32.mrf.mxu0
    %v4829 = vadd.f32 %v4812, %v4828
    %v4830 = vpop.f32.mrf.mxu0
    %v4831 = vadd.f32 %v4814, %v4830
    %4832 = vmatmul.bf16.gmra.mxu0 %v4511
    %v4833 = vpop.f32.mrf.mxu0
    %v4834 = vpop.f32.mrf.mxu0
    %4835 = vdwg.mxu0
    %v4900 = vunpack.c.l.b16 %v4250
    %v4901 = vunpack.c.l.b16 %v4251
    %v4902 = vunpack.c.l.b16 %v4252
    %v4903 = vunpack.c.l.b16 %v4253
    %v4904 = vunpack.c.l.b16 %v4254
    %v4905 = vunpack.c.l.b16 %v4255
    %v4906 = vunpack.c.l.b16 %v4256
    %v4907 = vunpack.c.l.b16 %v4257
    %v4908 = vunpack.c.l.b16 %v4258
    %v4909 = vunpack.c.l.b16 %v4259
    %v4910 = vunpack.c.l.b16 %v4260
    %v4911 = vunpack.c.l.b16 %v4261
    %v4912 = vunpack.c.l.b16 %v4262
    %v4913 = vunpack.c.l.b16 %v4263
    %v4914 = vunpack.c.l.b16 %v4264
    %v4915 = vunpack.c.l.b16 %v4265
    %v4916 = vunpack.c.l.b16 %v4266
    %v4917 = vunpack.c.l.b16 %v4267
    %v4918 = vunpack.c.l.b16 %v4268
    %v4919 = vunpack.c.l.b16 %v4269
    %v4920 = vunpack.c.l.b16 %v4270
    %v4921 = vunpack.c.l.b16 %v4271
    %v4922 = vunpack.c.l.b16 %v4272
    %v4923 = vunpack.c.l.b16 %v4273
    %v4924 = vunpack.c.l.b16 %v4274
    %v4925 = vunpack.c.l.b16 %v4275
    %v4926 = vunpack.c.l.b16 %v4276
    %v4927 = vunpack.c.l.b16 %v4277
    %v4928 = vunpack.c.l.b16 %v4278
    %v4929 = vunpack.c.l.b16 %v4279
    %v4930 = vunpack.c.l.b16 %v4280
    %v4931 = vunpack.c.l.b16 %v4281
    %v4932 = vunpack.c.l.b16 %v4282
    %v4933 = vunpack.c.l.b16 %v4283
    %v4934 = vunpack.c.l.b16 %v4284
    %v4935 = vunpack.c.l.b16 %v4285
    %v4936 = vunpack.c.l.b16 %v4286
    %v4937 = vunpack.c.l.b16 %v4287
    %v4938 = vunpack.c.l.b16 %v4288
    %v4939 = vunpack.c.l.b16 %v4289
    %v4940 = vunpack.c.l.b16 %v4290
    %v4941 = vunpack.c.l.b16 %v4291
    %v4942 = vunpack.c.l.b16 %v4292
    %v4943 = vunpack.c.l.b16 %v4293
    %v4944 = vunpack.c.l.b16 %v4294
    %v4945 = vunpack.c.l.b16 %v4295
    %v4946 = vunpack.c.l.b16 %v4296
    %v4947 = vunpack.c.l.b16 %v4297
    %v4948 = vunpack.c.l.b16 %v4298
    %v4949 = vunpack.c.l.b16 %v4299
    %v4950 = vunpack.c.l.b16 %v4300
    %v4951 = vunpack.c.l.b16 %v4301
    %v4952 = vunpack.c.l.b16 %v4302
    %v4953 = vunpack.c.l.b16 %v4303
    %v4954 = vunpack.c.l.b16 %v4304
    %v4955 = vunpack.c.l.b16 %v4305
    %v4956 = vunpack.c.l.b16 %v4306
    %v4957 = vunpack.c.l.b16 %v4307
    %v4958 = vunpack.c.l.b16 %v4308
    %v4959 = vunpack.c.l.b16 %v4309
    %v4960 = vunpack.c.l.b16 %v4310
    %v4961 = vunpack.c.l.b16 %v4311
    %v4962 = vunpack.c.l.b16 %v4312
    %v4963 = vunpack.c.l.b16 %v4313
    %v4964 = vpack.c.b16 %v4901, %v4900
    %v4965 = vpack.c.b16 %v4903, %v4902
    %v4966 = vpack.c.b16 %v4905, %v4904
    %v4967 = vpack.c.b16 %v4907, %v4906
    %v4968 = vpack.c.b16 %v4909, %v4908
    %v4969 = vpack.c.b16 %v4911, %v4910
    %v4970 = vpack.c.b16 %v4913, %v4912
    %v4971 = vpack.c.b16 %v4915, %v4914
    %v4972 = vpack.c.b16 %v4917, %v4916
    %v4973 = vpack.c.b16 %v4919, %v4918
    %v4974 = vpack.c.b16 %v4921, %v4920
    %v4975 = vpack.c.b16 %v4923, %v4922
    %v4976 = vpack.c.b16 %v4925, %v4924
    %v4977 = vpack.c.b16 %v4927, %v4926
    %v4978 = vpack.c.b16 %v4929, %v4928
    %v4979 = vpack.c.b16 %v4931, %v4930
    %v4980 = vpack.c.b16 %v4933, %v4932
    %v4981 = vpack.c.b16 %v4935, %v4934
    %v4982 = vpack.c.b16 %v4937, %v4936
    %v4983 = vpack.c.b16 %v4939, %v4938
    %v4984 = vpack.c.b16 %v4941, %v4940
    %v4985 = vpack.c.b16 %v4943, %v4942
    %v4986 = vpack.c.b16 %v4945, %v4944
    %v4987 = vpack.c.b16 %v4947, %v4946
    %v4988 = vpack.c.b16 %v4949, %v4948
    %v4989 = vpack.c.b16 %v4951, %v4950
    %v4990 = vpack.c.b16 %v4953, %v4952
    %v4991 = vpack.c.b16 %v4955, %v4954
    %v4992 = vpack.c.b16 %v4957, %v4956
    %v4993 = vpack.c.b16 %v4959, %v4958
    %v4994 = vpack.c.b16 %v4961, %v4960
    %v4995 = vpack.c.b16 %v4963, %v4962
    %5028 = vmatpush.bf16.msra.mxu0 %v4971
    %5029 = vmatpush.bf16.msra.mxu0 %v4970
    %5030 = vmatpush.bf16.msra.mxu0 %v4969
    %5031 = vmatpush.bf16.msra.mxu0 %v4968
    %5032 = vmatpush.bf16.msra.mxu0 %v4967
    %5033 = vmatpush.bf16.msra.mxu0 %v4966
    %5034 = vmatpush.bf16.msra.mxu0 %v4965
    %5035 = vmatpush.bf16.msra.mxu0 %v4964
    %5036 = vmatmul.bf16.gmra.mxu0 %v4241
    %v5037 = vpop.f32.mrf.mxu0
    %v5038 = vadd.f32 %v4829, %v5037
    %v5039 = vpop.f32.mrf.mxu0
    %v5040 = vadd.f32 %v4831, %v5039
    %5041 = vmatmul.bf16.gmra.mxu0 %v4245
    %v5042 = vpop.f32.mrf.mxu0
    %v5043 = vpop.f32.mrf.mxu0
    %5044 = vdwg.mxu0
    %5045 = vmatpush.bf16.msra.mxu0 %v4979
    %5046 = vmatpush.bf16.msra.mxu0 %v4978
    %5047 = vmatpush.bf16.msra.mxu0 %v4977
    %5048 = vmatpush.bf16.msra.mxu0 %v4976
    %5049 = vmatpush.bf16.msra.mxu0 %v4975
    %5050 = vmatpush.bf16.msra.mxu0 %v4974
    %5051 = vmatpush.bf16.msra.mxu0 %v4973
    %5052 = vmatpush.bf16.msra.mxu0 %v4972
    %5053 = vmatmul.bf16.gmra.mxu0 %v4242
    %v5054 = vpop.f32.mrf.mxu0
    %v5055 = vadd.f32 %v5038, %v5054
    %v5056 = vpop.f32.mrf.mxu0
    %v5057 = vadd.f32 %v5040, %v5056
    %5058 = vmatmul.bf16.gmra.mxu0 %v4246
    %v5059 = vpop.f32.mrf.mxu0
    %v5060 = vpop.f32.mrf.mxu0
    %5061 = vdwg.mxu0
    %5062 = vmatpush.bf16.msra.mxu0 %v4987
    %5063 = vmatpush.bf16.msra.mxu0 %v4986
    %5064 = vmatpush.bf16.msra.mxu0 %v4985
    %5065 = vmatpush.bf16.msra.mxu0 %v4984
    %5066 = vmatpush.bf16.msra.mxu0 %v4983
    %5067 = vmatpush.bf16.msra.mxu0 %v4982
    %5068 = vmatpush.bf16.msra.mxu0 %v4981
    %5069 = vmatpush.bf16.msra.mxu0 %v4980
    %5070 = vmatmul.bf16.gmra.mxu0 %v4243
    %v5071 = vpop.f32.mrf.mxu0
    %v5072 = vadd.f32 %v5055, %v5071
    %v5073 = vpop.f32.mrf.mxu0
    %v5074 = vadd.f32 %v5057, %v5073
    %5075 = vmatmul.bf16.gmra.mxu0 %v4247
    %v5076 = vpop.f32.mrf.mxu0
    %v5077 = vpop.f32.mrf.mxu0
    %5078 = vdwg.mxu0
    %5079 = vmatpush.bf16.msra.mxu0 %v4995
    %5080 = vmatpush.bf16.msra.mxu0 %v4994
    %5081 = vmatpush.bf16.msra.mxu0 %v4993
    %5082 = vmatpush.bf16.msra.mxu0 %v4992
    %5083 = vmatpush.bf16.msra.mxu0 %v4991
    %5084 = vmatpush.bf16.msra.mxu0 %v4990
    %5085 = vmatpush.bf16.msra.mxu0 %v4989
    %5086 = vmatpush.bf16.msra.mxu0 %v4988
    %5087 = vmatmul.bf16.gmra.mxu0 %v4244
    %v5088 = vpop.f32.mrf.mxu0
    %v5089 = vadd.f32 %v5072, %v5088
    %v5090 = vpop.f32.mrf.mxu0
    %v5091 = vadd.f32 %v5074, %v5090
    %5092 = vmatmul.bf16.gmra.mxu0 %v4248
    %v5093 = vpop.f32.mrf.mxu0
    %v5094 = vpop.f32.mrf.mxu0
    %5095 = vdwg.mxu0
    %v5096 = vld [vmem:[%s4043 + $0x20] sm:$0xff]
    %v5097 = vld [vmem:[%s4043 + $0x28] sm:$0xff]
    %v5098 = vld [vmem:[%s4043 + $0x60] sm:$0xff]
    %v5099 = vld [vmem:[%s4043 + $0x68] sm:$0xff]
    %v5100 = vld [vmem:[%s4043 + $0xa0] sm:$0xff]
    %v5101 = vld [vmem:[%s4043 + $0xa8] sm:$0xff]
    %v5102 = vld [vmem:[%s4043 + $0xe0] sm:$0xff]
    %v5103 = vld [vmem:[%s4043 + $0xe8] sm:$0xff]
    %v5104 = vld [vmem:[%s4043 + $0x120] sm:$0xff]
    %v5105 = vld [vmem:[%s4043 + $0x128] sm:$0xff]
    %v5106 = vld [vmem:[%s4043 + $0x160] sm:$0xff]
    %v5107 = vld [vmem:[%s4043 + $0x168] sm:$0xff]
    %v5108 = vld [vmem:[%s4043 + $0x1a0] sm:$0xff]
    %v5109 = vld [vmem:[%s4043 + $0x1a8] sm:$0xff]
    %v5110 = vld [vmem:[%s4043 + $0x1e0] sm:$0xff]
    %v5111 = vld [vmem:[%s4043 + $0x1e8] sm:$0xff]
    %v5112 = vld [vmem:[%s4060 + $0x8] sm:$0xf]
    %v5114 = vperm.slane %v5112, 0
    %v5115 = vperm.slane %v5112, 1
    %v5116 = vperm.slane %v5112, 2
    %v5117 = vperm.slane %v5112, 3
    %v5138 = vunpack.c.l.b16 %v5096
    %v5139 = vunpack.c.h.b16 %v5096
    %v5140 = vunpack.c.l.b16 %v5097
    %v5141 = vunpack.c.h.b16 %v5097
    %v5142 = vunpack.c.l.b16 %v5098
    %v5143 = vunpack.c.h.b16 %v5098
    %v5144 = vunpack.c.l.b16 %v5099
    %v5145 = vunpack.c.h.b16 %v5099
    %v5146 = vunpack.c.l.b16 %v5100
    %v5147 = vunpack.c.h.b16 %v5100
    %v5148 = vunpack.c.l.b16 %v5101
    %v5149 = vunpack.c.h.b16 %v5101
    %v5150 = vunpack.c.l.b16 %v5102
    %v5151 = vunpack.c.h.b16 %v5102
    %v5152 = vunpack.c.l.b16 %v5103
    %v5153 = vunpack.c.h.b16 %v5103
    %v5154 = vunpack.c.l.b16 %v5104
    %v5155 = vunpack.c.h.b16 %v5104
    %v5156 = vunpack.c.l.b16 %v5105
    %v5157 = vunpack.c.h.b16 %v5105
    %v5158 = vunpack.c.l.b16 %v5106
    %v5159 = vunpack.c.h.b16 %v5106
    %v5160 = vunpack.c.l.b16 %v5107
    %v5161 = vunpack.c.h.b16 %v5107
    %v5162 = vunpack.c.l.b16 %v5108
    %v5163 = vunpack.c.h.b16 %v5108
    %v5164 = vunpack.c.l.b16 %v5109
    %v5165 = vunpack.c.h.b16 %v5109
    %v5166 = vunpack.c.l.b16 %v5110
    %v5167 = vunpack.c.h.b16 %v5110
    %v5168 = vunpack.c.l.b16 %v5111
    %v5169 = vunpack.c.h.b16 %v5111
    %v5170 = vpack.c.b16 %v5142, %v5138
    %v5171 = vpack.c.b16 %v5143, %v5139
    %v5172 = vpack.c.b16 %v5144, %v5140
    %v5173 = vpack.c.b16 %v5145, %v5141
    %v5174 = vpack.c.b16 %v5150, %v5146
    %v5175 = vpack.c.b16 %v5151, %v5147
    %v5176 = vpack.c.b16 %v5152, %v5148
    %v5177 = vpack.c.b16 %v5153, %v5149
    %v5178 = vpack.c.b16 %v5158, %v5154
    %v5179 = vpack.c.b16 %v5159, %v5155
    %v5180 = vpack.c.b16 %v5160, %v5156
    %v5181 = vpack.c.b16 %v5161, %v5157
    %v5182 = vpack.c.b16 %v5166, %v5162
    %v5183 = vpack.c.b16 %v5167, %v5163
    %v5184 = vpack.c.b16 %v5168, %v5164
    %v5185 = vpack.c.b16 %v5169, %v5165
    %5202 = vmatpush.bf16.msra.mxu0 0
    %5203 = vmatpush.bf16.msra.mxu0 0
    %5204 = vmatpush.bf16.msra.mxu0 0
    %5205 = vmatpush.bf16.msra.mxu0 0
    %5206 = vmatpush.bf16.msra.mxu0 %v5182
    %5207 = vmatpush.bf16.msra.mxu0 %v5178
    %5208 = vmatpush.bf16.msra.mxu0 %v5174
    %5209 = vmatpush.bf16.msra.mxu0 %v5170
    %5210 = vmatmul.bf16.gmra.mxu0 %v4152
    %v5211 = vpop.f32.mrf.mxu0
    %v5212 = vadd.f32 %v5114, %v5211
    %v5213 = vpop.f32.mrf.mxu0
    %v5214 = vadd.f32 %v5114, %v5213
    %5215 = vmatmul.bf16.gmra.mxu0 %v4155
    %v5216 = vpop.f32.mrf.mxu0
    %v5217 = vadd.f32 %v5114, %v5216
    %v5218 = vpop.f32.mrf.mxu0
    %5219 = vdwg.mxu0
    %5220 = vmatpush.bf16.msra.mxu0 0
    %5221 = vmatpush.bf16.msra.mxu0 0
    %5222 = vmatpush.bf16.msra.mxu0 0
    %5223 = vmatpush.bf16.msra.mxu0 0
    %5224 = vmatpush.bf16.msra.mxu0 %v5183
    %5225 = vmatpush.bf16.msra.mxu0 %v5179
    %5226 = vmatpush.bf16.msra.mxu0 %v5175
    %5227 = vmatpush.bf16.msra.mxu0 %v5171
    %5228 = vmatmul.bf16.gmra.mxu0 %v4152
    %v5229 = vpop.f32.mrf.mxu0
    %v5230 = vadd.f32 %v5115, %v5229
    %v5231 = vpop.f32.mrf.mxu0
    %v5232 = vadd.f32 %v5115, %v5231
    %5233 = vmatmul.bf16.gmra.mxu0 %v4155
    %v5234 = vpop.f32.mrf.mxu0
    %v5235 = vadd.f32 %v5115, %v5234
    %v5236 = vpop.f32.mrf.mxu0
    %5237 = vdwg.mxu0
    %5238 = vmatpush.bf16.msra.mxu0 0
    %5239 = vmatpush.bf16.msra.mxu0 0
    %5240 = vmatpush.bf16.msra.mxu0 0
    %5241 = vmatpush.bf16.msra.mxu0 0
    %5242 = vmatpush.bf16.msra.mxu0 %v5184
    %5243 = vmatpush.bf16.msra.mxu0 %v5180
    %5244 = vmatpush.bf16.msra.mxu0 %v5176
    %5245 = vmatpush.bf16.msra.mxu0 %v5172
    %5246 = vmatmul.bf16.gmra.mxu0 %v4152
    %v5247 = vpop.f32.mrf.mxu0
    %v5248 = vadd.f32 %v5116, %v5247
    %v5249 = vpop.f32.mrf.mxu0
    %v5250 = vadd.f32 %v5116, %v5249
    %5251 = vmatmul.bf16.gmra.mxu0 %v4155
    %v5252 = vpop.f32.mrf.mxu0
    %v5253 = vadd.f32 %v5116, %v5252
    %v5254 = vpop.f32.mrf.mxu0
    %5255 = vdwg.mxu0
    %5256 = vmatpush.bf16.msra.mxu0 0
    %5257 = vmatpush.bf16.msra.mxu0 0
    %5258 = vmatpush.bf16.msra.mxu0 0
    %5259 = vmatpush.bf16.msra.mxu0 0
    %5260 = vmatpush.bf16.msra.mxu0 %v5185
    %5261 = vmatpush.bf16.msra.mxu0 %v5181
    %5262 = vmatpush.bf16.msra.mxu0 %v5177
    %5263 = vmatpush.bf16.msra.mxu0 %v5173
    %5264 = vmatmul.bf16.gmra.mxu0 %v4152
    %v5265 = vpop.f32.mrf.mxu0
    %v5266 = vadd.f32 %v5117, %v5265
    %v5267 = vpop.f32.mrf.mxu0
    %v5268 = vadd.f32 %v5117, %v5267
    %5269 = vmatmul.bf16.gmra.mxu0 %v4155
    %v5270 = vpop.f32.mrf.mxu0
    %v5271 = vadd.f32 %v5117, %v5270
    %v5272 = vpop.f32.mrf.mxu0
    %5273 = vdwg.mxu0
    %v5274 = vmax.f32 %v5212, 0.0
    %v5275 = vmax.f32 %v5230, 0.0
    %v5276 = vmax.f32 %v5248, 0.0
    %v5277 = vmax.f32 %v5266, 0.0
    %v5278 = vmax.f32 %v5214, 0.0
    %v5279 = vmax.f32 %v5232, 0.0
    %v5280 = vmax.f32 %v5250, 0.0
    %v5281 = vmax.f32 %v5268, 0.0
    %v5282 = vmax.f32 %v5217, 0.0
    %v5283 = vmax.f32 %v5235, 0.0
    %v5284 = vmax.f32 %v5253, 0.0
    %v5285 = vmax.f32 %v5271, 0.0
    %v5286 = vpack.c.bf16 %v5278, %v5274
    %v5287 = vpack.c.bf16 %v5279, %v5275
    %v5288 = vpack.c.bf16 %v5280, %v5276
    %v5289 = vpack.c.bf16 %v5281, %v5277
    %v5290 = vpack.c.bf16 %v5282, %v5282
    %v5291 = vpack.c.bf16 %v5283, %v5283
    %v5292 = vpack.c.bf16 %v5284, %v5284
    %v5293 = vpack.c.bf16 %v5285, %v5285
    %v5294 = vld [vmem:[%s4249 + $0x200] sm:$0xf]
    %v5295 = vld [vmem:[%s4249 + $0x204] sm:$0xf]
    %v5296 = vld [vmem:[%s4249 + $0x208] sm:$0xf]
    %v5297 = vld [vmem:[%s4249 + $0x20c] sm:$0xf]
    %v5298 = vld [vmem:[%s4249 + $0x210] sm:$0xf]
    %v5299 = vld [vmem:[%s4249 + $0x214] sm:$0xf]
    %v5300 = vld [vmem:[%s4249 + $0x218] sm:$0xf]
    %v5301 = vld [vmem:[%s4249 + $0x21c] sm:$0xf]
    %v5302 = vld [vmem:[%s4249 + $0x220] sm:$0xf]
    %v5303 = vld [vmem:[%s4249 + $0x224] sm:$0xf]
    %v5304 = vld [vmem:[%s4249 + $0x228] sm:$0xf]
    %v5305 = vld [vmem:[%s4249 + $0x22c] sm:$0xf]
    %v5306 = vld [vmem:[%s4249 + $0x230] sm:$0xf]
    %v5307 = vld [vmem:[%s4249 + $0x234] sm:$0xf]
    %v5308 = vld [vmem:[%s4249 + $0x238] sm:$0xf]
    %v5309 = vld [vmem:[%s4249 + $0x23c] sm:$0xf]
    %v5310 = vld [vmem:[%s4249 + $0x240] sm:$0xf]
    %v5311 = vld [vmem:[%s4249 + $0x244] sm:$0xf]
    %v5312 = vld [vmem:[%s4249 + $0x248] sm:$0xf]
    %v5313 = vld [vmem:[%s4249 + $0x24c] sm:$0xf]
    %v5314 = vld [vmem:[%s4249 + $0x250] sm:$0xf]
    %v5315 = vld [vmem:[%s4249 + $0x254] sm:$0xf]
    %v5316 = vld [vmem:[%s4249 + $0x258] sm:$0xf]
    %v5317 = vld [vmem:[%s4249 + $0x25c] sm:$0xf]
    %v5318 = vld [vmem:[%s4249 + $0x260] sm:$0xf]
    %v5319 = vld [vmem:[%s4249 + $0x264] sm:$0xf]
    %v5320 = vld [vmem:[%s4249 + $0x268] sm:$0xf]
    %v5321 = vld [vmem:[%s4249 + $0x26c] sm:$0xf]
    %v5322 = vld [vmem:[%s4249 + $0x270] sm:$0xf]
    %v5323 = vld [vmem:[%s4249 + $0x274] sm:$0xf]
    %v5324 = vld [vmem:[%s4249 + $0x278] sm:$0xf]
    %v5325 = vld [vmem:[%s4249 + $0x27c] sm:$0xf]
    %v5326 = vld [vmem:[%s4249 + $0x280] sm:$0xf]
    %v5327 = vld [vmem:[%s4249 + $0x284] sm:$0xf]
    %v5328 = vld [vmem:[%s4249 + $0x288] sm:$0xf]
    %v5329 = vld [vmem:[%s4249 + $0x28c] sm:$0xf]
    %v5330 = vld [vmem:[%s4249 + $0x290] sm:$0xf]
    %v5331 = vld [vmem:[%s4249 + $0x294] sm:$0xf]
    %v5332 = vld [vmem:[%s4249 + $0x298] sm:$0xf]
    %v5333 = vld [vmem:[%s4249 + $0x29c] sm:$0xf]
    %v5334 = vld [vmem:[%s4249 + $0x2a0] sm:$0xf]
    %v5335 = vld [vmem:[%s4249 + $0x2a4] sm:$0xf]
    %v5336 = vld [vmem:[%s4249 + $0x2a8] sm:$0xf]
    %v5337 = vld [vmem:[%s4249 + $0x2ac] sm:$0xf]
    %v5338 = vld [vmem:[%s4249 + $0x2b0] sm:$0xf]
    %v5339 = vld [vmem:[%s4249 + $0x2b4] sm:$0xf]
    %v5340 = vld [vmem:[%s4249 + $0x2b8] sm:$0xf]
    %v5341 = vld [vmem:[%s4249 + $0x2bc] sm:$0xf]
    %v5342 = vld [vmem:[%s4249 + $0x2c0] sm:$0xf]
    %v5343 = vld [vmem:[%s4249 + $0x2c4] sm:$0xf]
    %v5344 = vld [vmem:[%s4249 + $0x2c8] sm:$0xf]
    %v5345 = vld [vmem:[%s4249 + $0x2cc] sm:$0xf]
    %v5346 = vld [vmem:[%s4249 + $0x2d0] sm:$0xf]
    %v5347 = vld [vmem:[%s4249 + $0x2d4] sm:$0xf]
    %v5348 = vld [vmem:[%s4249 + $0x2d8] sm:$0xf]
    %v5349 = vld [vmem:[%s4249 + $0x2dc] sm:$0xf]
    %v5350 = vld [vmem:[%s4249 + $0x2e0] sm:$0xf]
    %v5351 = vld [vmem:[%s4249 + $0x2e4] sm:$0xf]
    %v5352 = vld [vmem:[%s4249 + $0x2e8] sm:$0xf]
    %v5353 = vld [vmem:[%s4249 + $0x2ec] sm:$0xf]
    %v5354 = vld [vmem:[%s4249 + $0x2f0] sm:$0xf]
    %v5355 = vld [vmem:[%s4249 + $0x2f4] sm:$0xf]
    %v5356 = vld [vmem:[%s4249 + $0x2f8] sm:$0xf]
    %v5357 = vld [vmem:[%s4249 + $0x2fc] sm:$0xf]
    %v5422 = vunpack.c.l.b16 %v5294
    %v5423 = vunpack.c.l.b16 %v5295
    %v5424 = vunpack.c.l.b16 %v5296
    %v5425 = vunpack.c.l.b16 %v5297
    %v5426 = vunpack.c.l.b16 %v5298
    %v5427 = vunpack.c.l.b16 %v5299
    %v5428 = vunpack.c.l.b16 %v5300
    %v5429 = vunpack.c.l.b16 %v5301
    %v5430 = vunpack.c.l.b16 %v5302
    %v5431 = vunpack.c.l.b16 %v5303
    %v5432 = vunpack.c.l.b16 %v5304
    %v5433 = vunpack.c.l.b16 %v5305
    %v5434 = vunpack.c.l.b16 %v5306
    %v5435 = vunpack.c.l.b16 %v5307
    %v5436 = vunpack.c.l.b16 %v5308
    %v5437 = vunpack.c.l.b16 %v5309
    %v5438 = vunpack.c.l.b16 %v5310
    %v5439 = vunpack.c.l.b16 %v5311
    %v5440 = vunpack.c.l.b16 %v5312
    %v5441 = vunpack.c.l.b16 %v5313
    %v5442 = vunpack.c.l.b16 %v5314
    %v5443 = vunpack.c.l.b16 %v5315
    %v5444 = vunpack.c.l.b16 %v5316
    %v5445 = vunpack.c.l.b16 %v5317
    %v5446 = vunpack.c.l.b16 %v5318
    %v5447 = vunpack.c.l.b16 %v5319
    %v5448 = vunpack.c.l.b16 %v5320
    %v5449 = vunpack.c.l.b16 %v5321
    %v5450 = vunpack.c.l.b16 %v5322
    %v5451 = vunpack.c.l.b16 %v5323
    %v5452 = vunpack.c.l.b16 %v5324
    %v5453 = vunpack.c.l.b16 %v5325
    %v5454 = vunpack.c.l.b16 %v5326
    %v5455 = vunpack.c.l.b16 %v5327
    %v5456 = vunpack.c.l.b16 %v5328
    %v5457 = vunpack.c.l.b16 %v5329
    %v5458 = vunpack.c.l.b16 %v5330
    %v5459 = vunpack.c.l.b16 %v5331
    %v5460 = vunpack.c.l.b16 %v5332
    %v5461 = vunpack.c.l.b16 %v5333
    %v5462 = vunpack.c.l.b16 %v5334
    %v5463 = vunpack.c.l.b16 %v5335
    %v5464 = vunpack.c.l.b16 %v5336
    %v5465 = vunpack.c.l.b16 %v5337
    %v5466 = vunpack.c.l.b16 %v5338
    %v5467 = vunpack.c.l.b16 %v5339
    %v5468 = vunpack.c.l.b16 %v5340
    %v5469 = vunpack.c.l.b16 %v5341
    %v5470 = vunpack.c.l.b16 %v5342
    %v5471 = vunpack.c.l.b16 %v5343
    %v5472 = vunpack.c.l.b16 %v5344
    %v5473 = vunpack.c.l.b16 %v5345
    %v5474 = vunpack.c.l.b16 %v5346
    %v5475 = vunpack.c.l.b16 %v5347
    %v5476 = vunpack.c.l.b16 %v5348
    %v5477 = vunpack.c.l.b16 %v5349
    %v5478 = vunpack.c.l.b16 %v5350
    %v5479 = vunpack.c.l.b16 %v5351
    %v5480 = vunpack.c.l.b16 %v5352
    %v5481 = vunpack.c.l.b16 %v5353
    %v5482 = vunpack.c.l.b16 %v5354
    %v5483 = vunpack.c.l.b16 %v5355
    %v5484 = vunpack.c.l.b16 %v5356
    %v5485 = vunpack.c.l.b16 %v5357
    %v5486 = vpack.c.b16 %v5423, %v5422
    %v5487 = vpack.c.b16 %v5425, %v5424
    %v5488 = vpack.c.b16 %v5427, %v5426
    %v5489 = vpack.c.b16 %v5429, %v5428
    %v5490 = vpack.c.b16 %v5431, %v5430
    %v5491 = vpack.c.b16 %v5433, %v5432
    %v5492 = vpack.c.b16 %v5435, %v5434
    %v5493 = vpack.c.b16 %v5437, %v5436
    %v5494 = vpack.c.b16 %v5439, %v5438
    %v5495 = vpack.c.b16 %v5441, %v5440
    %v5496 = vpack.c.b16 %v5443, %v5442
    %v5497 = vpack.c.b16 %v5445, %v5444
    %v5498 = vpack.c.b16 %v5447, %v5446
    %v5499 = vpack.c.b16 %v5449, %v5448
    %v5500 = vpack.c.b16 %v5451, %v5450
    %v5501 = vpack.c.b16 %v5453, %v5452
    %v5502 = vpack.c.b16 %v5455, %v5454
    %v5503 = vpack.c.b16 %v5457, %v5456
    %v5504 = vpack.c.b16 %v5459, %v5458
    %v5505 = vpack.c.b16 %v5461, %v5460
    %v5506 = vpack.c.b16 %v5463, %v5462
    %v5507 = vpack.c.b16 %v5465, %v5464
    %v5508 = vpack.c.b16 %v5467, %v5466
    %v5509 = vpack.c.b16 %v5469, %v5468
    %v5510 = vpack.c.b16 %v5471, %v5470
    %v5511 = vpack.c.b16 %v5473, %v5472
    %v5512 = vpack.c.b16 %v5475, %v5474
    %v5513 = vpack.c.b16 %v5477, %v5476
    %v5514 = vpack.c.b16 %v5479, %v5478
    %v5515 = vpack.c.b16 %v5481, %v5480
    %v5516 = vpack.c.b16 %v5483, %v5482
    %v5517 = vpack.c.b16 %v5485, %v5484
    %5550 = vmatpush.bf16.msra.mxu0 %v5493
    %5551 = vmatpush.bf16.msra.mxu0 %v5492
    %5552 = vmatpush.bf16.msra.mxu0 %v5491
    %5553 = vmatpush.bf16.msra.mxu0 %v5490
    %5554 = vmatpush.bf16.msra.mxu0 %v5489
    %5555 = vmatpush.bf16.msra.mxu0 %v5488
    %5556 = vmatpush.bf16.msra.mxu0 %v5487
    %5557 = vmatpush.bf16.msra.mxu0 %v5486
    %5558 = vmatmul.bf16.gmra.mxu0 %v5286
    %v5559 = vpop.f32.mrf.mxu0
    %v5560 = vadd.f32 0.0, %v5559
    %v5561 = vpop.f32.mrf.mxu0
    %v5562 = vadd.f32 0.0, %v5561
    %5563 = vmatmul.bf16.gmra.mxu0 %v5290
    %v5564 = vpop.f32.mrf.mxu0
    %v5565 = vpop.f32.mrf.mxu0
    %5566 = vdwg.mxu0
    %5567 = vmatpush.bf16.msra.mxu0 %v5501
    %5568 = vmatpush.bf16.msra.mxu0 %v5500
    %5569 = vmatpush.bf16.msra.mxu0 %v5499
    %5570 = vmatpush.bf16.msra.mxu0 %v5498
    %5571 = vmatpush.bf16.msra.mxu0 %v5497
    %5572 = vmatpush.bf16.msra.mxu0 %v5496
    %5573 = vmatpush.bf16.msra.mxu0 %v5495
    %5574 = vmatpush.bf16.msra.mxu0 %v5494
    %5575 = vmatmul.bf16.gmra.mxu0 %v5287
    %v5576 = vpop.f32.mrf.mxu0
    %v5577 = vadd.f32 %v5560, %v5576
    %v5578 = vpop.f32.mrf.mxu0
    %v5579 = vadd.f32 %v5562, %v5578
    %5580 = vmatmul.bf16.gmra.mxu0 %v5291
    %v5581 = vpop.f32.mrf.mxu0
    %v5582 = vpop.f32.mrf.mxu0
    %5583 = vdwg.mxu0
    %5584 = vmatpush.bf16.msra.mxu0 %v5509
    %5585 = vmatpush.bf16.msra.mxu0 %v5508
    %5586 = vmatpush.bf16.msra.mxu0 %v5507
    %5587 = vmatpush.bf16.msra.mxu0 %v5506
    %5588 = vmatpush.bf16.msra.mxu0 %v5505
    %5589 = vmatpush.bf16.msra.mxu0 %v5504
    %5590 = vmatpush.bf16.msra.mxu0 %v5503
    %5591 = vmatpush.bf16.msra.mxu0 %v5502
    %5592 = vmatmul.bf16.gmra.mxu0 %v5288
    %v5593 = vpop.f32.mrf.mxu0
    %v5594 = vadd.f32 %v5577, %v5593
    %v5595 = vpop.f32.mrf.mxu0
    %v5596 = vadd.f32 %v5579, %v5595
    %5597 = vmatmul.bf16.gmra.mxu0 %v5292
    %v5598 = vpop.f32.mrf.mxu0
    %v5599 = vpop.f32.mrf.mxu0
    %5600 = vdwg.mxu0
    %5601 = vmatpush.bf16.msra.mxu0 %v5517
    %5602 = vmatpush.bf16.msra.mxu0 %v5516
    %5603 = vmatpush.bf16.msra.mxu0 %v5515
    %5604 = vmatpush.bf16.msra.mxu0 %v5514
    %5605 = vmatpush.bf16.msra.mxu0 %v5513
    %5606 = vmatpush.bf16.msra.mxu0 %v5512
    %5607 = vmatpush.bf16.msra.mxu0 %v5511
    %5608 = vmatpush.bf16.msra.mxu0 %v5510
    %5609 = vmatmul.bf16.gmra.mxu0 %v5289
    %v5610 = vpop.f32.mrf.mxu0
    %v5611 = vadd.f32 %v5594, %v5610
    %v5612 = vpop.f32.mrf.mxu0
    %v5613 = vadd.f32 %v5596, %v5612
    %5614 = vmatmul.bf16.gmra.mxu0 %v5293
    %v5615 = vpop.f32.mrf.mxu0
    %v5616 = vpop.f32.mrf.mxu0
    %5617 = vdwg.mxu0
    %v5618 = vadd.f32 %v5089, %v5611
    %v5619 = vadd.f32 %v5091, %v5613
    %v5620 = vld [vmem:[%s4043 + $0x30] sm:$0xff]
    %v5621 = vld [vmem:[%s4043 + $0x38] sm:$0xff]
    %v5622 = vld [vmem:[%s4043 + $0x70] sm:$0xff]
    %v5623 = vld [vmem:[%s4043 + $0x78] sm:$0xff]
    %v5624 = vld [vmem:[%s4043 + $0xb0] sm:$0xff]
    %v5625 = vld [vmem:[%s4043 + $0xb8] sm:$0xff]
    %v5626 = vld [vmem:[%s4043 + $0xf0] sm:$0xff]
    %v5627 = vld [vmem:[%s4043 + $0xf8] sm:$0xff]
    %v5628 = vld [vmem:[%s4043 + $0x130] sm:$0xff]
    %v5629 = vld [vmem:[%s4043 + $0x138] sm:$0xff]
    %v5630 = vld [vmem:[%s4043 + $0x170] sm:$0xff]
    %v5631 = vld [vmem:[%s4043 + $0x178] sm:$0xff]
    %v5632 = vld [vmem:[%s4043 + $0x1b0] sm:$0xff]
    %v5633 = vld [vmem:[%s4043 + $0x1b8] sm:$0xff]
    %v5634 = vld [vmem:[%s4043 + $0x1f0] sm:$0xff]
    %v5635 = vld [vmem:[%s4043 + $0x1f8] sm:$0xff]
    %v5636 = vld [vmem:[%s4060 + $0xc] sm:$0xf]
    %v5638 = vperm.slane %v5636, 0
    %v5639 = vperm.slane %v5636, 1
    %v5640 = vperm.slane %v5636, 2
    %v5641 = vperm.slane %v5636, 3
    %v5662 = vunpack.c.l.b16 %v5620
    %v5663 = vunpack.c.h.b16 %v5620
    %v5664 = vunpack.c.l.b16 %v5621
    %v5665 = vunpack.c.h.b16 %v5621
    %v5666 = vunpack.c.l.b16 %v5622
    %v5667 = vunpack.c.h.b16 %v5622
    %v5668 = vunpack.c.l.b16 %v5623
    %v5669 = vunpack.c.h.b16 %v5623
    %v5670 = vunpack.c.l.b16 %v5624
    %v5671 = vunpack.c.h.b16 %v5624
    %v5672 = vunpack.c.l.b16 %v5625
    %v5673 = vunpack.c.h.b16 %v5625
    %v5674 = vunpack.c.l.b16 %v5626
    %v5675 = vunpack.c.h.b16 %v5626
    %v5676 = vunpack.c.l.b16 %v5627
    %v5677 = vunpack.c.h.b16 %v5627
    %v5678 = vunpack.c.l.b16 %v5628
    %v5679 = vunpack.c.h.b16 %v5628
    %v5680 = vunpack.c.l.b16 %v5629
    %v5681 = vunpack.c.h.b16 %v5629
    %v5682 = vunpack.c.l.b16 %v5630
    %v5683 = vunpack.c.h.b16 %v5630
    %v5684 = vunpack.c.l.b16 %v5631
    %v5685 = vunpack.c.h.b16 %v5631
    %v5686 = vunpack.c.l.b16 %v5632
    %v5687 = vunpack.c.h.b16 %v5632
    %v5688 = vunpack.c.l.b16 %v5633
    %v5689 = vunpack.c.h.b16 %v5633
    %v5690 = vunpack.c.l.b16 %v5634
    %v5691 = vunpack.c.h.b16 %v5634
    %v5692 = vunpack.c.l.b16 %v5635
    %v5693 = vunpack.c.h.b16 %v5635
    %v5694 = vpack.c.b16 %v5666, %v5662
    %v5695 = vpack.c.b16 %v5667, %v5663
    %v5696 = vpack.c.b16 %v5668, %v5664
    %v5697 = vpack.c.b16 %v5669, %v5665
    %v5698 = vpack.c.b16 %v5674, %v5670
    %v5699 = vpack.c.b16 %v5675, %v5671
    %v5700 = vpack.c.b16 %v5676, %v5672
    %v5701 = vpack.c.b16 %v5677, %v5673
    %v5702 = vpack.c.b16 %v5682, %v5678
    %v5703 = vpack.c.b16 %v5683, %v5679
    %v5704 = vpack.c.b16 %v5684, %v5680
    %v5705 = vpack.c.b16 %v5685, %v5681
    %v5706 = vpack.c.b16 %v5690, %v5686
    %v5707 = vpack.c.b16 %v5691, %v5687
    %v5708 = vpack.c.b16 %v5692, %v5688
    %v5709 = vpack.c.b16 %v5693, %v5689
    %5726 = vmatpush.bf16.msra.mxu0 0
    %5727 = vmatpush.bf16.msra.mxu0 0
    %5728 = vmatpush.bf16.msra.mxu0 0
    %5729 = vmatpush.bf16.msra.mxu0 0
    %5730 = vmatpush.bf16.msra.mxu0 %v5706
    %5731 = vmatpush.bf16.msra.mxu0 %v5702
    %5732 = vmatpush.bf16.msra.mxu0 %v5698
    %5733 = vmatpush.bf16.msra.mxu0 %v5694
    %5734 = vmatmul.bf16.gmra.mxu0 %v4152
    %v5735 = vpop.f32.mrf.mxu0
    %v5736 = vadd.f32 %v5638, %v5735
    %v5737 = vpop.f32.mrf.mxu0
    %v5738 = vadd.f32 %v5638, %v5737
    %5739 = vmatmul.bf16.gmra.mxu0 %v4155
    %v5740 = vpop.f32.mrf.mxu0
    %v5741 = vadd.f32 %v5638, %v5740
    %v5742 = vpop.f32.mrf.mxu0
    %5743 = vdwg.mxu0
    %5744 = vmatpush.bf16.msra.mxu0 0
    %5745 = vmatpush.bf16.msra.mxu0 0
    %5746 = vmatpush.bf16.msra.mxu0 0
    %5747 = vmatpush.bf16.msra.mxu0 0
    %5748 = vmatpush.bf16.msra.mxu0 %v5707
    %5749 = vmatpush.bf16.msra.mxu0 %v5703
    %5750 = vmatpush.bf16.msra.mxu0 %v5699
    %5751 = vmatpush.bf16.msra.mxu0 %v5695
    %5752 = vmatmul.bf16.gmra.mxu0 %v4152
    %v5753 = vpop.f32.mrf.mxu0
    %v5754 = vadd.f32 %v5639, %v5753
    %v5755 = vpop.f32.mrf.mxu0
    %v5756 = vadd.f32 %v5639, %v5755
    %5757 = vmatmul.bf16.gmra.mxu0 %v4155
    %v5758 = vpop.f32.mrf.mxu0
    %v5759 = vadd.f32 %v5639, %v5758
    %v5760 = vpop.f32.mrf.mxu0
    %5761 = vdwg.mxu0
    %5762 = vmatpush.bf16.msra.mxu0 0
    %5763 = vmatpush.bf16.msra.mxu0 0
    %5764 = vmatpush.bf16.msra.mxu0 0
    %5765 = vmatpush.bf16.msra.mxu0 0
    %5766 = vmatpush.bf16.msra.mxu0 %v5708
    %5767 = vmatpush.bf16.msra.mxu0 %v5704
    %5768 = vmatpush.bf16.msra.mxu0 %v5700
    %5769 = vmatpush.bf16.msra.mxu0 %v5696
    %5770 = vmatmul.bf16.gmra.mxu0 %v4152
    %v5771 = vpop.f32.mrf.mxu0
    %v5772 = vadd.f32 %v5640, %v5771
    %v5773 = vpop.f32.mrf.mxu0
    %v5774 = vadd.f32 %v5640, %v5773
    %5775 = vmatmul.bf16.gmra.mxu0 %v4155
    %v5776 = vpop.f32.mrf.mxu0
    %v5777 = vadd.f32 %v5640, %v5776
    %v5778 = vpop.f32.mrf.mxu0
    %5779 = vdwg.mxu0
    %5780 = vmatpush.bf16.msra.mxu0 0
    %5781 = vmatpush.bf16.msra.mxu0 0
    %5782 = vmatpush.bf16.msra.mxu0 0
    %5783 = vmatpush.bf16.msra.mxu0 0
    %5784 = vmatpush.bf16.msra.mxu0 %v5709
    %5785 = vmatpush.bf16.msra.mxu0 %v5705
    %5786 = vmatpush.bf16.msra.mxu0 %v5701
    %5787 = vmatpush.bf16.msra.mxu0 %v5697
    %5788 = vmatmul.bf16.gmra.mxu0 %v4152
    %v5789 = vpop.f32.mrf.mxu0
    %v5790 = vadd.f32 %v5641, %v5789
    %v5791 = vpop.f32.mrf.mxu0
    %v5792 = vadd.f32 %v5641, %v5791
    %5793 = vmatmul.bf16.gmra.mxu0 %v4155
    %v5794 = vpop.f32.mrf.mxu0
    %v5795 = vadd.f32 %v5641, %v5794
    %v5796 = vpop.f32.mrf.mxu0
    %5797 = vdwg.mxu0
    %v5798 = vmax.f32 %v5736, 0.0
    %v5799 = vmax.f32 %v5754, 0.0
    %v5800 = vmax.f32 %v5772, 0.0
    %v5801 = vmax.f32 %v5790, 0.0
    %v5802 = vmax.f32 %v5738, 0.0
    %v5803 = vmax.f32 %v5756, 0.0
    %v5804 = vmax.f32 %v5774, 0.0
    %v5805 = vmax.f32 %v5792, 0.0
    %v5806 = vmax.f32 %v5741, 0.0
    %v5807 = vmax.f32 %v5759, 0.0
    %v5808 = vmax.f32 %v5777, 0.0
    %v5809 = vmax.f32 %v5795, 0.0
    %v5810 = vpack.c.bf16 %v5802, %v5798
    %v5811 = vpack.c.bf16 %v5803, %v5799
    %v5812 = vpack.c.bf16 %v5804, %v5800
    %v5813 = vpack.c.bf16 %v5805, %v5801
    %v5814 = vpack.c.bf16 %v5806, %v5806
    %v5815 = vpack.c.bf16 %v5807, %v5807
    %v5816 = vpack.c.bf16 %v5808, %v5808
    %v5817 = vpack.c.bf16 %v5809, %v5809
    %v5818 = vld [vmem:[%s4249 + $0x300] sm:$0xf]
    %v5819 = vld [vmem:[%s4249 + $0x304] sm:$0xf]
    %v5820 = vld [vmem:[%s4249 + $0x308] sm:$0xf]
    %v5821 = vld [vmem:[%s4249 + $0x30c] sm:$0xf]
    %v5822 = vld [vmem:[%s4249 + $0x310] sm:$0xf]
    %v5823 = vld [vmem:[%s4249 + $0x314] sm:$0xf]
    %v5824 = vld [vmem:[%s4249 + $0x318] sm:$0xf]
    %v5825 = vld [vmem:[%s4249 + $0x31c] sm:$0xf]
    %v5826 = vld [vmem:[%s4249 + $0x320] sm:$0xf]
    %v5827 = vld [vmem:[%s4249 + $0x324] sm:$0xf]
    %v5828 = vld [vmem:[%s4249 + $0x328] sm:$0xf]
    %v5829 = vld [vmem:[%s4249 + $0x32c] sm:$0xf]
    %v5830 = vld [vmem:[%s4249 + $0x330] sm:$0xf]
    %v5831 = vld [vmem:[%s4249 + $0x334] sm:$0xf]
    %v5832 = vld [vmem:[%s4249 + $0x338] sm:$0xf]
    %v5833 = vld [vmem:[%s4249 + $0x33c] sm:$0xf]
    %v5834 = vld [vmem:[%s4249 + $0x340] sm:$0xf]
    %v5835 = vld [vmem:[%s4249 + $0x344] sm:$0xf]
    %v5836 = vld [vmem:[%s4249 + $0x348] sm:$0xf]
    %v5837 = vld [vmem:[%s4249 + $0x34c] sm:$0xf]
    %v5838 = vld [vmem:[%s4249 + $0x350] sm:$0xf]
    %v5839 = vld [vmem:[%s4249 + $0x354] sm:$0xf]
    %v5840 = vld [vmem:[%s4249 + $0x358] sm:$0xf]
    %v5841 = vld [vmem:[%s4249 + $0x35c] sm:$0xf]
    %v5842 = vld [vmem:[%s4249 + $0x360] sm:$0xf]
    %v5843 = vld [vmem:[%s4249 + $0x364] sm:$0xf]
    %v5844 = vld [vmem:[%s4249 + $0x368] sm:$0xf]
    %v5845 = vld [vmem:[%s4249 + $0x36c] sm:$0xf]
    %v5846 = vld [vmem:[%s4249 + $0x370] sm:$0xf]
    %v5847 = vld [vmem:[%s4249 + $0x374] sm:$0xf]
    %v5848 = vld [vmem:[%s4249 + $0x378] sm:$0xf]
    %v5849 = vld [vmem:[%s4249 + $0x37c] sm:$0xf]
    %v5850 = vld [vmem:[%s4249 + $0x380] sm:$0xf]
    %v5851 = vld [vmem:[%s4249 + $0x384] sm:$0xf]
    %v5852 = vld [vmem:[%s4249 + $0x388] sm:$0xf]
    %v5853 = vld [vmem:[%s4249 + $0x38c] sm:$0xf]
    %v5854 = vld [vmem:[%s4249 + $0x390] sm:$0xf]
    %v5855 = vld [vmem:[%s4249 + $0x394] sm:$0xf]
    %v5856 = vld [vmem:[%s4249 + $0x398] sm:$0xf]
    %v5857 = vld [vmem:[%s4249 + $0x39c] sm:$0xf]
    %v5858 = vld [vmem:[%s4249 + $0x3a0] sm:$0xf]
    %v5859 = vld [vmem:[%s4249 + $0x3a4] sm:$0xf]
    %v5860 = vld [vmem:[%s4249 + $0x3a8] sm:$0xf]
    %v5861 = vld [vmem:[%s4249 + $0x3ac] sm:$0xf]
    %v5862 = vld [vmem:[%s4249 + $0x3b0] sm:$0xf]
    %v5863 = vld [vmem:[%s4249 + $0x3b4] sm:$0xf]
    %v5864 = vld [vmem:[%s4249 + $0x3b8] sm:$0xf]
    %v5865 = vld [vmem:[%s4249 + $0x3bc] sm:$0xf]
    %v5866 = vld [vmem:[%s4249 + $0x3c0] sm:$0xf]
    %v5867 = vld [vmem:[%s4249 + $0x3c4] sm:$0xf]
    %v5868 = vld [vmem:[%s4249 + $0x3c8] sm:$0xf]
    %v5869 = vld [vmem:[%s4249 + $0x3cc] sm:$0xf]
    %v5870 = vld [vmem:[%s4249 + $0x3d0] sm:$0xf]
    %v5871 = vld [vmem:[%s4249 + $0x3d4] sm:$0xf]
    %v5872 = vld [vmem:[%s4249 + $0x3d8] sm:$0xf]
    %v5873 = vld [vmem:[%s4249 + $0x3dc] sm:$0xf]
    %v5874 = vld [vmem:[%s4249 + $0x3e0] sm:$0xf]
    %v5875 = vld [vmem:[%s4249 + $0x3e4] sm:$0xf]
    %v5876 = vld [vmem:[%s4249 + $0x3e8] sm:$0xf]
    %v5877 = vld [vmem:[%s4249 + $0x3ec] sm:$0xf]
    %v5878 = vld [vmem:[%s4249 + $0x3f0] sm:$0xf]
    %v5879 = vld [vmem:[%s4249 + $0x3f4] sm:$0xf]
    %v5880 = vld [vmem:[%s4249 + $0x3f8] sm:$0xf]
    %v5881 = vld [vmem:[%s4249 + $0x3fc] sm:$0xf]
    %v5946 = vunpack.c.l.b16 %v5818
    %v5947 = vunpack.c.l.b16 %v5819
    %v5948 = vunpack.c.l.b16 %v5820
    %v5949 = vunpack.c.l.b16 %v5821
    %v5950 = vunpack.c.l.b16 %v5822
    %v5951 = vunpack.c.l.b16 %v5823
    %v5952 = vunpack.c.l.b16 %v5824
    %v5953 = vunpack.c.l.b16 %v5825
    %v5954 = vunpack.c.l.b16 %v5826
    %v5955 = vunpack.c.l.b16 %v5827
    %v5956 = vunpack.c.l.b16 %v5828
    %v5957 = vunpack.c.l.b16 %v5829
    %v5958 = vunpack.c.l.b16 %v5830
    %v5959 = vunpack.c.l.b16 %v5831
    %v5960 = vunpack.c.l.b16 %v5832
    %v5961 = vunpack.c.l.b16 %v5833
    %v5962 = vunpack.c.l.b16 %v5834
    %v5963 = vunpack.c.l.b16 %v5835
    %v5964 = vunpack.c.l.b16 %v5836
    %v5965 = vunpack.c.l.b16 %v5837
    %v5966 = vunpack.c.l.b16 %v5838
    %v5967 = vunpack.c.l.b16 %v5839
    %v5968 = vunpack.c.l.b16 %v5840
    %v5969 = vunpack.c.l.b16 %v5841
    %v5970 = vunpack.c.l.b16 %v5842
    %v5971 = vunpack.c.l.b16 %v5843
    %v5972 = vunpack.c.l.b16 %v5844
    %v5973 = vunpack.c.l.b16 %v5845
    %v5974 = vunpack.c.l.b16 %v5846
    %v5975 = vunpack.c.l.b16 %v5847
    %v5976 = vunpack.c.l.b16 %v5848
    %v5977 = vunpack.c.l.b16 %v5849
    %v5978 = vunpack.c.l.b16 %v5850
    %v5979 = vunpack.c.l.b16 %v5851
    %v5980 = vunpack.c.l.b16 %v5852
    %v5981 = vunpack.c.l.b16 %v5853
    %v5982 = vunpack.c.l.b16 %v5854
    %v5983 = vunpack.c.l.b16 %v5855
    %v5984 = vunpack.c.l.b16 %v5856
    %v5985 = vunpack.c.l.b16 %v5857
    %v5986 = vunpack.c.l.b16 %v5858
    %v5987 = vunpack.c.l.b16 %v5859
    %v5988 = vunpack.c.l.b16 %v5860
    %v5989 = vunpack.c.l.b16 %v5861
    %v5990 = vunpack.c.l.b16 %v5862
    %v5991 = vunpack.c.l.b16 %v5863
    %v5992 = vunpack.c.l.b16 %v5864
    %v5993 = vunpack.c.l.b16 %v5865
    %v5994 = vunpack.c.l.b16 %v5866
    %v5995 = vunpack.c.l.b16 %v5867
    %v5996 = vunpack.c.l.b16 %v5868
    %v5997 = vunpack.c.l.b16 %v5869
    %v5998 = vunpack.c.l.b16 %v5870
    %v5999 = vunpack.c.l.b16 %v5871
    %v6000 = vunpack.c.l.b16 %v5872
    %v6001 = vunpack.c.l.b16 %v5873
    %v6002 = vunpack.c.l.b16 %v5874
    %v6003 = vunpack.c.l.b16 %v5875
    %v6004 = vunpack.c.l.b16 %v5876
    %v6005 = vunpack.c.l.b16 %v5877
    %v6006 = vunpack.c.l.b16 %v5878
    %v6007 = vunpack.c.l.b16 %v5879
    %v6008 = vunpack.c.l.b16 %v5880
    %v6009 = vunpack.c.l.b16 %v5881
    %v6010 = vpack.c.b16 %v5947, %v5946
    %v6011 = vpack.c.b16 %v5949, %v5948
    %v6012 = vpack.c.b16 %v5951, %v5950
    %v6013 = vpack.c.b16 %v5953, %v5952
    %v6014 = vpack.c.b16 %v5955, %v5954
    %v6015 = vpack.c.b16 %v5957, %v5956
    %v6016 = vpack.c.b16 %v5959, %v5958
    %v6017 = vpack.c.b16 %v5961, %v5960
    %v6018 = vpack.c.b16 %v5963, %v5962
    %v6019 = vpack.c.b16 %v5965, %v5964
    %v6020 = vpack.c.b16 %v5967, %v5966
    %v6021 = vpack.c.b16 %v5969, %v5968
    %v6022 = vpack.c.b16 %v5971, %v5970
    %v6023 = vpack.c.b16 %v5973, %v5972
    %v6024 = vpack.c.b16 %v5975, %v5974
    %v6025 = vpack.c.b16 %v5977, %v5976
    %v6026 = vpack.c.b16 %v5979, %v5978
    %v6027 = vpack.c.b16 %v5981, %v5980
    %v6028 = vpack.c.b16 %v5983, %v5982
    %v6029 = vpack.c.b16 %v5985, %v5984
    %v6030 = vpack.c.b16 %v5987, %v5986
    %v6031 = vpack.c.b16 %v5989, %v5988
    %v6032 = vpack.c.b16 %v5991, %v5990
    %v6033 = vpack.c.b16 %v5993, %v5992
    %v6034 = vpack.c.b16 %v5995, %v5994
    %v6035 = vpack.c.b16 %v5997, %v5996
    %v6036 = vpack.c.b16 %v5999, %v5998
    %v6037 = vpack.c.b16 %v6001, %v6000
    %v6038 = vpack.c.b16 %v6003, %v6002
    %v6039 = vpack.c.b16 %v6005, %v6004
    %v6040 = vpack.c.b16 %v6007, %v6006
    %v6041 = vpack.c.b16 %v6009, %v6008
    %6074 = vmatpush.bf16.msra.mxu0 %v6017
    %6075 = vmatpush.bf16.msra.mxu0 %v6016
    %6076 = vmatpush.bf16.msra.mxu0 %v6015
    %6077 = vmatpush.bf16.msra.mxu0 %v6014
    %6078 = vmatpush.bf16.msra.mxu0 %v6013
    %6079 = vmatpush.bf16.msra.mxu0 %v6012
    %6080 = vmatpush.bf16.msra.mxu0 %v6011
    %6081 = vmatpush.bf16.msra.mxu0 %v6010
    %6082 = vmatmul.bf16.gmra.mxu0 %v5810
    %v6083 = vpop.f32.mrf.mxu0
    %v6084 = vadd.f32 0.0, %v6083
    %v6085 = vpop.f32.mrf.mxu0
    %v6086 = vadd.f32 0.0, %v6085
    %6087 = vmatmul.bf16.gmra.mxu0 %v5814
    %v6088 = vpop.f32.mrf.mxu0
    %v6089 = vpop.f32.mrf.mxu0
    %6090 = vdwg.mxu0
    %6091 = vmatpush.bf16.msra.mxu0 %v6025
    %6092 = vmatpush.bf16.msra.mxu0 %v6024
    %6093 = vmatpush.bf16.msra.mxu0 %v6023
    %6094 = vmatpush.bf16.msra.mxu0 %v6022
    %6095 = vmatpush.bf16.msra.mxu0 %v6021
    %6096 = vmatpush.bf16.msra.mxu0 %v6020
    %6097 = vmatpush.bf16.msra.mxu0 %v6019
    %6098 = vmatpush.bf16.msra.mxu0 %v6018
    %6099 = vmatmul.bf16.gmra.mxu0 %v5811
    %v6100 = vpop.f32.mrf.mxu0
    %v6101 = vadd.f32 %v6084, %v6100
    %v6102 = vpop.f32.mrf.mxu0
    %v6103 = vadd.f32 %v6086, %v6102
    %6104 = vmatmul.bf16.gmra.mxu0 %v5815
    %v6105 = vpop.f32.mrf.mxu0
    %v6106 = vpop.f32.mrf.mxu0
    %6107 = vdwg.mxu0
    %6108 = vmatpush.bf16.msra.mxu0 %v6033
    %6109 = vmatpush.bf16.msra.mxu0 %v6032
    %6110 = vmatpush.bf16.msra.mxu0 %v6031
    %6111 = vmatpush.bf16.msra.mxu0 %v6030
    %6112 = vmatpush.bf16.msra.mxu0 %v6029
    %6113 = vmatpush.bf16.msra.mxu0 %v6028
    %6114 = vmatpush.bf16.msra.mxu0 %v6027
    %6115 = vmatpush.bf16.msra.mxu0 %v6026
    %6116 = vmatmul.bf16.gmra.mxu0 %v5812
    %v6117 = vpop.f32.mrf.mxu0
    %v6118 = vadd.f32 %v6101, %v6117
    %v6119 = vpop.f32.mrf.mxu0
    %v6120 = vadd.f32 %v6103, %v6119
    %6121 = vmatmul.bf16.gmra.mxu0 %v5816
    %v6122 = vpop.f32.mrf.mxu0
    %v6123 = vpop.f32.mrf.mxu0
    %6124 = vdwg.mxu0
    %6125 = vmatpush.bf16.msra.mxu0 %v6041
    %6126 = vmatpush.bf16.msra.mxu0 %v6040
    %6127 = vmatpush.bf16.msra.mxu0 %v6039
    %6128 = vmatpush.bf16.msra.mxu0 %v6038
    %6129 = vmatpush.bf16.msra.mxu0 %v6037
    %6130 = vmatpush.bf16.msra.mxu0 %v6036
    %6131 = vmatpush.bf16.msra.mxu0 %v6035
    %6132 = vmatpush.bf16.msra.mxu0 %v6034
    %6133 = vmatmul.bf16.gmra.mxu0 %v5813
    %v6134 = vpop.f32.mrf.mxu0
    %v6135 = vadd.f32 %v6118, %v6134
    %v6136 = vpop.f32.mrf.mxu0
    %v6137 = vadd.f32 %v6120, %v6136
    %6138 = vmatmul.bf16.gmra.mxu0 %v5817
    %v6139 = vpop.f32.mrf.mxu0
    %v6140 = vpop.f32.mrf.mxu0
    %6141 = vdwg.mxu0
    %v6142 = vadd.f32 %v5618, %v6135
    %v6143 = vadd.f32 %v5619, %v6137
    %v6144 = vadd.f32 %v4038, %v6142
    %v6145 = vadd.f32 %v4039, %v6143
    %s6146 = scalar_lea.vmem %s31, 1
    %v6147 = vld [vmem:[%s6146] sm:$0x1]
    %v6149 = vperm.slane %v6147, 0
    %v6151 = vadd.f32 %v6144, %v6149
    %v6152 = vadd.f32 %v6145, %v6149
    %s6153 = scalar_lea.vmem %s33, 1
    %v6154 = vld [vmem:[%s6153] sm:$0x1]
    %s6155 = scalar_lea.vmem %s35, 1
    %v6156 = vld [vmem:[%s6155] sm:$0x1]
    %v6157 = vsel %vm171, %v6151, 0.0
    %6158 = vadd.xlane.f32.xlu0 %v6157
    %v6159 = vpop.xlane.xlu0 %6158
    %v6160 = vsel %vm171, %v6152, 0.0
    %6161 = vadd.xlane.f32.xlu0 %v6160
    %v6162 = vpop.xlane.xlu0 %6161
    %v6163 = vmul.f32 %v6159, %v955
    %v6164 = vmul.f32 %v6162, %v955
    %v6165 = vsub.f32 %v6151, %v6163
    %v6166 = vsub.f32 %v6152, %v6164
    %v6167 = vmul.f32 %v6165, %v6165
    %v6168 = vmul.f32 %v6166, %v6166
    %v6169 = vsel %vm171, %v6167, 0.0
    %6170 = vadd.xlane.f32.xlu0 %v6169
    %v6171 = vpop.xlane.xlu0 %6170
    %v6172 = vsel %vm171, %v6168, 0.0
    %6173 = vadd.xlane.f32.xlu0 %v6172
    %v6174 = vpop.xlane.xlu0 %6173
    %v6175 = vmul.f32 %v6171, %v955
    %v6176 = vmul.f32 %v6174, %v955
    %v6177 = vadd.f32 %v6175, 1e-05
    %v6178 = vadd.f32 %v6176, 1e-05
    %v6179 = vrsqrt.pop %v6177
    %v6180 = vmul.f32 %v6179, %v6177
    %v6181 = vmul.f32 %v6180, %v6179
    %v6182 = vmul.f32 0.5, %v6181
    %v6183 = vsub.f32 1.5, %v6182
    %v6184 = vmul.f32 %v6179, %v6183
    %vm6185 = vweird.f32 %v6177
    %vm6186 = vweird.f32 %v6179
    %vm6187 = vmor %vm6185, %vm6186
    %v6188 = vsel %vm6187, %v6179, %v6184
    %v6189 = vrsqrt.pop %v6178
    %v6190 = vmul.f32 %v6189, %v6178
    %v6191 = vmul.f32 %v6190, %v6189
    %v6192 = vmul.f32 0.5, %v6191
    %v6193 = vsub.f32 1.5, %v6192
    %v6194 = vmul.f32 %v6189, %v6193
    %vm6195 = vweird.f32 %v6178
    %vm6196 = vweird.f32 %v6189
    %vm6197 = vmor %vm6195, %vm6196
    %v6198 = vsel %vm6197, %v6189, %v6194
    %v6199 = vmul.f32 %v6165, %v6188
    %v6200 = vmul.f32 %v6166, %v6198
    %v6202 = vperm.slane %v6154, 0
    %v6204 = vmul.f32 %v6199, %v6202
    %v6205 = vmul.f32 %v6200, %v6202
    %v6207 = vperm.slane %v6156, 0
    %v6209 = vadd.f32 %v6204, %v6207
    %v6210 = vadd.f32 %v6205, %v6207
    %6211 = vst.msk [vmem:[#allocation5] sm:$0xff] %vm171, %v6209
    %6212 = vst.msk [vmem:[#allocation5 + $0x8] sm:$0xf] %vm173, %v6210
    %6213 = vrot.lane.b32.xlu0 %v200, 96
    %v6214 = vpop.permute.xlu0 %6213
    %6215 = vrot.lane.b32.xlu0 %v201, 96
    %v6216 = vpop.permute.xlu0 %6215
    %v6219 = vadd.f32 %v6209, %v6214
    %v6220 = vadd.f32 %v6210, %v6216
    %v6221 = vld [vmem:[%s37] sm:$0x1]
    %v6223 = vperm.slane %v6221, 0
    %v6225 = vmul.f32 %v6219, %v6223
    %v6226 = vmul.f32 %v6220, %v6223
    %v6227 = vsel %vm880, %v6225, 0.0
    %6228 = vadd.xlane.f32.xlu0 %v6227
    %v6229 = vpop.xlane.xlu0 %6228
    %vm6230 = vcmask 257024
    %v6231 = vsel %vm6230, %v6226, 0.0
    %6232 = vadd.xlane.f32.xlu0 %v6231
    %v6233 = vpop.xlane.xlu0 %6232
    %v6234 = vld [vmem:[#allocation3] sm:$0x1]
    %v6236 = vperm.slane %v6234, 0
    %v6238 = vadd.f32 %v6229, %v6236
    %v6239 = vadd.f32 %v6233, %v6236
    %v6240 = vxor.u32 %v6238, 2147483648
    %v6241 = vxor.u32 %v6239, 2147483648
    %v6242 = vmul.f32 %v6240, 1.442695
    %v6243 = vpow.pop %v6242
    %v6244 = vmul.f32 %v6241, 1.442695
    %v6245 = vpow.pop %v6244
    %v6246 = vadd.f32 %v6243, 1.0
    %v6247 = vadd.f32 %v6245, 1.0
    %v6248 = vrcp.pop %v6246
    %v6249 = vmul.f32 %v6246, %v6248
    %v6250 = vsub.f32 1.0, %v6249
    %v6251 = vmul.f32 %v6248, %v6250
    %v6252 = vadd.f32 %v6248, %v6251
    %vm6253 = vweird.f32 %v6246
    %vm6254 = vweird.f32 %v6248
    %vm6255 = vmor %vm6253, %vm6254
    %v6256 = vsel %vm6255, %v6248, %v6252
    %v6257 = vand.u32 2147483647, %v6246
    %vm6258 = vcmp.eq.f32.partialorder %v6257, 8.507059e+37
    %v6259 = vand.u32 %v6246, 2147483648
    %v6260 = vor.u32 1.1754944e-38, %v6259
    %v6261 = vsel %vm6258, %v6260, %v6256
    %v6262 = vmul.f32 1.0, %v6261
    %v6263 = vrcp.pop %v6247
    %v6264 = vmul.f32 %v6247, %v6263
    %v6265 = vsub.f32 1.0, %v6264
    %v6266 = vmul.f32 %v6263, %v6265
    %v6267 = vadd.f32 %v6263, %v6266
    %vm6268 = vweird.f32 %v6247
    %vm6269 = vweird.f32 %v6263
    %vm6270 = vmor %vm6268, %vm6269
    %v6271 = vsel %vm6270, %v6263, %v6267
    %v6272 = vand.u32 2147483647, %v6247
    %vm6273 = vcmp.eq.f32.partialorder %v6272, 8.507059e+37
    %v6274 = vand.u32 %v6247, 2147483648
    %v6275 = vor.u32 1.1754944e-38, %v6274
    %v6276 = vsel %vm6273, %v6275, %v6271
    %v6277 = vmul.f32 1.0, %v6276
    %vm6278 = vcmask 7168
    %6279 = vst.msk [vmem:[%s61] sm:$0xff] %vm6278, %v6262
    %vm6280 = vcmask 3072
    %6281 = vst.msk [vmem:[%s61 + $0x8] sm:$0xf] %vm6280, %v6277
    %s6282 = sld [smem:[#allocation2]]
    %s6283 = scalar_lea.vmem [#allocation5], %s6282
    %v6284 = vld [vmem:[%s6283] sm:$0x1]
    %v6285 = vld [vmem:[%s41] sm:$0xff]
    %v6286 = vld [vmem:[%s41 + $0x8] sm:$0xff]
    %v6287 = vld [vmem:[%s41 + $0x10] sm:$0xff]
    %v6288 = vld [vmem:[%s41 + $0x18] sm:$0xff]
    %v6289 = vld [vmem:[%s41 + $0x20] sm:$0xff]
    %v6290 = vld [vmem:[%s41 + $0x28] sm:$0xff]
    %v6291 = vld [vmem:[%s41 + $0x30] sm:$0xff]
    %v6292 = vld [vmem:[%s41 + $0x38] sm:$0xff]
    %v6293 = vld [vmem:[%s43] sm:$0xff]
    %v6294 = vld [vmem:[%s43 + $0x8] sm:$0xff]
    %v6295 = vld [vmem:[%s43 + $0x10] sm:$0xff]
    %v6296 = vld [vmem:[%s43 + $0x18] sm:$0xff]
    %v6297 = vld [vmem:[%s43 + $0x20] sm:$0xff]
    %v6298 = vld [vmem:[%s43 + $0x28] sm:$0xff]
    %v6299 = vld [vmem:[%s43 + $0x30] sm:$0xff]
    %v6300 = vld [vmem:[%s43 + $0x38] sm:$0xff]
    %v6302 = vsel %vm171, %v6284, 0
    %6304 = vmatpush.msra.mxu0 0.0
    %6305 = vmatpush.msra.mxu0 0.0
    %6306 = vmatpush.msra.mxu0 0.0
    %6307 = vmatpush.msra.mxu0 0.0
    %6308 = vmatpush.msra.mxu0 0.0
    %6309 = vmatpush.msra.mxu0 0.0
    %6310 = vmatpush.msra.mxu0 0.0
    %6311 = vmatpush.msra.mxu0 0.0
    %6312 = vmatpush.msra.mxu0 %v6300
    %6313 = vmatpush.msra.mxu0 %v6299
    %6314 = vmatpush.msra.mxu0 %v6298
    %6315 = vmatpush.msra.mxu0 %v6297
    %6316 = vmatpush.msra.mxu0 %v6296
    %6317 = vmatpush.msra.mxu0 %v6295
    %6318 = vmatpush.msra.mxu0 %v6294
    %6319 = vmatpush.msra.mxu0 %v6293
    %6320 = vmatmul.f32.gmra.mxu0 %v6302
    %v6321 = vpop.f32.mrf.mxu0
    %v6322 = vadd.f32 0.0, %v6321
    %6323 = vdwg.mxu0
    %v6324 = vperm.slane %v6322, 0
    %v6326 = vsel %vm171, %v6209, 0
    %v6329 = vsel %vm171, %v6210, 0
    %6331 = vmatpush.msra.mxu0 0.0
    %6332 = vmatpush.msra.mxu0 0.0
    %6333 = vmatpush.msra.mxu0 0.0
    %6334 = vmatpush.msra.mxu0 0.0
    %6335 = vmatpush.msra.mxu0 0.0
    %6336 = vmatpush.msra.mxu0 0.0
    %6337 = vmatpush.msra.mxu0 0.0
    %6338 = vmatpush.msra.mxu0 0.0
    %6339 = vmatpush.msra.mxu0 %v6292
    %6340 = vmatpush.msra.mxu0 %v6291
    %6341 = vmatpush.msra.mxu0 %v6290
    %6342 = vmatpush.msra.mxu0 %v6289
    %6343 = vmatpush.msra.mxu0 %v6288
    %6344 = vmatpush.msra.mxu0 %v6287
    %6345 = vmatpush.msra.mxu0 %v6286
    %6346 = vmatpush.msra.mxu0 %v6285
    %6347 = vmatmul.f32.gmra.mxu0 %v6326
    %v6348 = vpop.f32.mrf.mxu0
    %v6349 = vadd.f32 %v6324, %v6348
    %6350 = vmatmul.f32.gmra.mxu0 %v6329
    %v6351 = vpop.f32.mrf.mxu0
    %v6352 = vadd.f32 %v6324, %v6351
    %6353 = vdwg.mxu0
    %v6354 = vld [vmem:[%s47] sm:$0x1]
    %v6356 = vperm.slane %v6354, 0
    %v6358 = vadd.f32 %v6349, %v6356
    %v6359 = vadd.f32 %v6352, %v6356
    %v6360 = vld [vmem:[%s49] sm:$0x1]
    %v6361 = vld [vmem:[%s51] sm:$0x1]
    %v6362 = vsel %vm171, %v6358, 0.0
    %v6363 = vsel %vm173, %v6359, 0.0
    %v6364 = vadd.f32 %v6362, %v6363
    %v6365 = vrot.slane %v6364, 4
    %v6366 = vadd.f32 %v6364, %v6365
    %v6367 = vrot.slane %v6366, 2
    %v6368 = vadd.f32 %v6366, %v6367
    %v6369 = vrot.slane %v6368, 1
    %v6370 = vadd.f32 %v6368, %v6369
    %v6371 = vrcp.pop 12.0
    %v6372 = vmul.f32 12.0, %v6371
    %v6373 = vsub.f32 1.0, %v6372
    %v6374 = vmul.f32 %v6371, %v6373
    %v6375 = vadd.f32 %v6371, %v6374
    %vm6376 = vweird.f32 %v6371
    %v6377 = vsel %vm6376, %v6371, %v6375
    %v6378 = vmul.f32 %v6370, %v6377
    %v6379 = vsub.f32 %v6358, %v6378
    %v6380 = vsub.f32 %v6359, %v6378
    %v6381 = vmul.f32 %v6379, %v6379
    %v6382 = vmul.f32 %v6380, %v6380
    %v6383 = vsel %vm171, %v6381, 0.0
    %v6384 = vsel %vm173, %v6382, 0.0
    %v6385 = vadd.f32 %v6383, %v6384
    %v6386 = vrot.slane %v6385, 4
    %v6387 = vadd.f32 %v6385, %v6386
    %v6388 = vrot.slane %v6387, 2
    %v6389 = vadd.f32 %v6387, %v6388
    %v6390 = vrot.slane %v6389, 1
    %v6391 = vadd.f32 %v6389, %v6390
    %v6392 = vmul.f32 %v6391, %v6377
    %v6393 = vadd.f32 %v6392, 1e-05
    %v6394 = vrsqrt.pop %v6393
    %v6395 = vmul.f32 %v6394, %v6393
    %v6396 = vmul.f32 %v6395, %v6394
    %v6397 = vmul.f32 0.5, %v6396
    %v6398 = vsub.f32 1.5, %v6397
    %v6399 = vmul.f32 %v6394, %v6398
    %vm6400 = vweird.f32 %v6393
    %vm6401 = vweird.f32 %v6394
    %vm6402 = vmor %vm6400, %vm6401
    %v6403 = vsel %vm6402, %v6394, %v6399
    %v6404 = vmul.f32 %v6379, %v6403
    %v6405 = vmul.f32 %v6380, %v6403
    %v6407 = vperm.slane %v6360, 0
    %v6409 = vmul.f32 %v6404, %v6407
    %v6410 = vmul.f32 %v6405, %v6407
    %v6412 = vperm.slane %v6361, 0
    %v6414 = vadd.f32 %v6409, %v6412
    %v6415 = vadd.f32 %v6410, %v6412
    %v6416 = vmax.f32 %v6414, 0.0
    %v6417 = vmax.f32 %v6415, 0.0
    %v6418 = vld [vmem:[%s45] sm:$0xff]
    %v6419 = vld [vmem:[%s45 + $0x8] sm:$0xff]
    %v6420 = vld [vmem:[%s45 + $0x10] sm:$0xff]
    %v6421 = vld [vmem:[%s45 + $0x18] sm:$0xff]
    %v6422 = vld [vmem:[%s45 + $0x20] sm:$0xff]
    %v6423 = vld [vmem:[%s45 + $0x28] sm:$0xff]
    %v6424 = vld [vmem:[%s45 + $0x30] sm:$0xff]
    %v6425 = vld [vmem:[%s45 + $0x38] sm:$0xff]
    %s6426 = scalar_lea.vmem %s47, 1
    %v6427 = vld [vmem:[%s6426] sm:$0x1]
    %v6429 = vperm.slane %v6427, 0
    %v6432 = vsel %vm171, %v6416, 0
    %v6435 = vsel %vm171, %v6417, 0
    %6437 = vmatpush.msra.mxu0 0.0
    %6438 = vmatpush.msra.mxu0 0.0
    %6439 = vmatpush.msra.mxu0 0.0
    %6440 = vmatpush.msra.mxu0 0.0
    %6441 = vmatpush.msra.mxu0 0.0
    %6442 = vmatpush.msra.mxu0 0.0
    %6443 = vmatpush.msra.mxu0 0.0
    %6444 = vmatpush.msra.mxu0 0.0
    %6445 = vmatpush.msra.mxu0 %v6425
    %6446 = vmatpush.msra.mxu0 %v6424
    %6447 = vmatpush.msra.mxu0 %v6423
    %6448 = vmatpush.msra.mxu0 %v6422
    %6449 = vmatpush.msra.mxu0 %v6421
    %6450 = vmatpush.msra.mxu0 %v6420
    %6451 = vmatpush.msra.mxu0 %v6419
    %6452 = vmatpush.msra.mxu0 %v6418
    %6453 = vmatmul.f32.gmra.mxu0 %v6432
    %v6454 = vpop.f32.mrf.mxu0
    %v6455 = vadd.f32 %v6429, %v6454
    %6456 = vmatmul.f32.gmra.mxu0 %v6435
    %v6457 = vpop.f32.mrf.mxu0
    %v6458 = vadd.f32 %v6429, %v6457
    %6459 = vdwg.mxu0
    %s6460 = scalar_lea.vmem %s49, 1
    %v6461 = vld [vmem:[%s6460] sm:$0x1]
    %s6462 = scalar_lea.vmem %s51, 1
    %v6463 = vld [vmem:[%s6462] sm:$0x1]
    %v6464 = vsel %vm171, %v6455, 0.0
    %v6465 = vsel %vm173, %v6458, 0.0
    %v6466 = vadd.f32 %v6464, %v6465
    %v6467 = vrot.slane %v6466, 4
    %v6468 = vadd.f32 %v6466, %v6467
    %v6469 = vrot.slane %v6468, 2
    %v6470 = vadd.f32 %v6468, %v6469
    %v6471 = vrot.slane %v6470, 1
    %v6472 = vadd.f32 %v6470, %v6471
    %v6473 = vmul.f32 %v6472, %v6377
    %v6474 = vsub.f32 %v6455, %v6473
    %v6475 = vsub.f32 %v6458, %v6473
    %v6476 = vmul.f32 %v6474, %v6474
    %v6477 = vmul.f32 %v6475, %v6475
    %v6478 = vsel %vm171, %v6476, 0.0
    %v6479 = vsel %vm173, %v6477, 0.0
    %v6480 = vadd.f32 %v6478, %v6479
    %v6481 = vrot.slane %v6480, 4
    %v6482 = vadd.f32 %v6480, %v6481
    %v6483 = vrot.slane %v6482, 2
    %v6484 = vadd.f32 %v6482, %v6483
    %v6485 = vrot.slane %v6484, 1
    %v6486 = vadd.f32 %v6484, %v6485
    %v6487 = vmul.f32 %v6486, %v6377
    %v6488 = vadd.f32 %v6487, 1e-05
    %v6489 = vrsqrt.pop %v6488
    %v6490 = vmul.f32 %v6489, %v6488
    %v6491 = vmul.f32 %v6490, %v6489
    %v6492 = vmul.f32 0.5, %v6491
    %v6493 = vsub.f32 1.5, %v6492
    %v6494 = vmul.f32 %v6489, %v6493
    %vm6495 = vweird.f32 %v6488
    %vm6496 = vweird.f32 %v6489
    %vm6497 = vmor %vm6495, %vm6496
    %v6498 = vsel %vm6497, %v6489, %v6494
    %v6499 = vmul.f32 %v6474, %v6498
    %v6500 = vmul.f32 %v6475, %v6498
    %v6502 = vperm.slane %v6461, 0
    %v6504 = vmul.f32 %v6499, %v6502
    %v6505 = vmul.f32 %v6500, %v6502
    %v6507 = vperm.slane %v6463, 0
    %v6509 = vadd.f32 %v6504, %v6507
    %v6510 = vadd.f32 %v6505, %v6507
    %v6511 = vmax.f32 %v6509, 0.0
    %v6512 = vmax.f32 %v6510, 0.0
    %s6513 = scalar_lea.vmem %s45, 64
    %v6514 = vld [vmem:[%s6513] sm:$0xff]
    %v6515 = vld [vmem:[%s6513 + $0x8] sm:$0xff]
    %v6516 = vld [vmem:[%s6513 + $0x10] sm:$0xff]
    %v6517 = vld [vmem:[%s6513 + $0x18] sm:$0xff]
    %v6518 = vld [vmem:[%s6513 + $0x20] sm:$0xff]
    %v6519 = vld [vmem:[%s6513 + $0x28] sm:$0xff]
    %v6520 = vld [vmem:[%s6513 + $0x30] sm:$0xff]
    %v6521 = vld [vmem:[%s6513 + $0x38] sm:$0xff]
    %s6522 = scalar_lea.vmem %s47, 2
    %v6523 = vld [vmem:[%s6522] sm:$0x1]
    %v6525 = vperm.slane %v6523, 0
    %v6528 = vsel %vm171, %v6511, 0
    %v6531 = vsel %vm171, %v6512, 0
    %6533 = vmatpush.msra.mxu0 0.0
    %6534 = vmatpush.msra.mxu0 0.0
    %6535 = vmatpush.msra.mxu0 0.0
    %6536 = vmatpush.msra.mxu0 0.0
    %6537 = vmatpush.msra.mxu0 0.0
    %6538 = vmatpush.msra.mxu0 0.0
    %6539 = vmatpush.msra.mxu0 0.0
    %6540 = vmatpush.msra.mxu0 0.0
    %6541 = vmatpush.msra.mxu0 %v6521
    %6542 = vmatpush.msra.mxu0 %v6520
    %6543 = vmatpush.msra.mxu0 %v6519
    %6544 = vmatpush.msra.mxu0 %v6518
    %6545 = vmatpush.msra.mxu0 %v6517
    %6546 = vmatpush.msra.mxu0 %v6516
    %6547 = vmatpush.msra.mxu0 %v6515
    %6548 = vmatpush.msra.mxu0 %v6514
    %6549 = vmatmul.f32.gmra.mxu0 %v6528
    %v6550 = vpop.f32.mrf.mxu0
    %v6551 = vadd.f32 %v6525, %v6550
    %6552 = vmatmul.f32.gmra.mxu0 %v6531
    %v6553 = vpop.f32.mrf.mxu0
    %v6554 = vadd.f32 %v6525, %v6553
    %6555 = vdwg.mxu0
    %s6556 = scalar_lea.vmem %s49, 2
    %v6557 = vld [vmem:[%s6556] sm:$0x1]
    %s6558 = scalar_lea.vmem %s51, 2
    %v6559 = vld [vmem:[%s6558] sm:$0x1]
    %v6560 = vsel %vm171, %v6551, 0.0
    %v6561 = vsel %vm173, %v6554, 0.0
    %v6562 = vadd.f32 %v6560, %v6561
    %v6563 = vrot.slane %v6562, 4
    %v6564 = vadd.f32 %v6562, %v6563
    %v6565 = vrot.slane %v6564, 2
    %v6566 = vadd.f32 %v6564, %v6565
    %v6567 = vrot.slane %v6566, 1
    %v6568 = vadd.f32 %v6566, %v6567
    %v6569 = vmul.f32 %v6568, %v6377
    %v6570 = vsub.f32 %v6551, %v6569
    %v6571 = vsub.f32 %v6554, %v6569
    %v6572 = vmul.f32 %v6570, %v6570
    %v6573 = vmul.f32 %v6571, %v6571
    %v6574 = vsel %vm171, %v6572, 0.0
    %v6575 = vsel %vm173, %v6573, 0.0
    %v6576 = vadd.f32 %v6574, %v6575
    %v6577 = vrot.slane %v6576, 4
    %v6578 = vadd.f32 %v6576, %v6577
    %v6579 = vrot.slane %v6578, 2
    %v6580 = vadd.f32 %v6578, %v6579
    %v6581 = vrot.slane %v6580, 1
    %v6582 = vadd.f32 %v6580, %v6581
    %v6583 = vmul.f32 %v6582, %v6377
    %v6584 = vadd.f32 %v6583, 1e-05
    %v6585 = vrsqrt.pop %v6584
    %v6586 = vmul.f32 %v6585, %v6584
    %v6587 = vmul.f32 %v6586, %v6585
    %v6588 = vmul.f32 0.5, %v6587
    %v6589 = vsub.f32 1.5, %v6588
    %v6590 = vmul.f32 %v6585, %v6589
    %vm6591 = vweird.f32 %v6584
    %vm6592 = vweird.f32 %v6585
    %vm6593 = vmor %vm6591, %vm6592
    %v6594 = vsel %vm6593, %v6585, %v6590
    %v6595 = vmul.f32 %v6570, %v6594
    %v6596 = vmul.f32 %v6571, %v6594
    %v6598 = vperm.slane %v6557, 0
    %v6600 = vmul.f32 %v6595, %v6598
    %v6601 = vmul.f32 %v6596, %v6598
    %v6603 = vperm.slane %v6559, 0
    %v6605 = vadd.f32 %v6600, %v6603
    %v6606 = vadd.f32 %v6601, %v6603
    %v6607 = vmax.f32 %v6605, 0.0
    %v6608 = vmax.f32 %v6606, 0.0
    %v6609 = vld [vmem:[%s53] sm:$0x1]
    %v6611 = vperm.slane %v6609, 0
    %v6613 = vmul.f32 %v6607, %v6611
    %v6614 = vmul.f32 %v6608, %v6611
    %v6615 = vsel %vm171, %v6613, 0.0
    %6616 = vadd.xlane.f32.xlu0 %v6615
    %v6617 = vpop.xlane.xlu0 %6616
    %v6618 = vsel %vm173, %v6614, 0.0
    %6619 = vadd.xlane.f32.xlu0 %v6618
    %v6620 = vpop.xlane.xlu0 %6619
    %v6621 = vld [vmem:[#allocation4] sm:$0x1]
    %v6623 = vperm.slane %v6621, 0
    %v6625 = vadd.f32 %v6617, %v6623
    %v6626 = vadd.f32 %v6620, %v6623
    %v6627 = vxor.u32 %v6625, 2147483648
    %v6628 = vxor.u32 %v6626, 2147483648
    %v6629 = vmul.f32 %v6627, 1.442695
    %v6630 = vpow.pop %v6629
    %v6631 = vmul.f32 %v6628, 1.442695
    %v6632 = vpow.pop %v6631
    %v6633 = vadd.f32 %v6630, 1.0
    %v6634 = vadd.f32 %v6632, 1.0
    %v6635 = vrcp.pop %v6633
    %v6636 = vmul.f32 %v6633, %v6635
    %v6637 = vsub.f32 1.0, %v6636
    %v6638 = vmul.f32 %v6635, %v6637
    %v6639 = vadd.f32 %v6635, %v6638
    %vm6640 = vweird.f32 %v6633
    %vm6641 = vweird.f32 %v6635
    %vm6642 = vmor %vm6640, %vm6641
    %v6643 = vsel %vm6642, %v6635, %v6639
    %v6644 = vand.u32 2147483647, %v6633
    %vm6645 = vcmp.eq.f32.partialorder %v6644, 8.507059e+37
    %v6646 = vand.u32 %v6633, 2147483648
    %v6647 = vor.u32 1.1754944e-38, %v6646
    %v6648 = vsel %vm6645, %v6647, %v6643
    %v6649 = vmul.f32 1.0, %v6648
    %v6650 = vrcp.pop %v6634
    %v6651 = vmul.f32 %v6634, %v6650
    %v6652 = vsub.f32 1.0, %v6651
    %v6653 = vmul.f32 %v6650, %v6652
    %v6654 = vadd.f32 %v6650, %v6653
    %vm6655 = vweird.f32 %v6634
    %vm6656 = vweird.f32 %v6650
    %vm6657 = vmor %vm6655, %vm6656
    %v6658 = vsel %vm6657, %v6650, %v6654
    %v6659 = vand.u32 2147483647, %v6634
    %vm6660 = vcmp.eq.f32.partialorder %v6659, 8.507059e+37
    %v6661 = vand.u32 %v6634, 2147483648
    %v6662 = vor.u32 1.1754944e-38, %v6661
    %v6663 = vsel %vm6660, %v6662, %v6658
    %v6664 = vmul.f32 1.0, %v6663
    %6665 = vst.msk [vmem:[%s63] sm:$0xff] %vm6278, %v6649
    %6666 = vst.msk [vmem:[%s63 + $0x8] sm:$0xf] %vm6280, %v6664
    // Predicated region
    $region114: #{tpu_custom_call.1} parent=1 // pred_check
      _
    $region115: #{tpu_custom_call.1} parent=1 // pred_check_branch
      %6668 = sbr.rel (0) target = $region117
    $region116: #{tpu_custom_call.1} parent=1 // pred_region
      %6670 = vsyncadd [#allocation6], 0
      %s6671 = sshll.u32 [#allocation5], 4
      %s6672 = int_to_ptr.vmem [resolvable:$true] %s6671
      %s6673 = sshll.u32 %s57, 4
      %s6674 = int_to_ptr.hbm [resolvable:$true] %s6673
      %6679 = dma.vmem_to_hbm [thread:$0]  %s6672, 256, %s6674, [#allocation6], 128, 128, 8
    $region117: #{tpu_custom_call.1} parent=1 // pred_fallthru
      _
    // Predicated region
    $region118: #{tpu_custom_call.1} parent=1 // pred_check
      _
    $region119: #{tpu_custom_call.1} parent=1 // pred_check_branch
      %6681 = sbr.rel (0) target = $region121
    $region120: #{tpu_custom_call.1} parent=1 // pred_region
      %6683 = vsyncadd [#allocation8], 0
      %s6684 = sshll.u32 [#allocation7], 4
      %s6685 = int_to_ptr.vmem [resolvable:$true] %s6684
      %s6686 = sshll.u32 %s59, 4
      %s6687 = int_to_ptr.hbm [resolvable:$true] %s6686
      %6692 = dma.vmem_to_hbm [thread:$0]  %s6685, 256, %s6687, [#allocation8], 128, 128, 8
    $region121: #{tpu_custom_call.1} parent=1 // pred_fallthru
      _
    // Predicated region
    $region122: #{tpu_custom_call.1} parent=1 // pred_check
      _
    $region123: #{tpu_custom_call.1} parent=1 // pred_check_branch
      %6694 = sbr.rel (0) target = $region125
    $region124: #{tpu_custom_call.1} parent=1 // pred_region
      _
    $region125: #{tpu_custom_call.1} parent=1 // pred_fallthru
      _
    // Predicated region
    $region126: #{tpu_custom_call.1} parent=1 // pred_check
      _
    $region127: #{tpu_custom_call.1} parent=1 // pred_check_branch
      %6696 = sbr.rel (0) target = $region129
    $region128: #{tpu_custom_call.1} parent=1 // pred_region
      _
    $region129: #{tpu_custom_call.1} parent=1 // pred_fallthru
      _
    // Predicated region
    $region130: #{tpu_custom_call.1} parent=1 // pred_check
      _
    $region131: #{tpu_custom_call.1} parent=1 // pred_check_branch
      %6698 = sbr.rel (0) target = $region133
    $region132: #{tpu_custom_call.1} parent=1 // pred_region
      %6700 = dma.done [#allocation6], 256
    $region133: #{tpu_custom_call.1} parent=1 // pred_fallthru
      _
    // Predicated region
    $region134: #{tpu_custom_call.1} parent=1 // pred_check
      _
    $region135: #{tpu_custom_call.1} parent=1 // pred_check_branch
      %6702 = sbr.rel (0) target = $region137
    $region136: #{tpu_custom_call.1} parent=1 // pred_region
      %6704 = dma.done [#allocation8], 256
    $region137: #{tpu_custom_call.1} parent=1 // pred_fallthru
      _
    // Predicated region
    $region138: #{tpu_custom_call.1} parent=1 // pred_check
      _
    $region139: #{tpu_custom_call.1} parent=1 // pred_check_branch
      %6706 = sbr.rel (0) target = $region141
    $region140: #{tpu_custom_call.1} parent=1 // pred_region
      _
    $region141: #{tpu_custom_call.1} parent=1 // pred_fallthru
      _
    // Predicated region
    $region142: #{tpu_custom_call.1} parent=1 // pred_check
      _
    $region143: #{tpu_custom_call.1} parent=1 // pred_check_branch
      %6708 = sbr.rel (0) target = $region145
    $region144: #{tpu_custom_call.1} parent=1 // pred_region
      _
    $region145: #{tpu_custom_call.1} parent=1 // pred_fallthru
      _
    %6709 = vsyncpa [#allocation6], 1
    %6710 = vsyncpa [#allocation8], 1

</llo_original>
